<compile_context>
chip_gen: v7x
topology: tpu7x:2x2x1
jax: 0.10.0
libtpu: 0.0.40
codegen_flags: <defaults>
</compile_context>

<pallas_src>
import functools

import jax
import jax.numpy as jnp
from jax.experimental import pallas as pl
from jax.experimental.pallas import tpu as pltpu

LRELU_SLOPE = 0.2
BN_EPS = 1e-5
TM_MAX = 256   # cap on the M tile of the im2col matmul


def _round_up(x, m):
    return (x + m - 1) // m * m


def _pick_tm(m):
    """M tile: multiple of 8, targeting >=2 tiles (v7x megacore), <= TM_MAX."""
    if m <= 8:
        return m
    tm = min(TM_MAX, _round_up((m + 1) // 2, 8))
    return m if tm >= m else tm


def _vmem_limit_bytes(tm, k, c):
    """Derived VMEM request: double-buffered tiles + resident weight + headroom."""
    need = (2 * tm * k * 2              # x tile, bf16, double-buffered
            + 2 * k * c * 2             # resident weight, bf16 (count 2x to be safe)
            + 2 * tm * c * 2            # output tile, bf16
            + 4 * (2 * k + 3 * c) * 4   # bias / scale / shift / stat vectors
            + 3 * tm * max(k, c) * 4)   # f32 intermediates (prologue + matmul acc)
    return max(32 << 20, min(2 * need + (4 << 20), 64 << 20))


# ----------------------------------------------------------------------------
# Pallas kernel: one M tile of   y = act( prologue(x) @ W + b )
#   * prologue  = previous layer's BatchNorm + LeakyReLU (optional, fused)
#   * epilogue  = bias + optional LeakyReLU + optional per-channel sum/sumsq
# bf16 MXU inputs, f32 accumulation; weight / bias / BN vectors are resident.
# ----------------------------------------------------------------------------
def _conv_kernel(*refs, prologue_bn, fuse_lrelu, emit_stats):
    if prologue_bn:
        x_ref, w_ref, b_ref, scale_ref, shift_ref, *out_refs = refs
    else:
        x_ref, w_ref, b_ref, *out_refs = refs
        scale_ref = shift_ref = None
    if emit_stats:
        o_ref, sum_ref, sq_ref = out_refs
    else:
        (o_ref,) = out_refs

    x = x_ref[...]
    if prologue_bn:
        # Previous layer's BN + LeakyReLU applied per im2col column.  This is
        # elementwise, so it commutes with the patch gather; the redundant VPU
        # work rides free slots under the MXU.
        xf = (x.astype(jnp.float32) - shift_ref[...]) * scale_ref[...]
        xf = jnp.where(xf >= 0, xf, LRELU_SLOPE * xf)
        x = xf.astype(jnp.bfloat16)

    y = jnp.dot(x, w_ref[...], preferred_element_type=jnp.float32) + b_ref[...]
    if fuse_lrelu:
        y = jnp.where(y >= 0, y, LRELU_SLOPE * y)
    o_ref[...] = y.astype(o_ref.dtype)

    if emit_stats:
        # BatchNorm batch statistics of the raw conv output (pre-activation).
        # TODO(synk): shifted/Welford accumulation if channel means get large.
        sum_ref[...] = jnp.sum(y, axis=0, keepdims=True)
        sq_ref[...] = jnp.sum(y * y, axis=0, keepdims=True)


def conv_matmul(x2d, w2d, b, *, fuse_lrelu, emit_stats, bn_scale=None, bn_shift=None):
    """y = act(prologue(x2d) @ w2d + b); optional per-channel sum / sumsq of y.

    x2d: (M, K) bf16 im2col patches; w2d: (K, C) bf16; b: (C,) f32.
    bn_scale / bn_shift: (K,) f32 inv_std / mean of the previous layer's BN,
    applied (with LeakyReLU) in the kernel prologue.
    """
    m, k = x2d.shape
    k2, c = w2d.shape
    assert k == k2
    assert not (fuse_lrelu and emit_stats)
    prologue_bn = bn_scale is not None

    # Stats convs use one full-M block so the per-channel reduction never sees
    # a ragged/OOB tile; M is small for the BN layers of this net.
    tm = m if emit_stats else _pick_tm(m)
    grid_m = pl.cdiv(m, tm)
    if emit_stats:
        assert grid_m == 1

    kernel = functools.partial(_conv_kernel, prologue_bn=prologue_bn,
                               fuse_lrelu=fuse_lrelu, emit_stats=emit_stats)

    in_specs = [
        pl.BlockSpec((tm, k), lambda i: (i, 0)),   # im2col activation tile
        pl.BlockSpec((k, c), lambda i: (0, 0)),    # resident weight
        pl.BlockSpec((1, c), lambda i: (0, 0)),    # bias
    ]
    args = [x2d, w2d, b.reshape(1, c).astype(jnp.float32)]
    if prologue_bn:
        in_specs += [pl.BlockSpec((1, k), lambda i: (0, 0)),
                     pl.BlockSpec((1, k), lambda i: (0, 0))]
        args += [bn_scale.reshape(1, k).astype(jnp.float32),
                 bn_shift.reshape(1, k).astype(jnp.float32)]

    if emit_stats:
        out_shape = (jax.ShapeDtypeStruct((m, c), jnp.bfloat16),
                     jax.ShapeDtypeStruct((1, c), jnp.float32),
                     jax.ShapeDtypeStruct((1, c), jnp.float32))
        out_specs = (pl.BlockSpec((tm, c), lambda i: (i, 0)),
                     pl.BlockSpec((1, c), lambda i: (0, 0)),
                     pl.BlockSpec((1, c), lambda i: (0, 0)))
    else:
        out_shape = jax.ShapeDtypeStruct((m, c), jnp.bfloat16)
        out_specs = pl.BlockSpec((tm, c), lambda i: (i, 0))

    return pl.pallas_call(
        kernel,
        out_shape=out_shape,
        grid=(grid_m,),
        in_specs=in_specs,
        out_specs=out_specs,
        compiler_params=pltpu.CompilerParams(
            dimension_semantics=("parallel",),
            vmem_limit_bytes=_vmem_limit_bytes(tm, k, c)),
    )(*args)


# ----------------------------------------------------------------------------
# JAX glue: im2col (bf16 patches), conv wrapper, avg-pool downsample, params
# ----------------------------------------------------------------------------
def im2col(x, kh, kw, stride, pad, pad_value=None):
    """x: [N, H, W, C] -> ([N*Ho*Wo, kh*kw*C], N, Ho, Wo).

    pad_value: optional per-channel (C,) border fill (default: zeros)."""
    n, h, w, c = x.shape
    hp, wp = h + 2 * pad, w + 2 * pad
    if pad_value is None:
        xp = jnp.pad(x, ((0, 0), (pad, pad), (pad, pad), (0, 0)))
    else:
        xp = jnp.broadcast_to(pad_value.astype(x.dtype).reshape(1, 1, 1, c),
                              (n, hp, wp, c))
        xp = jax.lax.dynamic_update_slice(xp, x, (0, pad, pad, 0))
    ho = (h + 2 * pad - kh) // stride + 1
    wo = (w + 2 * pad - kw) // stride + 1
    cols = []
    for i in range(kh):
        for j in range(kw):
            cols.append(xp[:, i:i + stride * ho:stride, j:j + stride * wo:stride, :])
    patches = jnp.concatenate(cols, axis=-1)           # [N, Ho, Wo, kh*kw*C]
    return patches.reshape(n * ho * wo, kh * kw * c), n, ho, wo


def conv2d(x_nhwc, w_hwio, b, *, stride, pad, fuse_lrelu, emit_stats, bn_prev=None):
    """4x4 conv as a bf16 im2col matmul Pallas kernel.

    bn_prev: optional (bf16 batch mean, f32 inv_std) of the previous layer's
    BatchNorm; normalization + LeakyReLU are applied inside the kernel
    prologue.  The border is filled with the same bf16 mean so the normalized
    border is exactly zero (PyTorch pads *after* BN+LeakyReLU).
    """
    kh, kw, cin, cout = w_hwio.shape
    assert x_nhwc.shape[-1] == cin
    if bn_prev is None:
        bn_scale = bn_shift = None
        pad_value = None
    else:
        mean_bf16, inv_std = bn_prev
        bn_shift = jnp.tile(mean_bf16.astype(jnp.float32), kh * kw)   # (K,)
        bn_scale = jnp.tile(inv_std, kh * kw)                         # (K,)
        pad_value = mean_bf16
    x2d, n, ho, wo = im2col(x_nhwc.astype(jnp.bfloat16), kh, kw, stride, pad,
                            pad_value=pad_value)
    w2d = w_hwio.reshape(kh * kw * cin, cout).astype(jnp.bfloat16)
    res = conv_matmul(x2d, w2d, b, fuse_lrelu=fuse_lrelu, emit_stats=emit_stats,
                      bn_scale=bn_scale, bn_shift=bn_shift)
    return res, (n, ho, wo, cout)


def avgpool_3x3_s2_p1(x):
    """AvgPool2d(3, stride=2, padding=1, count_include_pad=False), NHWC."""
    pad = ((0, 0), (1, 1), (1, 1), (0, 0))
    zero = jnp.zeros((), x.dtype)
    sum_x = jax.lax.reduce_window(
        x, zero, jax.lax.add, (1, 3, 3, 1), (1, 2, 2, 1), pad)
    counts = jax.lax.reduce_window(
        jnp.ones(x.shape[:3] + (1,), x.dtype), zero, jax.lax.add,
        (1, 3, 3, 1), (1, 2, 2, 1), pad)
    return sum_x / counts


def make_discriminator_params(key, cin, ndf, layers):
    """Conv stack of one DiscriminatorLayer: (cin->ndf s2), (s2+BN)x(layers-1),
    (s1+BN), (->1 s1)."""
    specs = [(cin, ndf, 2, False)]
    nf = ndf
    for _ in range(1, layers):
        nf_prev, nf = nf, min(nf * 2, 512)
        specs.append((nf_prev, nf, 2, True))
    nf_prev, nf = nf, min(nf * 2, 512)
    specs.append((nf_prev, nf, 1, True))
    specs.append((nf, 1, 1, False))

    params = []
    for (ci, co, stride, has_bn) in specs:
        key, kw_key, kb_key = jax.random.split(key, 3)
        w = 0.02 * jax.random.normal(kw_key, (4, 4, ci, co), jnp.float32)  # HWIO
        b = 0.01 * jax.random.normal(kb_key, (co,), jnp.float32)
        params.append(dict(w=w, b=b, stride=stride, bn=has_bn))
    return params, key


def run_discriminator_layer(x, params):
    """One DiscriminatorLayer.model forward (getIntermediateFeat=False)."""
    n_convs = len(params)
    out = x
    bn_prev = None       # (bf16 batch mean, f32 inv_std) of the previous BN layer
    for idx, p in enumerate(params):
        is_last = idx == n_convs - 1
        has_bn = p["bn"]
        fuse_lrelu = (not has_bn) and (not is_last)   # conv0: LReLU in epilogue
        res, (n, ho, wo, c) = conv2d(
            out, p["w"], p["b"], stride=p["stride"], pad=2,
            fuse_lrelu=fuse_lrelu, emit_stats=has_bn, bn_prev=bn_prev)
        if has_bn:
            y2d, ssum, ssq = res                        # raw conv output + stats
            m = y2d.shape[0]
            mean = ssum[0] / m
            var = jnp.maximum(ssq[0] / m - mean * mean, 0.0)   # biased batch var
            inv_std = jax.lax.rsqrt(var + BN_EPS)
            bn_prev = (mean.astype(jnp.bfloat16), inv_std)     # consumed by next conv
        else:
            y2d = res
            bn_prev = None
        out = y2d.reshape(n, ho, wo, c)
    return out


def wgan_discriminator_forward(x_nchw, scale_params, num_d):
    """Multi-scale forward: list (length num_d) of [output] lists, NCHW outputs."""
    x = jnp.transpose(x_nchw, (0, 2, 3, 1))               # NCHW -> NHWC
    results = []
    cur = x
    for i in range(num_d):
        params = scale_params[num_d - 1 - i]
        out_nhwc = run_discriminator_layer(cur, params)
        results.append([jnp.transpose(out_nhwc.astype(jnp.float32), (0, 3, 1, 2))])
        if i != num_d - 1:
            cur = avgpool_3x3_s2_p1(cur)
    return results


# ----------------------------------------------------------------------------
if __name__ == "__main__":
    # Small, module-consistent shapes: batch=2, in_channels=4, 16x16, ndf=16.
    N, CIN, H, W = 2, 4, 16, 16
    NDF, LAYERS, NUM_D = 16, 3, 3

    key = jax.random.PRNGKey(0)
    key, xkey = jax.random.split(key)
    x = jax.random.normal(xkey, (N, CIN, H, W), jnp.float32)

    # One independent DiscriminatorLayer per scale (as in WGANDiscriminator.__init__).
    scale_params = []
    for _ in range(NUM_D):
        p, key = make_discriminator_params(key, CIN, NDF, LAYERS)
        scale_params.append(p)

    fwd = jax.jit(lambda inp: wgan_discriminator_forward(inp, scale_params, NUM_D))
    results = fwd(x)
    jax.block_until_ready(results)

    # Basic sanity: one [output] per scale, 1 output channel, finite values.
    assert len(results) == NUM_D
    for r in results:
        assert len(r) == 1 and r[0].shape[1] == 1
        assert bool(jnp.all(jnp.isfinite(r[0])))

    print("KERNEL_OK")
</pallas_src>

<mosaic_0001>
module attributes {stable_mosaic.version = 11 : i64} {
  func.func @_conv_kernel(%arg0: i32, %arg1: memref<16x64xbf16, #tpu.memory_space<vmem>>, %arg2: memref<64x16xbf16, #tpu.memory_space<vmem>>, %arg3: memref<1x16xf32, #tpu.memory_space<vmem>>, %arg4: memref<16x16xbf16, #tpu.memory_space<vmem>>) attributes {dimension_semantics = [#tpu.dimension_semantics<parallel>], iteration_bounds = array<i64: 2>, scalar_prefetch = 0 : i64, scratch_operands = 0 : i64, tpu.core_type = #tpu.core_type<tc>, window_params = [{transform_indices = @transform_0, window_bounds = array<i64: 16, 64>}, {pipeline_mode = #tpu.pipeline_mode<synchronous>, transform_indices = @transform_1, window_bounds = array<i64: 64, 16>}, {pipeline_mode = #tpu.pipeline_mode<synchronous>, transform_indices = @transform_2, window_bounds = array<i64: 1, 16>}, {transform_indices = @transform_3, window_bounds = array<i64: 16, 16>}]} {
    %c0 = arith.constant 0 : index
    %c0_0 = arith.constant 0 : index
    %0 = vector.load %arg1[%c0, %c0_0] : memref<16x64xbf16, #tpu.memory_space<vmem>>, vector<16x64xbf16>
    %c0_1 = arith.constant 0 : index
    %c0_2 = arith.constant 0 : index
    %1 = vector.load %arg2[%c0_1, %c0_2] : memref<64x16xbf16, #tpu.memory_space<vmem>>, vector<64x16xbf16>
    %cst = arith.constant dense<0.000000e+00> : vector<16x16xf32>
    %2 = tpu.matmul %0, %1, %cst {dimension_numbers = #tpu.dot_dimension_numbers<[1], [0], [0], [1], [0, 0, 1, 1], [], []>} : vector<16x64xbf16>, vector<64x16xbf16>, vector<16x16xf32> -> vector<16x16xf32>
    %c0_3 = arith.constant 0 : index
    %c0_4 = arith.constant 0 : index
    %3 = vector.load %arg3[%c0_3, %c0_4] : memref<1x16xf32, #tpu.memory_space<vmem>>, vector<1x16xf32>
    %4 = vector.broadcast %3 : vector<1x16xf32> to vector<16x16xf32>
    %5 = arith.addf %2, %4 : vector<16x16xf32>
    %cst_5 = arith.constant 0.000000e+00 : f32
    %6 = vector.broadcast %cst_5 : f32 to vector<16x16xf32>
    %7 = arith.cmpf oge, %5, %6 : vector<16x16xf32>
    %cst_6 = arith.constant 2.000000e-01 : f32
    %8 = vector.broadcast %cst_6 : f32 to vector<16x16xf32>
    %9 = arith.mulf %8, %5 : vector<16x16xf32>
    %10 = arith.select %7, %5, %9 : vector<16x16xi1>, vector<16x16xf32>
    %11 = arith.truncf %10 : vector<16x16xf32> to vector<16x16xbf16>
    %c0_7 = arith.constant 0 : index
    %c0_8 = arith.constant 0 : index
    %12 = vector.load %arg4[%c0_7, %c0_8] : memref<16x16xbf16, #tpu.memory_space<vmem>>, vector<16x16xbf16>
    tpu.vector_store %arg4[%c0_7, %c0_8], %11 {strides = array<i32>} : memref<16x16xbf16, #tpu.memory_space<vmem>>, vector<16x16xbf16>,
    return
  }
  func.func @transform_0(%arg0: i32) -> (i32, i32) {
    %c0_i32 = arith.constant 0 : i32
    %c0_i32_0 = arith.constant 0 : i32
    return %arg0, %c0_i32 : i32, i32
  }
  func.func @transform_1(%arg0: i32) -> (i32, i32) {
    %c0_i32 = arith.constant 0 : i32
    %c0_i32_0 = arith.constant 0 : i32
    %c0_i32_1 = arith.constant 0 : i32
    return %c0_i32, %c0_i32_0 : i32, i32
  }
  func.func @transform_2(%arg0: i32) -> (i32, i32) {
    %c0_i32 = arith.constant 0 : i32
    %c0_i32_0 = arith.constant 0 : i32
    %c0_i32_1 = arith.constant 0 : i32
    return %c0_i32, %c0_i32_0 : i32, i32
  }
  func.func @transform_3(%arg0: i32) -> (i32, i32) {
    %c0_i32 = arith.constant 0 : i32
    %c0_i32_0 = arith.constant 0 : i32
    return %arg0, %c0_i32 : i32, i32
  }
}

module attributes {stable_mosaic.version = 11 : i64} {
  func.func @_conv_kernel(%arg0: i32, %arg1: memref<8x256xbf16, #tpu.memory_space<vmem>>, %arg2: memref<256x32xbf16, #tpu.memory_space<vmem>>, %arg3: memref<1x32xf32, #tpu.memory_space<vmem>>, %arg4: memref<8x32xbf16, #tpu.memory_space<vmem>>, %arg5: memref<1x32xf32, #tpu.memory_space<vmem>>, %arg6: memref<1x32xf32, #tpu.memory_space<vmem>>) attributes {dimension_semantics = [#tpu.dimension_semantics<parallel>], iteration_bounds = array<i64: 1>, scalar_prefetch = 0 : i64, scratch_operands = 0 : i64, tpu.core_type = #tpu.core_type<tc>, window_params = [{transform_indices = @transform_0, window_bounds = array<i64: 8, 256>}, {pipeline_mode = #tpu.pipeline_mode<synchronous>, transform_indices = @transform_1, window_bounds = array<i64: 256, 32>}, {pipeline_mode = #tpu.pipeline_mode<synchronous>, transform_indices = @transform_2, window_bounds = array<i64: 1, 32>}, {transform_indices = @transform_3, window_bounds = array<i64: 8, 32>}, {pipeline_mode = #tpu.pipeline_mode<synchronous>, transform_indices = @transform_4, window_bounds = array<i64: 1, 32>}, {pipeline_mode = #tpu.pipeline_mode<synchronous>, transform_indices = @transform_5, window_bounds = array<i64: 1, 32>}]} {
    %c0 = arith.constant 0 : index
    %c0_0 = arith.constant 0 : index
    %0 = vector.load %arg1[%c0, %c0_0] : memref<8x256xbf16, #tpu.memory_space<vmem>>, vector<8x256xbf16>
    %c0_1 = arith.constant 0 : index
    %c0_2 = arith.constant 0 : index
    %1 = vector.load %arg2[%c0_1, %c0_2] : memref<256x32xbf16, #tpu.memory_space<vmem>>, vector<256x32xbf16>
    %cst = arith.constant dense<0.000000e+00> : vector<8x32xf32>
    %2 = tpu.matmul %0, %1, %cst {dimension_numbers = #tpu.dot_dimension_numbers<[1], [0], [0], [1], [0, 0, 1, 1], [], []>} : vector<8x256xbf16>, vector<256x32xbf16>, vector<8x32xf32> -> vector<8x32xf32>
    %c0_3 = arith.constant 0 : index
    %c0_4 = arith.constant 0 : index
    %3 = vector.load %arg3[%c0_3, %c0_4] : memref<1x32xf32, #tpu.memory_space<vmem>>, vector<1x32xf32>
    %4 = vector.broadcast %3 : vector<1x32xf32> to vector<8x32xf32>
    %5 = arith.addf %2, %4 : vector<8x32xf32>
    %6 = arith.truncf %5 : vector<8x32xf32> to vector<8x32xbf16>
    %c0_5 = arith.constant 0 : index
    %c0_6 = arith.constant 0 : index
    %7 = vector.load %arg4[%c0_5, %c0_6] : memref<8x32xbf16, #tpu.memory_space<vmem>>, vector<8x32xbf16>
    tpu.vector_store %arg4[%c0_5, %c0_6], %6 {strides = array<i32>} : memref<8x32xbf16, #tpu.memory_space<vmem>>, vector<8x32xbf16>,
    %cst_7 = arith.constant dense<0.000000e+00> : vector<32xf32>
    %8 = vector.multi_reduction <add>, %5, %cst_7 [0] : vector<8x32xf32> to vector<32xf32>
    %9 = vector.shape_cast %8 : vector<32xf32> to vector<1x32xf32>
    %c0_8 = arith.constant 0 : index
    %c0_9 = arith.constant 0 : index
    %10 = vector.load %arg5[%c0_8, %c0_9] : memref<1x32xf32, #tpu.memory_space<vmem>>, vector<1x32xf32>
    tpu.vector_store %arg5[%c0_8, %c0_9], %9 {strides = array<i32>} : memref<1x32xf32, #tpu.memory_space<vmem>>, vector<1x32xf32>,
    %11 = arith.mulf %5, %5 : vector<8x32xf32>
    %cst_10 = arith.constant dense<0.000000e+00> : vector<32xf32>
    %12 = vector.multi_reduction <add>, %11, %cst_10 [0] : vector<8x32xf32> to vector<32xf32>
    %13 = vector.shape_cast %12 : vector<32xf32> to vector<1x32xf32>
    %c0_11 = arith.constant 0 : index
    %c0_12 = arith.constant 0 : index
    %14 = vector.load %arg6[%c0_11, %c0_12] : memref<1x32xf32, #tpu.memory_space<vmem>>, vector<1x32xf32>
    tpu.vector_store %arg6[%c0_11, %c0_12], %13 {strides = array<i32>} : memref<1x32xf32, #tpu.memory_space<vmem>>, vector<1x32xf32>,
    return
  }
  func.func @transform_0(%arg0: i32) -> (i32, i32) {
    %c0_i32 = arith.constant 0 : i32
    %c0_i32_0 = arith.constant 0 : i32
    return %arg0, %c0_i32 : i32, i32
  }
  func.func @transform_1(%arg0: i32) -> (i32, i32) {
    %c0_i32 = arith.constant 0 : i32
    %c0_i32_0 = arith.constant 0 : i32
    %c0_i32_1 = arith.constant 0 : i32
    return %c0_i32, %c0_i32_0 : i32, i32
  }
  func.func @transform_2(%arg0: i32) -> (i32, i32) {
    %c0_i32 = arith.constant 0 : i32
    %c0_i32_0 = arith.constant 0 : i32
    %c0_i32_1 = arith.constant 0 : i32
    return %c0_i32, %c0_i32_0 : i32, i32
  }
  func.func @transform_3(%arg0: i32) -> (i32, i32) {
    %c0_i32 = arith.constant 0 : i32
    %c0_i32_0 = arith.constant 0 : i32
    return %arg0, %c0_i32 : i32, i32
  }
  func.func @transform_4(%arg0: i32) -> (i32, i32) {
    %c0_i32 = arith.constant 0 : i32
    %c0_i32_0 = arith.constant 0 : i32
    %c0_i32_1 = arith.constant 0 : i32
    return %c0_i32, %c0_i32_0 : i32, i32
  }
  func.func @transform_5(%arg0: i32) -> (i32, i32) {
    %c0_i32 = arith.constant 0 : i32
    %c0_i32_0 = arith.constant 0 : i32
    %c0_i32_1 = arith.constant 0 : i32
    return %c0_i32, %c0_i32_0 : i32, i32
  }
}

module attributes {stable_mosaic.version = 11 : i64} {
  func.func @_conv_kernel(%arg0: i32, %arg1: memref<8x512xbf16, #tpu.memory_space<vmem>>, %arg2: memref<512x64xbf16, #tpu.memory_space<vmem>>, %arg3: memref<1x64xf32, #tpu.memory_space<vmem>>, %arg4: memref<1x512xf32, #tpu.memory_space<vmem>>, %arg5: memref<1x512xf32, #tpu.memory_space<vmem>>, %arg6: memref<8x64xbf16, #tpu.memory_space<vmem>>, %arg7: memref<1x64xf32, #tpu.memory_space<vmem>>, %arg8: memref<1x64xf32, #tpu.memory_space<vmem>>) attributes {dimension_semantics = [#tpu.dimension_semantics<parallel>], iteration_bounds = array<i64: 1>, scalar_prefetch = 0 : i64, scratch_operands = 0 : i64, tpu.core_type = #tpu.core_type<tc>, window_params = [{transform_indices = @transform_0, window_bounds = array<i64: 8, 512>}, {pipeline_mode = #tpu.pipeline_mode<synchronous>, transform_indices = @transform_1, window_bounds = array<i64: 512, 64>}, {pipeline_mode = #tpu.pipeline_mode<synchronous>, transform_indices = @transform_2, window_bounds = array<i64: 1, 64>}, {pipeline_mode = #tpu.pipeline_mode<synchronous>, transform_indices = @transform_3, window_bounds = array<i64: 1, 512>}, {pipeline_mode = #tpu.pipeline_mode<synchronous>, transform_indices = @transform_4, window_bounds = array<i64: 1, 512>}, {transform_indices = @transform_5, window_bounds = array<i64: 8, 64>}, {pipeline_mode = #tpu.pipeline_mode<synchronous>, transform_indices = @transform_6, window_bounds = array<i64: 1, 64>}, {pipeline_mode = #tpu.pipeline_mode<synchronous>, transform_indices = @transform_7, window_bounds = array<i64: 1, 64>}]} {
    %c0 = arith.constant 0 : index
    %c0_0 = arith.constant 0 : index
    %0 = vector.load %arg1[%c0, %c0_0] : memref<8x512xbf16, #tpu.memory_space<vmem>>, vector<8x512xbf16>
    %1 = arith.extf %0 : vector<8x512xbf16> to vector<8x512xf32>
    %c0_1 = arith.constant 0 : index
    %c0_2 = arith.constant 0 : index
    %2 = vector.load %arg5[%c0_1, %c0_2] : memref<1x512xf32, #tpu.memory_space<vmem>>, vector<1x512xf32>
    %3 = vector.broadcast %2 : vector<1x512xf32> to vector<8x512xf32>
    %4 = arith.subf %1, %3 : vector<8x512xf32>
    %c0_3 = arith.constant 0 : index
    %c0_4 = arith.constant 0 : index
    %5 = vector.load %arg4[%c0_3, %c0_4] : memref<1x512xf32, #tpu.memory_space<vmem>>, vector<1x512xf32>
    %6 = vector.broadcast %5 : vector<1x512xf32> to vector<8x512xf32>
    %7 = arith.mulf %4, %6 : vector<8x512xf32>
    %cst = arith.constant 0.000000e+00 : f32
    %8 = vector.broadcast %cst : f32 to vector<8x512xf32>
    %9 = arith.cmpf oge, %7, %8 : vector<8x512xf32>
    %cst_5 = arith.constant 2.000000e-01 : f32
    %10 = vector.broadcast %cst_5 : f32 to vector<8x512xf32>
    %11 = arith.mulf %10, %7 : vector<8x512xf32>
    %12 = arith.select %9, %7, %11 : vector<8x512xi1>, vector<8x512xf32>
    %13 = arith.truncf %12 : vector<8x512xf32> to vector<8x512xbf16>
    %c0_6 = arith.constant 0 : index
    %c0_7 = arith.constant 0 : index
    %14 = vector.load %arg2[%c0_6, %c0_7] : memref<512x64xbf16, #tpu.memory_space<vmem>>, vector<512x64xbf16>
    %cst_8 = arith.constant dense<0.000000e+00> : vector<8x64xf32>
    %15 = tpu.matmul %13, %14, %cst_8 {dimension_numbers = #tpu.dot_dimension_numbers<[1], [0], [0], [1], [0, 0, 1, 1], [], []>} : vector<8x512xbf16>, vector<512x64xbf16>, vector<8x64xf32> -> vector<8x64xf32>
    %c0_9 = arith.constant 0 : index
    %c0_10 = arith.constant 0 : index
    %16 = vector.load %arg3[%c0_9, %c0_10] : memref<1x64xf32, #tpu.memory_space<vmem>>, vector<1x64xf32>
    %17 = vector.broadcast %16 : vector<1x64xf32> to vector<8x64xf32>
    %18 = arith.addf %15, %17 : vector<8x64xf32>
    %19 = arith.truncf %18 : vector<8x64xf32> to vector<8x64xbf16>
    %c0_11 = arith.constant 0 : index
    %c0_12 = arith.constant 0 : index
    %20 = vector.load %arg6[%c0_11, %c0_12] : memref<8x64xbf16, #tpu.memory_space<vmem>>, vector<8x64xbf16>
    tpu.vector_store %arg6[%c0_11, %c0_12], %19 {strides = array<i32>} : memref<8x64xbf16, #tpu.memory_space<vmem>>, vector<8x64xbf16>,
    %cst_13 = arith.constant dense<0.000000e+00> : vector<64xf32>
    %21 = vector.multi_reduction <add>, %18, %cst_13 [0] : vector<8x64xf32> to vector<64xf32>
    %22 = vector.shape_cast %21 : vector<64xf32> to vector<1x64xf32>
    %c0_14 = arith.constant 0 : index
    %c0_15 = arith.constant 0 : index
    %23 = vector.load %arg7[%c0_14, %c0_15] : memref<1x64xf32, #tpu.memory_space<vmem>>, vector<1x64xf32>
    tpu.vector_store %arg7[%c0_14, %c0_15], %22 {strides = array<i32>} : memref<1x64xf32, #tpu.memory_space<vmem>>, vector<1x64xf32>,
    %24 = arith.mulf %18, %18 : vector<8x64xf32>
    %cst_16 = arith.constant dense<0.000000e+00> : vector<64xf32>
    %25 = vector.multi_reduction <add>, %24, %cst_16 [0] : vector<8x64xf32> to vector<64xf32>
    %26 = vector.shape_cast %25 : vector<64xf32> to vector<1x64xf32>
    %c0_17 = arith.constant 0 : index
    %c0_18 = arith.constant 0 : index
    %27 = vector.load %arg8[%c0_17, %c0_18] : memref<1x64xf32, #tpu.memory_space<vmem>>, vector<1x64xf32>
    tpu.vector_store %arg8[%c0_17, %c0_18], %26 {strides = array<i32>} : memref<1x64xf32, #tpu.memory_space<vmem>>, vector<1x64xf32>,
    return
  }
  func.func @transform_0(%arg0: i32) -> (i32, i32) {
    %c0_i32 = arith.constant 0 : i32
    %c0_i32_0 = arith.constant 0 : i32
    return %arg0, %c0_i32 : i32, i32
  }
  func.func @transform_1(%arg0: i32) -> (i32, i32) {
    %c0_i32 = arith.constant 0 : i32
    %c0_i32_0 = arith.constant 0 : i32
    %c0_i32_1 = arith.constant 0 : i32
    return %c0_i32, %c0_i32_0 : i32, i32
  }
  func.func @transform_2(%arg0: i32) -> (i32, i32) {
    %c0_i32 = arith.constant 0 : i32
    %c0_i32_0 = arith.constant 0 : i32
    %c0_i32_1 = arith.constant 0 : i32
    return %c0_i32, %c0_i32_0 : i32, i32
  }
  func.func @transform_3(%arg0: i32) -> (i32, i32) {
    %c0_i32 = arith.constant 0 : i32
    %c0_i32_0 = arith.constant 0 : i32
    %c0_i32_1 = arith.constant 0 : i32
    return %c0_i32, %c0_i32_0 : i32, i32
  }
  func.func @transform_4(%arg0: i32) -> (i32, i32) {
    %c0_i32 = arith.constant 0 : i32
    %c0_i32_0 = arith.constant 0 : i32
    %c0_i32_1 = arith.constant 0 : i32
    return %c0_i32, %c0_i32_0 : i32, i32
  }
  func.func @transform_5(%arg0: i32) -> (i32, i32) {
    %c0_i32 = arith.constant 0 : i32
    %c0_i32_0 = arith.constant 0 : i32
    return %arg0, %c0_i32 : i32, i32
  }
  func.func @transform_6(%arg0: i32) -> (i32, i32) {
    %c0_i32 = arith.constant 0 : i32
    %c0_i32_0 = arith.constant 0 : i32
    %c0_i32_1 = arith.constant 0 : i32
    return %c0_i32, %c0_i32_0 : i32, i32
  }
  func.func @transform_7(%arg0: i32) -> (i32, i32) {
    %c0_i32 = arith.constant 0 : i32
    %c0_i32_0 = arith.constant 0 : i32
    %c0_i32_1 = arith.constant 0 : i32
    return %c0_i32, %c0_i32_0 : i32, i32
  }
}

module attributes {stable_mosaic.version = 11 : i64} {
  func.func @_conv_kernel(%arg0: i32, %arg1: memref<18x1024xbf16, #tpu.memory_space<vmem>>, %arg2: memref<1024x128xbf16, #tpu.memory_space<vmem>>, %arg3: memref<1x128xf32, #tpu.memory_space<vmem>>, %arg4: memref<1x1024xf32, #tpu.memory_space<vmem>>, %arg5: memref<1x1024xf32, #tpu.memory_space<vmem>>, %arg6: memref<18x128xbf16, #tpu.memory_space<vmem>>, %arg7: memref<1x128xf32, #tpu.memory_space<vmem>>, %arg8: memref<1x128xf32, #tpu.memory_space<vmem>>) attributes {dimension_semantics = [#tpu.dimension_semantics<parallel>], iteration_bounds = array<i64: 1>, scalar_prefetch = 0 : i64, scratch_operands = 0 : i64, tpu.core_type = #tpu.core_type<tc>, window_params = [{transform_indices = @transform_0, window_bounds = array<i64: 18, 1024>}, {pipeline_mode = #tpu.pipeline_mode<synchronous>, transform_indices = @transform_1, window_bounds = array<i64: 1024, 128>}, {pipeline_mode = #tpu.pipeline_mode<synchronous>, transform_indices = @transform_2, window_bounds = array<i64: 1, 128>}, {pipeline_mode = #tpu.pipeline_mode<synchronous>, transform_indices = @transform_3, window_bounds = array<i64: 1, 1024>}, {pipeline_mode = #tpu.pipeline_mode<synchronous>, transform_indices = @transform_4, window_bounds = array<i64: 1, 1024>}, {transform_indices = @transform_5, window_bounds = array<i64: 18, 128>}, {pipeline_mode = #tpu.pipeline_mode<synchronous>, transform_indices = @transform_6, window_bounds = array<i64: 1, 128>}, {pipeline_mode = #tpu.pipeline_mode<synchronous>, transform_indices = @transform_7, window_bounds = array<i64: 1, 128>}]} {
    %c0 = arith.constant 0 : index
    %c0_0 = arith.constant 0 : index
    %0 = vector.load %arg1[%c0, %c0_0] : memref<18x1024xbf16, #tpu.memory_space<vmem>>, vector<18x1024xbf16>
    %1 = arith.extf %0 : vector<18x1024xbf16> to vector<18x1024xf32>
    %c0_1 = arith.constant 0 : index
    %c0_2 = arith.constant 0 : index
    %2 = vector.load %arg5[%c0_1, %c0_2] : memref<1x1024xf32, #tpu.memory_space<vmem>>, vector<1x1024xf32>
    %3 = vector.broadcast %2 : vector<1x1024xf32> to vector<18x1024xf32>
    %4 = arith.subf %1, %3 : vector<18x1024xf32>
    %c0_3 = arith.constant 0 : index
    %c0_4 = arith.constant 0 : index
    %5 = vector.load %arg4[%c0_3, %c0_4] : memref<1x1024xf32, #tpu.memory_space<vmem>>, vector<1x1024xf32>
    %6 = vector.broadcast %5 : vector<1x1024xf32> to vector<18x1024xf32>
    %7 = arith.mulf %4, %6 : vector<18x1024xf32>
    %cst = arith.constant 0.000000e+00 : f32
    %8 = vector.broadcast %cst : f32 to vector<18x1024xf32>
    %9 = arith.cmpf oge, %7, %8 : vector<18x1024xf32>
    %cst_5 = arith.constant 2.000000e-01 : f32
    %10 = vector.broadcast %cst_5 : f32 to vector<18x1024xf32>
    %11 = arith.mulf %10, %7 : vector<18x1024xf32>
    %12 = arith.select %9, %7, %11 : vector<18x1024xi1>, vector<18x1024xf32>
    %13 = arith.truncf %12 : vector<18x1024xf32> to vector<18x1024xbf16>
    %c0_6 = arith.constant 0 : index
    %c0_7 = arith.constant 0 : index
    %14 = vector.load %arg2[%c0_6, %c0_7] : memref<1024x128xbf16, #tpu.memory_space<vmem>>, vector<1024x128xbf16>
    %cst_8 = arith.constant dense<0.000000e+00> : vector<18x128xf32>
    %15 = tpu.matmul %13, %14, %cst_8 {dimension_numbers = #tpu.dot_dimension_numbers<[1], [0], [0], [1], [0, 0, 1, 1], [], []>} : vector<18x1024xbf16>, vector<1024x128xbf16>, vector<18x128xf32> -> vector<18x128xf32>
    %c0_9 = arith.constant 0 : index
    %c0_10 = arith.constant 0 : index
    %16 = vector.load %arg3[%c0_9, %c0_10] : memref<1x128xf32, #tpu.memory_space<vmem>>, vector<1x128xf32>
    %17 = vector.broadcast %16 : vector<1x128xf32> to vector<18x128xf32>
    %18 = arith.addf %15, %17 : vector<18x128xf32>
    %19 = arith.truncf %18 : vector<18x128xf32> to vector<18x128xbf16>
    %c0_11 = arith.constant 0 : index
    %c0_12 = arith.constant 0 : index
    %20 = vector.load %arg6[%c0_11, %c0_12] : memref<18x128xbf16, #tpu.memory_space<vmem>>, vector<18x128xbf16>
    tpu.vector_store %arg6[%c0_11, %c0_12], %19 {strides = array<i32>} : memref<18x128xbf16, #tpu.memory_space<vmem>>, vector<18x128xbf16>,
    %cst_13 = arith.constant dense<0.000000e+00> : vector<128xf32>
    %21 = vector.multi_reduction <add>, %18, %cst_13 [0] : vector<18x128xf32> to vector<128xf32>
    %22 = vector.shape_cast %21 : vector<128xf32> to vector<1x128xf32>
    %c0_14 = arith.constant 0 : index
    %c0_15 = arith.constant 0 : index
    %23 = vector.load %arg7[%c0_14, %c0_15] : memref<1x128xf32, #tpu.memory_space<vmem>>, vector<1x128xf32>
    tpu.vector_store %arg7[%c0_14, %c0_15], %22 {strides = array<i32>} : memref<1x128xf32, #tpu.memory_space<vmem>>, vector<1x128xf32>,
    %24 = arith.mulf %18, %18 : vector<18x128xf32>
    %cst_16 = arith.constant dense<0.000000e+00> : vector<128xf32>
    %25 = vector.multi_reduction <add>, %24, %cst_16 [0] : vector<18x128xf32> to vector<128xf32>
    %26 = vector.shape_cast %25 : vector<128xf32> to vector<1x128xf32>
    %c0_17 = arith.constant 0 : index
    %c0_18 = arith.constant 0 : index
    %27 = vector.load %arg8[%c0_17, %c0_18] : memref<1x128xf32, #tpu.memory_space<vmem>>, vector<1x128xf32>
    tpu.vector_store %arg8[%c0_17, %c0_18], %26 {strides = array<i32>} : memref<1x128xf32, #tpu.memory_space<vmem>>, vector<1x128xf32>,
    return
  }
  func.func @transform_0(%arg0: i32) -> (i32, i32) {
    %c0_i32 = arith.constant 0 : i32
    %c0_i32_0 = arith.constant 0 : i32
    return %arg0, %c0_i32 : i32, i32
  }
  func.func @transform_1(%arg0: i32) -> (i32, i32) {
    %c0_i32 = arith.constant 0 : i32
    %c0_i32_0 = arith.constant 0 : i32
    %c0_i32_1 = arith.constant 0 : i32
    return %c0_i32, %c0_i32_0 : i32, i32
  }
  func.func @transform_2(%arg0: i32) -> (i32, i32) {
    %c0_i32 = arith.constant 0 : i32
    %c0_i32_0 = arith.constant 0 : i32
    %c0_i32_1 = arith.constant 0 : i32
    return %c0_i32, %c0_i32_0 : i32, i32
  }
  func.func @transform_3(%arg0: i32) -> (i32, i32) {
    %c0_i32 = arith.constant 0 : i32
    %c0_i32_0 = arith.constant 0 : i32
    %c0_i32_1 = arith.constant 0 : i32
    return %c0_i32, %c0_i32_0 : i32, i32
  }
  func.func @transform_4(%arg0: i32) -> (i32, i32) {
    %c0_i32 = arith.constant 0 : i32
    %c0_i32_0 = arith.constant 0 : i32
    %c0_i32_1 = arith.constant 0 : i32
    return %c0_i32, %c0_i32_0 : i32, i32
  }
  func.func @transform_5(%arg0: i32) -> (i32, i32) {
    %c0_i32 = arith.constant 0 : i32
    %c0_i32_0 = arith.constant 0 : i32
    return %arg0, %c0_i32 : i32, i32
  }
  func.func @transform_6(%arg0: i32) -> (i32, i32) {
    %c0_i32 = arith.constant 0 : i32
    %c0_i32_0 = arith.constant 0 : i32
    %c0_i32_1 = arith.constant 0 : i32
    return %c0_i32, %c0_i32_0 : i32, i32
  }
  func.func @transform_7(%arg0: i32) -> (i32, i32) {
    %c0_i32 = arith.constant 0 : i32
    %c0_i32_0 = arith.constant 0 : i32
    %c0_i32_1 = arith.constant 0 : i32
    return %c0_i32, %c0_i32_0 : i32, i32
  }
}

module attributes {stable_mosaic.version = 11 : i64} {
  func.func @_conv_kernel(%arg0: i32, %arg1: memref<32x64xbf16, #tpu.memory_space<vmem>>, %arg2: memref<64x16xbf16, #tpu.memory_space<vmem>>, %arg3: memref<1x16xf32, #tpu.memory_space<vmem>>, %arg4: memref<32x16xbf16, #tpu.memory_space<vmem>>) attributes {dimension_semantics = [#tpu.dimension_semantics<parallel>], iteration_bounds = array<i64: 2>, scalar_prefetch = 0 : i64, scratch_operands = 0 : i64, tpu.core_type = #tpu.core_type<tc>, window_params = [{transform_indices = @transform_0, window_bounds = array<i64: 32, 64>}, {pipeline_mode = #tpu.pipeline_mode<synchronous>, transform_indices = @transform_1, window_bounds = array<i64: 64, 16>}, {pipeline_mode = #tpu.pipeline_mode<synchronous>, transform_indices = @transform_2, window_bounds = array<i64: 1, 16>}, {transform_indices = @transform_3, window_bounds = array<i64: 32, 16>}]} {
    %c0 = arith.constant 0 : index
    %c0_0 = arith.constant 0 : index
    %0 = vector.load %arg1[%c0, %c0_0] : memref<32x64xbf16, #tpu.memory_space<vmem>>, vector<32x64xbf16>
    %c0_1 = arith.constant 0 : index
    %c0_2 = arith.constant 0 : index
    %1 = vector.load %arg2[%c0_1, %c0_2] : memref<64x16xbf16, #tpu.memory_space<vmem>>, vector<64x16xbf16>
    %cst = arith.constant dense<0.000000e+00> : vector<32x16xf32>
    %2 = tpu.matmul %0, %1, %cst {dimension_numbers = #tpu.dot_dimension_numbers<[1], [0], [0], [1], [0, 0, 1, 1], [], []>} : vector<32x64xbf16>, vector<64x16xbf16>, vector<32x16xf32> -> vector<32x16xf32>
    %c0_3 = arith.constant 0 : index
    %c0_4 = arith.constant 0 : index
    %3 = vector.load %arg3[%c0_3, %c0_4] : memref<1x16xf32, #tpu.memory_space<vmem>>, vector<1x16xf32>
    %4 = vector.broadcast %3 : vector<1x16xf32> to vector<32x16xf32>
    %5 = arith.addf %2, %4 : vector<32x16xf32>
    %cst_5 = arith.constant 0.000000e+00 : f32
    %6 = vector.broadcast %cst_5 : f32 to vector<32x16xf32>
    %7 = arith.cmpf oge, %5, %6 : vector<32x16xf32>
    %cst_6 = arith.constant 2.000000e-01 : f32
    %8 = vector.broadcast %cst_6 : f32 to vector<32x16xf32>
    %9 = arith.mulf %8, %5 : vector<32x16xf32>
    %10 = arith.select %7, %5, %9 : vector<32x16xi1>, vector<32x16xf32>
    %11 = arith.truncf %10 : vector<32x16xf32> to vector<32x16xbf16>
    %c0_7 = arith.constant 0 : index
    %c0_8 = arith.constant 0 : index
    %12 = vector.load %arg4[%c0_7, %c0_8] : memref<32x16xbf16, #tpu.memory_space<vmem>>, vector<32x16xbf16>
    tpu.vector_store %arg4[%c0_7, %c0_8], %11 {strides = array<i32>} : memref<32x16xbf16, #tpu.memory_space<vmem>>, vector<32x16xbf16>,
    return
  }
  func.func @transform_0(%arg0: i32) -> (i32, i32) {
    %c0_i32 = arith.constant 0 : i32
    %c0_i32_0 = arith.constant 0 : i32
    return %arg0, %c0_i32 : i32, i32
  }
  func.func @transform_1(%arg0: i32) -> (i32, i32) {
    %c0_i32 = arith.constant 0 : i32
    %c0_i32_0 = arith.constant 0 : i32
    %c0_i32_1 = arith.constant 0 : i32
    return %c0_i32, %c0_i32_0 : i32, i32
  }
  func.func @transform_2(%arg0: i32) -> (i32, i32) {
    %c0_i32 = arith.constant 0 : i32
    %c0_i32_0 = arith.constant 0 : i32
    %c0_i32_1 = arith.constant 0 : i32
    return %c0_i32, %c0_i32_0 : i32, i32
  }
  func.func @transform_3(%arg0: i32) -> (i32, i32) {
    %c0_i32 = arith.constant 0 : i32
    %c0_i32_0 = arith.constant 0 : i32
    return %arg0, %c0_i32 : i32, i32
  }
}

module attributes {stable_mosaic.version = 11 : i64} {
  func.func @_conv_kernel(%arg0: i32, %arg1: memref<18x256xbf16, #tpu.memory_space<vmem>>, %arg2: memref<256x32xbf16, #tpu.memory_space<vmem>>, %arg3: memref<1x32xf32, #tpu.memory_space<vmem>>, %arg4: memref<18x32xbf16, #tpu.memory_space<vmem>>, %arg5: memref<1x32xf32, #tpu.memory_space<vmem>>, %arg6: memref<1x32xf32, #tpu.memory_space<vmem>>) attributes {dimension_semantics = [#tpu.dimension_semantics<parallel>], iteration_bounds = array<i64: 1>, scalar_prefetch = 0 : i64, scratch_operands = 0 : i64, tpu.core_type = #tpu.core_type<tc>, window_params = [{transform_indices = @transform_0, window_bounds = array<i64: 18, 256>}, {pipeline_mode = #tpu.pipeline_mode<synchronous>, transform_indices = @transform_1, window_bounds = array<i64: 256, 32>}, {pipeline_mode = #tpu.pipeline_mode<synchronous>, transform_indices = @transform_2, window_bounds = array<i64: 1, 32>}, {transform_indices = @transform_3, window_bounds = array<i64: 18, 32>}, {pipeline_mode = #tpu.pipeline_mode<synchronous>, transform_indices = @transform_4, window_bounds = array<i64: 1, 32>}, {pipeline_mode = #tpu.pipeline_mode<synchronous>, transform_indices = @transform_5, window_bounds = array<i64: 1, 32>}]} {
    %c0 = arith.constant 0 : index
    %c0_0 = arith.constant 0 : index
    %0 = vector.load %arg1[%c0, %c0_0] : memref<18x256xbf16, #tpu.memory_space<vmem>>, vector<18x256xbf16>
    %c0_1 = arith.constant 0 : index
    %c0_2 = arith.constant 0 : index
    %1 = vector.load %arg2[%c0_1, %c0_2] : memref<256x32xbf16, #tpu.memory_space<vmem>>, vector<256x32xbf16>
    %cst = arith.constant dense<0.000000e+00> : vector<18x32xf32>
    %2 = tpu.matmul %0, %1, %cst {dimension_numbers = #tpu.dot_dimension_numbers<[1], [0], [0], [1], [0, 0, 1, 1], [], []>} : vector<18x256xbf16>, vector<256x32xbf16>, vector<18x32xf32> -> vector<18x32xf32>
    %c0_3 = arith.constant 0 : index
    %c0_4 = arith.constant 0 : index
    %3 = vector.load %arg3[%c0_3, %c0_4] : memref<1x32xf32, #tpu.memory_space<vmem>>, vector<1x32xf32>
    %4 = vector.broadcast %3 : vector<1x32xf32> to vector<18x32xf32>
    %5 = arith.addf %2, %4 : vector<18x32xf32>
    %6 = arith.truncf %5 : vector<18x32xf32> to vector<18x32xbf16>
    %c0_5 = arith.constant 0 : index
    %c0_6 = arith.constant 0 : index
    %7 = vector.load %arg4[%c0_5, %c0_6] : memref<18x32xbf16, #tpu.memory_space<vmem>>, vector<18x32xbf16>
    tpu.vector_store %arg4[%c0_5, %c0_6], %6 {strides = array<i32>} : memref<18x32xbf16, #tpu.memory_space<vmem>>, vector<18x32xbf16>,
    %cst_7 = arith.constant dense<0.000000e+00> : vector<32xf32>
    %8 = vector.multi_reduction <add>, %5, %cst_7 [0] : vector<18x32xf32> to vector<32xf32>
    %9 = vector.shape_cast %8 : vector<32xf32> to vector<1x32xf32>
    %c0_8 = arith.constant 0 : index
    %c0_9 = arith.constant 0 : index
    %10 = vector.load %arg5[%c0_8, %c0_9] : memref<1x32xf32, #tpu.memory_space<vmem>>, vector<1x32xf32>
    tpu.vector_store %arg5[%c0_8, %c0_9], %9 {strides = array<i32>} : memref<1x32xf32, #tpu.memory_space<vmem>>, vector<1x32xf32>,
    %11 = arith.mulf %5, %5 : vector<18x32xf32>
    %cst_10 = arith.constant dense<0.000000e+00> : vector<32xf32>
    %12 = vector.multi_reduction <add>, %11, %cst_10 [0] : vector<18x32xf32> to vector<32xf32>
    %13 = vector.shape_cast %12 : vector<32xf32> to vector<1x32xf32>
    %c0_11 = arith.constant 0 : index
    %c0_12 = arith.constant 0 : index
    %14 = vector.load %arg6[%c0_11, %c0_12] : memref<1x32xf32, #tpu.memory_space<vmem>>, vector<1x32xf32>
    tpu.vector_store %arg6[%c0_11, %c0_12], %13 {strides = array<i32>} : memref<1x32xf32, #tpu.memory_space<vmem>>, vector<1x32xf32>,
    return
  }
  func.func @transform_0(%arg0: i32) -> (i32, i32) {
    %c0_i32 = arith.constant 0 : i32
    %c0_i32_0 = arith.constant 0 : i32
    return %arg0, %c0_i32 : i32, i32
  }
  func.func @transform_1(%arg0: i32) -> (i32, i32) {
    %c0_i32 = arith.constant 0 : i32
    %c0_i32_0 = arith.constant 0 : i32
    %c0_i32_1 = arith.constant 0 : i32
    return %c0_i32, %c0_i32_0 : i32, i32
  }
  func.func @transform_2(%arg0: i32) -> (i32, i32) {
    %c0_i32 = arith.constant 0 : i32
    %c0_i32_0 = arith.constant 0 : i32
    %c0_i32_1 = arith.constant 0 : i32
    return %c0_i32, %c0_i32_0 : i32, i32
  }
  func.func @transform_3(%arg0: i32) -> (i32, i32) {
    %c0_i32 = arith.constant 0 : i32
    %c0_i32_0 = arith.constant 0 : i32
    return %arg0, %c0_i32 : i32, i32
  }
  func.func @transform_4(%arg0: i32) -> (i32, i32) {
    %c0_i32 = arith.constant 0 : i32
    %c0_i32_0 = arith.constant 0 : i32
    %c0_i32_1 = arith.constant 0 : i32
    return %c0_i32, %c0_i32_0 : i32, i32
  }
  func.func @transform_5(%arg0: i32) -> (i32, i32) {
    %c0_i32 = arith.constant 0 : i32
    %c0_i32_0 = arith.constant 0 : i32
    %c0_i32_1 = arith.constant 0 : i32
    return %c0_i32, %c0_i32_0 : i32, i32
  }
}

module attributes {stable_mosaic.version = 11 : i64} {
  func.func @_conv_kernel(%arg0: i32, %arg1: memref<16x2048xbf16, #tpu.memory_space<vmem>>, %arg2: memref<2048x1xbf16, #tpu.memory_space<vmem>>, %arg3: memref<1x1xf32, #tpu.memory_space<vmem>>, %arg4: memref<1x2048xf32, #tpu.memory_space<vmem>>, %arg5: memref<1x2048xf32, #tpu.memory_space<vmem>>, %arg6: memref<16x1xbf16, #tpu.memory_space<vmem>>) attributes {dimension_semantics = [#tpu.dimension_semantics<parallel>], iteration_bounds = array<i64: 2>, scalar_prefetch = 0 : i64, scratch_operands = 0 : i64, tpu.core_type = #tpu.core_type<tc>, window_params = [{transform_indices = @transform_0, window_bounds = array<i64: 16, 2048>}, {pipeline_mode = #tpu.pipeline_mode<synchronous>, transform_indices = @transform_1, window_bounds = array<i64: 2048, 1>}, {pipeline_mode = #tpu.pipeline_mode<synchronous>, transform_indices = @transform_2, window_bounds = array<i64: 1, 1>}, {pipeline_mode = #tpu.pipeline_mode<synchronous>, transform_indices = @transform_3, window_bounds = array<i64: 1, 2048>}, {pipeline_mode = #tpu.pipeline_mode<synchronous>, transform_indices = @transform_4, window_bounds = array<i64: 1, 2048>}, {transform_indices = @transform_5, window_bounds = array<i64: 16, 1>}]} {
    %c0 = arith.constant 0 : index
    %c0_0 = arith.constant 0 : index
    %0 = vector.load %arg1[%c0, %c0_0] : memref<16x2048xbf16, #tpu.memory_space<vmem>>, vector<16x2048xbf16>
    %1 = arith.extf %0 : vector<16x2048xbf16> to vector<16x2048xf32>
    %c0_1 = arith.constant 0 : index
    %c0_2 = arith.constant 0 : index
    %2 = vector.load %arg5[%c0_1, %c0_2] : memref<1x2048xf32, #tpu.memory_space<vmem>>, vector<1x2048xf32>
    %3 = vector.broadcast %2 : vector<1x2048xf32> to vector<16x2048xf32>
    %4 = arith.subf %1, %3 : vector<16x2048xf32>
    %c0_3 = arith.constant 0 : index
    %c0_4 = arith.constant 0 : index
    %5 = vector.load %arg4[%c0_3, %c0_4] : memref<1x2048xf32, #tpu.memory_space<vmem>>, vector<1x2048xf32>
    %6 = vector.broadcast %5 : vector<1x2048xf32> to vector<16x2048xf32>
    %7 = arith.mulf %4, %6 : vector<16x2048xf32>
    %cst = arith.constant 0.000000e+00 : f32
    %8 = vector.broadcast %cst : f32 to vector<16x2048xf32>
    %9 = arith.cmpf oge, %7, %8 : vector<16x2048xf32>
    %cst_5 = arith.constant 2.000000e-01 : f32
    %10 = vector.broadcast %cst_5 : f32 to vector<16x2048xf32>
    %11 = arith.mulf %10, %7 : vector<16x2048xf32>
    %12 = arith.select %9, %7, %11 : vector<16x2048xi1>, vector<16x2048xf32>
    %13 = arith.truncf %12 : vector<16x2048xf32> to vector<16x2048xbf16>
    %c0_6 = arith.constant 0 : index
    %c0_7 = arith.constant 0 : index
    %14 = vector.load %arg2[%c0_6, %c0_7] : memref<2048x1xbf16, #tpu.memory_space<vmem>>, vector<2048x1xbf16>
    %cst_8 = arith.constant dense<0.000000e+00> : vector<16x1xf32>
    %15 = tpu.matmul %13, %14, %cst_8 {dimension_numbers = #tpu.dot_dimension_numbers<[1], [0], [0], [1], [0, 0, 1, 1], [], []>} : vector<16x2048xbf16>, vector<2048x1xbf16>, vector<16x1xf32> -> vector<16x1xf32>
    %c0_9 = arith.constant 0 : index
    %c0_10 = arith.constant 0 : index
    %16 = vector.load %arg3[%c0_9, %c0_10] : memref<1x1xf32, #tpu.memory_space<vmem>>, vector<1x1xf32>
    %17 = vector.broadcast %16 : vector<1x1xf32> to vector<16x1xf32>
    %18 = arith.addf %15, %17 : vector<16x1xf32>
    %19 = arith.truncf %18 : vector<16x1xf32> to vector<16x1xbf16>
    %c0_11 = arith.constant 0 : index
    %c0_12 = arith.constant 0 : index
    %20 = vector.load %arg6[%c0_11, %c0_12] : memref<16x1xbf16, #tpu.memory_space<vmem>>, vector<16x1xbf16>
    tpu.vector_store %arg6[%c0_11, %c0_12], %19 {strides = array<i32>} : memref<16x1xbf16, #tpu.memory_space<vmem>>, vector<16x1xbf16>,
    return
  }
  func.func @transform_0(%arg0: i32) -> (i32, i32) {
    %c0_i32 = arith.constant 0 : i32
    %c0_i32_0 = arith.constant 0 : i32
    return %arg0, %c0_i32 : i32, i32
  }
  func.func @transform_1(%arg0: i32) -> (i32, i32) {
    %c0_i32 = arith.constant 0 : i32
    %c0_i32_0 = arith.constant 0 : i32
    %c0_i32_1 = arith.constant 0 : i32
    return %c0_i32, %c0_i32_0 : i32, i32
  }
  func.func @transform_2(%arg0: i32) -> (i32, i32) {
    %c0_i32 = arith.constant 0 : i32
    %c0_i32_0 = arith.constant 0 : i32
    %c0_i32_1 = arith.constant 0 : i32
    return %c0_i32, %c0_i32_0 : i32, i32
  }
  func.func @transform_3(%arg0: i32) -> (i32, i32) {
    %c0_i32 = arith.constant 0 : i32
    %c0_i32_0 = arith.constant 0 : i32
    %c0_i32_1 = arith.constant 0 : i32
    return %c0_i32, %c0_i32_0 : i32, i32
  }
  func.func @transform_4(%arg0: i32) -> (i32, i32) {
    %c0_i32 = arith.constant 0 : i32
    %c0_i32_0 = arith.constant 0 : i32
    %c0_i32_1 = arith.constant 0 : i32
    return %c0_i32, %c0_i32_0 : i32, i32
  }
  func.func @transform_5(%arg0: i32) -> (i32, i32) {
    %c0_i32 = arith.constant 0 : i32
    %c0_i32_0 = arith.constant 0 : i32
    return %arg0, %c0_i32 : i32, i32
  }
}

module attributes {stable_mosaic.version = 11 : i64} {
  func.func @_conv_kernel(%arg0: i32, %arg1: memref<88x64xbf16, #tpu.memory_space<vmem>>, %arg2: memref<64x16xbf16, #tpu.memory_space<vmem>>, %arg3: memref<1x16xf32, #tpu.memory_space<vmem>>, %arg4: memref<88x16xbf16, #tpu.memory_space<vmem>>) attributes {dimension_semantics = [#tpu.dimension_semantics<parallel>], iteration_bounds = array<i64: 2>, scalar_prefetch = 0 : i64, scratch_operands = 0 : i64, tpu.core_type = #tpu.core_type<tc>, window_params = [{transform_indices = @transform_0, window_bounds = array<i64: 88, 64>}, {pipeline_mode = #tpu.pipeline_mode<synchronous>, transform_indices = @transform_1, window_bounds = array<i64: 64, 16>}, {pipeline_mode = #tpu.pipeline_mode<synchronous>, transform_indices = @transform_2, window_bounds = array<i64: 1, 16>}, {transform_indices = @transform_3, window_bounds = array<i64: 88, 16>}]} {
    %c0 = arith.constant 0 : index
    %c0_0 = arith.constant 0 : index
    %0 = vector.load %arg1[%c0, %c0_0] : memref<88x64xbf16, #tpu.memory_space<vmem>>, vector<88x64xbf16>
    %c0_1 = arith.constant 0 : index
    %c0_2 = arith.constant 0 : index
    %1 = vector.load %arg2[%c0_1, %c0_2] : memref<64x16xbf16, #tpu.memory_space<vmem>>, vector<64x16xbf16>
    %cst = arith.constant dense<0.000000e+00> : vector<88x16xf32>
    %2 = tpu.matmul %0, %1, %cst {dimension_numbers = #tpu.dot_dimension_numbers<[1], [0], [0], [1], [0, 0, 1, 1], [], []>} : vector<88x64xbf16>, vector<64x16xbf16>, vector<88x16xf32> -> vector<88x16xf32>
    %c0_3 = arith.constant 0 : index
    %c0_4 = arith.constant 0 : index
    %3 = vector.load %arg3[%c0_3, %c0_4] : memref<1x16xf32, #tpu.memory_space<vmem>>, vector<1x16xf32>
    %4 = vector.broadcast %3 : vector<1x16xf32> to vector<88x16xf32>
    %5 = arith.addf %2, %4 : vector<88x16xf32>
    %cst_5 = arith.constant 0.000000e+00 : f32
    %6 = vector.broadcast %cst_5 : f32 to vector<88x16xf32>
    %7 = arith.cmpf oge, %5, %6 : vector<88x16xf32>
    %cst_6 = arith.constant 2.000000e-01 : f32
    %8 = vector.broadcast %cst_6 : f32 to vector<88x16xf32>
    %9 = arith.mulf %8, %5 : vector<88x16xf32>
    %10 = arith.select %7, %5, %9 : vector<88x16xi1>, vector<88x16xf32>
    %11 = arith.truncf %10 : vector<88x16xf32> to vector<88x16xbf16>
    %c0_7 = arith.constant 0 : index
    %c0_8 = arith.constant 0 : index
    %12 = vector.load %arg4[%c0_7, %c0_8] : memref<88x16xbf16, #tpu.memory_space<vmem>>, vector<88x16xbf16>
    tpu.vector_store %arg4[%c0_7, %c0_8], %11 {strides = array<i32>} : memref<88x16xbf16, #tpu.memory_space<vmem>>, vector<88x16xbf16>,
    return
  }
  func.func @transform_0(%arg0: i32) -> (i32, i32) {
    %c0_i32 = arith.constant 0 : i32
    %c0_i32_0 = arith.constant 0 : i32
    return %arg0, %c0_i32 : i32, i32
  }
  func.func @transform_1(%arg0: i32) -> (i32, i32) {
    %c0_i32 = arith.constant 0 : i32
    %c0_i32_0 = arith.constant 0 : i32
    %c0_i32_1 = arith.constant 0 : i32
    return %c0_i32, %c0_i32_0 : i32, i32
  }
  func.func @transform_2(%arg0: i32) -> (i32, i32) {
    %c0_i32 = arith.constant 0 : i32
    %c0_i32_0 = arith.constant 0 : i32
    %c0_i32_1 = arith.constant 0 : i32
    return %c0_i32, %c0_i32_0 : i32, i32
  }
  func.func @transform_3(%arg0: i32) -> (i32, i32) {
    %c0_i32 = arith.constant 0 : i32
    %c0_i32_0 = arith.constant 0 : i32
    return %arg0, %c0_i32 : i32, i32
  }
}

module attributes {stable_mosaic.version = 11 : i64} {
  func.func @_conv_kernel(%arg0: i32, %arg1: memref<50x256xbf16, #tpu.memory_space<vmem>>, %arg2: memref<256x32xbf16, #tpu.memory_space<vmem>>, %arg3: memref<1x32xf32, #tpu.memory_space<vmem>>, %arg4: memref<50x32xbf16, #tpu.memory_space<vmem>>, %arg5: memref<1x32xf32, #tpu.memory_space<vmem>>, %arg6: memref<1x32xf32, #tpu.memory_space<vmem>>) attributes {dimension_semantics = [#tpu.dimension_semantics<parallel>], iteration_bounds = array<i64: 1>, scalar_prefetch = 0 : i64, scratch_operands = 0 : i64, tpu.core_type = #tpu.core_type<tc>, window_params = [{transform_indices = @transform_0, window_bounds = array<i64: 50, 256>}, {pipeline_mode = #tpu.pipeline_mode<synchronous>, transform_indices = @transform_1, window_bounds = array<i64: 256, 32>}, {pipeline_mode = #tpu.pipeline_mode<synchronous>, transform_indices = @transform_2, window_bounds = array<i64: 1, 32>}, {transform_indices = @transform_3, window_bounds = array<i64: 50, 32>}, {pipeline_mode = #tpu.pipeline_mode<synchronous>, transform_indices = @transform_4, window_bounds = array<i64: 1, 32>}, {pipeline_mode = #tpu.pipeline_mode<synchronous>, transform_indices = @transform_5, window_bounds = array<i64: 1, 32>}]} {
    %c0 = arith.constant 0 : index
    %c0_0 = arith.constant 0 : index
    %0 = vector.load %arg1[%c0, %c0_0] : memref<50x256xbf16, #tpu.memory_space<vmem>>, vector<50x256xbf16>
    %c0_1 = arith.constant 0 : index
    %c0_2 = arith.constant 0 : index
    %1 = vector.load %arg2[%c0_1, %c0_2] : memref<256x32xbf16, #tpu.memory_space<vmem>>, vector<256x32xbf16>
    %cst = arith.constant dense<0.000000e+00> : vector<50x32xf32>
    %2 = tpu.matmul %0, %1, %cst {dimension_numbers = #tpu.dot_dimension_numbers<[1], [0], [0], [1], [0, 0, 1, 1], [], []>} : vector<50x256xbf16>, vector<256x32xbf16>, vector<50x32xf32> -> vector<50x32xf32>
    %c0_3 = arith.constant 0 : index
    %c0_4 = arith.constant 0 : index
    %3 = vector.load %arg3[%c0_3, %c0_4] : memref<1x32xf32, #tpu.memory_space<vmem>>, vector<1x32xf32>
    %4 = vector.broadcast %3 : vector<1x32xf32> to vector<50x32xf32>
    %5 = arith.addf %2, %4 : vector<50x32xf32>
    %6 = arith.truncf %5 : vector<50x32xf32> to vector<50x32xbf16>
    %c0_5 = arith.constant 0 : index
    %c0_6 = arith.constant 0 : index
    %7 = vector.load %arg4[%c0_5, %c0_6] : memref<50x32xbf16, #tpu.memory_space<vmem>>, vector<50x32xbf16>
    tpu.vector_store %arg4[%c0_5, %c0_6], %6 {strides = array<i32>} : memref<50x32xbf16, #tpu.memory_space<vmem>>, vector<50x32xbf16>,
    %cst_7 = arith.constant dense<0.000000e+00> : vector<32xf32>
    %8 = vector.multi_reduction <add>, %5, %cst_7 [0] : vector<50x32xf32> to vector<32xf32>
    %9 = vector.shape_cast %8 : vector<32xf32> to vector<1x32xf32>
    %c0_8 = arith.constant 0 : index
    %c0_9 = arith.constant 0 : index
    %10 = vector.load %arg5[%c0_8, %c0_9] : memref<1x32xf32, #tpu.memory_space<vmem>>, vector<1x32xf32>
    tpu.vector_store %arg5[%c0_8, %c0_9], %9 {strides = array<i32>} : memref<1x32xf32, #tpu.memory_space<vmem>>, vector<1x32xf32>,
    %11 = arith.mulf %5, %5 : vector<50x32xf32>
    %cst_10 = arith.constant dense<0.000000e+00> : vector<32xf32>
    %12 = vector.multi_reduction <add>, %11, %cst_10 [0] : vector<50x32xf32> to vector<32xf32>
    %13 = vector.shape_cast %12 : vector<32xf32> to vector<1x32xf32>
    %c0_11 = arith.constant 0 : index
    %c0_12 = arith.constant 0 : index
    %14 = vector.load %arg6[%c0_11, %c0_12] : memref<1x32xf32, #tpu.memory_space<vmem>>, vector<1x32xf32>
    tpu.vector_store %arg6[%c0_11, %c0_12], %13 {strides = array<i32>} : memref<1x32xf32, #tpu.memory_space<vmem>>, vector<1x32xf32>,
    return
  }
  func.func @transform_0(%arg0: i32) -> (i32, i32) {
    %c0_i32 = arith.constant 0 : i32
    %c0_i32_0 = arith.constant 0 : i32
    return %arg0, %c0_i32 : i32, i32
  }
  func.func @transform_1(%arg0: i32) -> (i32, i32) {
    %c0_i32 = arith.constant 0 : i32
    %c0_i32_0 = arith.constant 0 : i32
    %c0_i32_1 = arith.constant 0 : i32
    return %c0_i32, %c0_i32_0 : i32, i32
  }
  func.func @transform_2(%arg0: i32) -> (i32, i32) {
    %c0_i32 = arith.constant 0 : i32
    %c0_i32_0 = arith.constant 0 : i32
    %c0_i32_1 = arith.constant 0 : i32
    return %c0_i32, %c0_i32_0 : i32, i32
  }
  func.func @transform_3(%arg0: i32) -> (i32, i32) {
    %c0_i32 = arith.constant 0 : i32
    %c0_i32_0 = arith.constant 0 : i32
    return %arg0, %c0_i32 : i32, i32
  }
  func.func @transform_4(%arg0: i32) -> (i32, i32) {
    %c0_i32 = arith.constant 0 : i32
    %c0_i32_0 = arith.constant 0 : i32
    %c0_i32_1 = arith.constant 0 : i32
    return %c0_i32, %c0_i32_0 : i32, i32
  }
  func.func @transform_5(%arg0: i32) -> (i32, i32) {
    %c0_i32 = arith.constant 0 : i32
    %c0_i32_0 = arith.constant 0 : i32
    %c0_i32_1 = arith.constant 0 : i32
    return %c0_i32, %c0_i32_0 : i32, i32
  }
}

module attributes {stable_mosaic.version = 11 : i64} {
  func.func @_conv_kernel(%arg0: i32, %arg1: memref<18x512xbf16, #tpu.memory_space<vmem>>, %arg2: memref<512x64xbf16, #tpu.memory_space<vmem>>, %arg3: memref<1x64xf32, #tpu.memory_space<vmem>>, %arg4: memref<1x512xf32, #tpu.memory_space<vmem>>, %arg5: memref<1x512xf32, #tpu.memory_space<vmem>>, %arg6: memref<18x64xbf16, #tpu.memory_space<vmem>>, %arg7: memref<1x64xf32, #tpu.memory_space<vmem>>, %arg8: memref<1x64xf32, #tpu.memory_space<vmem>>) attributes {dimension_semantics = [#tpu.dimension_semantics<parallel>], iteration_bounds = array<i64: 1>, scalar_prefetch = 0 : i64, scratch_operands = 0 : i64, tpu.core_type = #tpu.core_type<tc>, window_params = [{transform_indices = @transform_0, window_bounds = array<i64: 18, 512>}, {pipeline_mode = #tpu.pipeline_mode<synchronous>, transform_indices = @transform_1, window_bounds = array<i64: 512, 64>}, {pipeline_mode = #tpu.pipeline_mode<synchronous>, transform_indices = @transform_2, window_bounds = array<i64: 1, 64>}, {pipeline_mode = #tpu.pipeline_mode<synchronous>, transform_indices = @transform_3, window_bounds = array<i64: 1, 512>}, {pipeline_mode = #tpu.pipeline_mode<synchronous>, transform_indices = @transform_4, window_bounds = array<i64: 1, 512>}, {transform_indices = @transform_5, window_bounds = array<i64: 18, 64>}, {pipeline_mode = #tpu.pipeline_mode<synchronous>, transform_indices = @transform_6, window_bounds = array<i64: 1, 64>}, {pipeline_mode = #tpu.pipeline_mode<synchronous>, transform_indices = @transform_7, window_bounds = array<i64: 1, 64>}]} {
    %c0 = arith.constant 0 : index
    %c0_0 = arith.constant 0 : index
    %0 = vector.load %arg1[%c0, %c0_0] : memref<18x512xbf16, #tpu.memory_space<vmem>>, vector<18x512xbf16>
    %1 = arith.extf %0 : vector<18x512xbf16> to vector<18x512xf32>
    %c0_1 = arith.constant 0 : index
    %c0_2 = arith.constant 0 : index
    %2 = vector.load %arg5[%c0_1, %c0_2] : memref<1x512xf32, #tpu.memory_space<vmem>>, vector<1x512xf32>
    %3 = vector.broadcast %2 : vector<1x512xf32> to vector<18x512xf32>
    %4 = arith.subf %1, %3 : vector<18x512xf32>
    %c0_3 = arith.constant 0 : index
    %c0_4 = arith.constant 0 : index
    %5 = vector.load %arg4[%c0_3, %c0_4] : memref<1x512xf32, #tpu.memory_space<vmem>>, vector<1x512xf32>
    %6 = vector.broadcast %5 : vector<1x512xf32> to vector<18x512xf32>
    %7 = arith.mulf %4, %6 : vector<18x512xf32>
    %cst = arith.constant 0.000000e+00 : f32
    %8 = vector.broadcast %cst : f32 to vector<18x512xf32>
    %9 = arith.cmpf oge, %7, %8 : vector<18x512xf32>
    %cst_5 = arith.constant 2.000000e-01 : f32
    %10 = vector.broadcast %cst_5 : f32 to vector<18x512xf32>
    %11 = arith.mulf %10, %7 : vector<18x512xf32>
    %12 = arith.select %9, %7, %11 : vector<18x512xi1>, vector<18x512xf32>
    %13 = arith.truncf %12 : vector<18x512xf32> to vector<18x512xbf16>
    %c0_6 = arith.constant 0 : index
    %c0_7 = arith.constant 0 : index
    %14 = vector.load %arg2[%c0_6, %c0_7] : memref<512x64xbf16, #tpu.memory_space<vmem>>, vector<512x64xbf16>
    %cst_8 = arith.constant dense<0.000000e+00> : vector<18x64xf32>
    %15 = tpu.matmul %13, %14, %cst_8 {dimension_numbers = #tpu.dot_dimension_numbers<[1], [0], [0], [1], [0, 0, 1, 1], [], []>} : vector<18x512xbf16>, vector<512x64xbf16>, vector<18x64xf32> -> vector<18x64xf32>
    %c0_9 = arith.constant 0 : index
    %c0_10 = arith.constant 0 : index
    %16 = vector.load %arg3[%c0_9, %c0_10] : memref<1x64xf32, #tpu.memory_space<vmem>>, vector<1x64xf32>
    %17 = vector.broadcast %16 : vector<1x64xf32> to vector<18x64xf32>
    %18 = arith.addf %15, %17 : vector<18x64xf32>
    %19 = arith.truncf %18 : vector<18x64xf32> to vector<18x64xbf16>
    %c0_11 = arith.constant 0 : index
    %c0_12 = arith.constant 0 : index
    %20 = vector.load %arg6[%c0_11, %c0_12] : memref<18x64xbf16, #tpu.memory_space<vmem>>, vector<18x64xbf16>
    tpu.vector_store %arg6[%c0_11, %c0_12], %19 {strides = array<i32>} : memref<18x64xbf16, #tpu.memory_space<vmem>>, vector<18x64xbf16>,
    %cst_13 = arith.constant dense<0.000000e+00> : vector<64xf32>
    %21 = vector.multi_reduction <add>, %18, %cst_13 [0] : vector<18x64xf32> to vector<64xf32>
    %22 = vector.shape_cast %21 : vector<64xf32> to vector<1x64xf32>
    %c0_14 = arith.constant 0 : index
    %c0_15 = arith.constant 0 : index
    %23 = vector.load %arg7[%c0_14, %c0_15] : memref<1x64xf32, #tpu.memory_space<vmem>>, vector<1x64xf32>
    tpu.vector_store %arg7[%c0_14, %c0_15], %22 {strides = array<i32>} : memref<1x64xf32, #tpu.memory_space<vmem>>, vector<1x64xf32>,
    %24 = arith.mulf %18, %18 : vector<18x64xf32>
    %cst_16 = arith.constant dense<0.000000e+00> : vector<64xf32>
    %25 = vector.multi_reduction <add>, %24, %cst_16 [0] : vector<18x64xf32> to vector<64xf32>
    %26 = vector.shape_cast %25 : vector<64xf32> to vector<1x64xf32>
    %c0_17 = arith.constant 0 : index
    %c0_18 = arith.constant 0 : index
    %27 = vector.load %arg8[%c0_17, %c0_18] : memref<1x64xf32, #tpu.memory_space<vmem>>, vector<1x64xf32>
    tpu.vector_store %arg8[%c0_17, %c0_18], %26 {strides = array<i32>} : memref<1x64xf32, #tpu.memory_space<vmem>>, vector<1x64xf32>,
    return
  }
  func.func @transform_0(%arg0: i32) -> (i32, i32) {
    %c0_i32 = arith.constant 0 : i32
    %c0_i32_0 = arith.constant 0 : i32
    return %arg0, %c0_i32 : i32, i32
  }
  func.func @transform_1(%arg0: i32) -> (i32, i32) {
    %c0_i32 = arith.constant 0 : i32
    %c0_i32_0 = arith.constant 0 : i32
    %c0_i32_1 = arith.constant 0 : i32
    return %c0_i32, %c0_i32_0 : i32, i32
  }
  func.func @transform_2(%arg0: i32) -> (i32, i32) {
    %c0_i32 = arith.constant 0 : i32
    %c0_i32_0 = arith.constant 0 : i32
    %c0_i32_1 = arith.constant 0 : i32
    return %c0_i32, %c0_i32_0 : i32, i32
  }
  func.func @transform_3(%arg0: i32) -> (i32, i32) {
    %c0_i32 = arith.constant 0 : i32
    %c0_i32_0 = arith.constant 0 : i32
    %c0_i32_1 = arith.constant 0 : i32
    return %c0_i32, %c0_i32_0 : i32, i32
  }
  func.func @transform_4(%arg0: i32) -> (i32, i32) {
    %c0_i32 = arith.constant 0 : i32
    %c0_i32_0 = arith.constant 0 : i32
    %c0_i32_1 = arith.constant 0 : i32
    return %c0_i32, %c0_i32_0 : i32, i32
  }
  func.func @transform_5(%arg0: i32) -> (i32, i32) {
    %c0_i32 = arith.constant 0 : i32
    %c0_i32_0 = arith.constant 0 : i32
    return %arg0, %c0_i32 : i32, i32
  }
  func.func @transform_6(%arg0: i32) -> (i32, i32) {
    %c0_i32 = arith.constant 0 : i32
    %c0_i32_0 = arith.constant 0 : i32
    %c0_i32_1 = arith.constant 0 : i32
    return %c0_i32, %c0_i32_0 : i32, i32
  }
  func.func @transform_7(%arg0: i32) -> (i32, i32) {
    %c0_i32 = arith.constant 0 : i32
    %c0_i32_0 = arith.constant 0 : i32
    %c0_i32_1 = arith.constant 0 : i32
    return %c0_i32, %c0_i32_0 : i32, i32
  }
}

module attributes {stable_mosaic.version = 11 : i64} {
  func.func @_conv_kernel(%arg0: i32, %arg1: memref<32x1024xbf16, #tpu.memory_space<vmem>>, %arg2: memref<1024x128xbf16, #tpu.memory_space<vmem>>, %arg3: memref<1x128xf32, #tpu.memory_space<vmem>>, %arg4: memref<1x1024xf32, #tpu.memory_space<vmem>>, %arg5: memref<1x1024xf32, #tpu.memory_space<vmem>>, %arg6: memref<32x128xbf16, #tpu.memory_space<vmem>>, %arg7: memref<1x128xf32, #tpu.memory_space<vmem>>, %arg8: memref<1x128xf32, #tpu.memory_space<vmem>>) attributes {dimension_semantics = [#tpu.dimension_semantics<parallel>], iteration_bounds = array<i64: 1>, scalar_prefetch = 0 : i64, scratch_operands = 0 : i64, tpu.core_type = #tpu.core_type<tc>, window_params = [{transform_indices = @transform_0, window_bounds = array<i64: 32, 1024>}, {pipeline_mode = #tpu.pipeline_mode<synchronous>, transform_indices = @transform_1, window_bounds = array<i64: 1024, 128>}, {pipeline_mode = #tpu.pipeline_mode<synchronous>, transform_indices = @transform_2, window_bounds = array<i64: 1, 128>}, {pipeline_mode = #tpu.pipeline_mode<synchronous>, transform_indices = @transform_3, window_bounds = array<i64: 1, 1024>}, {pipeline_mode = #tpu.pipeline_mode<synchronous>, transform_indices = @transform_4, window_bounds = array<i64: 1, 1024>}, {transform_indices = @transform_5, window_bounds = array<i64: 32, 128>}, {pipeline_mode = #tpu.pipeline_mode<synchronous>, transform_indices = @transform_6, window_bounds = array<i64: 1, 128>}, {pipeline_mode = #tpu.pipeline_mode<synchronous>, transform_indices = @transform_7, window_bounds = array<i64: 1, 128>}]} {
    %c0 = arith.constant 0 : index
    %c0_0 = arith.constant 0 : index
    %0 = vector.load %arg1[%c0, %c0_0] : memref<32x1024xbf16, #tpu.memory_space<vmem>>, vector<32x1024xbf16>
    %1 = arith.extf %0 : vector<32x1024xbf16> to vector<32x1024xf32>
    %c0_1 = arith.constant 0 : index
    %c0_2 = arith.constant 0 : index
    %2 = vector.load %arg5[%c0_1, %c0_2] : memref<1x1024xf32, #tpu.memory_space<vmem>>, vector<1x1024xf32>
    %3 = vector.broadcast %2 : vector<1x1024xf32> to vector<32x1024xf32>
    %4 = arith.subf %1, %3 : vector<32x1024xf32>
    %c0_3 = arith.constant 0 : index
    %c0_4 = arith.constant 0 : index
    %5 = vector.load %arg4[%c0_3, %c0_4] : memref<1x1024xf32, #tpu.memory_space<vmem>>, vector<1x1024xf32>
    %6 = vector.broadcast %5 : vector<1x1024xf32> to vector<32x1024xf32>
    %7 = arith.mulf %4, %6 : vector<32x1024xf32>
    %cst = arith.constant 0.000000e+00 : f32
    %8 = vector.broadcast %cst : f32 to vector<32x1024xf32>
    %9 = arith.cmpf oge, %7, %8 : vector<32x1024xf32>
    %cst_5 = arith.constant 2.000000e-01 : f32
    %10 = vector.broadcast %cst_5 : f32 to vector<32x1024xf32>
    %11 = arith.mulf %10, %7 : vector<32x1024xf32>
    %12 = arith.select %9, %7, %11 : vector<32x1024xi1>, vector<32x1024xf32>
    %13 = arith.truncf %12 : vector<32x1024xf32> to vector<32x1024xbf16>
    %c0_6 = arith.constant 0 : index
    %c0_7 = arith.constant 0 : index
    %14 = vector.load %arg2[%c0_6, %c0_7] : memref<1024x128xbf16, #tpu.memory_space<vmem>>, vector<1024x128xbf16>
    %cst_8 = arith.constant dense<0.000000e+00> : vector<32x128xf32>
    %15 = tpu.matmul %13, %14, %cst_8 {dimension_numbers = #tpu.dot_dimension_numbers<[1], [0], [0], [1], [0, 0, 1, 1], [], []>} : vector<32x1024xbf16>, vector<1024x128xbf16>, vector<32x128xf32> -> vector<32x128xf32>
    %c0_9 = arith.constant 0 : index
    %c0_10 = arith.constant 0 : index
    %16 = vector.load %arg3[%c0_9, %c0_10] : memref<1x128xf32, #tpu.memory_space<vmem>>, vector<1x128xf32>
    %17 = vector.broadcast %16 : vector<1x128xf32> to vector<32x128xf32>
    %18 = arith.addf %15, %17 : vector<32x128xf32>
    %19 = arith.truncf %18 : vector<32x128xf32> to vector<32x128xbf16>
    %c0_11 = arith.constant 0 : index
    %c0_12 = arith.constant 0 : index
    %20 = vector.load %arg6[%c0_11, %c0_12] : memref<32x128xbf16, #tpu.memory_space<vmem>>, vector<32x128xbf16>
    tpu.vector_store %arg6[%c0_11, %c0_12], %19 {strides = array<i32>} : memref<32x128xbf16, #tpu.memory_space<vmem>>, vector<32x128xbf16>,
    %cst_13 = arith.constant dense<0.000000e+00> : vector<128xf32>
    %21 = vector.multi_reduction <add>, %18, %cst_13 [0] : vector<32x128xf32> to vector<128xf32>
    %22 = vector.shape_cast %21 : vector<128xf32> to vector<1x128xf32>
    %c0_14 = arith.constant 0 : index
    %c0_15 = arith.constant 0 : index
    %23 = vector.load %arg7[%c0_14, %c0_15] : memref<1x128xf32, #tpu.memory_space<vmem>>, vector<1x128xf32>
    tpu.vector_store %arg7[%c0_14, %c0_15], %22 {strides = array<i32>} : memref<1x128xf32, #tpu.memory_space<vmem>>, vector<1x128xf32>,
    %24 = arith.mulf %18, %18 : vector<32x128xf32>
    %cst_16 = arith.constant dense<0.000000e+00> : vector<128xf32>
    %25 = vector.multi_reduction <add>, %24, %cst_16 [0] : vector<32x128xf32> to vector<128xf32>
    %26 = vector.shape_cast %25 : vector<128xf32> to vector<1x128xf32>
    %c0_17 = arith.constant 0 : index
    %c0_18 = arith.constant 0 : index
    %27 = vector.load %arg8[%c0_17, %c0_18] : memref<1x128xf32, #tpu.memory_space<vmem>>, vector<1x128xf32>
    tpu.vector_store %arg8[%c0_17, %c0_18], %26 {strides = array<i32>} : memref<1x128xf32, #tpu.memory_space<vmem>>, vector<1x128xf32>,
    return
  }
  func.func @transform_0(%arg0: i32) -> (i32, i32) {
    %c0_i32 = arith.constant 0 : i32
    %c0_i32_0 = arith.constant 0 : i32
    return %arg0, %c0_i32 : i32, i32
  }
  func.func @transform_1(%arg0: i32) -> (i32, i32) {
    %c0_i32 = arith.constant 0 : i32
    %c0_i32_0 = arith.constant 0 : i32
    %c0_i32_1 = arith.constant 0 : i32
    return %c0_i32, %c0_i32_0 : i32, i32
  }
  func.func @transform_2(%arg0: i32) -> (i32, i32) {
    %c0_i32 = arith.constant 0 : i32
    %c0_i32_0 = arith.constant 0 : i32
    %c0_i32_1 = arith.constant 0 : i32
    return %c0_i32, %c0_i32_0 : i32, i32
  }
  func.func @transform_3(%arg0: i32) -> (i32, i32) {
    %c0_i32 = arith.constant 0 : i32
    %c0_i32_0 = arith.constant 0 : i32
    %c0_i32_1 = arith.constant 0 : i32
    return %c0_i32, %c0_i32_0 : i32, i32
  }
  func.func @transform_4(%arg0: i32) -> (i32, i32) {
    %c0_i32 = arith.constant 0 : i32
    %c0_i32_0 = arith.constant 0 : i32
    %c0_i32_1 = arith.constant 0 : i32
    return %c0_i32, %c0_i32_0 : i32, i32
  }
  func.func @transform_5(%arg0: i32) -> (i32, i32) {
    %c0_i32 = arith.constant 0 : i32
    %c0_i32_0 = arith.constant 0 : i32
    return %arg0, %c0_i32 : i32, i32
  }
  func.func @transform_6(%arg0: i32) -> (i32, i32) {
    %c0_i32 = arith.constant 0 : i32
    %c0_i32_0 = arith.constant 0 : i32
    %c0_i32_1 = arith.constant 0 : i32
    return %c0_i32, %c0_i32_0 : i32, i32
  }
  func.func @transform_7(%arg0: i32) -> (i32, i32) {
    %c0_i32 = arith.constant 0 : i32
    %c0_i32_0 = arith.constant 0 : i32
    %c0_i32_1 = arith.constant 0 : i32
    return %c0_i32, %c0_i32_0 : i32, i32
  }
}

module attributes {stable_mosaic.version = 11 : i64} {
  func.func @_conv_kernel(%arg0: i32, %arg1: memref<32x2048xbf16, #tpu.memory_space<vmem>>, %arg2: memref<2048x1xbf16, #tpu.memory_space<vmem>>, %arg3: memref<1x1xf32, #tpu.memory_space<vmem>>, %arg4: memref<1x2048xf32, #tpu.memory_space<vmem>>, %arg5: memref<1x2048xf32, #tpu.memory_space<vmem>>, %arg6: memref<32x1xbf16, #tpu.memory_space<vmem>>) attributes {dimension_semantics = [#tpu.dimension_semantics<parallel>], iteration_bounds = array<i64: 2>, scalar_prefetch = 0 : i64, scratch_operands = 0 : i64, tpu.core_type = #tpu.core_type<tc>, window_params = [{transform_indices = @transform_0, window_bounds = array<i64: 32, 2048>}, {pipeline_mode = #tpu.pipeline_mode<synchronous>, transform_indices = @transform_1, window_bounds = array<i64: 2048, 1>}, {pipeline_mode = #tpu.pipeline_mode<synchronous>, transform_indices = @transform_2, window_bounds = array<i64: 1, 1>}, {pipeline_mode = #tpu.pipeline_mode<synchronous>, transform_indices = @transform_3, window_bounds = array<i64: 1, 2048>}, {pipeline_mode = #tpu.pipeline_mode<synchronous>, transform_indices = @transform_4, window_bounds = array<i64: 1, 2048>}, {transform_indices = @transform_5, window_bounds = array<i64: 32, 1>}]} {
    %c0 = arith.constant 0 : index
    %c0_0 = arith.constant 0 : index
    %0 = vector.load %arg1[%c0, %c0_0] : memref<32x2048xbf16, #tpu.memory_space<vmem>>, vector<32x2048xbf16>
    %1 = arith.extf %0 : vector<32x2048xbf16> to vector<32x2048xf32>
    %c0_1 = arith.constant 0 : index
    %c0_2 = arith.constant 0 : index
    %2 = vector.load %arg5[%c0_1, %c0_2] : memref<1x2048xf32, #tpu.memory_space<vmem>>, vector<1x2048xf32>
    %3 = vector.broadcast %2 : vector<1x2048xf32> to vector<32x2048xf32>
    %4 = arith.subf %1, %3 : vector<32x2048xf32>
    %c0_3 = arith.constant 0 : index
    %c0_4 = arith.constant 0 : index
    %5 = vector.load %arg4[%c0_3, %c0_4] : memref<1x2048xf32, #tpu.memory_space<vmem>>, vector<1x2048xf32>
    %6 = vector.broadcast %5 : vector<1x2048xf32> to vector<32x2048xf32>
    %7 = arith.mulf %4, %6 : vector<32x2048xf32>
    %cst = arith.constant 0.000000e+00 : f32
    %8 = vector.broadcast %cst : f32 to vector<32x2048xf32>
    %9 = arith.cmpf oge, %7, %8 : vector<32x2048xf32>
    %cst_5 = arith.constant 2.000000e-01 : f32
    %10 = vector.broadcast %cst_5 : f32 to vector<32x2048xf32>
    %11 = arith.mulf %10, %7 : vector<32x2048xf32>
    %12 = arith.select %9, %7, %11 : vector<32x2048xi1>, vector<32x2048xf32>
    %13 = arith.truncf %12 : vector<32x2048xf32> to vector<32x2048xbf16>
    %c0_6 = arith.constant 0 : index
    %c0_7 = arith.constant 0 : index
    %14 = vector.load %arg2[%c0_6, %c0_7] : memref<2048x1xbf16, #tpu.memory_space<vmem>>, vector<2048x1xbf16>
    %cst_8 = arith.constant dense<0.000000e+00> : vector<32x1xf32>
    %15 = tpu.matmul %13, %14, %cst_8 {dimension_numbers = #tpu.dot_dimension_numbers<[1], [0], [0], [1], [0, 0, 1, 1], [], []>} : vector<32x2048xbf16>, vector<2048x1xbf16>, vector<32x1xf32> -> vector<32x1xf32>
    %c0_9 = arith.constant 0 : index
    %c0_10 = arith.constant 0 : index
    %16 = vector.load %arg3[%c0_9, %c0_10] : memref<1x1xf32, #tpu.memory_space<vmem>>, vector<1x1xf32>
    %17 = vector.broadcast %16 : vector<1x1xf32> to vector<32x1xf32>
    %18 = arith.addf %15, %17 : vector<32x1xf32>
    %19 = arith.truncf %18 : vector<32x1xf32> to vector<32x1xbf16>
    %c0_11 = arith.constant 0 : index
    %c0_12 = arith.constant 0 : index
    %20 = vector.load %arg6[%c0_11, %c0_12] : memref<32x1xbf16, #tpu.memory_space<vmem>>, vector<32x1xbf16>
    tpu.vector_store %arg6[%c0_11, %c0_12], %19 {strides = array<i32>} : memref<32x1xbf16, #tpu.memory_space<vmem>>, vector<32x1xbf16>,
    return
  }
  func.func @transform_0(%arg0: i32) -> (i32, i32) {
    %c0_i32 = arith.constant 0 : i32
    %c0_i32_0 = arith.constant 0 : i32
    return %arg0, %c0_i32 : i32, i32
  }
  func.func @transform_1(%arg0: i32) -> (i32, i32) {
    %c0_i32 = arith.constant 0 : i32
    %c0_i32_0 = arith.constant 0 : i32
    %c0_i32_1 = arith.constant 0 : i32
    return %c0_i32, %c0_i32_0 : i32, i32
  }
  func.func @transform_2(%arg0: i32) -> (i32, i32) {
    %c0_i32 = arith.constant 0 : i32
    %c0_i32_0 = arith.constant 0 : i32
    %c0_i32_1 = arith.constant 0 : i32
    return %c0_i32, %c0_i32_0 : i32, i32
  }
  func.func @transform_3(%arg0: i32) -> (i32, i32) {
    %c0_i32 = arith.constant 0 : i32
    %c0_i32_0 = arith.constant 0 : i32
    %c0_i32_1 = arith.constant 0 : i32
    return %c0_i32, %c0_i32_0 : i32, i32
  }
  func.func @transform_4(%arg0: i32) -> (i32, i32) {
    %c0_i32 = arith.constant 0 : i32
    %c0_i32_0 = arith.constant 0 : i32
    %c0_i32_1 = arith.constant 0 : i32
    return %c0_i32, %c0_i32_0 : i32, i32
  }
  func.func @transform_5(%arg0: i32) -> (i32, i32) {
    %c0_i32 = arith.constant 0 : i32
    %c0_i32_0 = arith.constant 0 : i32
    return %arg0, %c0_i32 : i32, i32
  }
}

</mosaic_0001>

<llo_original>
// kernel: _lambda_.25
$region0: #{_lambda_.25}
  #allocation0 [shape = 'u32[]', space=smem, size = 0x4, offset = 0x4, fixed_abs, tag = 'smem constant byte address 0x4 - core index']
  #allocation1 [shape = 'u32[144,128]{1,0:T(1,128)}', space=vmem, size = 0x12000, scoped, tag = 'internal scratch']
  %s0 = inlined_call_operand.vmem [shape: bf16[18,64], index: 0, kind: input, shape index: {}]
  %s1 = inlined_call_operand.vmem [shape: bf16[64,16], index: 1, kind: input, shape index: {}]
  %s2 = inlined_call_operand.vmem [shape: f32[1,16], index: 2, kind: input, shape index: {}]
  %s3 = inlined_call_operand.vmem [shape: bf16[18,16], index: 3, kind: output, shape index: {}]
  %s4 = sld [smem:[#allocation0]]
  $region89: #{_lambda_.25} parent=0
    _
  %s6 = ssub.s32 1, %s4
  %s7 = scalar_select 0, %s6, %s4
  $region1: #{_lambda_.25} parent=0
    #allocation2 [shape = 'u8[8192]{0}', space=vmem, size = 0x2000, scoped, tag = 'output window, operand 0']
    loop: start=0, step=1, limit=4
    $region2: #{_lambda_.25} parent=1 // loop_pre_header
      _
    $region3: #{_lambda_.25} parent=1 // loop_header
      %s9 = sphi 0, %s13
      %p10 = scmp.ge.s32.totalorder %s9, 4
      %s19 = sphi 0, %s21
      %s22 = sphi 0, %s19
      %s23 = sphi 0, %s22
      %s39 = sphi 0, %s23
      %s43 = sphi 0, %s43
      %s45 = sphi 0, %s43
      %s46 = sphi 0, %s45
      %s60 = sphi 0, %s46
      %s64 = sphi 0, %s64
      %s66 = sphi 0, %s64
      %s67 = sphi 0, %s66
      %s81 = sphi 0, %s67
      %s87 = sphi 0, %s89
      %s90 = sphi 0, %s87
      %s91 = sphi 0, %s90
      %s107 = sphi 0, %s91
    $region4: #{_lambda_.25} parent=1 // loop_header_branch
      %12 = sbr.rel (%p10) target = $region8
    $region5: #{_lambda_.25} parent=1 // loop_body
      %s14 = ssub.s32 %s9, 1
      %s15 = ssub.s32 %s9, 2
      %s16 = sadd.s32 %s9, 1
      %s17 = ssub.s32 %s9, %s16
      %p18 = scmp.eq.s32.totalorder %s17, 0
      %s20 = sadd.s32 %s19, 1
      %s21 = scalar_select %p18, %s19, %s20
      %p24 = pneg %p18
      %p25 = scmp.eq.s32.totalorder %s9, 1
      %p26 = por %p24, %p25
      %p27 = scmp.ne.s32.totalorder %s19, %s22
      %p28 = scmp.eq.s32.totalorder %s9, 0
      %p29 = por %p27, %p28
      %p30 = scmp.ne.s32.totalorder %s19, %s22
      %p31 = scmp.eq.s32.totalorder %s14, 1
      %p32 = por %p30, %p31
      %p33 = scmp.ne.s32.totalorder %s22, %s23
      %p34 = scmp.eq.s32.totalorder %s14, 0
      %p35 = por %p33, %p34
      %p36 = scmp.ne.s32.totalorder %s22, %s23
      %p37 = scmp.eq.s32.totalorder %s15, 1
      %p38 = por %p36, %p37
      %p40 = scmp.ne.s32.totalorder %s23, %s39
      %p41 = scmp.eq.s32.totalorder %s15, 0
      %p42 = por %p40, %p41
      %s44 = sadd.s32 %s43, 1
      %p47 = scmp.eq.s32.totalorder %s9, 1
      %p48 = scmp.ne.s32.totalorder %s43, %s45
      %p49 = scmp.eq.s32.totalorder %s9, 0
      %p50 = por %p48, %p49
      %p51 = scmp.ne.s32.totalorder %s43, %s45
      %p52 = scmp.eq.s32.totalorder %s14, 1
      %p53 = por %p51, %p52
      %p54 = scmp.ne.s32.totalorder %s45, %s46
      %p55 = scmp.eq.s32.totalorder %s14, 0
      %p56 = por %p54, %p55
      %p57 = scmp.ne.s32.totalorder %s45, %s46
      %p58 = scmp.eq.s32.totalorder %s15, 1
      %p59 = por %p57, %p58
      %p61 = scmp.ne.s32.totalorder %s46, %s60
      %p62 = scmp.eq.s32.totalorder %s15, 0
      %p63 = por %p61, %p62
      %s65 = sadd.s32 %s64, 1
      %p68 = scmp.eq.s32.totalorder %s9, 1
      %p69 = scmp.ne.s32.totalorder %s64, %s66
      %p70 = scmp.eq.s32.totalorder %s9, 0
      %p71 = por %p69, %p70
      %p72 = scmp.ne.s32.totalorder %s64, %s66
      %p73 = scmp.eq.s32.totalorder %s14, 1
      %p74 = por %p72, %p73
      %p75 = scmp.ne.s32.totalorder %s66, %s67
      %p76 = scmp.eq.s32.totalorder %s14, 0
      %p77 = por %p75, %p76
      %p78 = scmp.ne.s32.totalorder %s66, %s67
      %p79 = scmp.eq.s32.totalorder %s15, 1
      %p80 = por %p78, %p79
      %p82 = scmp.ne.s32.totalorder %s67, %s81
      %p83 = scmp.eq.s32.totalorder %s15, 0
      %p84 = por %p82, %p83
      %s85 = ssub.s32 %s9, %s16
      %p86 = scmp.eq.s32.totalorder %s85, 0
      %s88 = sadd.s32 %s87, 1
      %s89 = scalar_select %p86, %s87, %s88
      %p92 = pneg %p86
      %p93 = scmp.eq.s32.totalorder %s9, 1
      %p94 = por %p92, %p93
      %p95 = scmp.ne.s32.totalorder %s87, %s90
      %p96 = scmp.eq.s32.totalorder %s9, 0
      %p97 = por %p95, %p96
      %p98 = scmp.ne.s32.totalorder %s87, %s90
      %p99 = scmp.eq.s32.totalorder %s14, 1
      %p100 = por %p98, %p99
      %p101 = scmp.ne.s32.totalorder %s90, %s91
      %p102 = scmp.eq.s32.totalorder %s14, 0
      %p103 = por %p101, %p102
      %p104 = scmp.ne.s32.totalorder %s90, %s91
      %p105 = scmp.eq.s32.totalorder %s15, 1
      %p106 = por %p104, %p105
      %p108 = scmp.ne.s32.totalorder %s91, %s107
      %p109 = scmp.eq.s32.totalorder %s15, 0
      %p110 = por %p108, %p109
      %p111 = scmp.le.s32.totalorder 1, %s9
      %p112 = scmp.lt.s32.totalorder %s9, 3
      %p113 = pnand %p111, %p112
      %p114 = pneg %p113
      // Predicated region
      $region9: #{_lambda_.25} parent=5 // pred_check
        _
      $region10: #{_lambda_.25} parent=5 // pred_check_branch
        %116 = sbr.rel (%p113) target = $region12
      $region11: #{_lambda_.25} parent=5 // pred_region
        %s117 = ssub.s32 %s9, 1
        // Predicated region
        $region13: #{_lambda_.25} parent=11 // pred_check
          %p118 = pneg %p56
        $region14: #{_lambda_.25} parent=11 // pred_check_branch
          %120 = sbr.rel (%p118) target = $region16
        $region15: #{_lambda_.25} parent=11 // pred_region
          _
        $region16: #{_lambda_.25} parent=11 // pred_fallthru
          _
        // Predicated region
        $region17: #{_lambda_.25} parent=11 // pred_check
          %p121 = pneg %p77
        $region18: #{_lambda_.25} parent=11 // pred_check_branch
          %123 = sbr.rel (%p121) target = $region20
        $region19: #{_lambda_.25} parent=11 // pred_region
          _
        $region20: #{_lambda_.25} parent=11 // pred_fallthru
          _
      $region12: #{_lambda_.25} parent=5 // pred_fallthru
        _
      %p124 = scmp.lt.s32.totalorder %s9, 2
      // Predicated region
      $region21: #{_lambda_.25} parent=5 // pred_check
        %p125 = pneg %p124
      $region22: #{_lambda_.25} parent=5 // pred_check_branch
        %127 = sbr.rel (%p125) target = $region24
      $region23: #{_lambda_.25} parent=5 // pred_region
        // Predicated region
        $region25: #{_lambda_.25} parent=23 // pred_check
          %p128 = pneg %p29
        $region26: #{_lambda_.25} parent=23 // pred_check_branch
          %130 = sbr.rel (%p128) target = $region28
        $region27: #{_lambda_.25} parent=23 // pred_region
          %s131 = smul.u32 2, %s9
          %s132 = ssub.s32 3, %s131
          %p133 = scmp.lt.s32.totalorder %s132, 2
          %s134 = scalar_select %p133, %s132, 2
          %s135 = smul.u32 64, %s134
          %p136 = scmp.lt.s32.totalorder %s131, 2
          %s137 = scalar_select %p136, %s131, 2
          %s138 = smul.addr %s137, 4
          %s139 = scalar_lea.vmem %s0, %s138
          %s140 = smul.u32 2, %s9
          %s141 = ssub.s32 3, %s140
          %p142 = scmp.lt.s32.totalorder %s141, 2
          %s143 = scalar_select %p142, %s141, 2
          %s144 = smul.u32 64, %s143
        $region28: #{_lambda_.25} parent=23 // pred_fallthru
          _
      $region24: #{_lambda_.25} parent=5 // pred_fallthru
        _
      %p145 = scmp.le.s32.totalorder 1, %s9
      %p146 = scmp.lt.s32.totalorder %s9, 3
      %p147 = pnand %p145, %p146
      %p148 = pneg %p147
      // Predicated region
      $region29: #{_lambda_.25} parent=5 // pred_check
        _
      $region30: #{_lambda_.25} parent=5 // pred_check_branch
        %150 = sbr.rel (%p147) target = $region32
      $region31: #{_lambda_.25} parent=5 // pred_region
        %s151 = ssub.s32 %s9, 1
        %s152 = smul.u32 2, %s14
        %s153 = ssub.s32 3, %s152
        %p154 = scmp.lt.s32.totalorder %s153, 2
        %s155 = scalar_select %p154, %s153, 2
        %s156 = smul.u32 64, %s155
        %p157 = scmp.lt.s32.totalorder %s152, 2
        %s158 = scalar_select %p157, %s152, 2
        %s159 = smul.addr %s158, 4
        %s160 = scalar_lea.vmem %s0, %s159
        %p161 = pneg %p35
        %p162 = pneg %p32
        %p163 = pneg %p56
        %p164 = pneg %p53
        %p165 = pneg %p77
        %p166 = pneg %p74
        %p167 = pneg %p103
        %p168 = pneg %p100
        %s169 = sand.u32 %s90, 1
        %s170 = sand.u32 %s90, 1
        %s171 = smul.addr %s170, 8
        %s172 = scalar_lea.vmem [#allocation2], %s171
        %s173 = smul.u32 2, %s14
        %s174 = ssub.s32 3, %s173
        %p175 = scmp.lt.s32.totalorder %s174, 2
        %s176 = scalar_select %p175, %s174, 2
        %s177 = smul.u32 64, %s176
        %p178 = scmp.lt.s32.totalorder %s173, 2
        %s179 = scalar_select %p178, %s173, 2
        %s180 = smul.addr %s179, 4
        %s181 = scalar_lea.vmem %s0, %s180
        %s182 = smul.u32 2, %s14
        %s183 = ssub.s32 3, %s182
        %p184 = scmp.lt.s32.totalorder %s183, 2
        %s185 = scalar_select %p184, %s183, 2
        %s186 = smul.u32 64, %s185
        %s187 = smul.u32 2, %s14
        %s188 = ssub.s32 3, %s187
        %p189 = scmp.lt.s32.totalorder %s188, 2
        %s190 = scalar_select %p189, %s188, 2
        %s191 = smul.u32 64, %s190
        %v193 = vld [vmem:[%s181] sm:$0xf]
        %v194 = vld [vmem:[%s181 + $0x4] sm:$0xf]
        %v195 = vld [vmem:[%s1] sm:$0xf]
        %v196 = vld [vmem:[%s1 + $0x4] sm:$0xf]
        %v197 = vld [vmem:[%s1 + $0x8] sm:$0xf]
        %v198 = vld [vmem:[%s1 + $0xc] sm:$0xf]
        %v199 = vld [vmem:[%s1 + $0x10] sm:$0xf]
        %v200 = vld [vmem:[%s1 + $0x14] sm:$0xf]
        %v201 = vld [vmem:[%s1 + $0x18] sm:$0xf]
        %v202 = vld [vmem:[%s1 + $0x1c] sm:$0xf]
        %v203 = vld [vmem:[%s2] sm:$0x1]
        %v205 = vlaneseq
        %v206 = vshrl.u32 %v205, 7
        %v207 = vsub.s32 0, %v206
        %v208 = vrot.slane %v203, %v207
        %v212 = vunpack.c.l.b16 %v193
        %v213 = vunpack.c.l.b16 %v194
        %v214 = vpack.c.b16 %v213, %v212
        %v223 = vunpack.c.l.b16 %v195
        %v224 = vunpack.c.l.b16 %v196
        %v225 = vunpack.c.l.b16 %v197
        %v226 = vunpack.c.l.b16 %v198
        %v227 = vunpack.c.l.b16 %v199
        %v228 = vunpack.c.l.b16 %v200
        %v229 = vunpack.c.l.b16 %v201
        %v230 = vunpack.c.l.b16 %v202
        %v231 = vpack.c.b16 %v224, %v223
        %v232 = vpack.c.b16 %v226, %v225
        %v233 = vpack.c.b16 %v228, %v227
        %v234 = vpack.c.b16 %v230, %v229
        %vm239 = vcmask 523264
        %v241 = vsel %vm239, %v214, 0
        %243 = vmatprep.subr.bf16.mxu0 0
        %244 = vmatpush1.bf16.msra.mxu0 %v231
        %245 = vmatprep.subr.bf16.mxu0 0
        %246 = vmatpush1.bf16.msra.mxu0 %v232
        %247 = vmatprep.subr.bf16.mxu0 0
        %248 = vmatpush1.bf16.msra.mxu0 %v233
        %249 = vmatprep.subr.bf16.mxu0 0
        %250 = vmatpush1.bf16.msra.mxu0 %v234
        %251 = vmatprep.subr.bf16.mxu0 0
        %252 = vmatpush1.bf16.msra.mxu0 0
        %253 = vmatprep.subr.bf16.mxu0 0
        %254 = vmatpush1.bf16.msra.mxu0 0
        %255 = vmatprep.subr.bf16.mxu0 0
        %256 = vmatpush1.bf16.msra.mxu0 0
        %257 = vmatprep.subr.bf16.mxu0 0
        %258 = vmatpush1.bf16.msra.mxu0 0
        %259 = vmatprep.subr.bf16.mxu0 0
        %260 = vmatpush1.bf16.msra.mxu0 0
        %261 = vmatprep.subr.bf16.mxu0 0
        %262 = vmatpush1.bf16.msra.mxu0 0
        %263 = vmatprep.subr.bf16.mxu0 0
        %264 = vmatpush1.bf16.msra.mxu0 0
        %265 = vmatprep.subr.bf16.mxu0 0
        %266 = vmatpush1.bf16.msra.mxu0 0
        %267 = vmatprep.subr.bf16.mxu0 0
        %268 = vmatpush1.bf16.msra.mxu0 0
        %269 = vmatprep.subr.bf16.mxu0 0
        %270 = vmatpush1.bf16.msra.mxu0 0
        %271 = vmatprep.subr.bf16.mxu0 0
        %272 = vmatpush1.bf16.msra.mxu0 0
        %273 = vmatprep.subr.bf16.mxu0 0
        %274 = vmatpush1.bf16.msra.mxu0 0
        %275 = vmatprep.mubr.bf16.mxu0 0
        %276 = vmatmul.mubr.bf16.gmra.mrb[0].mxu0 %v241
        %v277 = vpop.f32.mrb[0].mxu0
        %v278 = vadd.f32 %v208, %v277
        %v279 = vpop.f32.mrb[0].mxu0
        %v280 = vpop.f32.mrb[0].mxu0
        %v281 = vadd.f32 %v208, %v280
        %v282 = vpop.f32.mrb[0].mxu0
        %283 = vdwg.mxu0
        %vm284 = vcmp.ge.f32.partialorder %v278, 0.0
        %vm285 = vcmp.ge.f32.partialorder %v281, 0.0
        %v286 = vmul.f32 %v278, 0.2
        %v287 = vmul.f32 %v281, 0.2
        %v288 = vsel %vm284, %v278, %v286
        %v289 = vsel %vm285, %v281, %v287
        %v290 = vpack.c.bf16 %v289, %v288
        %v292 = vunpack.c.l.b16 %v290
        %v293 = vunpack.c.h.b16 %v290
        %v294 = vpack.c.b16 %v292, %v292
        %v295 = vpack.c.b16 %v293, %v293
        %vm298 = vcmask 125952
        %299 = vst.msk [vmem:[%s172] sm:$0xf] %vm298, %v294
        %300 = vst.msk [vmem:[%s172 + $0x4] sm:$0xf] %vm298, %v295
        %s301 = sand.u32 %s90, 1
        %s302 = sand.u32 %s90, 1
        %s303 = smul.addr %s302, 8
        %s304 = scalar_lea.vmem [#allocation2], %s303
        // Predicated region
        $region33: #{_lambda_.25} parent=31 // pred_check
          %p305 = pneg %p100
        $region34: #{_lambda_.25} parent=31 // pred_check_branch
          %307 = sbr.rel (%p305) target = $region36
        $region35: #{_lambda_.25} parent=31 // pred_region
          %s308 = smul.u32 2, %s14
          %s309 = ssub.s32 3, %s308
          %p310 = scmp.lt.s32.totalorder %s309, 2
          %s311 = scalar_select %p310, %s309, 2
          %s312 = smul.u32 64, %s311
          %p313 = scmp.ne.s32.totalorder 0, %s312
          %s314 = smul.addr %s308, 4
          %s315 = scalar_lea.vmem %s3, %s314
          // Predicated region
          $region37: #{_lambda_.25} parent=35 // pred_check
            %p316 = pneg %p313
          $region38: #{_lambda_.25} parent=35 // pred_check_branch
            %318 = sbr.rel (%p316) target = $region40
          $region39: #{_lambda_.25} parent=35 // pred_region
            // Predicated region
            $region41: #{_lambda_.25} parent=39 // pred_check
              _
            $region42: #{_lambda_.25} parent=39 // pred_check_branch
              %320 = sbr.rel target = $region44
            $region43: #{_lambda_.25} parent=39 // pred_region
              // Predicated region
              $region63: #{_lambda_.25} parent=43 // pred_check
                _
              $region64: #{_lambda_.25} parent=43 // pred_check_branch
                %371 = sbr.rel (0) target = $region66
              $region65: #{_lambda_.25} parent=43 // pred_region
                %s373 = sshrl.u32 %s311, 1
                // While loop
                $region67: #{_lambda_.25} parent=65 // loop_pre_header
                  _
                $region68: #{_lambda_.25} parent=65 // loop_header
                  %s375 = sphi 0, %s377
                  %p376 = scmp.ge.s32.totalorder %s375, %s373
                  %s380 = sphi 0, %s389
                  %s381 = sphi %s304, %s392
                  %s382 = sphi %s315, %s393
                $region69: #{_lambda_.25} parent=65 // loop_header_branch
                  %379 = sbr.rel (%p376) target = $region73
                $region70: #{_lambda_.25} parent=65 // loop_body
                  %v383 = vld [vmem:[%s381] sm:$0xf]
                  %384 = vst [vmem:[%s382] sm:$0xf] %v383
                  %v385 = vld [vmem:[%s381 + $0x4] sm:$0xf]
                  %386 = vst [vmem:[%s382 + $0x4] sm:$0xf] %v385
                  %s387 = sadd.s32 1, %s380
                  %p388 = scmp.ge.s32.totalorder %s387, %s373
                  %s389 = scalar_select %p388, 0, %s387
                  %s390 = smul.u32 %s389, 8
                  %s391 = smul.u32 %s389, 8
                  %s392 = scalar_lea.vmem %s304, %s390 [#allocation2]
                  %s393 = scalar_lea.vmem %s315, %s391
                $region71: #{_lambda_.25} parent=65 // loop_footer
                  %s377 = sadd.s32 %s375, 1
                $region72: #{_lambda_.25} parent=65 // loop_footer_branch
                  %374 = sbr.rel target = $region68
                $region73: #{_lambda_.25} parent=65 // loop_exit
                  _
                %s394 = sshrl.u32 %s311, 1
                %s395 = sand.u32 %s311, 1
                %s396 = smul.u32 %s394, 2
                %s397 = smul.u32 4, %s396
                %s398 = scalar_lea.vmem %s304, %s397 [#allocation2]
                %s399 = smul.u32 4, %s396
                %s400 = scalar_lea.vmem %s315, %s399
                // While loop
                $region74: #{_lambda_.25} parent=65 // loop_pre_header
                  _
                $region75: #{_lambda_.25} parent=65 // loop_header
                  %s402 = sphi 0, %s404
                  %p403 = scmp.ge.s32.totalorder %s402, %s395
                  %s407 = sphi 0, %s414
                  %s408 = sphi %s398, %s417
                  %s409 = sphi %s400, %s418
                $region76: #{_lambda_.25} parent=65 // loop_header_branch
                  %406 = sbr.rel (%p403) target = $region80
                $region77: #{_lambda_.25} parent=65 // loop_body
                  %v410 = vld [vmem:[%s408] sm:$0xf]
                  %411 = vst [vmem:[%s409] sm:$0xf] %v410
                  %s412 = sadd.s32 1, %s407
                  %p413 = scmp.ge.s32.totalorder %s412, %s395
                  %s414 = scalar_select %p413, 0, %s412
                  %s415 = smul.u32 %s414, 4
                  %s416 = smul.u32 %s414, 4
                  %s417 = scalar_lea.vmem %s398, %s415 [#allocation2]
                  %s418 = scalar_lea.vmem %s400, %s416
                $region78: #{_lambda_.25} parent=65 // loop_footer
                  %s404 = sadd.s32 %s402, 1
                $region79: #{_lambda_.25} parent=65 // loop_footer_branch
                  %401 = sbr.rel target = $region75
                $region80: #{_lambda_.25} parent=65 // loop_exit
                  _
              $region66: #{_lambda_.25} parent=43 // pred_fallthru
                _
            $region44: #{_lambda_.25} parent=39 // pred_fallthru
              _
            // Predicated region
            $region45: #{_lambda_.25} parent=39 // pred_check
              _
            $region46: #{_lambda_.25} parent=39 // pred_check_branch
              %322 = sbr.rel (0) target = $region48
            $region47: #{_lambda_.25} parent=39 // pred_region
              %s324 = sshrl.u32 %s311, 1
              // While loop
              $region49: #{_lambda_.25} parent=47 // loop_pre_header
                _
              $region50: #{_lambda_.25} parent=47 // loop_header
                %s326 = sphi 0, %s328
                %p327 = scmp.ge.s32.totalorder %s326, %s324
                %s331 = sphi 0, %s340
                %s332 = sphi %s304, %s343
                %s333 = sphi %s315, %s344
              $region51: #{_lambda_.25} parent=47 // loop_header_branch
                %330 = sbr.rel (%p327) target = $region55
              $region52: #{_lambda_.25} parent=47 // loop_body
                %v334 = vld [vmem:[%s332] sm:$0xf]
                %335 = vst [vmem:[%s333] sm:$0xf] %v334
                %v336 = vld [vmem:[%s332 + $0x4] sm:$0xf]
                %337 = vst [vmem:[%s333 + $0x4] sm:$0xf] %v336
                %s338 = sadd.s32 1, %s331
                %p339 = scmp.ge.s32.totalorder %s338, %s324
                %s340 = scalar_select %p339, 0, %s338
                %s341 = smul.u32 %s340, 8
                %s342 = smul.u32 %s340, 8
                %s343 = scalar_lea.vmem %s304, %s341 [#allocation2]
                %s344 = scalar_lea.vmem %s315, %s342
              $region53: #{_lambda_.25} parent=47 // loop_footer
                %s328 = sadd.s32 %s326, 1
              $region54: #{_lambda_.25} parent=47 // loop_footer_branch
                %325 = sbr.rel target = $region50
              $region55: #{_lambda_.25} parent=47 // loop_exit
                _
              %s345 = sshrl.u32 %s311, 1
              %s346 = sand.u32 %s311, 1
              %s347 = smul.u32 %s345, 2
              %s348 = smul.u32 4, %s347
              %s349 = scalar_lea.vmem %s304, %s348 [#allocation2]
              %s350 = smul.u32 4, %s347
              %s351 = scalar_lea.vmem %s315, %s350
              // While loop
              $region56: #{_lambda_.25} parent=47 // loop_pre_header
                _
              $region57: #{_lambda_.25} parent=47 // loop_header
                %s353 = sphi 0, %s355
                %p354 = scmp.ge.s32.totalorder %s353, %s346
                %s358 = sphi 0, %s365
                %s359 = sphi %s349, %s368
                %s360 = sphi %s351, %s369
              $region58: #{_lambda_.25} parent=47 // loop_header_branch
                %357 = sbr.rel (%p354) target = $region62
              $region59: #{_lambda_.25} parent=47 // loop_body
                %v361 = vld [vmem:[%s359] sm:$0xf]
                %362 = vst [vmem:[%s360] sm:$0xf] %v361
                %s363 = sadd.s32 1, %s358
                %p364 = scmp.ge.s32.totalorder %s363, %s346
                %s365 = scalar_select %p364, 0, %s363
                %s366 = smul.u32 %s365, 4
                %s367 = smul.u32 %s365, 4
                %s368 = scalar_lea.vmem %s349, %s366 [#allocation2]
                %s369 = scalar_lea.vmem %s351, %s367
              $region60: #{_lambda_.25} parent=47 // loop_footer
                %s355 = sadd.s32 %s353, 1
              $region61: #{_lambda_.25} parent=47 // loop_footer_branch
                %352 = sbr.rel target = $region57
              $region62: #{_lambda_.25} parent=47 // loop_exit
                _
            $region48: #{_lambda_.25} parent=39 // pred_fallthru
              _
          $region40: #{_lambda_.25} parent=35 // pred_fallthru
            _
          %419 = vnop
        $region36: #{_lambda_.25} parent=31 // pred_fallthru
          _
      $region32: #{_lambda_.25} parent=5 // pred_fallthru
        _
      %p420 = scmp.le.s32.totalorder 2, %s9
      // Predicated region
      $region81: #{_lambda_.25} parent=5 // pred_check
        %p421 = pneg %p420
      $region82: #{_lambda_.25} parent=5 // pred_check_branch
        %423 = sbr.rel (%p421) target = $region84
      $region83: #{_lambda_.25} parent=5 // pred_region
        %s424 = ssub.s32 %s9, 2
        // Predicated region
        $region85: #{_lambda_.25} parent=83 // pred_check
          %p425 = pneg %p106
        $region86: #{_lambda_.25} parent=83 // pred_check_branch
          %427 = sbr.rel (%p425) target = $region88
        $region87: #{_lambda_.25} parent=83 // pred_region
          %s428 = sand.u32 %s91, 1
          %s429 = sand.u32 %s91, 1
          %s430 = smul.addr %s429, 8
          %s431 = scalar_lea.vmem [#allocation2], %s430
        $region88: #{_lambda_.25} parent=83 // pred_fallthru
          _
      $region84: #{_lambda_.25} parent=5 // pred_fallthru
        _
    $region6: #{_lambda_.25} parent=1 // loop_footer
      %s13 = sadd.s32 1, %s9
    $region7: #{_lambda_.25} parent=1 // loop_footer_branch
      %8 = sbr.rel target = $region3
    $region8: #{_lambda_.25} parent=1 // loop_exit
      _

// kernel: tile.153
$region0: #{tile.153}
  #allocation0 [shape = 's32[1]{0}', space=sflag, size = 0x4, scoped, tag = 'scoped memory for tile.153']
  %s0 = inlined_call_operand.vmem [shape: f32[32], index: 0, kind: input, shape index: {}]
  %s1 = inlined_call_operand.vmem [shape: f32[16,32], index: 1, kind: output, shape index: {}]
  // Predicated region
  $region2: #{tile.153} parent=0 // pred_check
    _
  $region3: #{tile.153} parent=0 // pred_check_branch
    %3 = sbr.rel (0) target = $region5
  $region4: #{tile.153} parent=0 // pred_region
    _
  $region5: #{tile.153} parent=0 // pred_fallthru
    _
  %v4 = vld [vmem:[%s0] ss:$0 sm:$0xff]
  %5 = vst [vmem:[%s1] sm:$0xff] %v4
  %s6 = scalar_lea.vmem %s1, 8
  %7 = vst [vmem:[%s6] sm:$0xff] %v4

// kernel: tile.159
$region0: #{tile.159}
  %s0 = inlined_call_operand.vmem [shape: f32[16,32], index: 0, kind: input, shape index: {}]
  %s1 = inlined_call_operand.vmem [shape: f32[1,512], index: 1, kind: output, shape index: {}]
  $region1: #{tile.159} parent=0
    #allocation0 [shape = 'u8[16384]{0}', space=vmem, size = 0x4000, scoped, tag = 'scoped mem for output reshape']
    %v2 = vld [vmem:[%s0] ss:$4 sm:$0xf]
    %vm3 = vcmask 261120
    %4 = vst.msk [vmem:[#allocation0] ss:$8 sm:$0xf] %vm3, %v2
    %s5 = scalar_lea.vmem %s0, 3
    %v6 = vld [vmem:[%s5] ss:$4 sm:$0xf]
    %7 = vrot.lane.b32.xlu0 %v6, 96
    %v8 = vpop.permute.xlu0 %7
    %vm9 = vcmask 1048320
    %10 = vst.msk [vmem:[#allocation0] ss:$8 sm:$0xf] %vm9, %v8
    %s11 = scalar_lea.vmem %s0, 2
    %v12 = vld [vmem:[%s11] ss:$4 sm:$0xf]
    %13 = vrot.lane.b32.xlu0 %v12, 64
    %v14 = vpop.permute.xlu0 %13
    %vm15 = vcmask 785920
    %16 = vst.msk [vmem:[#allocation0] ss:$8 sm:$0xf] %vm15, %v14
    %s17 = scalar_lea.vmem %s0, 1
    %v18 = vld [vmem:[%s17] ss:$4 sm:$0xf]
    %19 = vrot.lane.b32.xlu0 %v18, 32
    %v20 = vpop.permute.xlu0 %19
    %vm21 = vcmask 523520
    %22 = vst.msk [vmem:[#allocation0] ss:$8 sm:$0xf] %vm21, %v20
    %s24 = sshllo.u32 0, 1
    %v26 = vld [vmem:[#allocation0] sm:%s24]
    %s27 = sshllo.u32 0, 1
    %28 = vst [vmem:[%s1] sm:%s27] %v26
    %s29 = scalar_lea.vmem [#allocation0], 8
    %v30 = vld [vmem:[%s29] sm:%s24]
    %s31 = sshllo.u32 0, 1
    %s32 = scalar_lea.vmem %s1, 1
    %33 = vst [vmem:[%s32] sm:%s31] %v30
    %s34 = scalar_lea.vmem [#allocation0], 16
    %v35 = vld [vmem:[%s34] sm:%s24]
    %s36 = sshllo.u32 0, 1
    %s37 = smul.addr 1, 2
    %s38 = scalar_lea.vmem %s1, %s37
    %39 = vst [vmem:[%s38] sm:%s36] %v35
    %s40 = scalar_lea.vmem [#allocation0], 24
    %v41 = vld [vmem:[%s40] sm:%s24]
    %s42 = sshllo.u32 0, 1
    %s43 = smul.addr 1, 3
    %s44 = scalar_lea.vmem %s1, %s43
    %45 = vst [vmem:[%s44] sm:%s42] %v41

// kernel: _lambda_.26
$region0: #{_lambda_.26}
  #allocation0 [shape = 'u32[]', space=smem, size = 0x4, offset = 0x4, fixed_abs, tag = 'smem constant byte address 0x4 - core index']
  #allocation1 [shape = 'u32[144,128]{1,0:T(1,128)}', space=vmem, size = 0x12000, scoped, tag = 'internal scratch']
  %s0 = inlined_call_operand.vmem [shape: bf16[8,256], index: 0, kind: input, shape index: {}]
  %s1 = inlined_call_operand.vmem [shape: bf16[256,32], index: 1, kind: input, shape index: {}]
  %s2 = inlined_call_operand.vmem [shape: f32[1,32], index: 2, kind: input, shape index: {}]
  %s3 = inlined_call_operand.vmem [shape: bf16[8,32], index: 3, kind: output, shape index: {0}]
  %s4 = inlined_call_operand.vmem [shape: f32[1,32], index: 4, kind: output, shape index: {1}]
  %s5 = inlined_call_operand.vmem [shape: f32[1,32], index: 5, kind: output, shape index: {2}]
  %6 = xla_tuple %s3, %s4, %s5
  %s7 = sld [smem:[#allocation0]]
  $region38: #{_lambda_.26} parent=0
    _
  %s9 = ssub.s32 1, %s7
  %s10 = scalar_select 0, %s9, %s7
  // Predicated region
  $region2: #{_lambda_.26} parent=0 // pred_check
    _
  $region3: #{_lambda_.26} parent=0 // pred_check_branch
    %12 = sbr.rel (0) target = $region5
  $region4: #{_lambda_.26} parent=0 // pred_region
    _
  $region5: #{_lambda_.26} parent=0 // pred_fallthru
    _
  // Predicated region
  $region6: #{_lambda_.26} parent=0 // pred_check
    _
  $region7: #{_lambda_.26} parent=0 // pred_check_branch
    %14 = sbr.rel (0) target = $region9
  $region8: #{_lambda_.26} parent=0 // pred_region
    _
  $region9: #{_lambda_.26} parent=0 // pred_fallthru
    _
  // Predicated region
  $region10: #{_lambda_.26} parent=0 // pred_check
    _
  $region11: #{_lambda_.26} parent=0 // pred_check_branch
    %16 = sbr.rel (0) target = $region13
  $region12: #{_lambda_.26} parent=0 // pred_region
    _
  $region13: #{_lambda_.26} parent=0 // pred_fallthru
    _
  %v18 = vld [vmem:[%s0] sm:$0xff]
  %v19 = vld [vmem:[%s1] sm:$0xf]
  %v20 = vld [vmem:[%s1 + $0x4] sm:$0xf]
  %v21 = vld [vmem:[%s1 + $0x8] sm:$0xf]
  %v22 = vld [vmem:[%s1 + $0xc] sm:$0xf]
  %v23 = vld [vmem:[%s1 + $0x10] sm:$0xf]
  %v24 = vld [vmem:[%s1 + $0x14] sm:$0xf]
  %v25 = vld [vmem:[%s1 + $0x18] sm:$0xf]
  %v26 = vld [vmem:[%s1 + $0x1c] sm:$0xf]
  %v27 = vld [vmem:[%s1 + $0x20] sm:$0xf]
  %v28 = vld [vmem:[%s1 + $0x24] sm:$0xf]
  %v29 = vld [vmem:[%s1 + $0x28] sm:$0xf]
  %v30 = vld [vmem:[%s1 + $0x2c] sm:$0xf]
  %v31 = vld [vmem:[%s1 + $0x30] sm:$0xf]
  %v32 = vld [vmem:[%s1 + $0x34] sm:$0xf]
  %v33 = vld [vmem:[%s1 + $0x38] sm:$0xf]
  %v34 = vld [vmem:[%s1 + $0x3c] sm:$0xf]
  %v35 = vld [vmem:[%s1 + $0x40] sm:$0xf]
  %v36 = vld [vmem:[%s1 + $0x44] sm:$0xf]
  %v37 = vld [vmem:[%s1 + $0x48] sm:$0xf]
  %v38 = vld [vmem:[%s1 + $0x4c] sm:$0xf]
  %v39 = vld [vmem:[%s1 + $0x50] sm:$0xf]
  %v40 = vld [vmem:[%s1 + $0x54] sm:$0xf]
  %v41 = vld [vmem:[%s1 + $0x58] sm:$0xf]
  %v42 = vld [vmem:[%s1 + $0x5c] sm:$0xf]
  %v43 = vld [vmem:[%s1 + $0x60] sm:$0xf]
  %v44 = vld [vmem:[%s1 + $0x64] sm:$0xf]
  %v45 = vld [vmem:[%s1 + $0x68] sm:$0xf]
  %v46 = vld [vmem:[%s1 + $0x6c] sm:$0xf]
  %v47 = vld [vmem:[%s1 + $0x70] sm:$0xf]
  %v48 = vld [vmem:[%s1 + $0x74] sm:$0xf]
  %v49 = vld [vmem:[%s1 + $0x78] sm:$0xf]
  %v50 = vld [vmem:[%s1 + $0x7c] sm:$0xf]
  %v51 = vld [vmem:[%s2] sm:$0x1]
  %v53 = vlaneseq
  %v54 = vshrl.u32 %v53, 7
  %v55 = vsub.s32 0, %v54
  %v56 = vrot.slane %v51, %v55
  %v59 = vunpack.c.l.b16 %v18
  %v60 = vunpack.c.h.b16 %v18
  %v61 = vpack.c.b16 %v59, %v59
  %v62 = vpack.c.b16 %v60, %v60
  %v97 = vunpack.c.l.b16 %v19
  %v98 = vunpack.c.l.b16 %v20
  %v99 = vunpack.c.l.b16 %v21
  %v100 = vunpack.c.l.b16 %v22
  %v101 = vunpack.c.l.b16 %v23
  %v102 = vunpack.c.l.b16 %v24
  %v103 = vunpack.c.l.b16 %v25
  %v104 = vunpack.c.l.b16 %v26
  %v105 = vunpack.c.l.b16 %v27
  %v106 = vunpack.c.l.b16 %v28
  %v107 = vunpack.c.l.b16 %v29
  %v108 = vunpack.c.l.b16 %v30
  %v109 = vunpack.c.l.b16 %v31
  %v110 = vunpack.c.l.b16 %v32
  %v111 = vunpack.c.l.b16 %v33
  %v112 = vunpack.c.l.b16 %v34
  %v113 = vunpack.c.l.b16 %v35
  %v114 = vunpack.c.l.b16 %v36
  %v115 = vunpack.c.l.b16 %v37
  %v116 = vunpack.c.l.b16 %v38
  %v117 = vunpack.c.l.b16 %v39
  %v118 = vunpack.c.l.b16 %v40
  %v119 = vunpack.c.l.b16 %v41
  %v120 = vunpack.c.l.b16 %v42
  %v121 = vunpack.c.l.b16 %v43
  %v122 = vunpack.c.l.b16 %v44
  %v123 = vunpack.c.l.b16 %v45
  %v124 = vunpack.c.l.b16 %v46
  %v125 = vunpack.c.l.b16 %v47
  %v126 = vunpack.c.l.b16 %v48
  %v127 = vunpack.c.l.b16 %v49
  %v128 = vunpack.c.l.b16 %v50
  %v129 = vpack.c.b16 %v98, %v97
  %v130 = vpack.c.b16 %v100, %v99
  %v131 = vpack.c.b16 %v102, %v101
  %v132 = vpack.c.b16 %v104, %v103
  %v133 = vpack.c.b16 %v106, %v105
  %v134 = vpack.c.b16 %v108, %v107
  %v135 = vpack.c.b16 %v110, %v109
  %v136 = vpack.c.b16 %v112, %v111
  %v137 = vpack.c.b16 %v114, %v113
  %v138 = vpack.c.b16 %v116, %v115
  %v139 = vpack.c.b16 %v118, %v117
  %v140 = vpack.c.b16 %v120, %v119
  %v141 = vpack.c.b16 %v122, %v121
  %v142 = vpack.c.b16 %v124, %v123
  %v143 = vpack.c.b16 %v126, %v125
  %v144 = vpack.c.b16 %v128, %v127
  %161 = vmatprep.subr.bf16.mxu0 0
  %162 = vmatpush1.bf16.msra.mxu0 %v129
  %163 = vmatprep.subr.bf16.mxu0 0
  %164 = vmatpush1.bf16.msra.mxu0 %v130
  %165 = vmatprep.subr.bf16.mxu0 0
  %166 = vmatpush1.bf16.msra.mxu0 %v131
  %167 = vmatprep.subr.bf16.mxu0 0
  %168 = vmatpush1.bf16.msra.mxu0 %v132
  %169 = vmatprep.subr.bf16.mxu0 0
  %170 = vmatpush1.bf16.msra.mxu0 %v133
  %171 = vmatprep.subr.bf16.mxu0 0
  %172 = vmatpush1.bf16.msra.mxu0 %v134
  %173 = vmatprep.subr.bf16.mxu0 0
  %174 = vmatpush1.bf16.msra.mxu0 %v135
  %175 = vmatprep.subr.bf16.mxu0 0
  %176 = vmatpush1.bf16.msra.mxu0 %v136
  %177 = vmatprep.subr.bf16.mxu0 0
  %178 = vmatpush1.bf16.msra.mxu0 %v137
  %179 = vmatprep.subr.bf16.mxu0 0
  %180 = vmatpush1.bf16.msra.mxu0 %v138
  %181 = vmatprep.subr.bf16.mxu0 0
  %182 = vmatpush1.bf16.msra.mxu0 %v139
  %183 = vmatprep.subr.bf16.mxu0 0
  %184 = vmatpush1.bf16.msra.mxu0 %v140
  %185 = vmatprep.subr.bf16.mxu0 0
  %186 = vmatpush1.bf16.msra.mxu0 %v141
  %187 = vmatprep.subr.bf16.mxu0 0
  %188 = vmatpush1.bf16.msra.mxu0 %v142
  %189 = vmatprep.subr.bf16.mxu0 0
  %190 = vmatpush1.bf16.msra.mxu0 %v143
  %191 = vmatprep.subr.bf16.mxu0 0
  %192 = vmatpush1.bf16.msra.mxu0 %v144
  %193 = vmatprep.mubr.bf16.mxu0 %v62
  %194 = vmatmul.mubr.bf16.gmra.mrb[0].mxu0 %v61
  %v195 = vpop.f32.mrb[0].mxu0
  %v196 = vadd.f32 %v56, %v195
  %v197 = vpop.f32.mrb[0].mxu0
  %v198 = vpop.f32.mrb[0].mxu0
  %v199 = vpop.f32.mrb[0].mxu0
  %200 = vdwg.mxu0
  %v201 = vpack.c.bf16 %v196, %v196
  %vm202 = vcmask 257024
  %203 = vst.msk [vmem:[%s3] sm:$0xf] %vm202, %v201
  %vm204 = vcmask 261120
  %v205 = vsel %vm204, %v196, 0.0
  %v206 = vrot.slane %v205, 4
  %v207 = vadd.f32 %v205, %v206
  %v208 = vrot.slane %v207, 2
  %v209 = vadd.f32 %v207, %v208
  %v210 = vrot.slane %v209, 1
  %v211 = vadd.f32 %v209, %v210
  %vm212 = vcmask 253952
  %213 = vst.msk [vmem:[%s4] sm:$0x1] %vm212, %v211
  %v214 = vmul.f32 %v196, %v196
  %v215 = vsel %vm204, %v214, 0.0
  %v216 = vrot.slane %v215, 4
  %v217 = vadd.f32 %v215, %v216
  %v218 = vrot.slane %v217, 2
  %v219 = vadd.f32 %v217, %v218
  %v220 = vrot.slane %v219, 1
  %v221 = vadd.f32 %v219, %v220
  %222 = vst.msk [vmem:[%s5] sm:$0x1] %vm212, %v221
  // Predicated region
  $region14: #{_lambda_.26} parent=0 // pred_check
    _
  $region15: #{_lambda_.26} parent=0 // pred_check_branch
    %224 = sbr.rel (0) target = $region17
  $region16: #{_lambda_.26} parent=0 // pred_region
    _
  $region17: #{_lambda_.26} parent=0 // pred_fallthru
    _
  // Predicated region
  $region18: #{_lambda_.26} parent=0 // pred_check
    _
  $region19: #{_lambda_.26} parent=0 // pred_check_branch
    %226 = sbr.rel (0) target = $region21
  $region20: #{_lambda_.26} parent=0 // pred_region
    _
  $region21: #{_lambda_.26} parent=0 // pred_fallthru
    _
  // Predicated region
  $region22: #{_lambda_.26} parent=0 // pred_check
    _
  $region23: #{_lambda_.26} parent=0 // pred_check_branch
    %228 = sbr.rel (0) target = $region25
  $region24: #{_lambda_.26} parent=0 // pred_region
    _
  $region25: #{_lambda_.26} parent=0 // pred_fallthru
    _
  // Predicated region
  $region26: #{_lambda_.26} parent=0 // pred_check
    _
  $region27: #{_lambda_.26} parent=0 // pred_check_branch
    %230 = sbr.rel (0) target = $region29
  $region28: #{_lambda_.26} parent=0 // pred_region
    _
  $region29: #{_lambda_.26} parent=0 // pred_fallthru
    _
  // Predicated region
  $region30: #{_lambda_.26} parent=0 // pred_check
    _
  $region31: #{_lambda_.26} parent=0 // pred_check_branch
    %232 = sbr.rel (0) target = $region33
  $region32: #{_lambda_.26} parent=0 // pred_region
    _
  $region33: #{_lambda_.26} parent=0 // pred_fallthru
    _
  // Predicated region
  $region34: #{_lambda_.26} parent=0 // pred_check
    _
  $region35: #{_lambda_.26} parent=0 // pred_check_branch
    %234 = sbr.rel (0) target = $region37
  $region36: #{_lambda_.26} parent=0 // pred_region
    _
  $region37: #{_lambda_.26} parent=0 // pred_fallthru
    _

// kernel: tile.163
$region0: #{tile.163}
  #allocation0 [shape = 's32[1]{0}', space=sflag, size = 0x4, scoped, tag = 'scoped memory for tile.163']
  %s0 = inlined_call_operand.vmem [shape: f32[64], index: 0, kind: input, shape index: {}]
  %s1 = inlined_call_operand.vmem [shape: f32[16,64], index: 1, kind: output, shape index: {}]
  // Predicated region
  $region2: #{tile.163} parent=0 // pred_check
    _
  $region3: #{tile.163} parent=0 // pred_check_branch
    %3 = sbr.rel (0) target = $region5
  $region4: #{tile.163} parent=0 // pred_region
    _
  $region5: #{tile.163} parent=0 // pred_fallthru
    _
  %v4 = vld [vmem:[%s0] ss:$0 sm:$0xff]
  %5 = vst [vmem:[%s1] sm:$0xff] %v4
  %s6 = scalar_lea.vmem %s1, 8
  %7 = vst [vmem:[%s6] sm:$0xff] %v4

// kernel: tile.169
$region0: #{tile.169}
  %s0 = inlined_call_operand.vmem [shape: f32[16,64], index: 0, kind: input, shape index: {}]
  %s1 = inlined_call_operand.vmem [shape: f32[1,1024], index: 1, kind: output, shape index: {}]
  $region1: #{tile.169} parent=0
    #allocation0 [shape = 'u8[32768]{0}', space=vmem, size = 0x8000, scoped, tag = 'scoped mem for output reshape']
    %v2 = vld [vmem:[%s0] ss:$2 sm:$0xff]
    %vm3 = vcmask 523264
    %4 = vst.msk [vmem:[#allocation0] ss:$8 sm:$0xf] %vm3, %v2
    %5 = vst.msk [vmem:[#allocation0] ss:$8 sm:$0xf0] %vm3, %v2
    %s6 = scalar_lea.vmem %s0, 1
    %v7 = vld [vmem:[%s6] ss:$2 sm:$0xff]
    %8 = vrot.lane.b32.xlu0 %v7, 64
    %v9 = vpop.permute.xlu0 %8
    %vm10 = vcmask 1048064
    %11 = vst.msk [vmem:[#allocation0] ss:$8 sm:$0xf] %vm10, %v9
    %12 = vst.msk [vmem:[#allocation0] ss:$8 sm:$0xf0] %vm10, %v9
    %s14 = sshllo.u32 0, 1
    %v16 = vld [vmem:[#allocation0] sm:%s14]
    %s17 = sshllo.u32 0, 1
    %18 = vst [vmem:[%s1] sm:%s17] %v16
    %s19 = scalar_lea.vmem [#allocation0], 8
    %v20 = vld [vmem:[%s19] sm:%s14]
    %s21 = sshllo.u32 0, 1
    %s22 = scalar_lea.vmem %s1, 1
    %23 = vst [vmem:[%s22] sm:%s21] %v20
    %s24 = scalar_lea.vmem [#allocation0], 16
    %v25 = vld [vmem:[%s24] sm:%s14]
    %s26 = sshllo.u32 0, 1
    %s27 = smul.addr 1, 2
    %s28 = scalar_lea.vmem %s1, %s27
    %29 = vst [vmem:[%s28] sm:%s26] %v25
    %s30 = scalar_lea.vmem [#allocation0], 24
    %v31 = vld [vmem:[%s30] sm:%s14]
    %s32 = sshllo.u32 0, 1
    %s33 = smul.addr 1, 3
    %s34 = scalar_lea.vmem %s1, %s33
    %35 = vst [vmem:[%s34] sm:%s32] %v31
    %s36 = scalar_lea.vmem [#allocation0], 32
    %v37 = vld [vmem:[%s36] sm:%s14]
    %s38 = sshllo.u32 0, 1
    %s39 = smul.addr 1, 4
    %s40 = scalar_lea.vmem %s1, %s39
    %41 = vst [vmem:[%s40] sm:%s38] %v37
    %s42 = scalar_lea.vmem [#allocation0], 40
    %v43 = vld [vmem:[%s42] sm:%s14]
    %s44 = sshllo.u32 0, 1
    %s45 = smul.addr 1, 5
    %s46 = scalar_lea.vmem %s1, %s45
    %47 = vst [vmem:[%s46] sm:%s44] %v43
    %s48 = scalar_lea.vmem [#allocation0], 48
    %v49 = vld [vmem:[%s48] sm:%s14]
    %s50 = sshllo.u32 0, 1
    %s51 = smul.addr 1, 6
    %s52 = scalar_lea.vmem %s1, %s51
    %53 = vst [vmem:[%s52] sm:%s50] %v49
    %s54 = scalar_lea.vmem [#allocation0], 56
    %v55 = vld [vmem:[%s54] sm:%s14]
    %s56 = sshllo.u32 0, 1
    %s57 = smul.addr 1, 7
    %s58 = scalar_lea.vmem %s1, %s57
    %59 = vst [vmem:[%s58] sm:%s56] %v55

// kernel: _lambda_.27
$region0: #{_lambda_.27}
  #allocation0 [shape = 'u32[]', space=smem, size = 0x4, offset = 0x4, fixed_abs, tag = 'smem constant byte address 0x4 - core index']
  #allocation1 [shape = 'u32[144,128]{1,0:T(1,128)}', space=vmem, size = 0x12000, scoped, tag = 'internal scratch']
  %s0 = inlined_call_operand.vmem [shape: bf16[8,512], index: 0, kind: input, shape index: {}]
  %s1 = inlined_call_operand.vmem [shape: bf16[512,64], index: 1, kind: input, shape index: {}]
  %s2 = inlined_call_operand.vmem [shape: f32[1,64], index: 2, kind: input, shape index: {}]
  %s3 = inlined_call_operand.vmem [shape: f32[1,512], index: 3, kind: input, shape index: {}]
  %s4 = inlined_call_operand.vmem [shape: f32[1,512], index: 4, kind: input, shape index: {}]
  %s5 = inlined_call_operand.vmem [shape: bf16[8,64], index: 5, kind: output, shape index: {0}]
  %s6 = inlined_call_operand.vmem [shape: f32[1,64], index: 6, kind: output, shape index: {1}]
  %s7 = inlined_call_operand.vmem [shape: f32[1,64], index: 7, kind: output, shape index: {2}]
  %8 = xla_tuple %s5, %s6, %s7
  %s9 = sld [smem:[#allocation0]]
  $region46: #{_lambda_.27} parent=0
    _
  %s11 = ssub.s32 1, %s9
  %s12 = scalar_select 0, %s11, %s9
  // Predicated region
  $region2: #{_lambda_.27} parent=0 // pred_check
    _
  $region3: #{_lambda_.27} parent=0 // pred_check_branch
    %14 = sbr.rel (0) target = $region5
  $region4: #{_lambda_.27} parent=0 // pred_region
    _
  $region5: #{_lambda_.27} parent=0 // pred_fallthru
    _
  // Predicated region
  $region6: #{_lambda_.27} parent=0 // pred_check
    _
  $region7: #{_lambda_.27} parent=0 // pred_check_branch
    %16 = sbr.rel (0) target = $region9
  $region8: #{_lambda_.27} parent=0 // pred_region
    _
  $region9: #{_lambda_.27} parent=0 // pred_fallthru
    _
  // Predicated region
  $region10: #{_lambda_.27} parent=0 // pred_check
    _
  $region11: #{_lambda_.27} parent=0 // pred_check_branch
    %18 = sbr.rel (0) target = $region13
  $region12: #{_lambda_.27} parent=0 // pred_region
    _
  $region13: #{_lambda_.27} parent=0 // pred_fallthru
    _
  // Predicated region
  $region14: #{_lambda_.27} parent=0 // pred_check
    _
  $region15: #{_lambda_.27} parent=0 // pred_check_branch
    %20 = sbr.rel (0) target = $region17
  $region16: #{_lambda_.27} parent=0 // pred_region
    _
  $region17: #{_lambda_.27} parent=0 // pred_fallthru
    _
  // Predicated region
  $region18: #{_lambda_.27} parent=0 // pred_check
    _
  $region19: #{_lambda_.27} parent=0 // pred_check_branch
    %22 = sbr.rel (0) target = $region21
  $region20: #{_lambda_.27} parent=0 // pred_region
    _
  $region21: #{_lambda_.27} parent=0 // pred_fallthru
    _
  %v24 = vld [vmem:[%s0] sm:$0xff]
  %v25 = vld [vmem:[%s0 + $0x8] sm:$0xff]
  %v26 = vunpack.c.l.bf16 %v24
  %v27 = vunpack.c.h.bf16 %v24
  %v28 = vunpack.c.l.bf16 %v25
  %v29 = vunpack.c.h.bf16 %v25
  %v30 = vld [vmem:[%s4] sm:$0xf]
  %v32 = vlaneseq
  %v33 = vshrl.u32 %v32, 7
  %v34 = vsub.s32 0, %v33
  %v35 = vrot.slane %v30, %v34
  %v36 = vlaneseq
  %v37 = vshrl.u32 %v36, 7
  %v38 = vsub.s32 1, %v37
  %v39 = vrot.slane %v30, %v38
  %v40 = vlaneseq
  %v41 = vshrl.u32 %v40, 7
  %v42 = vsub.s32 2, %v41
  %v43 = vrot.slane %v30, %v42
  %v44 = vlaneseq
  %v45 = vshrl.u32 %v44, 7
  %v46 = vsub.s32 3, %v45
  %v47 = vrot.slane %v30, %v46
  %v52 = vsub.f32 %v26, %v35
  %v53 = vsub.f32 %v27, %v39
  %v54 = vsub.f32 %v28, %v43
  %v55 = vsub.f32 %v29, %v47
  %v56 = vld [vmem:[%s3] sm:$0xf]
  %v58 = vlaneseq
  %v59 = vshrl.u32 %v58, 7
  %v60 = vsub.s32 0, %v59
  %v61 = vrot.slane %v56, %v60
  %v62 = vlaneseq
  %v63 = vshrl.u32 %v62, 7
  %v64 = vsub.s32 1, %v63
  %v65 = vrot.slane %v56, %v64
  %v66 = vlaneseq
  %v67 = vshrl.u32 %v66, 7
  %v68 = vsub.s32 2, %v67
  %v69 = vrot.slane %v56, %v68
  %v70 = vlaneseq
  %v71 = vshrl.u32 %v70, 7
  %v72 = vsub.s32 3, %v71
  %v73 = vrot.slane %v56, %v72
  %v78 = vmul.f32 %v52, %v61
  %v79 = vmul.f32 %v53, %v65
  %v80 = vmul.f32 %v54, %v69
  %v81 = vmul.f32 %v55, %v73
  %vm82 = vcmp.ge.f32.partialorder %v78, 0.0
  %vm83 = vcmp.ge.f32.partialorder %v79, 0.0
  %vm84 = vcmp.ge.f32.partialorder %v80, 0.0
  %vm85 = vcmp.ge.f32.partialorder %v81, 0.0
  %v86 = vmul.f32 %v78, 0.2
  %v87 = vmul.f32 %v79, 0.2
  %v88 = vmul.f32 %v80, 0.2
  %v89 = vmul.f32 %v81, 0.2
  %v90 = vsel %vm82, %v78, %v86
  %v91 = vsel %vm83, %v79, %v87
  %v92 = vsel %vm84, %v80, %v88
  %v93 = vsel %vm85, %v81, %v89
  %v94 = vpack.c.bf16 %v90, %v90
  %v95 = vpack.c.bf16 %v91, %v91
  %v96 = vpack.c.bf16 %v92, %v92
  %v97 = vpack.c.bf16 %v93, %v93
  %v98 = vld [vmem:[%s1] sm:$0xf]
  %v99 = vld [vmem:[%s1 + $0x4] sm:$0xf]
  %v100 = vld [vmem:[%s1 + $0x8] sm:$0xf]
  %v101 = vld [vmem:[%s1 + $0xc] sm:$0xf]
  %v102 = vld [vmem:[%s1 + $0x10] sm:$0xf]
  %v103 = vld [vmem:[%s1 + $0x14] sm:$0xf]
  %v104 = vld [vmem:[%s1 + $0x18] sm:$0xf]
  %v105 = vld [vmem:[%s1 + $0x1c] sm:$0xf]
  %v106 = vld [vmem:[%s1 + $0x20] sm:$0xf]
  %v107 = vld [vmem:[%s1 + $0x24] sm:$0xf]
  %v108 = vld [vmem:[%s1 + $0x28] sm:$0xf]
  %v109 = vld [vmem:[%s1 + $0x2c] sm:$0xf]
  %v110 = vld [vmem:[%s1 + $0x30] sm:$0xf]
  %v111 = vld [vmem:[%s1 + $0x34] sm:$0xf]
  %v112 = vld [vmem:[%s1 + $0x38] sm:$0xf]
  %v113 = vld [vmem:[%s1 + $0x3c] sm:$0xf]
  %v114 = vld [vmem:[%s1 + $0x40] sm:$0xf]
  %v115 = vld [vmem:[%s1 + $0x44] sm:$0xf]
  %v116 = vld [vmem:[%s1 + $0x48] sm:$0xf]
  %v117 = vld [vmem:[%s1 + $0x4c] sm:$0xf]
  %v118 = vld [vmem:[%s1 + $0x50] sm:$0xf]
  %v119 = vld [vmem:[%s1 + $0x54] sm:$0xf]
  %v120 = vld [vmem:[%s1 + $0x58] sm:$0xf]
  %v121 = vld [vmem:[%s1 + $0x5c] sm:$0xf]
  %v122 = vld [vmem:[%s1 + $0x60] sm:$0xf]
  %v123 = vld [vmem:[%s1 + $0x64] sm:$0xf]
  %v124 = vld [vmem:[%s1 + $0x68] sm:$0xf]
  %v125 = vld [vmem:[%s1 + $0x6c] sm:$0xf]
  %v126 = vld [vmem:[%s1 + $0x70] sm:$0xf]
  %v127 = vld [vmem:[%s1 + $0x74] sm:$0xf]
  %v128 = vld [vmem:[%s1 + $0x78] sm:$0xf]
  %v129 = vld [vmem:[%s1 + $0x7c] sm:$0xf]
  %v130 = vld [vmem:[%s1 + $0x80] sm:$0xf]
  %v131 = vld [vmem:[%s1 + $0x84] sm:$0xf]
  %v132 = vld [vmem:[%s1 + $0x88] sm:$0xf]
  %v133 = vld [vmem:[%s1 + $0x8c] sm:$0xf]
  %v134 = vld [vmem:[%s1 + $0x90] sm:$0xf]
  %v135 = vld [vmem:[%s1 + $0x94] sm:$0xf]
  %v136 = vld [vmem:[%s1 + $0x98] sm:$0xf]
  %v137 = vld [vmem:[%s1 + $0x9c] sm:$0xf]
  %v138 = vld [vmem:[%s1 + $0xa0] sm:$0xf]
  %v139 = vld [vmem:[%s1 + $0xa4] sm:$0xf]
  %v140 = vld [vmem:[%s1 + $0xa8] sm:$0xf]
  %v141 = vld [vmem:[%s1 + $0xac] sm:$0xf]
  %v142 = vld [vmem:[%s1 + $0xb0] sm:$0xf]
  %v143 = vld [vmem:[%s1 + $0xb4] sm:$0xf]
  %v144 = vld [vmem:[%s1 + $0xb8] sm:$0xf]
  %v145 = vld [vmem:[%s1 + $0xbc] sm:$0xf]
  %v146 = vld [vmem:[%s1 + $0xc0] sm:$0xf]
  %v147 = vld [vmem:[%s1 + $0xc4] sm:$0xf]
  %v148 = vld [vmem:[%s1 + $0xc8] sm:$0xf]
  %v149 = vld [vmem:[%s1 + $0xcc] sm:$0xf]
  %v150 = vld [vmem:[%s1 + $0xd0] sm:$0xf]
  %v151 = vld [vmem:[%s1 + $0xd4] sm:$0xf]
  %v152 = vld [vmem:[%s1 + $0xd8] sm:$0xf]
  %v153 = vld [vmem:[%s1 + $0xdc] sm:$0xf]
  %v154 = vld [vmem:[%s1 + $0xe0] sm:$0xf]
  %v155 = vld [vmem:[%s1 + $0xe4] sm:$0xf]
  %v156 = vld [vmem:[%s1 + $0xe8] sm:$0xf]
  %v157 = vld [vmem:[%s1 + $0xec] sm:$0xf]
  %v158 = vld [vmem:[%s1 + $0xf0] sm:$0xf]
  %v159 = vld [vmem:[%s1 + $0xf4] sm:$0xf]
  %v160 = vld [vmem:[%s1 + $0xf8] sm:$0xf]
  %v161 = vld [vmem:[%s1 + $0xfc] sm:$0xf]
  %v162 = vld [vmem:[%s2] sm:$0x1]
  %v164 = vlaneseq
  %v165 = vshrl.u32 %v164, 7
  %v166 = vsub.s32 0, %v165
  %v167 = vrot.slane %v162, %v166
  %v233 = vunpack.c.l.b16 %v98
  %v234 = vunpack.c.l.b16 %v99
  %v235 = vunpack.c.l.b16 %v100
  %v236 = vunpack.c.l.b16 %v101
  %v237 = vunpack.c.l.b16 %v102
  %v238 = vunpack.c.l.b16 %v103
  %v239 = vunpack.c.l.b16 %v104
  %v240 = vunpack.c.l.b16 %v105
  %v241 = vunpack.c.l.b16 %v106
  %v242 = vunpack.c.l.b16 %v107
  %v243 = vunpack.c.l.b16 %v108
  %v244 = vunpack.c.l.b16 %v109
  %v245 = vunpack.c.l.b16 %v110
  %v246 = vunpack.c.l.b16 %v111
  %v247 = vunpack.c.l.b16 %v112
  %v248 = vunpack.c.l.b16 %v113
  %v249 = vunpack.c.l.b16 %v114
  %v250 = vunpack.c.l.b16 %v115
  %v251 = vunpack.c.l.b16 %v116
  %v252 = vunpack.c.l.b16 %v117
  %v253 = vunpack.c.l.b16 %v118
  %v254 = vunpack.c.l.b16 %v119
  %v255 = vunpack.c.l.b16 %v120
  %v256 = vunpack.c.l.b16 %v121
  %v257 = vunpack.c.l.b16 %v122
  %v258 = vunpack.c.l.b16 %v123
  %v259 = vunpack.c.l.b16 %v124
  %v260 = vunpack.c.l.b16 %v125
  %v261 = vunpack.c.l.b16 %v126
  %v262 = vunpack.c.l.b16 %v127
  %v263 = vunpack.c.l.b16 %v128
  %v264 = vunpack.c.l.b16 %v129
  %v265 = vunpack.c.l.b16 %v130
  %v266 = vunpack.c.l.b16 %v131
  %v267 = vunpack.c.l.b16 %v132
  %v268 = vunpack.c.l.b16 %v133
  %v269 = vunpack.c.l.b16 %v134
  %v270 = vunpack.c.l.b16 %v135
  %v271 = vunpack.c.l.b16 %v136
  %v272 = vunpack.c.l.b16 %v137
  %v273 = vunpack.c.l.b16 %v138
  %v274 = vunpack.c.l.b16 %v139
  %v275 = vunpack.c.l.b16 %v140
  %v276 = vunpack.c.l.b16 %v141
  %v277 = vunpack.c.l.b16 %v142
  %v278 = vunpack.c.l.b16 %v143
  %v279 = vunpack.c.l.b16 %v144
  %v280 = vunpack.c.l.b16 %v145
  %v281 = vunpack.c.l.b16 %v146
  %v282 = vunpack.c.l.b16 %v147
  %v283 = vunpack.c.l.b16 %v148
  %v284 = vunpack.c.l.b16 %v149
  %v285 = vunpack.c.l.b16 %v150
  %v286 = vunpack.c.l.b16 %v151
  %v287 = vunpack.c.l.b16 %v152
  %v288 = vunpack.c.l.b16 %v153
  %v289 = vunpack.c.l.b16 %v154
  %v290 = vunpack.c.l.b16 %v155
  %v291 = vunpack.c.l.b16 %v156
  %v292 = vunpack.c.l.b16 %v157
  %v293 = vunpack.c.l.b16 %v158
  %v294 = vunpack.c.l.b16 %v159
  %v295 = vunpack.c.l.b16 %v160
  %v296 = vunpack.c.l.b16 %v161
  %v297 = vpack.c.b16 %v234, %v233
  %v298 = vpack.c.b16 %v236, %v235
  %v299 = vpack.c.b16 %v238, %v237
  %v300 = vpack.c.b16 %v240, %v239
  %v301 = vpack.c.b16 %v242, %v241
  %v302 = vpack.c.b16 %v244, %v243
  %v303 = vpack.c.b16 %v246, %v245
  %v304 = vpack.c.b16 %v248, %v247
  %v305 = vpack.c.b16 %v250, %v249
  %v306 = vpack.c.b16 %v252, %v251
  %v307 = vpack.c.b16 %v254, %v253
  %v308 = vpack.c.b16 %v256, %v255
  %v309 = vpack.c.b16 %v258, %v257
  %v310 = vpack.c.b16 %v260, %v259
  %v311 = vpack.c.b16 %v262, %v261
  %v312 = vpack.c.b16 %v264, %v263
  %v313 = vpack.c.b16 %v266, %v265
  %v314 = vpack.c.b16 %v268, %v267
  %v315 = vpack.c.b16 %v270, %v269
  %v316 = vpack.c.b16 %v272, %v271
  %v317 = vpack.c.b16 %v274, %v273
  %v318 = vpack.c.b16 %v276, %v275
  %v319 = vpack.c.b16 %v278, %v277
  %v320 = vpack.c.b16 %v280, %v279
  %v321 = vpack.c.b16 %v282, %v281
  %v322 = vpack.c.b16 %v284, %v283
  %v323 = vpack.c.b16 %v286, %v285
  %v324 = vpack.c.b16 %v288, %v287
  %v325 = vpack.c.b16 %v290, %v289
  %v326 = vpack.c.b16 %v292, %v291
  %v327 = vpack.c.b16 %v294, %v293
  %v328 = vpack.c.b16 %v296, %v295
  %361 = vmatprep.subr.bf16.mxu0 0
  %362 = vmatpush1.bf16.msra.mxu0 %v297
  %363 = vmatprep.subr.bf16.mxu0 0
  %364 = vmatpush1.bf16.msra.mxu0 %v298
  %365 = vmatprep.subr.bf16.mxu0 0
  %366 = vmatpush1.bf16.msra.mxu0 %v299
  %367 = vmatprep.subr.bf16.mxu0 0
  %368 = vmatpush1.bf16.msra.mxu0 %v300
  %369 = vmatprep.subr.bf16.mxu0 0
  %370 = vmatpush1.bf16.msra.mxu0 %v301
  %371 = vmatprep.subr.bf16.mxu0 0
  %372 = vmatpush1.bf16.msra.mxu0 %v302
  %373 = vmatprep.subr.bf16.mxu0 0
  %374 = vmatpush1.bf16.msra.mxu0 %v303
  %375 = vmatprep.subr.bf16.mxu0 0
  %376 = vmatpush1.bf16.msra.mxu0 %v304
  %377 = vmatprep.subr.bf16.mxu0 0
  %378 = vmatpush1.bf16.msra.mxu0 %v305
  %379 = vmatprep.subr.bf16.mxu0 0
  %380 = vmatpush1.bf16.msra.mxu0 %v306
  %381 = vmatprep.subr.bf16.mxu0 0
  %382 = vmatpush1.bf16.msra.mxu0 %v307
  %383 = vmatprep.subr.bf16.mxu0 0
  %384 = vmatpush1.bf16.msra.mxu0 %v308
  %385 = vmatprep.subr.bf16.mxu0 0
  %386 = vmatpush1.bf16.msra.mxu0 %v309
  %387 = vmatprep.subr.bf16.mxu0 0
  %388 = vmatpush1.bf16.msra.mxu0 %v310
  %389 = vmatprep.subr.bf16.mxu0 0
  %390 = vmatpush1.bf16.msra.mxu0 %v311
  %391 = vmatprep.subr.bf16.mxu0 0
  %392 = vmatpush1.bf16.msra.mxu0 %v312
  %393 = vmatprep.mubr.bf16.mxu0 %v95
  %394 = vmatmul.mubr.bf16.gmra.mrb[0].mxu0 %v94
  %v395 = vpop.f32.mrb[0].mxu0
  %v396 = vadd.f32 %v167, %v395
  %v397 = vpop.f32.mrb[0].mxu0
  %v398 = vpop.f32.mrb[0].mxu0
  %v399 = vpop.f32.mrb[0].mxu0
  %400 = vdwg.mxu0
  %401 = vmatprep.subr.bf16.mxu0 0
  %402 = vmatpush1.bf16.msra.mxu0 %v313
  %403 = vmatprep.subr.bf16.mxu0 0
  %404 = vmatpush1.bf16.msra.mxu0 %v314
  %405 = vmatprep.subr.bf16.mxu0 0
  %406 = vmatpush1.bf16.msra.mxu0 %v315
  %407 = vmatprep.subr.bf16.mxu0 0
  %408 = vmatpush1.bf16.msra.mxu0 %v316
  %409 = vmatprep.subr.bf16.mxu0 0
  %410 = vmatpush1.bf16.msra.mxu0 %v317
  %411 = vmatprep.subr.bf16.mxu0 0
  %412 = vmatpush1.bf16.msra.mxu0 %v318
  %413 = vmatprep.subr.bf16.mxu0 0
  %414 = vmatpush1.bf16.msra.mxu0 %v319
  %415 = vmatprep.subr.bf16.mxu0 0
  %416 = vmatpush1.bf16.msra.mxu0 %v320
  %417 = vmatprep.subr.bf16.mxu0 0
  %418 = vmatpush1.bf16.msra.mxu0 %v321
  %419 = vmatprep.subr.bf16.mxu0 0
  %420 = vmatpush1.bf16.msra.mxu0 %v322
  %421 = vmatprep.subr.bf16.mxu0 0
  %422 = vmatpush1.bf16.msra.mxu0 %v323
  %423 = vmatprep.subr.bf16.mxu0 0
  %424 = vmatpush1.bf16.msra.mxu0 %v324
  %425 = vmatprep.subr.bf16.mxu0 0
  %426 = vmatpush1.bf16.msra.mxu0 %v325
  %427 = vmatprep.subr.bf16.mxu0 0
  %428 = vmatpush1.bf16.msra.mxu0 %v326
  %429 = vmatprep.subr.bf16.mxu0 0
  %430 = vmatpush1.bf16.msra.mxu0 %v327
  %431 = vmatprep.subr.bf16.mxu0 0
  %432 = vmatpush1.bf16.msra.mxu0 %v328
  %433 = vmatprep.mubr.bf16.mxu0 %v97
  %434 = vmatmul.mubr.bf16.gmra.mrb[0].mxu0 %v96
  %v435 = vpop.f32.mrb[0].mxu0
  %v436 = vadd.f32 %v396, %v435
  %v437 = vpop.f32.mrb[0].mxu0
  %v438 = vpop.f32.mrb[0].mxu0
  %v439 = vpop.f32.mrb[0].mxu0
  %440 = vdwg.mxu0
  %v441 = vpack.c.bf16 %v436, %v436
  %vm442 = vcmask 519168
  %443 = vst.msk [vmem:[%s5] sm:$0xf] %vm442, %v441
  %vm444 = vcmask 523264
  %v445 = vsel %vm444, %v436, 0.0
  %v446 = vrot.slane %v445, 4
  %v447 = vadd.f32 %v445, %v446
  %v448 = vrot.slane %v447, 2
  %v449 = vadd.f32 %v447, %v448
  %v450 = vrot.slane %v449, 1
  %v451 = vadd.f32 %v449, %v450
  %vm452 = vcmask 516096
  %453 = vst.msk [vmem:[%s6] sm:$0x1] %vm452, %v451
  %v454 = vmul.f32 %v436, %v436
  %v455 = vsel %vm444, %v454, 0.0
  %v456 = vrot.slane %v455, 4
  %v457 = vadd.f32 %v455, %v456
  %v458 = vrot.slane %v457, 2
  %v459 = vadd.f32 %v457, %v458
  %v460 = vrot.slane %v459, 1
  %v461 = vadd.f32 %v459, %v460
  %462 = vst.msk [vmem:[%s7] sm:$0x1] %vm452, %v461
  // Predicated region
  $region22: #{_lambda_.27} parent=0 // pred_check
    _
  $region23: #{_lambda_.27} parent=0 // pred_check_branch
    %464 = sbr.rel (0) target = $region25
  $region24: #{_lambda_.27} parent=0 // pred_region
    _
  $region25: #{_lambda_.27} parent=0 // pred_fallthru
    _
  // Predicated region
  $region26: #{_lambda_.27} parent=0 // pred_check
    _
  $region27: #{_lambda_.27} parent=0 // pred_check_branch
    %466 = sbr.rel (0) target = $region29
  $region28: #{_lambda_.27} parent=0 // pred_region
    _
  $region29: #{_lambda_.27} parent=0 // pred_fallthru
    _
  // Predicated region
  $region30: #{_lambda_.27} parent=0 // pred_check
    _
  $region31: #{_lambda_.27} parent=0 // pred_check_branch
    %468 = sbr.rel (0) target = $region33
  $region32: #{_lambda_.27} parent=0 // pred_region
    _
  $region33: #{_lambda_.27} parent=0 // pred_fallthru
    _
  // Predicated region
  $region34: #{_lambda_.27} parent=0 // pred_check
    _
  $region35: #{_lambda_.27} parent=0 // pred_check_branch
    %470 = sbr.rel (0) target = $region37
  $region36: #{_lambda_.27} parent=0 // pred_region
    _
  $region37: #{_lambda_.27} parent=0 // pred_fallthru
    _
  // Predicated region
  $region38: #{_lambda_.27} parent=0 // pred_check
    _
  $region39: #{_lambda_.27} parent=0 // pred_check_branch
    %472 = sbr.rel (0) target = $region41
  $region40: #{_lambda_.27} parent=0 // pred_region
    _
  $region41: #{_lambda_.27} parent=0 // pred_fallthru
    _
  // Predicated region
  $region42: #{_lambda_.27} parent=0 // pred_check
    _
  $region43: #{_lambda_.27} parent=0 // pred_check_branch
    %474 = sbr.rel (0) target = $region45
  $region44: #{_lambda_.27} parent=0 // pred_region
    _
  $region45: #{_lambda_.27} parent=0 // pred_fallthru
    _

// kernel: tile.173
$region0: #{tile.173}
  #allocation0 [shape = 's32[1]{0}', space=sflag, size = 0x4, scoped, tag = 'scoped memory for tile.173']
  %s0 = inlined_call_operand.vmem [shape: f32[128], index: 0, kind: input, shape index: {}]
  %s1 = inlined_call_operand.vmem [shape: f32[16,128], index: 1, kind: output, shape index: {}]
  // Predicated region
  $region2: #{tile.173} parent=0 // pred_check
    _
  $region3: #{tile.173} parent=0 // pred_check_branch
    %3 = sbr.rel (0) target = $region5
  $region4: #{tile.173} parent=0 // pred_region
    _
  $region5: #{tile.173} parent=0 // pred_fallthru
    _
  %v4 = vld [vmem:[%s0] ss:$0 sm:$0xff]
  %5 = vst [vmem:[%s1] sm:$0xff] %v4
  %s6 = scalar_lea.vmem %s1, 8
  %7 = vst [vmem:[%s6] sm:$0xff] %v4

// kernel: _lambda_.28
$region0: #{_lambda_.28}
  #allocation0 [shape = 'u32[]', space=smem, size = 0x4, offset = 0x4, fixed_abs, tag = 'smem constant byte address 0x4 - core index']
  #allocation1 [shape = 'u32[144,128]{1,0:T(1,128)}', space=vmem, size = 0x12000, scoped, tag = 'internal scratch']
  %s0 = inlined_call_operand.vmem [shape: bf16[18,1024], index: 0, kind: input, shape index: {}]
  %s1 = inlined_call_operand.vmem [shape: bf16[1024,128], index: 1, kind: input, shape index: {}]
  %s2 = inlined_call_operand.vmem [shape: f32[1,128], index: 2, kind: input, shape index: {}]
  %s3 = inlined_call_operand.vmem [shape: f32[1,1024], index: 3, kind: input, shape index: {}]
  %s4 = inlined_call_operand.vmem [shape: f32[1,1024], index: 4, kind: input, shape index: {}]
  %s5 = inlined_call_operand.vmem [shape: bf16[18,128], index: 5, kind: output, shape index: {0}]
  %s6 = inlined_call_operand.vmem [shape: f32[1,128], index: 6, kind: output, shape index: {1}]
  %s7 = inlined_call_operand.vmem [shape: f32[1,128], index: 7, kind: output, shape index: {2}]
  %8 = xla_tuple %s5, %s6, %s7
  %s9 = sld [smem:[#allocation0]]
  $region46: #{_lambda_.28} parent=0
    _
  %s11 = ssub.s32 1, %s9
  %s12 = scalar_select 0, %s11, %s9
  // Predicated region
  $region2: #{_lambda_.28} parent=0 // pred_check
    _
  $region3: #{_lambda_.28} parent=0 // pred_check_branch
    %14 = sbr.rel (0) target = $region5
  $region4: #{_lambda_.28} parent=0 // pred_region
    _
  $region5: #{_lambda_.28} parent=0 // pred_fallthru
    _
  // Predicated region
  $region6: #{_lambda_.28} parent=0 // pred_check
    _
  $region7: #{_lambda_.28} parent=0 // pred_check_branch
    %16 = sbr.rel (0) target = $region9
  $region8: #{_lambda_.28} parent=0 // pred_region
    _
  $region9: #{_lambda_.28} parent=0 // pred_fallthru
    _
  // Predicated region
  $region10: #{_lambda_.28} parent=0 // pred_check
    _
  $region11: #{_lambda_.28} parent=0 // pred_check_branch
    %18 = sbr.rel (0) target = $region13
  $region12: #{_lambda_.28} parent=0 // pred_region
    _
  $region13: #{_lambda_.28} parent=0 // pred_fallthru
    _
  // Predicated region
  $region14: #{_lambda_.28} parent=0 // pred_check
    _
  $region15: #{_lambda_.28} parent=0 // pred_check_branch
    %20 = sbr.rel (0) target = $region17
  $region16: #{_lambda_.28} parent=0 // pred_region
    _
  $region17: #{_lambda_.28} parent=0 // pred_fallthru
    _
  // Predicated region
  $region18: #{_lambda_.28} parent=0 // pred_check
    _
  $region19: #{_lambda_.28} parent=0 // pred_check_branch
    %22 = sbr.rel (0) target = $region21
  $region20: #{_lambda_.28} parent=0 // pred_region
    _
  $region21: #{_lambda_.28} parent=0 // pred_fallthru
    _
  %v24 = vld [vmem:[%s0] sm:$0xff]
  %v25 = vld [vmem:[%s0 + $0x8] sm:$0xff]
  %v26 = vld [vmem:[%s0 + $0x10] sm:$0xff]
  %v27 = vld [vmem:[%s0 + $0x18] sm:$0xff]
  %v28 = vld [vmem:[%s0 + $0x20] sm:$0xff]
  %v29 = vld [vmem:[%s0 + $0x28] sm:$0xff]
  %v30 = vld [vmem:[%s0 + $0x30] sm:$0xff]
  %v31 = vld [vmem:[%s0 + $0x38] sm:$0xff]
  %v32 = vld [vmem:[%s0 + $0x40] sm:$0x11]
  %v33 = vld [vmem:[%s0 + $0x48] sm:$0x11]
  %v34 = vld [vmem:[%s0 + $0x50] sm:$0x11]
  %v35 = vld [vmem:[%s0 + $0x58] sm:$0x11]
  %v36 = vunpack.c.l.bf16 %v24
  %v37 = vunpack.c.h.bf16 %v24
  %v38 = vunpack.c.l.bf16 %v25
  %v39 = vunpack.c.h.bf16 %v25
  %v40 = vunpack.c.l.bf16 %v26
  %v41 = vunpack.c.h.bf16 %v26
  %v42 = vunpack.c.l.bf16 %v27
  %v43 = vunpack.c.h.bf16 %v27
  %v44 = vunpack.c.l.bf16 %v28
  %v45 = vunpack.c.h.bf16 %v28
  %v46 = vunpack.c.l.bf16 %v29
  %v47 = vunpack.c.h.bf16 %v29
  %v48 = vunpack.c.l.bf16 %v30
  %v49 = vunpack.c.h.bf16 %v30
  %v50 = vunpack.c.l.bf16 %v31
  %v51 = vunpack.c.h.bf16 %v31
  %v52 = vunpack.c.l.bf16 %v32
  %v53 = vunpack.c.h.bf16 %v32
  %v54 = vunpack.c.l.bf16 %v33
  %v55 = vunpack.c.h.bf16 %v33
  %v56 = vunpack.c.l.bf16 %v34
  %v57 = vunpack.c.h.bf16 %v34
  %v58 = vunpack.c.l.bf16 %v35
  %v59 = vunpack.c.h.bf16 %v35
  %v60 = vld [vmem:[%s4] sm:$0xff]
  %v62 = vlaneseq
  %v63 = vshrl.u32 %v62, 7
  %v64 = vsub.s32 0, %v63
  %v65 = vrot.slane %v60, %v64
  %v66 = vlaneseq
  %v67 = vshrl.u32 %v66, 7
  %v68 = vsub.s32 1, %v67
  %v69 = vrot.slane %v60, %v68
  %v70 = vlaneseq
  %v71 = vshrl.u32 %v70, 7
  %v72 = vsub.s32 2, %v71
  %v73 = vrot.slane %v60, %v72
  %v74 = vlaneseq
  %v75 = vshrl.u32 %v74, 7
  %v76 = vsub.s32 3, %v75
  %v77 = vrot.slane %v60, %v76
  %v78 = vlaneseq
  %v79 = vshrl.u32 %v78, 7
  %v80 = vsub.s32 4, %v79
  %v81 = vrot.slane %v60, %v80
  %v82 = vlaneseq
  %v83 = vshrl.u32 %v82, 7
  %v84 = vsub.s32 5, %v83
  %v85 = vrot.slane %v60, %v84
  %v86 = vlaneseq
  %v87 = vshrl.u32 %v86, 7
  %v88 = vsub.s32 6, %v87
  %v89 = vrot.slane %v60, %v88
  %v90 = vlaneseq
  %v91 = vshrl.u32 %v90, 7
  %v92 = vsub.s32 7, %v91
  %v93 = vrot.slane %v60, %v92
  %v102 = vsub.f32 %v36, %v65
  %v103 = vsub.f32 %v37, %v69
  %v104 = vsub.f32 %v38, %v73
  %v105 = vsub.f32 %v39, %v77
  %v106 = vsub.f32 %v40, %v81
  %v107 = vsub.f32 %v41, %v85
  %v108 = vsub.f32 %v42, %v89
  %v109 = vsub.f32 %v43, %v93
  %v110 = vsub.f32 %v44, %v65
  %v111 = vsub.f32 %v45, %v69
  %v112 = vsub.f32 %v46, %v73
  %v113 = vsub.f32 %v47, %v77
  %v114 = vsub.f32 %v48, %v81
  %v115 = vsub.f32 %v49, %v85
  %v116 = vsub.f32 %v50, %v89
  %v117 = vsub.f32 %v51, %v93
  %v118 = vsub.f32 %v52, %v65
  %v119 = vsub.f32 %v53, %v69
  %v120 = vsub.f32 %v54, %v73
  %v121 = vsub.f32 %v55, %v77
  %v122 = vsub.f32 %v56, %v81
  %v123 = vsub.f32 %v57, %v85
  %v124 = vsub.f32 %v58, %v89
  %v125 = vsub.f32 %v59, %v93
  %v126 = vld [vmem:[%s3] sm:$0xff]
  %v128 = vlaneseq
  %v129 = vshrl.u32 %v128, 7
  %v130 = vsub.s32 0, %v129
  %v131 = vrot.slane %v126, %v130
  %v132 = vlaneseq
  %v133 = vshrl.u32 %v132, 7
  %v134 = vsub.s32 1, %v133
  %v135 = vrot.slane %v126, %v134
  %v136 = vlaneseq
  %v137 = vshrl.u32 %v136, 7
  %v138 = vsub.s32 2, %v137
  %v139 = vrot.slane %v126, %v138
  %v140 = vlaneseq
  %v141 = vshrl.u32 %v140, 7
  %v142 = vsub.s32 3, %v141
  %v143 = vrot.slane %v126, %v142
  %v144 = vlaneseq
  %v145 = vshrl.u32 %v144, 7
  %v146 = vsub.s32 4, %v145
  %v147 = vrot.slane %v126, %v146
  %v148 = vlaneseq
  %v149 = vshrl.u32 %v148, 7
  %v150 = vsub.s32 5, %v149
  %v151 = vrot.slane %v126, %v150
  %v152 = vlaneseq
  %v153 = vshrl.u32 %v152, 7
  %v154 = vsub.s32 6, %v153
  %v155 = vrot.slane %v126, %v154
  %v156 = vlaneseq
  %v157 = vshrl.u32 %v156, 7
  %v158 = vsub.s32 7, %v157
  %v159 = vrot.slane %v126, %v158
  %v168 = vmul.f32 %v102, %v131
  %v169 = vmul.f32 %v103, %v135
  %v170 = vmul.f32 %v104, %v139
  %v171 = vmul.f32 %v105, %v143
  %v172 = vmul.f32 %v106, %v147
  %v173 = vmul.f32 %v107, %v151
  %v174 = vmul.f32 %v108, %v155
  %v175 = vmul.f32 %v109, %v159
  %v176 = vmul.f32 %v110, %v131
  %v177 = vmul.f32 %v111, %v135
  %v178 = vmul.f32 %v112, %v139
  %v179 = vmul.f32 %v113, %v143
  %v180 = vmul.f32 %v114, %v147
  %v181 = vmul.f32 %v115, %v151
  %v182 = vmul.f32 %v116, %v155
  %v183 = vmul.f32 %v117, %v159
  %v184 = vmul.f32 %v118, %v131
  %v185 = vmul.f32 %v119, %v135
  %v186 = vmul.f32 %v120, %v139
  %v187 = vmul.f32 %v121, %v143
  %v188 = vmul.f32 %v122, %v147
  %v189 = vmul.f32 %v123, %v151
  %v190 = vmul.f32 %v124, %v155
  %v191 = vmul.f32 %v125, %v159
  %vm192 = vcmp.ge.f32.partialorder %v168, 0.0
  %vm193 = vcmp.ge.f32.partialorder %v169, 0.0
  %vm194 = vcmp.ge.f32.partialorder %v170, 0.0
  %vm195 = vcmp.ge.f32.partialorder %v171, 0.0
  %vm196 = vcmp.ge.f32.partialorder %v172, 0.0
  %vm197 = vcmp.ge.f32.partialorder %v173, 0.0
  %vm198 = vcmp.ge.f32.partialorder %v174, 0.0
  %vm199 = vcmp.ge.f32.partialorder %v175, 0.0
  %vm200 = vcmp.ge.f32.partialorder %v176, 0.0
  %vm201 = vcmp.ge.f32.partialorder %v177, 0.0
  %vm202 = vcmp.ge.f32.partialorder %v178, 0.0
  %vm203 = vcmp.ge.f32.partialorder %v179, 0.0
  %vm204 = vcmp.ge.f32.partialorder %v180, 0.0
  %vm205 = vcmp.ge.f32.partialorder %v181, 0.0
  %vm206 = vcmp.ge.f32.partialorder %v182, 0.0
  %vm207 = vcmp.ge.f32.partialorder %v183, 0.0
  %vm208 = vcmp.ge.f32.partialorder %v184, 0.0
  %vm209 = vcmp.ge.f32.partialorder %v185, 0.0
  %vm210 = vcmp.ge.f32.partialorder %v186, 0.0
  %vm211 = vcmp.ge.f32.partialorder %v187, 0.0
  %vm212 = vcmp.ge.f32.partialorder %v188, 0.0
  %vm213 = vcmp.ge.f32.partialorder %v189, 0.0
  %vm214 = vcmp.ge.f32.partialorder %v190, 0.0
  %vm215 = vcmp.ge.f32.partialorder %v191, 0.0
  %v216 = vmul.f32 %v168, 0.2
  %v217 = vmul.f32 %v169, 0.2
  %v218 = vmul.f32 %v170, 0.2
  %v219 = vmul.f32 %v171, 0.2
  %v220 = vmul.f32 %v172, 0.2
  %v221 = vmul.f32 %v173, 0.2
  %v222 = vmul.f32 %v174, 0.2
  %v223 = vmul.f32 %v175, 0.2
  %v224 = vmul.f32 %v176, 0.2
  %v225 = vmul.f32 %v177, 0.2
  %v226 = vmul.f32 %v178, 0.2
  %v227 = vmul.f32 %v179, 0.2
  %v228 = vmul.f32 %v180, 0.2
  %v229 = vmul.f32 %v181, 0.2
  %v230 = vmul.f32 %v182, 0.2
  %v231 = vmul.f32 %v183, 0.2
  %v232 = vmul.f32 %v184, 0.2
  %v233 = vmul.f32 %v185, 0.2
  %v234 = vmul.f32 %v186, 0.2
  %v235 = vmul.f32 %v187, 0.2
  %v236 = vmul.f32 %v188, 0.2
  %v237 = vmul.f32 %v189, 0.2
  %v238 = vmul.f32 %v190, 0.2
  %v239 = vmul.f32 %v191, 0.2
  %v240 = vsel %vm192, %v168, %v216
  %v241 = vsel %vm193, %v169, %v217
  %v242 = vsel %vm194, %v170, %v218
  %v243 = vsel %vm195, %v171, %v219
  %v244 = vsel %vm196, %v172, %v220
  %v245 = vsel %vm197, %v173, %v221
  %v246 = vsel %vm198, %v174, %v222
  %v247 = vsel %vm199, %v175, %v223
  %v248 = vsel %vm200, %v176, %v224
  %v249 = vsel %vm201, %v177, %v225
  %v250 = vsel %vm202, %v178, %v226
  %v251 = vsel %vm203, %v179, %v227
  %v252 = vsel %vm204, %v180, %v228
  %v253 = vsel %vm205, %v181, %v229
  %v254 = vsel %vm206, %v182, %v230
  %v255 = vsel %vm207, %v183, %v231
  %v256 = vsel %vm208, %v184, %v232
  %v257 = vsel %vm209, %v185, %v233
  %v258 = vsel %vm210, %v186, %v234
  %v259 = vsel %vm211, %v187, %v235
  %v260 = vsel %vm212, %v188, %v236
  %v261 = vsel %vm213, %v189, %v237
  %v262 = vsel %vm214, %v190, %v238
  %v263 = vsel %vm215, %v191, %v239
  %v264 = vpack.c.bf16 %v248, %v240
  %v265 = vpack.c.bf16 %v249, %v241
  %v266 = vpack.c.bf16 %v250, %v242
  %v267 = vpack.c.bf16 %v251, %v243
  %v268 = vpack.c.bf16 %v252, %v244
  %v269 = vpack.c.bf16 %v253, %v245
  %v270 = vpack.c.bf16 %v254, %v246
  %v271 = vpack.c.bf16 %v255, %v247
  %v272 = vpack.c.bf16 %v256, %v256
  %v273 = vpack.c.bf16 %v257, %v257
  %v274 = vpack.c.bf16 %v258, %v258
  %v275 = vpack.c.bf16 %v259, %v259
  %v276 = vpack.c.bf16 %v260, %v260
  %v277 = vpack.c.bf16 %v261, %v261
  %v278 = vpack.c.bf16 %v262, %v262
  %v279 = vpack.c.bf16 %v263, %v263
  %v280 = vld [vmem:[%s1] sm:$0xf]
  %v281 = vld [vmem:[%s1 + $0x4] sm:$0xf]
  %v282 = vld [vmem:[%s1 + $0x8] sm:$0xf]
  %v283 = vld [vmem:[%s1 + $0xc] sm:$0xf]
  %v284 = vld [vmem:[%s1 + $0x10] sm:$0xf]
  %v285 = vld [vmem:[%s1 + $0x14] sm:$0xf]
  %v286 = vld [vmem:[%s1 + $0x18] sm:$0xf]
  %v287 = vld [vmem:[%s1 + $0x1c] sm:$0xf]
  %v288 = vld [vmem:[%s1 + $0x20] sm:$0xf]
  %v289 = vld [vmem:[%s1 + $0x24] sm:$0xf]
  %v290 = vld [vmem:[%s1 + $0x28] sm:$0xf]
  %v291 = vld [vmem:[%s1 + $0x2c] sm:$0xf]
  %v292 = vld [vmem:[%s1 + $0x30] sm:$0xf]
  %v293 = vld [vmem:[%s1 + $0x34] sm:$0xf]
  %v294 = vld [vmem:[%s1 + $0x38] sm:$0xf]
  %v295 = vld [vmem:[%s1 + $0x3c] sm:$0xf]
  %v296 = vld [vmem:[%s1 + $0x40] sm:$0xf]
  %v297 = vld [vmem:[%s1 + $0x44] sm:$0xf]
  %v298 = vld [vmem:[%s1 + $0x48] sm:$0xf]
  %v299 = vld [vmem:[%s1 + $0x4c] sm:$0xf]
  %v300 = vld [vmem:[%s1 + $0x50] sm:$0xf]
  %v301 = vld [vmem:[%s1 + $0x54] sm:$0xf]
  %v302 = vld [vmem:[%s1 + $0x58] sm:$0xf]
  %v303 = vld [vmem:[%s1 + $0x5c] sm:$0xf]
  %v304 = vld [vmem:[%s1 + $0x60] sm:$0xf]
  %v305 = vld [vmem:[%s1 + $0x64] sm:$0xf]
  %v306 = vld [vmem:[%s1 + $0x68] sm:$0xf]
  %v307 = vld [vmem:[%s1 + $0x6c] sm:$0xf]
  %v308 = vld [vmem:[%s1 + $0x70] sm:$0xf]
  %v309 = vld [vmem:[%s1 + $0x74] sm:$0xf]
  %v310 = vld [vmem:[%s1 + $0x78] sm:$0xf]
  %v311 = vld [vmem:[%s1 + $0x7c] sm:$0xf]
  %v312 = vld [vmem:[%s1 + $0x80] sm:$0xf]
  %v313 = vld [vmem:[%s1 + $0x84] sm:$0xf]
  %v314 = vld [vmem:[%s1 + $0x88] sm:$0xf]
  %v315 = vld [vmem:[%s1 + $0x8c] sm:$0xf]
  %v316 = vld [vmem:[%s1 + $0x90] sm:$0xf]
  %v317 = vld [vmem:[%s1 + $0x94] sm:$0xf]
  %v318 = vld [vmem:[%s1 + $0x98] sm:$0xf]
  %v319 = vld [vmem:[%s1 + $0x9c] sm:$0xf]
  %v320 = vld [vmem:[%s1 + $0xa0] sm:$0xf]
  %v321 = vld [vmem:[%s1 + $0xa4] sm:$0xf]
  %v322 = vld [vmem:[%s1 + $0xa8] sm:$0xf]
  %v323 = vld [vmem:[%s1 + $0xac] sm:$0xf]
  %v324 = vld [vmem:[%s1 + $0xb0] sm:$0xf]
  %v325 = vld [vmem:[%s1 + $0xb4] sm:$0xf]
  %v326 = vld [vmem:[%s1 + $0xb8] sm:$0xf]
  %v327 = vld [vmem:[%s1 + $0xbc] sm:$0xf]
  %v328 = vld [vmem:[%s1 + $0xc0] sm:$0xf]
  %v329 = vld [vmem:[%s1 + $0xc4] sm:$0xf]
  %v330 = vld [vmem:[%s1 + $0xc8] sm:$0xf]
  %v331 = vld [vmem:[%s1 + $0xcc] sm:$0xf]
  %v332 = vld [vmem:[%s1 + $0xd0] sm:$0xf]
  %v333 = vld [vmem:[%s1 + $0xd4] sm:$0xf]
  %v334 = vld [vmem:[%s1 + $0xd8] sm:$0xf]
  %v335 = vld [vmem:[%s1 + $0xdc] sm:$0xf]
  %v336 = vld [vmem:[%s1 + $0xe0] sm:$0xf]
  %v337 = vld [vmem:[%s1 + $0xe4] sm:$0xf]
  %v338 = vld [vmem:[%s1 + $0xe8] sm:$0xf]
  %v339 = vld [vmem:[%s1 + $0xec] sm:$0xf]
  %v340 = vld [vmem:[%s1 + $0xf0] sm:$0xf]
  %v341 = vld [vmem:[%s1 + $0xf4] sm:$0xf]
  %v342 = vld [vmem:[%s1 + $0xf8] sm:$0xf]
  %v343 = vld [vmem:[%s1 + $0xfc] sm:$0xf]
  %v344 = vld [vmem:[%s1 + $0x100] sm:$0xf]
  %v345 = vld [vmem:[%s1 + $0x104] sm:$0xf]
  %v346 = vld [vmem:[%s1 + $0x108] sm:$0xf]
  %v347 = vld [vmem:[%s1 + $0x10c] sm:$0xf]
  %v348 = vld [vmem:[%s1 + $0x110] sm:$0xf]
  %v349 = vld [vmem:[%s1 + $0x114] sm:$0xf]
  %v350 = vld [vmem:[%s1 + $0x118] sm:$0xf]
  %v351 = vld [vmem:[%s1 + $0x11c] sm:$0xf]
  %v352 = vld [vmem:[%s1 + $0x120] sm:$0xf]
  %v353 = vld [vmem:[%s1 + $0x124] sm:$0xf]
  %v354 = vld [vmem:[%s1 + $0x128] sm:$0xf]
  %v355 = vld [vmem:[%s1 + $0x12c] sm:$0xf]
  %v356 = vld [vmem:[%s1 + $0x130] sm:$0xf]
  %v357 = vld [vmem:[%s1 + $0x134] sm:$0xf]
  %v358 = vld [vmem:[%s1 + $0x138] sm:$0xf]
  %v359 = vld [vmem:[%s1 + $0x13c] sm:$0xf]
  %v360 = vld [vmem:[%s1 + $0x140] sm:$0xf]
  %v361 = vld [vmem:[%s1 + $0x144] sm:$0xf]
  %v362 = vld [vmem:[%s1 + $0x148] sm:$0xf]
  %v363 = vld [vmem:[%s1 + $0x14c] sm:$0xf]
  %v364 = vld [vmem:[%s1 + $0x150] sm:$0xf]
  %v365 = vld [vmem:[%s1 + $0x154] sm:$0xf]
  %v366 = vld [vmem:[%s1 + $0x158] sm:$0xf]
  %v367 = vld [vmem:[%s1 + $0x15c] sm:$0xf]
  %v368 = vld [vmem:[%s1 + $0x160] sm:$0xf]
  %v369 = vld [vmem:[%s1 + $0x164] sm:$0xf]
  %v370 = vld [vmem:[%s1 + $0x168] sm:$0xf]
  %v371 = vld [vmem:[%s1 + $0x16c] sm:$0xf]
  %v372 = vld [vmem:[%s1 + $0x170] sm:$0xf]
  %v373 = vld [vmem:[%s1 + $0x174] sm:$0xf]
  %v374 = vld [vmem:[%s1 + $0x178] sm:$0xf]
  %v375 = vld [vmem:[%s1 + $0x17c] sm:$0xf]
  %v376 = vld [vmem:[%s1 + $0x180] sm:$0xf]
  %v377 = vld [vmem:[%s1 + $0x184] sm:$0xf]
  %v378 = vld [vmem:[%s1 + $0x188] sm:$0xf]
  %v379 = vld [vmem:[%s1 + $0x18c] sm:$0xf]
  %v380 = vld [vmem:[%s1 + $0x190] sm:$0xf]
  %v381 = vld [vmem:[%s1 + $0x194] sm:$0xf]
  %v382 = vld [vmem:[%s1 + $0x198] sm:$0xf]
  %v383 = vld [vmem:[%s1 + $0x19c] sm:$0xf]
  %v384 = vld [vmem:[%s1 + $0x1a0] sm:$0xf]
  %v385 = vld [vmem:[%s1 + $0x1a4] sm:$0xf]
  %v386 = vld [vmem:[%s1 + $0x1a8] sm:$0xf]
  %v387 = vld [vmem:[%s1 + $0x1ac] sm:$0xf]
  %v388 = vld [vmem:[%s1 + $0x1b0] sm:$0xf]
  %v389 = vld [vmem:[%s1 + $0x1b4] sm:$0xf]
  %v390 = vld [vmem:[%s1 + $0x1b8] sm:$0xf]
  %v391 = vld [vmem:[%s1 + $0x1bc] sm:$0xf]
  %v392 = vld [vmem:[%s1 + $0x1c0] sm:$0xf]
  %v393 = vld [vmem:[%s1 + $0x1c4] sm:$0xf]
  %v394 = vld [vmem:[%s1 + $0x1c8] sm:$0xf]
  %v395 = vld [vmem:[%s1 + $0x1cc] sm:$0xf]
  %v396 = vld [vmem:[%s1 + $0x1d0] sm:$0xf]
  %v397 = vld [vmem:[%s1 + $0x1d4] sm:$0xf]
  %v398 = vld [vmem:[%s1 + $0x1d8] sm:$0xf]
  %v399 = vld [vmem:[%s1 + $0x1dc] sm:$0xf]
  %v400 = vld [vmem:[%s1 + $0x1e0] sm:$0xf]
  %v401 = vld [vmem:[%s1 + $0x1e4] sm:$0xf]
  %v402 = vld [vmem:[%s1 + $0x1e8] sm:$0xf]
  %v403 = vld [vmem:[%s1 + $0x1ec] sm:$0xf]
  %v404 = vld [vmem:[%s1 + $0x1f0] sm:$0xf]
  %v405 = vld [vmem:[%s1 + $0x1f4] sm:$0xf]
  %v406 = vld [vmem:[%s1 + $0x1f8] sm:$0xf]
  %v407 = vld [vmem:[%s1 + $0x1fc] sm:$0xf]
  %v408 = vld [vmem:[%s2] sm:$0x1]
  %v410 = vlaneseq
  %v411 = vshrl.u32 %v410, 7
  %v412 = vsub.s32 0, %v411
  %v413 = vrot.slane %v408, %v412
  %v543 = vunpack.c.l.b16 %v280
  %v544 = vunpack.c.l.b16 %v281
  %v545 = vunpack.c.l.b16 %v282
  %v546 = vunpack.c.l.b16 %v283
  %v547 = vunpack.c.l.b16 %v284
  %v548 = vunpack.c.l.b16 %v285
  %v549 = vunpack.c.l.b16 %v286
  %v550 = vunpack.c.l.b16 %v287
  %v551 = vunpack.c.l.b16 %v288
  %v552 = vunpack.c.l.b16 %v289
  %v553 = vunpack.c.l.b16 %v290
  %v554 = vunpack.c.l.b16 %v291
  %v555 = vunpack.c.l.b16 %v292
  %v556 = vunpack.c.l.b16 %v293
  %v557 = vunpack.c.l.b16 %v294
  %v558 = vunpack.c.l.b16 %v295
  %v559 = vunpack.c.l.b16 %v296
  %v560 = vunpack.c.l.b16 %v297
  %v561 = vunpack.c.l.b16 %v298
  %v562 = vunpack.c.l.b16 %v299
  %v563 = vunpack.c.l.b16 %v300
  %v564 = vunpack.c.l.b16 %v301
  %v565 = vunpack.c.l.b16 %v302
  %v566 = vunpack.c.l.b16 %v303
  %v567 = vunpack.c.l.b16 %v304
  %v568 = vunpack.c.l.b16 %v305
  %v569 = vunpack.c.l.b16 %v306
  %v570 = vunpack.c.l.b16 %v307
  %v571 = vunpack.c.l.b16 %v308
  %v572 = vunpack.c.l.b16 %v309
  %v573 = vunpack.c.l.b16 %v310
  %v574 = vunpack.c.l.b16 %v311
  %v575 = vunpack.c.l.b16 %v312
  %v576 = vunpack.c.l.b16 %v313
  %v577 = vunpack.c.l.b16 %v314
  %v578 = vunpack.c.l.b16 %v315
  %v579 = vunpack.c.l.b16 %v316
  %v580 = vunpack.c.l.b16 %v317
  %v581 = vunpack.c.l.b16 %v318
  %v582 = vunpack.c.l.b16 %v319
  %v583 = vunpack.c.l.b16 %v320
  %v584 = vunpack.c.l.b16 %v321
  %v585 = vunpack.c.l.b16 %v322
  %v586 = vunpack.c.l.b16 %v323
  %v587 = vunpack.c.l.b16 %v324
  %v588 = vunpack.c.l.b16 %v325
  %v589 = vunpack.c.l.b16 %v326
  %v590 = vunpack.c.l.b16 %v327
  %v591 = vunpack.c.l.b16 %v328
  %v592 = vunpack.c.l.b16 %v329
  %v593 = vunpack.c.l.b16 %v330
  %v594 = vunpack.c.l.b16 %v331
  %v595 = vunpack.c.l.b16 %v332
  %v596 = vunpack.c.l.b16 %v333
  %v597 = vunpack.c.l.b16 %v334
  %v598 = vunpack.c.l.b16 %v335
  %v599 = vunpack.c.l.b16 %v336
  %v600 = vunpack.c.l.b16 %v337
  %v601 = vunpack.c.l.b16 %v338
  %v602 = vunpack.c.l.b16 %v339
  %v603 = vunpack.c.l.b16 %v340
  %v604 = vunpack.c.l.b16 %v341
  %v605 = vunpack.c.l.b16 %v342
  %v606 = vunpack.c.l.b16 %v343
  %v607 = vunpack.c.l.b16 %v344
  %v608 = vunpack.c.l.b16 %v345
  %v609 = vunpack.c.l.b16 %v346
  %v610 = vunpack.c.l.b16 %v347
  %v611 = vunpack.c.l.b16 %v348
  %v612 = vunpack.c.l.b16 %v349
  %v613 = vunpack.c.l.b16 %v350
  %v614 = vunpack.c.l.b16 %v351
  %v615 = vunpack.c.l.b16 %v352
  %v616 = vunpack.c.l.b16 %v353
  %v617 = vunpack.c.l.b16 %v354
  %v618 = vunpack.c.l.b16 %v355
  %v619 = vunpack.c.l.b16 %v356
  %v620 = vunpack.c.l.b16 %v357
  %v621 = vunpack.c.l.b16 %v358
  %v622 = vunpack.c.l.b16 %v359
  %v623 = vunpack.c.l.b16 %v360
  %v624 = vunpack.c.l.b16 %v361
  %v625 = vunpack.c.l.b16 %v362
  %v626 = vunpack.c.l.b16 %v363
  %v627 = vunpack.c.l.b16 %v364
  %v628 = vunpack.c.l.b16 %v365
  %v629 = vunpack.c.l.b16 %v366
  %v630 = vunpack.c.l.b16 %v367
  %v631 = vunpack.c.l.b16 %v368
  %v632 = vunpack.c.l.b16 %v369
  %v633 = vunpack.c.l.b16 %v370
  %v634 = vunpack.c.l.b16 %v371
  %v635 = vunpack.c.l.b16 %v372
  %v636 = vunpack.c.l.b16 %v373
  %v637 = vunpack.c.l.b16 %v374
  %v638 = vunpack.c.l.b16 %v375
  %v639 = vunpack.c.l.b16 %v376
  %v640 = vunpack.c.l.b16 %v377
  %v641 = vunpack.c.l.b16 %v378
  %v642 = vunpack.c.l.b16 %v379
  %v643 = vunpack.c.l.b16 %v380
  %v644 = vunpack.c.l.b16 %v381
  %v645 = vunpack.c.l.b16 %v382
  %v646 = vunpack.c.l.b16 %v383
  %v647 = vunpack.c.l.b16 %v384
  %v648 = vunpack.c.l.b16 %v385
  %v649 = vunpack.c.l.b16 %v386
  %v650 = vunpack.c.l.b16 %v387
  %v651 = vunpack.c.l.b16 %v388
  %v652 = vunpack.c.l.b16 %v389
  %v653 = vunpack.c.l.b16 %v390
  %v654 = vunpack.c.l.b16 %v391
  %v655 = vunpack.c.l.b16 %v392
  %v656 = vunpack.c.l.b16 %v393
  %v657 = vunpack.c.l.b16 %v394
  %v658 = vunpack.c.l.b16 %v395
  %v659 = vunpack.c.l.b16 %v396
  %v660 = vunpack.c.l.b16 %v397
  %v661 = vunpack.c.l.b16 %v398
  %v662 = vunpack.c.l.b16 %v399
  %v663 = vunpack.c.l.b16 %v400
  %v664 = vunpack.c.l.b16 %v401
  %v665 = vunpack.c.l.b16 %v402
  %v666 = vunpack.c.l.b16 %v403
  %v667 = vunpack.c.l.b16 %v404
  %v668 = vunpack.c.l.b16 %v405
  %v669 = vunpack.c.l.b16 %v406
  %v670 = vunpack.c.l.b16 %v407
  %v671 = vpack.c.b16 %v544, %v543
  %v672 = vpack.c.b16 %v546, %v545
  %v673 = vpack.c.b16 %v548, %v547
  %v674 = vpack.c.b16 %v550, %v549
  %v675 = vpack.c.b16 %v552, %v551
  %v676 = vpack.c.b16 %v554, %v553
  %v677 = vpack.c.b16 %v556, %v555
  %v678 = vpack.c.b16 %v558, %v557
  %v679 = vpack.c.b16 %v560, %v559
  %v680 = vpack.c.b16 %v562, %v561
  %v681 = vpack.c.b16 %v564, %v563
  %v682 = vpack.c.b16 %v566, %v565
  %v683 = vpack.c.b16 %v568, %v567
  %v684 = vpack.c.b16 %v570, %v569
  %v685 = vpack.c.b16 %v572, %v571
  %v686 = vpack.c.b16 %v574, %v573
  %v687 = vpack.c.b16 %v576, %v575
  %v688 = vpack.c.b16 %v578, %v577
  %v689 = vpack.c.b16 %v580, %v579
  %v690 = vpack.c.b16 %v582, %v581
  %v691 = vpack.c.b16 %v584, %v583
  %v692 = vpack.c.b16 %v586, %v585
  %v693 = vpack.c.b16 %v588, %v587
  %v694 = vpack.c.b16 %v590, %v589
  %v695 = vpack.c.b16 %v592, %v591
  %v696 = vpack.c.b16 %v594, %v593
  %v697 = vpack.c.b16 %v596, %v595
  %v698 = vpack.c.b16 %v598, %v597
  %v699 = vpack.c.b16 %v600, %v599
  %v700 = vpack.c.b16 %v602, %v601
  %v701 = vpack.c.b16 %v604, %v603
  %v702 = vpack.c.b16 %v606, %v605
  %v703 = vpack.c.b16 %v608, %v607
  %v704 = vpack.c.b16 %v610, %v609
  %v705 = vpack.c.b16 %v612, %v611
  %v706 = vpack.c.b16 %v614, %v613
  %v707 = vpack.c.b16 %v616, %v615
  %v708 = vpack.c.b16 %v618, %v617
  %v709 = vpack.c.b16 %v620, %v619
  %v710 = vpack.c.b16 %v622, %v621
  %v711 = vpack.c.b16 %v624, %v623
  %v712 = vpack.c.b16 %v626, %v625
  %v713 = vpack.c.b16 %v628, %v627
  %v714 = vpack.c.b16 %v630, %v629
  %v715 = vpack.c.b16 %v632, %v631
  %v716 = vpack.c.b16 %v634, %v633
  %v717 = vpack.c.b16 %v636, %v635
  %v718 = vpack.c.b16 %v638, %v637
  %v719 = vpack.c.b16 %v640, %v639
  %v720 = vpack.c.b16 %v642, %v641
  %v721 = vpack.c.b16 %v644, %v643
  %v722 = vpack.c.b16 %v646, %v645
  %v723 = vpack.c.b16 %v648, %v647
  %v724 = vpack.c.b16 %v650, %v649
  %v725 = vpack.c.b16 %v652, %v651
  %v726 = vpack.c.b16 %v654, %v653
  %v727 = vpack.c.b16 %v656, %v655
  %v728 = vpack.c.b16 %v658, %v657
  %v729 = vpack.c.b16 %v660, %v659
  %v730 = vpack.c.b16 %v662, %v661
  %v731 = vpack.c.b16 %v664, %v663
  %v732 = vpack.c.b16 %v666, %v665
  %v733 = vpack.c.b16 %v668, %v667
  %v734 = vpack.c.b16 %v670, %v669
  %799 = vmatprep.subr.bf16.mxu0 0
  %800 = vmatpush1.bf16.msra.mxu0 %v671
  %801 = vmatprep.subr.bf16.mxu0 0
  %802 = vmatpush1.bf16.msra.mxu0 %v672
  %803 = vmatprep.subr.bf16.mxu0 0
  %804 = vmatpush1.bf16.msra.mxu0 %v673
  %805 = vmatprep.subr.bf16.mxu0 0
  %806 = vmatpush1.bf16.msra.mxu0 %v674
  %807 = vmatprep.subr.bf16.mxu0 0
  %808 = vmatpush1.bf16.msra.mxu0 %v675
  %809 = vmatprep.subr.bf16.mxu0 0
  %810 = vmatpush1.bf16.msra.mxu0 %v676
  %811 = vmatprep.subr.bf16.mxu0 0
  %812 = vmatpush1.bf16.msra.mxu0 %v677
  %813 = vmatprep.subr.bf16.mxu0 0
  %814 = vmatpush1.bf16.msra.mxu0 %v678
  %815 = vmatprep.subr.bf16.mxu0 0
  %816 = vmatpush1.bf16.msra.mxu0 %v679
  %817 = vmatprep.subr.bf16.mxu0 0
  %818 = vmatpush1.bf16.msra.mxu0 %v680
  %819 = vmatprep.subr.bf16.mxu0 0
  %820 = vmatpush1.bf16.msra.mxu0 %v681
  %821 = vmatprep.subr.bf16.mxu0 0
  %822 = vmatpush1.bf16.msra.mxu0 %v682
  %823 = vmatprep.subr.bf16.mxu0 0
  %824 = vmatpush1.bf16.msra.mxu0 %v683
  %825 = vmatprep.subr.bf16.mxu0 0
  %826 = vmatpush1.bf16.msra.mxu0 %v684
  %827 = vmatprep.subr.bf16.mxu0 0
  %828 = vmatpush1.bf16.msra.mxu0 %v685
  %829 = vmatprep.subr.bf16.mxu0 0
  %830 = vmatpush1.bf16.msra.mxu0 %v686
  %831 = vmatprep.mubr.bf16.mxu0 %v265
  %832 = vmatmul.mubr.bf16.gmra.mrb[0].mxu0 %v264
  %v833 = vpop.f32.mrb[0].mxu0
  %v834 = vadd.f32 %v413, %v833
  %v835 = vpop.f32.mrb[0].mxu0
  %v836 = vpop.f32.mrb[0].mxu0
  %v837 = vadd.f32 %v413, %v836
  %v838 = vpop.f32.mrb[0].mxu0
  %839 = vmatprep.mubr.bf16.mxu0 %v273
  %840 = vmatmul.mubr.bf16.gmra.mrb[0].mxu0 %v272
  %v841 = vpop.f32.mrb[0].mxu0
  %v842 = vadd.f32 %v413, %v841
  %v843 = vpop.f32.mrb[0].mxu0
  %v844 = vpop.f32.mrb[0].mxu0
  %v845 = vpop.f32.mrb[0].mxu0
  %846 = vdwg.mxu0
  %847 = vmatprep.subr.bf16.mxu0 0
  %848 = vmatpush1.bf16.msra.mxu0 %v687
  %849 = vmatprep.subr.bf16.mxu0 0
  %850 = vmatpush1.bf16.msra.mxu0 %v688
  %851 = vmatprep.subr.bf16.mxu0 0
  %852 = vmatpush1.bf16.msra.mxu0 %v689
  %853 = vmatprep.subr.bf16.mxu0 0
  %854 = vmatpush1.bf16.msra.mxu0 %v690
  %855 = vmatprep.subr.bf16.mxu0 0
  %856 = vmatpush1.bf16.msra.mxu0 %v691
  %857 = vmatprep.subr.bf16.mxu0 0
  %858 = vmatpush1.bf16.msra.mxu0 %v692
  %859 = vmatprep.subr.bf16.mxu0 0
  %860 = vmatpush1.bf16.msra.mxu0 %v693
  %861 = vmatprep.subr.bf16.mxu0 0
  %862 = vmatpush1.bf16.msra.mxu0 %v694
  %863 = vmatprep.subr.bf16.mxu0 0
  %864 = vmatpush1.bf16.msra.mxu0 %v695
  %865 = vmatprep.subr.bf16.mxu0 0
  %866 = vmatpush1.bf16.msra.mxu0 %v696
  %867 = vmatprep.subr.bf16.mxu0 0
  %868 = vmatpush1.bf16.msra.mxu0 %v697
  %869 = vmatprep.subr.bf16.mxu0 0
  %870 = vmatpush1.bf16.msra.mxu0 %v698
  %871 = vmatprep.subr.bf16.mxu0 0
  %872 = vmatpush1.bf16.msra.mxu0 %v699
  %873 = vmatprep.subr.bf16.mxu0 0
  %874 = vmatpush1.bf16.msra.mxu0 %v700
  %875 = vmatprep.subr.bf16.mxu0 0
  %876 = vmatpush1.bf16.msra.mxu0 %v701
  %877 = vmatprep.subr.bf16.mxu0 0
  %878 = vmatpush1.bf16.msra.mxu0 %v702
  %879 = vmatprep.mubr.bf16.mxu0 %v267
  %880 = vmatmul.mubr.bf16.gmra.mrb[0].mxu0 %v266
  %v881 = vpop.f32.mrb[0].mxu0
  %v882 = vadd.f32 %v834, %v881
  %v883 = vpop.f32.mrb[0].mxu0
  %v884 = vpop.f32.mrb[0].mxu0
  %v885 = vadd.f32 %v837, %v884
  %v886 = vpop.f32.mrb[0].mxu0
  %887 = vmatprep.mubr.bf16.mxu0 %v275
  %888 = vmatmul.mubr.bf16.gmra.mrb[0].mxu0 %v274
  %v889 = vpop.f32.mrb[0].mxu0
  %v890 = vadd.f32 %v842, %v889
  %v891 = vpop.f32.mrb[0].mxu0
  %v892 = vpop.f32.mrb[0].mxu0
  %v893 = vpop.f32.mrb[0].mxu0
  %894 = vdwg.mxu0
  %895 = vmatprep.subr.bf16.mxu0 0
  %896 = vmatpush1.bf16.msra.mxu0 %v703
  %897 = vmatprep.subr.bf16.mxu0 0
  %898 = vmatpush1.bf16.msra.mxu0 %v704
  %899 = vmatprep.subr.bf16.mxu0 0
  %900 = vmatpush1.bf16.msra.mxu0 %v705
  %901 = vmatprep.subr.bf16.mxu0 0
  %902 = vmatpush1.bf16.msra.mxu0 %v706
  %903 = vmatprep.subr.bf16.mxu0 0
  %904 = vmatpush1.bf16.msra.mxu0 %v707
  %905 = vmatprep.subr.bf16.mxu0 0
  %906 = vmatpush1.bf16.msra.mxu0 %v708
  %907 = vmatprep.subr.bf16.mxu0 0
  %908 = vmatpush1.bf16.msra.mxu0 %v709
  %909 = vmatprep.subr.bf16.mxu0 0
  %910 = vmatpush1.bf16.msra.mxu0 %v710
  %911 = vmatprep.subr.bf16.mxu0 0
  %912 = vmatpush1.bf16.msra.mxu0 %v711
  %913 = vmatprep.subr.bf16.mxu0 0
  %914 = vmatpush1.bf16.msra.mxu0 %v712
  %915 = vmatprep.subr.bf16.mxu0 0
  %916 = vmatpush1.bf16.msra.mxu0 %v713
  %917 = vmatprep.subr.bf16.mxu0 0
  %918 = vmatpush1.bf16.msra.mxu0 %v714
  %919 = vmatprep.subr.bf16.mxu0 0
  %920 = vmatpush1.bf16.msra.mxu0 %v715
  %921 = vmatprep.subr.bf16.mxu0 0
  %922 = vmatpush1.bf16.msra.mxu0 %v716
  %923 = vmatprep.subr.bf16.mxu0 0
  %924 = vmatpush1.bf16.msra.mxu0 %v717
  %925 = vmatprep.subr.bf16.mxu0 0
  %926 = vmatpush1.bf16.msra.mxu0 %v718
  %927 = vmatprep.mubr.bf16.mxu0 %v269
  %928 = vmatmul.mubr.bf16.gmra.mrb[0].mxu0 %v268
  %v929 = vpop.f32.mrb[0].mxu0
  %v930 = vadd.f32 %v882, %v929
  %v931 = vpop.f32.mrb[0].mxu0
  %v932 = vpop.f32.mrb[0].mxu0
  %v933 = vadd.f32 %v885, %v932
  %v934 = vpop.f32.mrb[0].mxu0
  %935 = vmatprep.mubr.bf16.mxu0 %v277
  %936 = vmatmul.mubr.bf16.gmra.mrb[0].mxu0 %v276
  %v937 = vpop.f32.mrb[0].mxu0
  %v938 = vadd.f32 %v890, %v937
  %v939 = vpop.f32.mrb[0].mxu0
  %v940 = vpop.f32.mrb[0].mxu0
  %v941 = vpop.f32.mrb[0].mxu0
  %942 = vdwg.mxu0
  %943 = vmatprep.subr.bf16.mxu0 0
  %944 = vmatpush1.bf16.msra.mxu0 %v719
  %945 = vmatprep.subr.bf16.mxu0 0
  %946 = vmatpush1.bf16.msra.mxu0 %v720
  %947 = vmatprep.subr.bf16.mxu0 0
  %948 = vmatpush1.bf16.msra.mxu0 %v721
  %949 = vmatprep.subr.bf16.mxu0 0
  %950 = vmatpush1.bf16.msra.mxu0 %v722
  %951 = vmatprep.subr.bf16.mxu0 0
  %952 = vmatpush1.bf16.msra.mxu0 %v723
  %953 = vmatprep.subr.bf16.mxu0 0
  %954 = vmatpush1.bf16.msra.mxu0 %v724
  %955 = vmatprep.subr.bf16.mxu0 0
  %956 = vmatpush1.bf16.msra.mxu0 %v725
  %957 = vmatprep.subr.bf16.mxu0 0
  %958 = vmatpush1.bf16.msra.mxu0 %v726
  %959 = vmatprep.subr.bf16.mxu0 0
  %960 = vmatpush1.bf16.msra.mxu0 %v727
  %961 = vmatprep.subr.bf16.mxu0 0
  %962 = vmatpush1.bf16.msra.mxu0 %v728
  %963 = vmatprep.subr.bf16.mxu0 0
  %964 = vmatpush1.bf16.msra.mxu0 %v729
  %965 = vmatprep.subr.bf16.mxu0 0
  %966 = vmatpush1.bf16.msra.mxu0 %v730
  %967 = vmatprep.subr.bf16.mxu0 0
  %968 = vmatpush1.bf16.msra.mxu0 %v731
  %969 = vmatprep.subr.bf16.mxu0 0
  %970 = vmatpush1.bf16.msra.mxu0 %v732
  %971 = vmatprep.subr.bf16.mxu0 0
  %972 = vmatpush1.bf16.msra.mxu0 %v733
  %973 = vmatprep.subr.bf16.mxu0 0
  %974 = vmatpush1.bf16.msra.mxu0 %v734
  %975 = vmatprep.mubr.bf16.mxu0 %v271
  %976 = vmatmul.mubr.bf16.gmra.mrb[0].mxu0 %v270
  %v977 = vpop.f32.mrb[0].mxu0
  %v978 = vadd.f32 %v930, %v977
  %v979 = vpop.f32.mrb[0].mxu0
  %v980 = vpop.f32.mrb[0].mxu0
  %v981 = vadd.f32 %v933, %v980
  %v982 = vpop.f32.mrb[0].mxu0
  %983 = vmatprep.mubr.bf16.mxu0 %v279
  %984 = vmatmul.mubr.bf16.gmra.mrb[0].mxu0 %v278
  %v985 = vpop.f32.mrb[0].mxu0
  %v986 = vadd.f32 %v938, %v985
  %v987 = vpop.f32.mrb[0].mxu0
  %v988 = vpop.f32.mrb[0].mxu0
  %v989 = vpop.f32.mrb[0].mxu0
  %990 = vdwg.mxu0
  %v991 = vpack.c.bf16 %v981, %v978
  %v992 = vpack.c.bf16 %v986, %v986
  %v995 = vunpack.c.l.b16 %v991
  %v996 = vunpack.c.h.b16 %v991
  %v997 = vunpack.c.l.b16 %v992
  %v998 = vpack.c.b16 %v995, %v995
  %v999 = vpack.c.b16 %v996, %v996
  %v1000 = vpack.c.b16 %v997, %v997
  %1004 = vst [vmem:[%s5] sm:$0xf] %v998
  %1005 = vst [vmem:[%s5 + $0x4] sm:$0xf] %v999
  %1006 = vst [vmem:[%s5 + $0x8] sm:$0x1] %v1000
  %v1007 = vadd.f32 %v978, %v981
  %vm1008 = vcmask 1041408
  %v1009 = vsel %vm1008, %v986, 0.0
  %v1010 = vadd.f32 %v1007, %v1009
  %v1011 = vrot.slane %v1010, 4
  %v1012 = vadd.f32 %v1010, %v1011
  %v1013 = vrot.slane %v1012, 2
  %v1014 = vadd.f32 %v1012, %v1013
  %v1015 = vrot.slane %v1014, 1
  %v1016 = vadd.f32 %v1014, %v1015
  %1017 = vst [vmem:[%s6] sm:$0x1] %v1016
  %v1018 = vmul.f32 %v978, %v978
  %v1019 = vmul.f32 %v981, %v981
  %v1020 = vmul.f32 %v986, %v986
  %v1021 = vadd.f32 %v1018, %v1019
  %v1022 = vsel %vm1008, %v1020, 0.0
  %v1023 = vadd.f32 %v1021, %v1022
  %v1024 = vrot.slane %v1023, 4
  %v1025 = vadd.f32 %v1023, %v1024
  %v1026 = vrot.slane %v1025, 2
  %v1027 = vadd.f32 %v1025, %v1026
  %v1028 = vrot.slane %v1027, 1
  %v1029 = vadd.f32 %v1027, %v1028
  %1030 = vst [vmem:[%s7] sm:$0x1] %v1029
  // Predicated region
  $region22: #{_lambda_.28} parent=0 // pred_check
    _
  $region23: #{_lambda_.28} parent=0 // pred_check_branch
    %1032 = sbr.rel (0) target = $region25
  $region24: #{_lambda_.28} parent=0 // pred_region
    _
  $region25: #{_lambda_.28} parent=0 // pred_fallthru
    _
  // Predicated region
  $region26: #{_lambda_.28} parent=0 // pred_check
    _
  $region27: #{_lambda_.28} parent=0 // pred_check_branch
    %1034 = sbr.rel (0) target = $region29
  $region28: #{_lambda_.28} parent=0 // pred_region
    _
  $region29: #{_lambda_.28} parent=0 // pred_fallthru
    _
  // Predicated region
  $region30: #{_lambda_.28} parent=0 // pred_check
    _
  $region31: #{_lambda_.28} parent=0 // pred_check_branch
    %1036 = sbr.rel (0) target = $region33
  $region32: #{_lambda_.28} parent=0 // pred_region
    _
  $region33: #{_lambda_.28} parent=0 // pred_fallthru
    _
  // Predicated region
  $region34: #{_lambda_.28} parent=0 // pred_check
    _
  $region35: #{_lambda_.28} parent=0 // pred_check_branch
    %1038 = sbr.rel (0) target = $region37
  $region36: #{_lambda_.28} parent=0 // pred_region
    _
  $region37: #{_lambda_.28} parent=0 // pred_fallthru
    _
  // Predicated region
  $region38: #{_lambda_.28} parent=0 // pred_check
    _
  $region39: #{_lambda_.28} parent=0 // pred_check_branch
    %1040 = sbr.rel (0) target = $region41
  $region40: #{_lambda_.28} parent=0 // pred_region
    _
  $region41: #{_lambda_.28} parent=0 // pred_fallthru
    _
  // Predicated region
  $region42: #{_lambda_.28} parent=0 // pred_check
    _
  $region43: #{_lambda_.28} parent=0 // pred_check_branch
    %1042 = sbr.rel (0) target = $region45
  $region44: #{_lambda_.28} parent=0 // pred_region
    _
  $region45: #{_lambda_.28} parent=0 // pred_fallthru
    _

// kernel: _lambda_.20
$region0: #{_lambda_.20}
  #allocation0 [shape = 'u32[]', space=smem, size = 0x4, offset = 0x4, fixed_abs, tag = 'smem constant byte address 0x4 - core index']
  #allocation1 [shape = 'u32[144,128]{1,0:T(1,128)}', space=vmem, size = 0x12000, scoped, tag = 'internal scratch']
  %s0 = inlined_call_operand.vmem [shape: bf16[50,64], index: 0, kind: input, shape index: {}]
  %s1 = inlined_call_operand.vmem [shape: bf16[64,16], index: 1, kind: input, shape index: {}]
  %s2 = inlined_call_operand.vmem [shape: f32[1,16], index: 2, kind: input, shape index: {}]
  %s3 = inlined_call_operand.vmem [shape: bf16[50,16], index: 3, kind: output, shape index: {}]
  %s4 = sld [smem:[#allocation0]]
  $region89: #{_lambda_.20} parent=0
    _
  %s6 = ssub.s32 1, %s4
  %s7 = scalar_select 0, %s6, %s4
  $region1: #{_lambda_.20} parent=0
    #allocation2 [shape = 'u8[16384]{0}', space=vmem, size = 0x4000, scoped, tag = 'output window, operand 0']
    loop: start=0, step=1, limit=4
    $region2: #{_lambda_.20} parent=1 // loop_pre_header
      _
    $region3: #{_lambda_.20} parent=1 // loop_header
      %s9 = sphi 0, %s13
      %p10 = scmp.ge.s32.totalorder %s9, 4
      %s19 = sphi 0, %s21
      %s22 = sphi 0, %s19
      %s23 = sphi 0, %s22
      %s39 = sphi 0, %s23
      %s43 = sphi 0, %s43
      %s45 = sphi 0, %s43
      %s46 = sphi 0, %s45
      %s60 = sphi 0, %s46
      %s64 = sphi 0, %s64
      %s66 = sphi 0, %s64
      %s67 = sphi 0, %s66
      %s81 = sphi 0, %s67
      %s87 = sphi 0, %s89
      %s90 = sphi 0, %s87
      %s91 = sphi 0, %s90
      %s107 = sphi 0, %s91
    $region4: #{_lambda_.20} parent=1 // loop_header_branch
      %12 = sbr.rel (%p10) target = $region8
    $region5: #{_lambda_.20} parent=1 // loop_body
      %s14 = ssub.s32 %s9, 1
      %s15 = ssub.s32 %s9, 2
      %s16 = sadd.s32 %s9, 1
      %s17 = ssub.s32 %s9, %s16
      %p18 = scmp.eq.s32.totalorder %s17, 0
      %s20 = sadd.s32 %s19, 1
      %s21 = scalar_select %p18, %s19, %s20
      %p24 = pneg %p18
      %p25 = scmp.eq.s32.totalorder %s9, 1
      %p26 = por %p24, %p25
      %p27 = scmp.ne.s32.totalorder %s19, %s22
      %p28 = scmp.eq.s32.totalorder %s9, 0
      %p29 = por %p27, %p28
      %p30 = scmp.ne.s32.totalorder %s19, %s22
      %p31 = scmp.eq.s32.totalorder %s14, 1
      %p32 = por %p30, %p31
      %p33 = scmp.ne.s32.totalorder %s22, %s23
      %p34 = scmp.eq.s32.totalorder %s14, 0
      %p35 = por %p33, %p34
      %p36 = scmp.ne.s32.totalorder %s22, %s23
      %p37 = scmp.eq.s32.totalorder %s15, 1
      %p38 = por %p36, %p37
      %p40 = scmp.ne.s32.totalorder %s23, %s39
      %p41 = scmp.eq.s32.totalorder %s15, 0
      %p42 = por %p40, %p41
      %s44 = sadd.s32 %s43, 1
      %p47 = scmp.eq.s32.totalorder %s9, 1
      %p48 = scmp.ne.s32.totalorder %s43, %s45
      %p49 = scmp.eq.s32.totalorder %s9, 0
      %p50 = por %p48, %p49
      %p51 = scmp.ne.s32.totalorder %s43, %s45
      %p52 = scmp.eq.s32.totalorder %s14, 1
      %p53 = por %p51, %p52
      %p54 = scmp.ne.s32.totalorder %s45, %s46
      %p55 = scmp.eq.s32.totalorder %s14, 0
      %p56 = por %p54, %p55
      %p57 = scmp.ne.s32.totalorder %s45, %s46
      %p58 = scmp.eq.s32.totalorder %s15, 1
      %p59 = por %p57, %p58
      %p61 = scmp.ne.s32.totalorder %s46, %s60
      %p62 = scmp.eq.s32.totalorder %s15, 0
      %p63 = por %p61, %p62
      %s65 = sadd.s32 %s64, 1
      %p68 = scmp.eq.s32.totalorder %s9, 1
      %p69 = scmp.ne.s32.totalorder %s64, %s66
      %p70 = scmp.eq.s32.totalorder %s9, 0
      %p71 = por %p69, %p70
      %p72 = scmp.ne.s32.totalorder %s64, %s66
      %p73 = scmp.eq.s32.totalorder %s14, 1
      %p74 = por %p72, %p73
      %p75 = scmp.ne.s32.totalorder %s66, %s67
      %p76 = scmp.eq.s32.totalorder %s14, 0
      %p77 = por %p75, %p76
      %p78 = scmp.ne.s32.totalorder %s66, %s67
      %p79 = scmp.eq.s32.totalorder %s15, 1
      %p80 = por %p78, %p79
      %p82 = scmp.ne.s32.totalorder %s67, %s81
      %p83 = scmp.eq.s32.totalorder %s15, 0
      %p84 = por %p82, %p83
      %s85 = ssub.s32 %s9, %s16
      %p86 = scmp.eq.s32.totalorder %s85, 0
      %s88 = sadd.s32 %s87, 1
      %s89 = scalar_select %p86, %s87, %s88
      %p92 = pneg %p86
      %p93 = scmp.eq.s32.totalorder %s9, 1
      %p94 = por %p92, %p93
      %p95 = scmp.ne.s32.totalorder %s87, %s90
      %p96 = scmp.eq.s32.totalorder %s9, 0
      %p97 = por %p95, %p96
      %p98 = scmp.ne.s32.totalorder %s87, %s90
      %p99 = scmp.eq.s32.totalorder %s14, 1
      %p100 = por %p98, %p99
      %p101 = scmp.ne.s32.totalorder %s90, %s91
      %p102 = scmp.eq.s32.totalorder %s14, 0
      %p103 = por %p101, %p102
      %p104 = scmp.ne.s32.totalorder %s90, %s91
      %p105 = scmp.eq.s32.totalorder %s15, 1
      %p106 = por %p104, %p105
      %p108 = scmp.ne.s32.totalorder %s91, %s107
      %p109 = scmp.eq.s32.totalorder %s15, 0
      %p110 = por %p108, %p109
      %p111 = scmp.le.s32.totalorder 1, %s9
      %p112 = scmp.lt.s32.totalorder %s9, 3
      %p113 = pnand %p111, %p112
      %p114 = pneg %p113
      // Predicated region
      $region9: #{_lambda_.20} parent=5 // pred_check
        _
      $region10: #{_lambda_.20} parent=5 // pred_check_branch
        %116 = sbr.rel (%p113) target = $region12
      $region11: #{_lambda_.20} parent=5 // pred_region
        %s117 = ssub.s32 %s9, 1
        // Predicated region
        $region13: #{_lambda_.20} parent=11 // pred_check
          %p118 = pneg %p56
        $region14: #{_lambda_.20} parent=11 // pred_check_branch
          %120 = sbr.rel (%p118) target = $region16
        $region15: #{_lambda_.20} parent=11 // pred_region
          _
        $region16: #{_lambda_.20} parent=11 // pred_fallthru
          _
        // Predicated region
        $region17: #{_lambda_.20} parent=11 // pred_check
          %p121 = pneg %p77
        $region18: #{_lambda_.20} parent=11 // pred_check_branch
          %123 = sbr.rel (%p121) target = $region20
        $region19: #{_lambda_.20} parent=11 // pred_region
          _
        $region20: #{_lambda_.20} parent=11 // pred_fallthru
          _
      $region12: #{_lambda_.20} parent=5 // pred_fallthru
        _
      %p124 = scmp.lt.s32.totalorder %s9, 2
      // Predicated region
      $region21: #{_lambda_.20} parent=5 // pred_check
        %p125 = pneg %p124
      $region22: #{_lambda_.20} parent=5 // pred_check_branch
        %127 = sbr.rel (%p125) target = $region24
      $region23: #{_lambda_.20} parent=5 // pred_region
        // Predicated region
        $region25: #{_lambda_.20} parent=23 // pred_check
          %p128 = pneg %p29
        $region26: #{_lambda_.20} parent=23 // pred_check_branch
          %130 = sbr.rel (%p128) target = $region28
        $region27: #{_lambda_.20} parent=23 // pred_region
          %s131 = smul.u32 4, %s9
          %s132 = ssub.s32 7, %s131
          %p133 = scmp.lt.s32.totalorder %s132, 4
          %s134 = scalar_select %p133, %s132, 4
          %s135 = smul.u32 64, %s134
          %p136 = scmp.lt.s32.totalorder %s131, 6
          %s137 = scalar_select %p136, %s131, 6
          %s138 = smul.addr %s137, 4
          %s139 = scalar_lea.vmem %s0, %s138
          %s140 = smul.u32 4, %s9
          %s141 = ssub.s32 7, %s140
          %p142 = scmp.lt.s32.totalorder %s141, 4
          %s143 = scalar_select %p142, %s141, 4
          %s144 = smul.u32 64, %s143
        $region28: #{_lambda_.20} parent=23 // pred_fallthru
          _
      $region24: #{_lambda_.20} parent=5 // pred_fallthru
        _
      %p145 = scmp.le.s32.totalorder 1, %s9
      %p146 = scmp.lt.s32.totalorder %s9, 3
      %p147 = pnand %p145, %p146
      %p148 = pneg %p147
      // Predicated region
      $region29: #{_lambda_.20} parent=5 // pred_check
        _
      $region30: #{_lambda_.20} parent=5 // pred_check_branch
        %150 = sbr.rel (%p147) target = $region32
      $region31: #{_lambda_.20} parent=5 // pred_region
        %s151 = ssub.s32 %s9, 1
        %s152 = smul.u32 4, %s14
        %s153 = ssub.s32 7, %s152
        %p154 = scmp.lt.s32.totalorder %s153, 4
        %s155 = scalar_select %p154, %s153, 4
        %s156 = smul.u32 64, %s155
        %p157 = scmp.lt.s32.totalorder %s152, 6
        %s158 = scalar_select %p157, %s152, 6
        %s159 = smul.addr %s158, 4
        %s160 = scalar_lea.vmem %s0, %s159
        %p161 = pneg %p35
        %p162 = pneg %p32
        %p163 = pneg %p56
        %p164 = pneg %p53
        %p165 = pneg %p77
        %p166 = pneg %p74
        %p167 = pneg %p103
        %p168 = pneg %p100
        %s169 = sand.u32 %s90, 1
        %s170 = sand.u32 %s90, 1
        %s171 = smul.addr %s170, 16
        %s172 = scalar_lea.vmem [#allocation2], %s171
        %s173 = smul.u32 4, %s14
        %s174 = ssub.s32 7, %s173
        %p175 = scmp.lt.s32.totalorder %s174, 4
        %s176 = scalar_select %p175, %s174, 4
        %s177 = smul.u32 64, %s176
        %p178 = scmp.lt.s32.totalorder %s173, 6
        %s179 = scalar_select %p178, %s173, 6
        %s180 = smul.addr %s179, 4
        %s181 = scalar_lea.vmem %s0, %s180
        %s182 = smul.u32 4, %s14
        %s183 = ssub.s32 7, %s182
        %p184 = scmp.lt.s32.totalorder %s183, 4
        %s185 = scalar_select %p184, %s183, 4
        %s186 = smul.u32 64, %s185
        %s187 = smul.u32 4, %s14
        %s188 = ssub.s32 7, %s187
        %p189 = scmp.lt.s32.totalorder %s188, 4
        %s190 = scalar_select %p189, %s188, 4
        %s191 = smul.u32 64, %s190
        %v193 = vld [vmem:[%s181] sm:$0xf]
        %v194 = vld [vmem:[%s181 + $0x4] sm:$0xf]
        %v195 = vld [vmem:[%s181 + $0x8] sm:$0xf]
        %v196 = vld [vmem:[%s181 + $0xc] sm:$0xf]
        %v197 = vld [vmem:[%s1] sm:$0xf]
        %v198 = vld [vmem:[%s1 + $0x4] sm:$0xf]
        %v199 = vld [vmem:[%s1 + $0x8] sm:$0xf]
        %v200 = vld [vmem:[%s1 + $0xc] sm:$0xf]
        %v201 = vld [vmem:[%s1 + $0x10] sm:$0xf]
        %v202 = vld [vmem:[%s1 + $0x14] sm:$0xf]
        %v203 = vld [vmem:[%s1 + $0x18] sm:$0xf]
        %v204 = vld [vmem:[%s1 + $0x1c] sm:$0xf]
        %v205 = vld [vmem:[%s2] sm:$0x1]
        %v207 = vlaneseq
        %v208 = vshrl.u32 %v207, 7
        %v209 = vsub.s32 0, %v208
        %v210 = vrot.slane %v205, %v209
        %v216 = vunpack.c.l.b16 %v193
        %v217 = vunpack.c.l.b16 %v194
        %v218 = vunpack.c.l.b16 %v195
        %v219 = vunpack.c.l.b16 %v196
        %v220 = vpack.c.b16 %v217, %v216
        %v221 = vpack.c.b16 %v219, %v218
        %v230 = vunpack.c.l.b16 %v197
        %v231 = vunpack.c.l.b16 %v198
        %v232 = vunpack.c.l.b16 %v199
        %v233 = vunpack.c.l.b16 %v200
        %v234 = vunpack.c.l.b16 %v201
        %v235 = vunpack.c.l.b16 %v202
        %v236 = vunpack.c.l.b16 %v203
        %v237 = vunpack.c.l.b16 %v204
        %v238 = vpack.c.b16 %v231, %v230
        %v239 = vpack.c.b16 %v233, %v232
        %v240 = vpack.c.b16 %v235, %v234
        %v241 = vpack.c.b16 %v237, %v236
        %vm246 = vcmask 523264
        %v248 = vsel %vm246, %v220, 0
        %v251 = vsel %vm246, %v221, 0
        %253 = vmatprep.subr.bf16.mxu0 0
        %254 = vmatpush1.bf16.msra.mxu0 %v238
        %255 = vmatprep.subr.bf16.mxu0 0
        %256 = vmatpush1.bf16.msra.mxu0 %v239
        %257 = vmatprep.subr.bf16.mxu0 0
        %258 = vmatpush1.bf16.msra.mxu0 %v240
        %259 = vmatprep.subr.bf16.mxu0 0
        %260 = vmatpush1.bf16.msra.mxu0 %v241
        %261 = vmatprep.subr.bf16.mxu0 0
        %262 = vmatpush1.bf16.msra.mxu0 0
        %263 = vmatprep.subr.bf16.mxu0 0
        %264 = vmatpush1.bf16.msra.mxu0 0
        %265 = vmatprep.subr.bf16.mxu0 0
        %266 = vmatpush1.bf16.msra.mxu0 0
        %267 = vmatprep.subr.bf16.mxu0 0
        %268 = vmatpush1.bf16.msra.mxu0 0
        %269 = vmatprep.subr.bf16.mxu0 0
        %270 = vmatpush1.bf16.msra.mxu0 0
        %271 = vmatprep.subr.bf16.mxu0 0
        %272 = vmatpush1.bf16.msra.mxu0 0
        %273 = vmatprep.subr.bf16.mxu0 0
        %274 = vmatpush1.bf16.msra.mxu0 0
        %275 = vmatprep.subr.bf16.mxu0 0
        %276 = vmatpush1.bf16.msra.mxu0 0
        %277 = vmatprep.subr.bf16.mxu0 0
        %278 = vmatpush1.bf16.msra.mxu0 0
        %279 = vmatprep.subr.bf16.mxu0 0
        %280 = vmatpush1.bf16.msra.mxu0 0
        %281 = vmatprep.subr.bf16.mxu0 0
        %282 = vmatpush1.bf16.msra.mxu0 0
        %283 = vmatprep.subr.bf16.mxu0 0
        %284 = vmatpush1.bf16.msra.mxu0 0
        %285 = vmatprep.mubr.bf16.mxu0 0
        %286 = vmatmul.mubr.bf16.gmra.mrb[0].mxu0 %v248
        %v287 = vpop.f32.mrb[0].mxu0
        %v288 = vadd.f32 %v210, %v287
        %v289 = vpop.f32.mrb[0].mxu0
        %v290 = vpop.f32.mrb[0].mxu0
        %v291 = vadd.f32 %v210, %v290
        %v292 = vpop.f32.mrb[0].mxu0
        %293 = vmatprep.mubr.bf16.mxu0 0
        %294 = vmatmul.mubr.bf16.gmra.mrb[0].mxu0 %v251
        %v295 = vpop.f32.mrb[0].mxu0
        %v296 = vadd.f32 %v210, %v295
        %v297 = vpop.f32.mrb[0].mxu0
        %v298 = vpop.f32.mrb[0].mxu0
        %v299 = vadd.f32 %v210, %v298
        %v300 = vpop.f32.mrb[0].mxu0
        %301 = vdwg.mxu0
        %vm302 = vcmp.ge.f32.partialorder %v288, 0.0
        %vm303 = vcmp.ge.f32.partialorder %v291, 0.0
        %vm304 = vcmp.ge.f32.partialorder %v296, 0.0
        %vm305 = vcmp.ge.f32.partialorder %v299, 0.0
        %v306 = vmul.f32 %v288, 0.2
        %v307 = vmul.f32 %v291, 0.2
        %v308 = vmul.f32 %v296, 0.2
        %v309 = vmul.f32 %v299, 0.2
        %v310 = vsel %vm302, %v288, %v306
        %v311 = vsel %vm303, %v291, %v307
        %v312 = vsel %vm304, %v296, %v308
        %v313 = vsel %vm305, %v299, %v309
        %v314 = vpack.c.bf16 %v311, %v310
        %v315 = vpack.c.bf16 %v313, %v312
        %v318 = vunpack.c.l.b16 %v314
        %v319 = vunpack.c.h.b16 %v314
        %v320 = vunpack.c.l.b16 %v315
        %v321 = vunpack.c.h.b16 %v315
        %v322 = vpack.c.b16 %v318, %v318
        %v323 = vpack.c.b16 %v319, %v319
        %v324 = vpack.c.b16 %v320, %v320
        %v325 = vpack.c.b16 %v321, %v321
        %vm330 = vcmask 125952
        %331 = vst.msk [vmem:[%s172] sm:$0xf] %vm330, %v322
        %332 = vst.msk [vmem:[%s172 + $0x4] sm:$0xf] %vm330, %v323
        %333 = vst.msk [vmem:[%s172 + $0x8] sm:$0xf] %vm330, %v324
        %334 = vst.msk [vmem:[%s172 + $0xc] sm:$0xf] %vm330, %v325
        %s335 = sand.u32 %s90, 1
        %s336 = sand.u32 %s90, 1
        %s337 = smul.addr %s336, 16
        %s338 = scalar_lea.vmem [#allocation2], %s337
        // Predicated region
        $region33: #{_lambda_.20} parent=31 // pred_check
          %p339 = pneg %p100
        $region34: #{_lambda_.20} parent=31 // pred_check_branch
          %341 = sbr.rel (%p339) target = $region36
        $region35: #{_lambda_.20} parent=31 // pred_region
          %s342 = smul.u32 4, %s14
          %s343 = ssub.s32 7, %s342
          %p344 = scmp.lt.s32.totalorder %s343, 4
          %s345 = scalar_select %p344, %s343, 4
          %s346 = smul.u32 64, %s345
          %p347 = scmp.ne.s32.totalorder 0, %s346
          %s348 = smul.addr %s342, 4
          %s349 = scalar_lea.vmem %s3, %s348
          // Predicated region
          $region37: #{_lambda_.20} parent=35 // pred_check
            %p350 = pneg %p347
          $region38: #{_lambda_.20} parent=35 // pred_check_branch
            %352 = sbr.rel (%p350) target = $region40
          $region39: #{_lambda_.20} parent=35 // pred_region
            // Predicated region
            $region41: #{_lambda_.20} parent=39 // pred_check
              _
            $region42: #{_lambda_.20} parent=39 // pred_check_branch
              %354 = sbr.rel target = $region44
            $region43: #{_lambda_.20} parent=39 // pred_region
              // Predicated region
              $region63: #{_lambda_.20} parent=43 // pred_check
                _
              $region64: #{_lambda_.20} parent=43 // pred_check_branch
                %409 = sbr.rel (0) target = $region66
              $region65: #{_lambda_.20} parent=43 // pred_region
                %s411 = sshrl.u32 %s345, 2
                // While loop
                $region67: #{_lambda_.20} parent=65 // loop_pre_header
                  _
                $region68: #{_lambda_.20} parent=65 // loop_header
                  %s413 = sphi 0, %s415
                  %p414 = scmp.ge.s32.totalorder %s413, %s411
                  %s418 = sphi 0, %s431
                  %s419 = sphi %s338, %s434
                  %s420 = sphi %s349, %s435
                $region69: #{_lambda_.20} parent=65 // loop_header_branch
                  %417 = sbr.rel (%p414) target = $region73
                $region70: #{_lambda_.20} parent=65 // loop_body
                  %v421 = vld [vmem:[%s419] sm:$0xf]
                  %422 = vst [vmem:[%s420] sm:$0xf] %v421
                  %v423 = vld [vmem:[%s419 + $0x4] sm:$0xf]
                  %424 = vst [vmem:[%s420 + $0x4] sm:$0xf] %v423
                  %v425 = vld [vmem:[%s419 + $0x8] sm:$0xf]
                  %426 = vst [vmem:[%s420 + $0x8] sm:$0xf] %v425
                  %v427 = vld [vmem:[%s419 + $0xc] sm:$0xf]
                  %428 = vst [vmem:[%s420 + $0xc] sm:$0xf] %v427
                  %s429 = sadd.s32 1, %s418
                  %p430 = scmp.ge.s32.totalorder %s429, %s411
                  %s431 = scalar_select %p430, 0, %s429
                  %s432 = smul.u32 %s431, 16
                  %s433 = smul.u32 %s431, 16
                  %s434 = scalar_lea.vmem %s338, %s432 [#allocation2]
                  %s435 = scalar_lea.vmem %s349, %s433
                $region71: #{_lambda_.20} parent=65 // loop_footer
                  %s415 = sadd.s32 %s413, 1
                $region72: #{_lambda_.20} parent=65 // loop_footer_branch
                  %412 = sbr.rel target = $region68
                $region73: #{_lambda_.20} parent=65 // loop_exit
                  _
                %s436 = sshrl.u32 %s345, 2
                %s437 = sand.u32 %s345, 3
                %s438 = smul.u32 %s436, 4
                %s439 = smul.u32 4, %s438
                %s440 = scalar_lea.vmem %s338, %s439 [#allocation2]
                %s441 = smul.u32 4, %s438
                %s442 = scalar_lea.vmem %s349, %s441
                // While loop
                $region74: #{_lambda_.20} parent=65 // loop_pre_header
                  _
                $region75: #{_lambda_.20} parent=65 // loop_header
                  %s444 = sphi 0, %s446
                  %p445 = scmp.ge.s32.totalorder %s444, %s437
                  %s449 = sphi 0, %s456
                  %s450 = sphi %s440, %s459
                  %s451 = sphi %s442, %s460
                $region76: #{_lambda_.20} parent=65 // loop_header_branch
                  %448 = sbr.rel (%p445) target = $region80
                $region77: #{_lambda_.20} parent=65 // loop_body
                  %v452 = vld [vmem:[%s450] sm:$0xf]
                  %453 = vst [vmem:[%s451] sm:$0xf] %v452
                  %s454 = sadd.s32 1, %s449
                  %p455 = scmp.ge.s32.totalorder %s454, %s437
                  %s456 = scalar_select %p455, 0, %s454
                  %s457 = smul.u32 %s456, 4
                  %s458 = smul.u32 %s456, 4
                  %s459 = scalar_lea.vmem %s440, %s457 [#allocation2]
                  %s460 = scalar_lea.vmem %s442, %s458
                $region78: #{_lambda_.20} parent=65 // loop_footer
                  %s446 = sadd.s32 %s444, 1
                $region79: #{_lambda_.20} parent=65 // loop_footer_branch
                  %443 = sbr.rel target = $region75
                $region80: #{_lambda_.20} parent=65 // loop_exit
                  _
              $region66: #{_lambda_.20} parent=43 // pred_fallthru
                _
            $region44: #{_lambda_.20} parent=39 // pred_fallthru
              _
            // Predicated region
            $region45: #{_lambda_.20} parent=39 // pred_check
              _
            $region46: #{_lambda_.20} parent=39 // pred_check_branch
              %356 = sbr.rel (0) target = $region48
            $region47: #{_lambda_.20} parent=39 // pred_region
              %s358 = sshrl.u32 %s345, 2
              // While loop
              $region49: #{_lambda_.20} parent=47 // loop_pre_header
                _
              $region50: #{_lambda_.20} parent=47 // loop_header
                %s360 = sphi 0, %s362
                %p361 = scmp.ge.s32.totalorder %s360, %s358
                %s365 = sphi 0, %s378
                %s366 = sphi %s338, %s381
                %s367 = sphi %s349, %s382
              $region51: #{_lambda_.20} parent=47 // loop_header_branch
                %364 = sbr.rel (%p361) target = $region55
              $region52: #{_lambda_.20} parent=47 // loop_body
                %v368 = vld [vmem:[%s366] sm:$0xf]
                %369 = vst [vmem:[%s367] sm:$0xf] %v368
                %v370 = vld [vmem:[%s366 + $0x4] sm:$0xf]
                %371 = vst [vmem:[%s367 + $0x4] sm:$0xf] %v370
                %v372 = vld [vmem:[%s366 + $0x8] sm:$0xf]
                %373 = vst [vmem:[%s367 + $0x8] sm:$0xf] %v372
                %v374 = vld [vmem:[%s366 + $0xc] sm:$0xf]
                %375 = vst [vmem:[%s367 + $0xc] sm:$0xf] %v374
                %s376 = sadd.s32 1, %s365
                %p377 = scmp.ge.s32.totalorder %s376, %s358
                %s378 = scalar_select %p377, 0, %s376
                %s379 = smul.u32 %s378, 16
                %s380 = smul.u32 %s378, 16
                %s381 = scalar_lea.vmem %s338, %s379 [#allocation2]
                %s382 = scalar_lea.vmem %s349, %s380
              $region53: #{_lambda_.20} parent=47 // loop_footer
                %s362 = sadd.s32 %s360, 1
              $region54: #{_lambda_.20} parent=47 // loop_footer_branch
                %359 = sbr.rel target = $region50
              $region55: #{_lambda_.20} parent=47 // loop_exit
                _
              %s383 = sshrl.u32 %s345, 2
              %s384 = sand.u32 %s345, 3
              %s385 = smul.u32 %s383, 4
              %s386 = smul.u32 4, %s385
              %s387 = scalar_lea.vmem %s338, %s386 [#allocation2]
              %s388 = smul.u32 4, %s385
              %s389 = scalar_lea.vmem %s349, %s388
              // While loop
              $region56: #{_lambda_.20} parent=47 // loop_pre_header
                _
              $region57: #{_lambda_.20} parent=47 // loop_header
                %s391 = sphi 0, %s393
                %p392 = scmp.ge.s32.totalorder %s391, %s384
                %s396 = sphi 0, %s403
                %s397 = sphi %s387, %s406
                %s398 = sphi %s389, %s407
              $region58: #{_lambda_.20} parent=47 // loop_header_branch
                %395 = sbr.rel (%p392) target = $region62
              $region59: #{_lambda_.20} parent=47 // loop_body
                %v399 = vld [vmem:[%s397] sm:$0xf]
                %400 = vst [vmem:[%s398] sm:$0xf] %v399
                %s401 = sadd.s32 1, %s396
                %p402 = scmp.ge.s32.totalorder %s401, %s384
                %s403 = scalar_select %p402, 0, %s401
                %s404 = smul.u32 %s403, 4
                %s405 = smul.u32 %s403, 4
                %s406 = scalar_lea.vmem %s387, %s404 [#allocation2]
                %s407 = scalar_lea.vmem %s389, %s405
              $region60: #{_lambda_.20} parent=47 // loop_footer
                %s393 = sadd.s32 %s391, 1
              $region61: #{_lambda_.20} parent=47 // loop_footer_branch
                %390 = sbr.rel target = $region57
              $region62: #{_lambda_.20} parent=47 // loop_exit
                _
            $region48: #{_lambda_.20} parent=39 // pred_fallthru
              _
          $region40: #{_lambda_.20} parent=35 // pred_fallthru
            _
          %461 = vnop
        $region36: #{_lambda_.20} parent=31 // pred_fallthru
          _
      $region32: #{_lambda_.20} parent=5 // pred_fallthru
        _
      %p462 = scmp.le.s32.totalorder 2, %s9
      // Predicated region
      $region81: #{_lambda_.20} parent=5 // pred_check
        %p463 = pneg %p462
      $region82: #{_lambda_.20} parent=5 // pred_check_branch
        %465 = sbr.rel (%p463) target = $region84
      $region83: #{_lambda_.20} parent=5 // pred_region
        %s466 = ssub.s32 %s9, 2
        // Predicated region
        $region85: #{_lambda_.20} parent=83 // pred_check
          %p467 = pneg %p106
        $region86: #{_lambda_.20} parent=83 // pred_check_branch
          %469 = sbr.rel (%p467) target = $region88
        $region87: #{_lambda_.20} parent=83 // pred_region
          %s470 = sand.u32 %s91, 1
          %s471 = sand.u32 %s91, 1
          %s472 = smul.addr %s471, 16
          %s473 = scalar_lea.vmem [#allocation2], %s472
        $region88: #{_lambda_.20} parent=83 // pred_fallthru
          _
      $region84: #{_lambda_.20} parent=5 // pred_fallthru
        _
    $region6: #{_lambda_.20} parent=1 // loop_footer
      %s13 = sadd.s32 1, %s9
    $region7: #{_lambda_.20} parent=1 // loop_footer_branch
      %8 = sbr.rel target = $region3
    $region8: #{_lambda_.20} parent=1 // loop_exit
      _

// kernel: _lambda_.21
$region0: #{_lambda_.21}
  #allocation0 [shape = 'u32[]', space=smem, size = 0x4, offset = 0x4, fixed_abs, tag = 'smem constant byte address 0x4 - core index']
  #allocation1 [shape = 'u32[144,128]{1,0:T(1,128)}', space=vmem, size = 0x12000, scoped, tag = 'internal scratch']
  %s0 = inlined_call_operand.vmem [shape: bf16[18,256], index: 0, kind: input, shape index: {}]
  %s1 = inlined_call_operand.vmem [shape: bf16[256,32], index: 1, kind: input, shape index: {}]
  %s2 = inlined_call_operand.vmem [shape: f32[1,32], index: 2, kind: input, shape index: {}]
  %s3 = inlined_call_operand.vmem [shape: bf16[18,32], index: 3, kind: output, shape index: {0}]
  %s4 = inlined_call_operand.vmem [shape: f32[1,32], index: 4, kind: output, shape index: {1}]
  %s5 = inlined_call_operand.vmem [shape: f32[1,32], index: 5, kind: output, shape index: {2}]
  %6 = xla_tuple %s3, %s4, %s5
  %s7 = sld [smem:[#allocation0]]
  $region38: #{_lambda_.21} parent=0
    _
  %s9 = ssub.s32 1, %s7
  %s10 = scalar_select 0, %s9, %s7
  // Predicated region
  $region2: #{_lambda_.21} parent=0 // pred_check
    _
  $region3: #{_lambda_.21} parent=0 // pred_check_branch
    %12 = sbr.rel (0) target = $region5
  $region4: #{_lambda_.21} parent=0 // pred_region
    _
  $region5: #{_lambda_.21} parent=0 // pred_fallthru
    _
  // Predicated region
  $region6: #{_lambda_.21} parent=0 // pred_check
    _
  $region7: #{_lambda_.21} parent=0 // pred_check_branch
    %14 = sbr.rel (0) target = $region9
  $region8: #{_lambda_.21} parent=0 // pred_region
    _
  $region9: #{_lambda_.21} parent=0 // pred_fallthru
    _
  // Predicated region
  $region10: #{_lambda_.21} parent=0 // pred_check
    _
  $region11: #{_lambda_.21} parent=0 // pred_check_branch
    %16 = sbr.rel (0) target = $region13
  $region12: #{_lambda_.21} parent=0 // pred_region
    _
  $region13: #{_lambda_.21} parent=0 // pred_fallthru
    _
  %v18 = vld [vmem:[%s0] sm:$0xff]
  %v19 = vld [vmem:[%s0 + $0x8] sm:$0xff]
  %v20 = vld [vmem:[%s0 + $0x10] sm:$0x11]
  %v21 = vld [vmem:[%s1] sm:$0xf]
  %v22 = vld [vmem:[%s1 + $0x4] sm:$0xf]
  %v23 = vld [vmem:[%s1 + $0x8] sm:$0xf]
  %v24 = vld [vmem:[%s1 + $0xc] sm:$0xf]
  %v25 = vld [vmem:[%s1 + $0x10] sm:$0xf]
  %v26 = vld [vmem:[%s1 + $0x14] sm:$0xf]
  %v27 = vld [vmem:[%s1 + $0x18] sm:$0xf]
  %v28 = vld [vmem:[%s1 + $0x1c] sm:$0xf]
  %v29 = vld [vmem:[%s1 + $0x20] sm:$0xf]
  %v30 = vld [vmem:[%s1 + $0x24] sm:$0xf]
  %v31 = vld [vmem:[%s1 + $0x28] sm:$0xf]
  %v32 = vld [vmem:[%s1 + $0x2c] sm:$0xf]
  %v33 = vld [vmem:[%s1 + $0x30] sm:$0xf]
  %v34 = vld [vmem:[%s1 + $0x34] sm:$0xf]
  %v35 = vld [vmem:[%s1 + $0x38] sm:$0xf]
  %v36 = vld [vmem:[%s1 + $0x3c] sm:$0xf]
  %v37 = vld [vmem:[%s1 + $0x40] sm:$0xf]
  %v38 = vld [vmem:[%s1 + $0x44] sm:$0xf]
  %v39 = vld [vmem:[%s1 + $0x48] sm:$0xf]
  %v40 = vld [vmem:[%s1 + $0x4c] sm:$0xf]
  %v41 = vld [vmem:[%s1 + $0x50] sm:$0xf]
  %v42 = vld [vmem:[%s1 + $0x54] sm:$0xf]
  %v43 = vld [vmem:[%s1 + $0x58] sm:$0xf]
  %v44 = vld [vmem:[%s1 + $0x5c] sm:$0xf]
  %v45 = vld [vmem:[%s1 + $0x60] sm:$0xf]
  %v46 = vld [vmem:[%s1 + $0x64] sm:$0xf]
  %v47 = vld [vmem:[%s1 + $0x68] sm:$0xf]
  %v48 = vld [vmem:[%s1 + $0x6c] sm:$0xf]
  %v49 = vld [vmem:[%s1 + $0x70] sm:$0xf]
  %v50 = vld [vmem:[%s1 + $0x74] sm:$0xf]
  %v51 = vld [vmem:[%s1 + $0x78] sm:$0xf]
  %v52 = vld [vmem:[%s1 + $0x7c] sm:$0xf]
  %v53 = vld [vmem:[%s2] sm:$0x1]
  %v55 = vlaneseq
  %v56 = vshrl.u32 %v55, 7
  %v57 = vsub.s32 0, %v56
  %v58 = vrot.slane %v53, %v57
  %v63 = vunpack.c.l.b16 %v18
  %v64 = vunpack.c.h.b16 %v18
  %v65 = vunpack.c.l.b16 %v19
  %v66 = vunpack.c.h.b16 %v19
  %v67 = vunpack.c.l.b16 %v20
  %v68 = vunpack.c.h.b16 %v20
  %v69 = vpack.c.b16 %v65, %v63
  %v70 = vpack.c.b16 %v66, %v64
  %v71 = vpack.c.b16 %v67, %v67
  %v72 = vpack.c.b16 %v68, %v68
  %v109 = vunpack.c.l.b16 %v21
  %v110 = vunpack.c.l.b16 %v22
  %v111 = vunpack.c.l.b16 %v23
  %v112 = vunpack.c.l.b16 %v24
  %v113 = vunpack.c.l.b16 %v25
  %v114 = vunpack.c.l.b16 %v26
  %v115 = vunpack.c.l.b16 %v27
  %v116 = vunpack.c.l.b16 %v28
  %v117 = vunpack.c.l.b16 %v29
  %v118 = vunpack.c.l.b16 %v30
  %v119 = vunpack.c.l.b16 %v31
  %v120 = vunpack.c.l.b16 %v32
  %v121 = vunpack.c.l.b16 %v33
  %v122 = vunpack.c.l.b16 %v34
  %v123 = vunpack.c.l.b16 %v35
  %v124 = vunpack.c.l.b16 %v36
  %v125 = vunpack.c.l.b16 %v37
  %v126 = vunpack.c.l.b16 %v38
  %v127 = vunpack.c.l.b16 %v39
  %v128 = vunpack.c.l.b16 %v40
  %v129 = vunpack.c.l.b16 %v41
  %v130 = vunpack.c.l.b16 %v42
  %v131 = vunpack.c.l.b16 %v43
  %v132 = vunpack.c.l.b16 %v44
  %v133 = vunpack.c.l.b16 %v45
  %v134 = vunpack.c.l.b16 %v46
  %v135 = vunpack.c.l.b16 %v47
  %v136 = vunpack.c.l.b16 %v48
  %v137 = vunpack.c.l.b16 %v49
  %v138 = vunpack.c.l.b16 %v50
  %v139 = vunpack.c.l.b16 %v51
  %v140 = vunpack.c.l.b16 %v52
  %v141 = vpack.c.b16 %v110, %v109
  %v142 = vpack.c.b16 %v112, %v111
  %v143 = vpack.c.b16 %v114, %v113
  %v144 = vpack.c.b16 %v116, %v115
  %v145 = vpack.c.b16 %v118, %v117
  %v146 = vpack.c.b16 %v120, %v119
  %v147 = vpack.c.b16 %v122, %v121
  %v148 = vpack.c.b16 %v124, %v123
  %v149 = vpack.c.b16 %v126, %v125
  %v150 = vpack.c.b16 %v128, %v127
  %v151 = vpack.c.b16 %v130, %v129
  %v152 = vpack.c.b16 %v132, %v131
  %v153 = vpack.c.b16 %v134, %v133
  %v154 = vpack.c.b16 %v136, %v135
  %v155 = vpack.c.b16 %v138, %v137
  %v156 = vpack.c.b16 %v140, %v139
  %173 = vmatprep.subr.bf16.mxu0 0
  %174 = vmatpush1.bf16.msra.mxu0 %v141
  %175 = vmatprep.subr.bf16.mxu0 0
  %176 = vmatpush1.bf16.msra.mxu0 %v142
  %177 = vmatprep.subr.bf16.mxu0 0
  %178 = vmatpush1.bf16.msra.mxu0 %v143
  %179 = vmatprep.subr.bf16.mxu0 0
  %180 = vmatpush1.bf16.msra.mxu0 %v144
  %181 = vmatprep.subr.bf16.mxu0 0
  %182 = vmatpush1.bf16.msra.mxu0 %v145
  %183 = vmatprep.subr.bf16.mxu0 0
  %184 = vmatpush1.bf16.msra.mxu0 %v146
  %185 = vmatprep.subr.bf16.mxu0 0
  %186 = vmatpush1.bf16.msra.mxu0 %v147
  %187 = vmatprep.subr.bf16.mxu0 0
  %188 = vmatpush1.bf16.msra.mxu0 %v148
  %189 = vmatprep.subr.bf16.mxu0 0
  %190 = vmatpush1.bf16.msra.mxu0 %v149
  %191 = vmatprep.subr.bf16.mxu0 0
  %192 = vmatpush1.bf16.msra.mxu0 %v150
  %193 = vmatprep.subr.bf16.mxu0 0
  %194 = vmatpush1.bf16.msra.mxu0 %v151
  %195 = vmatprep.subr.bf16.mxu0 0
  %196 = vmatpush1.bf16.msra.mxu0 %v152
  %197 = vmatprep.subr.bf16.mxu0 0
  %198 = vmatpush1.bf16.msra.mxu0 %v153
  %199 = vmatprep.subr.bf16.mxu0 0
  %200 = vmatpush1.bf16.msra.mxu0 %v154
  %201 = vmatprep.subr.bf16.mxu0 0
  %202 = vmatpush1.bf16.msra.mxu0 %v155
  %203 = vmatprep.subr.bf16.mxu0 0
  %204 = vmatpush1.bf16.msra.mxu0 %v156
  %205 = vmatprep.mubr.bf16.mxu0 %v70
  %206 = vmatmul.mubr.bf16.gmra.mrb[0].mxu0 %v69
  %v207 = vpop.f32.mrb[0].mxu0
  %v208 = vadd.f32 %v58, %v207
  %v209 = vpop.f32.mrb[0].mxu0
  %v210 = vpop.f32.mrb[0].mxu0
  %v211 = vadd.f32 %v58, %v210
  %v212 = vpop.f32.mrb[0].mxu0
  %213 = vmatprep.mubr.bf16.mxu0 %v72
  %214 = vmatmul.mubr.bf16.gmra.mrb[0].mxu0 %v71
  %v215 = vpop.f32.mrb[0].mxu0
  %v216 = vadd.f32 %v58, %v215
  %v217 = vpop.f32.mrb[0].mxu0
  %v218 = vpop.f32.mrb[0].mxu0
  %v219 = vpop.f32.mrb[0].mxu0
  %220 = vdwg.mxu0
  %v221 = vpack.c.bf16 %v211, %v208
  %v222 = vpack.c.bf16 %v216, %v216
  %v225 = vunpack.c.l.b16 %v221
  %v226 = vunpack.c.h.b16 %v221
  %v227 = vunpack.c.l.b16 %v222
  %v228 = vpack.c.b16 %v225, %v225
  %v229 = vpack.c.b16 %v226, %v226
  %v230 = vpack.c.b16 %v227, %v227
  %vm234 = vcmask 257024
  %235 = vst.msk [vmem:[%s3] sm:$0xf] %vm234, %v228
  %236 = vst.msk [vmem:[%s3 + $0x4] sm:$0xf] %vm234, %v229
  %vm237 = vcmask 253952
  %238 = vst.msk [vmem:[%s3 + $0x8] sm:$0x1] %vm237, %v230
  %vm239 = vcmask 261120
  %v240 = vsel %vm239, %v208, 0.0
  %v241 = vsel %vm239, %v211, 0.0
  %v242 = vadd.f32 %v240, %v241
  %vm243 = vcmask 254976
  %v244 = vsel %vm243, %v216, 0.0
  %v245 = vadd.f32 %v242, %v244
  %v246 = vrot.slane %v245, 4
  %v247 = vadd.f32 %v245, %v246
  %v248 = vrot.slane %v247, 2
  %v249 = vadd.f32 %v247, %v248
  %v250 = vrot.slane %v249, 1
  %v251 = vadd.f32 %v249, %v250
  %252 = vst.msk [vmem:[%s4] sm:$0x1] %vm237, %v251
  %v253 = vmul.f32 %v208, %v208
  %v254 = vmul.f32 %v211, %v211
  %v255 = vmul.f32 %v216, %v216
  %v256 = vsel %vm239, %v253, 0.0
  %v257 = vsel %vm239, %v254, 0.0
  %v258 = vadd.f32 %v256, %v257
  %v259 = vsel %vm243, %v255, 0.0
  %v260 = vadd.f32 %v258, %v259
  %v261 = vrot.slane %v260, 4
  %v262 = vadd.f32 %v260, %v261
  %v263 = vrot.slane %v262, 2
  %v264 = vadd.f32 %v262, %v263
  %v265 = vrot.slane %v264, 1
  %v266 = vadd.f32 %v264, %v265
  %267 = vst.msk [vmem:[%s5] sm:$0x1] %vm237, %v266
  // Predicated region
  $region14: #{_lambda_.21} parent=0 // pred_check
    _
  $region15: #{_lambda_.21} parent=0 // pred_check_branch
    %269 = sbr.rel (0) target = $region17
  $region16: #{_lambda_.21} parent=0 // pred_region
    _
  $region17: #{_lambda_.21} parent=0 // pred_fallthru
    _
  // Predicated region
  $region18: #{_lambda_.21} parent=0 // pred_check
    _
  $region19: #{_lambda_.21} parent=0 // pred_check_branch
    %271 = sbr.rel (0) target = $region21
  $region20: #{_lambda_.21} parent=0 // pred_region
    _
  $region21: #{_lambda_.21} parent=0 // pred_fallthru
    _
  // Predicated region
  $region22: #{_lambda_.21} parent=0 // pred_check
    _
  $region23: #{_lambda_.21} parent=0 // pred_check_branch
    %273 = sbr.rel (0) target = $region25
  $region24: #{_lambda_.21} parent=0 // pred_region
    _
  $region25: #{_lambda_.21} parent=0 // pred_fallthru
    _
  // Predicated region
  $region26: #{_lambda_.21} parent=0 // pred_check
    _
  $region27: #{_lambda_.21} parent=0 // pred_check_branch
    %275 = sbr.rel (0) target = $region29
  $region28: #{_lambda_.21} parent=0 // pred_region
    _
  $region29: #{_lambda_.21} parent=0 // pred_fallthru
    _
  // Predicated region
  $region30: #{_lambda_.21} parent=0 // pred_check
    _
  $region31: #{_lambda_.21} parent=0 // pred_check_branch
    %277 = sbr.rel (0) target = $region33
  $region32: #{_lambda_.21} parent=0 // pred_region
    _
  $region33: #{_lambda_.21} parent=0 // pred_fallthru
    _
  // Predicated region
  $region34: #{_lambda_.21} parent=0 // pred_check
    _
  $region35: #{_lambda_.21} parent=0 // pred_check_branch
    %279 = sbr.rel (0) target = $region37
  $region36: #{_lambda_.21} parent=0 // pred_region
    _
  $region37: #{_lambda_.21} parent=0 // pred_fallthru
    _

// kernel: _lambda_.24
$region0: #{_lambda_.24}
  #allocation0 [shape = 'u32[]', space=smem, size = 0x4, offset = 0x4, fixed_abs, tag = 'smem constant byte address 0x4 - core index']
  #allocation1 [shape = 'u32[144,128]{1,0:T(1,128)}', space=vmem, size = 0x12000, scoped, tag = 'internal scratch']
  #allocation2 [shape = 'f32[1,1]{1,0:T(1,128)S(1)}', space=vmem, size = 0x200, scoped, tag = 'scoped memory for _lambda_.24']
  %s0 = inlined_call_operand.vmem [shape: bf16[32,2048], index: 0, kind: input, shape index: {}]
  %s1 = inlined_call_operand.vmem [shape: bf16[2048,1], index: 1, kind: input, shape index: {}]
  %s2 = inlined_call_operand.<no memory space> [shape: f32[1,1], index: 2, kind: input, shape index: {}]
  %s3 = inlined_call_operand.vmem [shape: f32[1,2048], index: 3, kind: input, shape index: {}]
  %s4 = inlined_call_operand.vmem [shape: f32[1,2048], index: 4, kind: input, shape index: {}]
  %s5 = inlined_call_operand.vmem [shape: bf16[32,1], index: 5, kind: output, shape index: {}]
  %s6 = sld [smem:[#allocation0]]
  $region53: #{_lambda_.24} parent=0
    _
  %s8 = ssub.s32 1, %s6
  %s9 = scalar_select 0, %s8, %s6
  %v10 = vstv %s2
  %11 = vst [vmem:[#allocation2] sm:$0x1] %v10
  loop: start=0, step=1, limit=4
  $region2: #{_lambda_.24} parent=0 // loop_pre_header
    _
  $region3: #{_lambda_.24} parent=0 // loop_header
    %s13 = sphi 0, %s17
    %p14 = scmp.ge.s32.totalorder %s13, 4
    %s23 = sphi 0, %s25
    %s26 = sphi 0, %s23
    %s27 = sphi 0, %s26
    %s43 = sphi 0, %s27
    %s47 = sphi 0, %s47
    %s49 = sphi 0, %s47
    %s50 = sphi 0, %s49
    %s64 = sphi 0, %s50
    %s68 = sphi 0, %s68
    %s70 = sphi 0, %s68
    %s71 = sphi 0, %s70
    %s85 = sphi 0, %s71
    %s89 = sphi 0, %s89
    %s91 = sphi 0, %s89
    %s92 = sphi 0, %s91
    %s106 = sphi 0, %s92
    %s110 = sphi 0, %s110
    %s112 = sphi 0, %s110
    %s113 = sphi 0, %s112
    %s127 = sphi 0, %s113
    %s133 = sphi 0, %s135
    %s136 = sphi 0, %s133
    %s137 = sphi 0, %s136
    %s153 = sphi 0, %s137
  $region4: #{_lambda_.24} parent=0 // loop_header_branch
    %16 = sbr.rel (%p14) target = $region8
  $region5: #{_lambda_.24} parent=0 // loop_body
    %s18 = ssub.s32 %s13, 1
    %s19 = ssub.s32 %s13, 2
    %s20 = sadd.s32 %s13, 1
    %s21 = ssub.s32 %s13, %s20
    %p22 = scmp.eq.s32.totalorder %s21, 0
    %s24 = sadd.s32 %s23, 1
    %s25 = scalar_select %p22, %s23, %s24
    %p28 = pneg %p22
    %p29 = scmp.eq.s32.totalorder %s13, 1
    %p30 = por %p28, %p29
    %p31 = scmp.ne.s32.totalorder %s23, %s26
    %p32 = scmp.eq.s32.totalorder %s13, 0
    %p33 = por %p31, %p32
    %p34 = scmp.ne.s32.totalorder %s23, %s26
    %p35 = scmp.eq.s32.totalorder %s18, 1
    %p36 = por %p34, %p35
    %p37 = scmp.ne.s32.totalorder %s26, %s27
    %p38 = scmp.eq.s32.totalorder %s18, 0
    %p39 = por %p37, %p38
    %p40 = scmp.ne.s32.totalorder %s26, %s27
    %p41 = scmp.eq.s32.totalorder %s19, 1
    %p42 = por %p40, %p41
    %p44 = scmp.ne.s32.totalorder %s27, %s43
    %p45 = scmp.eq.s32.totalorder %s19, 0
    %p46 = por %p44, %p45
    %s48 = sadd.s32 %s47, 1
    %p51 = scmp.eq.s32.totalorder %s13, 1
    %p52 = scmp.ne.s32.totalorder %s47, %s49
    %p53 = scmp.eq.s32.totalorder %s13, 0
    %p54 = por %p52, %p53
    %p55 = scmp.ne.s32.totalorder %s47, %s49
    %p56 = scmp.eq.s32.totalorder %s18, 1
    %p57 = por %p55, %p56
    %p58 = scmp.ne.s32.totalorder %s49, %s50
    %p59 = scmp.eq.s32.totalorder %s18, 0
    %p60 = por %p58, %p59
    %p61 = scmp.ne.s32.totalorder %s49, %s50
    %p62 = scmp.eq.s32.totalorder %s19, 1
    %p63 = por %p61, %p62
    %p65 = scmp.ne.s32.totalorder %s50, %s64
    %p66 = scmp.eq.s32.totalorder %s19, 0
    %p67 = por %p65, %p66
    %s69 = sadd.s32 %s68, 1
    %p72 = scmp.eq.s32.totalorder %s13, 1
    %p73 = scmp.ne.s32.totalorder %s68, %s70
    %p74 = scmp.eq.s32.totalorder %s13, 0
    %p75 = por %p73, %p74
    %p76 = scmp.ne.s32.totalorder %s68, %s70
    %p77 = scmp.eq.s32.totalorder %s18, 1
    %p78 = por %p76, %p77
    %p79 = scmp.ne.s32.totalorder %s70, %s71
    %p80 = scmp.eq.s32.totalorder %s18, 0
    %p81 = por %p79, %p80
    %p82 = scmp.ne.s32.totalorder %s70, %s71
    %p83 = scmp.eq.s32.totalorder %s19, 1
    %p84 = por %p82, %p83
    %p86 = scmp.ne.s32.totalorder %s71, %s85
    %p87 = scmp.eq.s32.totalorder %s19, 0
    %p88 = por %p86, %p87
    %s90 = sadd.s32 %s89, 1
    %p93 = scmp.eq.s32.totalorder %s13, 1
    %p94 = scmp.ne.s32.totalorder %s89, %s91
    %p95 = scmp.eq.s32.totalorder %s13, 0
    %p96 = por %p94, %p95
    %p97 = scmp.ne.s32.totalorder %s89, %s91
    %p98 = scmp.eq.s32.totalorder %s18, 1
    %p99 = por %p97, %p98
    %p100 = scmp.ne.s32.totalorder %s91, %s92
    %p101 = scmp.eq.s32.totalorder %s18, 0
    %p102 = por %p100, %p101
    %p103 = scmp.ne.s32.totalorder %s91, %s92
    %p104 = scmp.eq.s32.totalorder %s19, 1
    %p105 = por %p103, %p104
    %p107 = scmp.ne.s32.totalorder %s92, %s106
    %p108 = scmp.eq.s32.totalorder %s19, 0
    %p109 = por %p107, %p108
    %s111 = sadd.s32 %s110, 1
    %p114 = scmp.eq.s32.totalorder %s13, 1
    %p115 = scmp.ne.s32.totalorder %s110, %s112
    %p116 = scmp.eq.s32.totalorder %s13, 0
    %p117 = por %p115, %p116
    %p118 = scmp.ne.s32.totalorder %s110, %s112
    %p119 = scmp.eq.s32.totalorder %s18, 1
    %p120 = por %p118, %p119
    %p121 = scmp.ne.s32.totalorder %s112, %s113
    %p122 = scmp.eq.s32.totalorder %s18, 0
    %p123 = por %p121, %p122
    %p124 = scmp.ne.s32.totalorder %s112, %s113
    %p125 = scmp.eq.s32.totalorder %s19, 1
    %p126 = por %p124, %p125
    %p128 = scmp.ne.s32.totalorder %s113, %s127
    %p129 = scmp.eq.s32.totalorder %s19, 0
    %p130 = por %p128, %p129
    %s131 = ssub.s32 %s13, %s20
    %p132 = scmp.eq.s32.totalorder %s131, 0
    %s134 = sadd.s32 %s133, 1
    %s135 = scalar_select %p132, %s133, %s134
    %p138 = pneg %p132
    %p139 = scmp.eq.s32.totalorder %s13, 1
    %p140 = por %p138, %p139
    %p141 = scmp.ne.s32.totalorder %s133, %s136
    %p142 = scmp.eq.s32.totalorder %s13, 0
    %p143 = por %p141, %p142
    %p144 = scmp.ne.s32.totalorder %s133, %s136
    %p145 = scmp.eq.s32.totalorder %s18, 1
    %p146 = por %p144, %p145
    %p147 = scmp.ne.s32.totalorder %s136, %s137
    %p148 = scmp.eq.s32.totalorder %s18, 0
    %p149 = por %p147, %p148
    %p150 = scmp.ne.s32.totalorder %s136, %s137
    %p151 = scmp.eq.s32.totalorder %s19, 1
    %p152 = por %p150, %p151
    %p154 = scmp.ne.s32.totalorder %s137, %s153
    %p155 = scmp.eq.s32.totalorder %s19, 0
    %p156 = por %p154, %p155
    %p157 = scmp.le.s32.totalorder 1, %s13
    %p158 = scmp.lt.s32.totalorder %s13, 3
    %p159 = pnand %p157, %p158
    %p160 = pneg %p159
    // Predicated region
    $region9: #{_lambda_.24} parent=5 // pred_check
      _
    $region10: #{_lambda_.24} parent=5 // pred_check_branch
      %162 = sbr.rel (%p159) target = $region12
    $region11: #{_lambda_.24} parent=5 // pred_region
      %s163 = ssub.s32 %s13, 1
      // Predicated region
      $region13: #{_lambda_.24} parent=11 // pred_check
        %p164 = pneg %p60
      $region14: #{_lambda_.24} parent=11 // pred_check_branch
        %166 = sbr.rel (%p164) target = $region16
      $region15: #{_lambda_.24} parent=11 // pred_region
        _
      $region16: #{_lambda_.24} parent=11 // pred_fallthru
        _
      // Predicated region
      $region17: #{_lambda_.24} parent=11 // pred_check
        %p167 = pneg %p81
      $region18: #{_lambda_.24} parent=11 // pred_check_branch
        %169 = sbr.rel (%p167) target = $region20
      $region19: #{_lambda_.24} parent=11 // pred_region
        _
      $region20: #{_lambda_.24} parent=11 // pred_fallthru
        _
      // Predicated region
      $region21: #{_lambda_.24} parent=11 // pred_check
        %p170 = pneg %p102
      $region22: #{_lambda_.24} parent=11 // pred_check_branch
        %172 = sbr.rel (%p170) target = $region24
      $region23: #{_lambda_.24} parent=11 // pred_region
        _
      $region24: #{_lambda_.24} parent=11 // pred_fallthru
        _
      // Predicated region
      $region25: #{_lambda_.24} parent=11 // pred_check
        %p173 = pneg %p123
      $region26: #{_lambda_.24} parent=11 // pred_check_branch
        %175 = sbr.rel (%p173) target = $region28
      $region27: #{_lambda_.24} parent=11 // pred_region
        _
      $region28: #{_lambda_.24} parent=11 // pred_fallthru
        _
    $region12: #{_lambda_.24} parent=5 // pred_fallthru
      _
    %p176 = scmp.lt.s32.totalorder %s13, 2
    // Predicated region
    $region29: #{_lambda_.24} parent=5 // pred_check
      %p177 = pneg %p176
    $region30: #{_lambda_.24} parent=5 // pred_check_branch
      %179 = sbr.rel (%p177) target = $region32
    $region31: #{_lambda_.24} parent=5 // pred_region
      // Predicated region
      $region33: #{_lambda_.24} parent=31 // pred_check
        %p180 = pneg %p33
      $region34: #{_lambda_.24} parent=31 // pred_check_branch
        %182 = sbr.rel (%p180) target = $region36
      $region35: #{_lambda_.24} parent=31 // pred_region
        %s183 = smul.u32 2, %s13
        %p184 = scmp.lt.s32.totalorder %s183, 3
        %s185 = scalar_select %p184, %s183, 3
        %s186 = smul.addr %s185, 16
        %s187 = smul.addr %s186, 4
        %s188 = scalar_lea.vmem %s0, %s187
        %s189 = smul.u32 2, %s13
      $region36: #{_lambda_.24} parent=31 // pred_fallthru
        _
    $region32: #{_lambda_.24} parent=5 // pred_fallthru
      _
    %p190 = scmp.le.s32.totalorder 1, %s13
    %p191 = scmp.lt.s32.totalorder %s13, 3
    %p192 = pnand %p190, %p191
    %p193 = pneg %p192
    // Predicated region
    $region37: #{_lambda_.24} parent=5 // pred_check
      _
    $region38: #{_lambda_.24} parent=5 // pred_check_branch
      %195 = sbr.rel (%p192) target = $region40
    $region39: #{_lambda_.24} parent=5 // pred_region
      %s196 = ssub.s32 %s13, 1
      %s197 = smul.u32 2, %s18
      %p198 = scmp.lt.s32.totalorder %s197, 3
      %s199 = scalar_select %p198, %s197, 3
      %s200 = smul.addr %s199, 16
      %s201 = smul.addr %s200, 4
      %s202 = scalar_lea.vmem %s0, %s201
      %p203 = pneg %p39
      %p204 = pneg %p36
      %p205 = pneg %p60
      %p206 = pneg %p57
      %p207 = pneg %p81
      %p208 = pneg %p78
      %p209 = pneg %p102
      %p210 = pneg %p99
      %p211 = pneg %p123
      %p212 = pneg %p120
      %p213 = pneg %p149
      %p214 = pneg %p146
      %s215 = smul.u32 2, %s18
      %p216 = scmp.lt.s32.totalorder %s215, 3
      %s217 = scalar_select %p216, %s215, 3
      %s218 = smul.addr %s217, 4
      %s219 = scalar_lea.vmem %s5, %s218
      %s220 = smul.u32 2, %s18
      %p221 = scmp.lt.s32.totalorder %s220, 3
      %s222 = scalar_select %p221, %s220, 3
      %s223 = smul.addr %s222, 16
      %s224 = smul.addr %s223, 4
      %s225 = scalar_lea.vmem %s0, %s224
      %s226 = smul.u32 2, %s18
      %s227 = smul.u32 2, %s18
      %p228 = scmp.lt.s32.totalorder %s227, 3
      %s229 = scalar_select %p228, %s227, 3
      %s230 = smul.addr %s229, 4
      %s231 = scalar_lea.vmem %s5, %s230
      %s232 = smul.u32 2, %s18
      %v234 = vld [vmem:[%s225] sm:$0xff]
      %v235 = vld [vmem:[%s225 + $0x8] sm:$0xff]
      %v236 = vld [vmem:[%s225 + $0x10] sm:$0xff]
      %v237 = vld [vmem:[%s225 + $0x18] sm:$0xff]
      %v238 = vld [vmem:[%s225 + $0x20] sm:$0xff]
      %v239 = vld [vmem:[%s225 + $0x28] sm:$0xff]
      %v240 = vld [vmem:[%s225 + $0x30] sm:$0xff]
      %v241 = vld [vmem:[%s225 + $0x38] sm:$0xff]
      %v242 = vld [vmem:[%s225 + $0x40] sm:$0xff]
      %v243 = vld [vmem:[%s225 + $0x48] sm:$0xff]
      %v244 = vld [vmem:[%s225 + $0x50] sm:$0xff]
      %v245 = vld [vmem:[%s225 + $0x58] sm:$0xff]
      %v246 = vld [vmem:[%s225 + $0x60] sm:$0xff]
      %v247 = vld [vmem:[%s225 + $0x68] sm:$0xff]
      %v248 = vld [vmem:[%s225 + $0x70] sm:$0xff]
      %v249 = vld [vmem:[%s225 + $0x78] sm:$0xff]
      %v250 = vunpack.c.l.bf16 %v234
      %v251 = vunpack.c.h.bf16 %v234
      %v252 = vunpack.c.l.bf16 %v235
      %v253 = vunpack.c.h.bf16 %v235
      %v254 = vunpack.c.l.bf16 %v236
      %v255 = vunpack.c.h.bf16 %v236
      %v256 = vunpack.c.l.bf16 %v237
      %v257 = vunpack.c.h.bf16 %v237
      %v258 = vunpack.c.l.bf16 %v238
      %v259 = vunpack.c.h.bf16 %v238
      %v260 = vunpack.c.l.bf16 %v239
      %v261 = vunpack.c.h.bf16 %v239
      %v262 = vunpack.c.l.bf16 %v240
      %v263 = vunpack.c.h.bf16 %v240
      %v264 = vunpack.c.l.bf16 %v241
      %v265 = vunpack.c.h.bf16 %v241
      %v266 = vunpack.c.l.bf16 %v242
      %v267 = vunpack.c.h.bf16 %v242
      %v268 = vunpack.c.l.bf16 %v243
      %v269 = vunpack.c.h.bf16 %v243
      %v270 = vunpack.c.l.bf16 %v244
      %v271 = vunpack.c.h.bf16 %v244
      %v272 = vunpack.c.l.bf16 %v245
      %v273 = vunpack.c.h.bf16 %v245
      %v274 = vunpack.c.l.bf16 %v246
      %v275 = vunpack.c.h.bf16 %v246
      %v276 = vunpack.c.l.bf16 %v247
      %v277 = vunpack.c.h.bf16 %v247
      %v278 = vunpack.c.l.bf16 %v248
      %v279 = vunpack.c.h.bf16 %v248
      %v280 = vunpack.c.l.bf16 %v249
      %v281 = vunpack.c.h.bf16 %v249
      %v282 = vld [vmem:[%s4] sm:$0xff]
      %v283 = vld [vmem:[%s4 + $0x8] sm:$0xff]
      %v286 = vlaneseq
      %v287 = vshrl.u32 %v286, 7
      %v288 = vsub.s32 0, %v287
      %v289 = vrot.slane %v282, %v288
      %v290 = vlaneseq
      %v291 = vshrl.u32 %v290, 7
      %v292 = vsub.s32 1, %v291
      %v293 = vrot.slane %v282, %v292
      %v294 = vlaneseq
      %v295 = vshrl.u32 %v294, 7
      %v296 = vsub.s32 2, %v295
      %v297 = vrot.slane %v282, %v296
      %v298 = vlaneseq
      %v299 = vshrl.u32 %v298, 7
      %v300 = vsub.s32 3, %v299
      %v301 = vrot.slane %v282, %v300
      %v302 = vlaneseq
      %v303 = vshrl.u32 %v302, 7
      %v304 = vsub.s32 4, %v303
      %v305 = vrot.slane %v282, %v304
      %v306 = vlaneseq
      %v307 = vshrl.u32 %v306, 7
      %v308 = vsub.s32 5, %v307
      %v309 = vrot.slane %v282, %v308
      %v310 = vlaneseq
      %v311 = vshrl.u32 %v310, 7
      %v312 = vsub.s32 6, %v311
      %v313 = vrot.slane %v282, %v312
      %v314 = vlaneseq
      %v315 = vshrl.u32 %v314, 7
      %v316 = vsub.s32 7, %v315
      %v317 = vrot.slane %v282, %v316
      %v318 = vlaneseq
      %v319 = vshrl.u32 %v318, 7
      %v320 = vsub.s32 0, %v319
      %v321 = vrot.slane %v283, %v320
      %v322 = vlaneseq
      %v323 = vshrl.u32 %v322, 7
      %v324 = vsub.s32 1, %v323
      %v325 = vrot.slane %v283, %v324
      %v326 = vlaneseq
      %v327 = vshrl.u32 %v326, 7
      %v328 = vsub.s32 2, %v327
      %v329 = vrot.slane %v283, %v328
      %v330 = vlaneseq
      %v331 = vshrl.u32 %v330, 7
      %v332 = vsub.s32 3, %v331
      %v333 = vrot.slane %v283, %v332
      %v334 = vlaneseq
      %v335 = vshrl.u32 %v334, 7
      %v336 = vsub.s32 4, %v335
      %v337 = vrot.slane %v283, %v336
      %v338 = vlaneseq
      %v339 = vshrl.u32 %v338, 7
      %v340 = vsub.s32 5, %v339
      %v341 = vrot.slane %v283, %v340
      %v342 = vlaneseq
      %v343 = vshrl.u32 %v342, 7
      %v344 = vsub.s32 6, %v343
      %v345 = vrot.slane %v283, %v344
      %v346 = vlaneseq
      %v347 = vshrl.u32 %v346, 7
      %v348 = vsub.s32 7, %v347
      %v349 = vrot.slane %v283, %v348
      %v366 = vsub.f32 %v250, %v289
      %v367 = vsub.f32 %v251, %v293
      %v368 = vsub.f32 %v252, %v297
      %v369 = vsub.f32 %v253, %v301
      %v370 = vsub.f32 %v254, %v305
      %v371 = vsub.f32 %v255, %v309
      %v372 = vsub.f32 %v256, %v313
      %v373 = vsub.f32 %v257, %v317
      %v374 = vsub.f32 %v258, %v321
      %v375 = vsub.f32 %v259, %v325
      %v376 = vsub.f32 %v260, %v329
      %v377 = vsub.f32 %v261, %v333
      %v378 = vsub.f32 %v262, %v337
      %v379 = vsub.f32 %v263, %v341
      %v380 = vsub.f32 %v264, %v345
      %v381 = vsub.f32 %v265, %v349
      %v382 = vsub.f32 %v266, %v289
      %v383 = vsub.f32 %v267, %v293
      %v384 = vsub.f32 %v268, %v297
      %v385 = vsub.f32 %v269, %v301
      %v386 = vsub.f32 %v270, %v305
      %v387 = vsub.f32 %v271, %v309
      %v388 = vsub.f32 %v272, %v313
      %v389 = vsub.f32 %v273, %v317
      %v390 = vsub.f32 %v274, %v321
      %v391 = vsub.f32 %v275, %v325
      %v392 = vsub.f32 %v276, %v329
      %v393 = vsub.f32 %v277, %v333
      %v394 = vsub.f32 %v278, %v337
      %v395 = vsub.f32 %v279, %v341
      %v396 = vsub.f32 %v280, %v345
      %v397 = vsub.f32 %v281, %v349
      %v398 = vld [vmem:[%s3] sm:$0xff]
      %v399 = vld [vmem:[%s3 + $0x8] sm:$0xff]
      %v402 = vlaneseq
      %v403 = vshrl.u32 %v402, 7
      %v404 = vsub.s32 0, %v403
      %v405 = vrot.slane %v398, %v404
      %v406 = vlaneseq
      %v407 = vshrl.u32 %v406, 7
      %v408 = vsub.s32 1, %v407
      %v409 = vrot.slane %v398, %v408
      %v410 = vlaneseq
      %v411 = vshrl.u32 %v410, 7
      %v412 = vsub.s32 2, %v411
      %v413 = vrot.slane %v398, %v412
      %v414 = vlaneseq
      %v415 = vshrl.u32 %v414, 7
      %v416 = vsub.s32 3, %v415
      %v417 = vrot.slane %v398, %v416
      %v418 = vlaneseq
      %v419 = vshrl.u32 %v418, 7
      %v420 = vsub.s32 4, %v419
      %v421 = vrot.slane %v398, %v420
      %v422 = vlaneseq
      %v423 = vshrl.u32 %v422, 7
      %v424 = vsub.s32 5, %v423
      %v425 = vrot.slane %v398, %v424
      %v426 = vlaneseq
      %v427 = vshrl.u32 %v426, 7
      %v428 = vsub.s32 6, %v427
      %v429 = vrot.slane %v398, %v428
      %v430 = vlaneseq
      %v431 = vshrl.u32 %v430, 7
      %v432 = vsub.s32 7, %v431
      %v433 = vrot.slane %v398, %v432
      %v434 = vlaneseq
      %v435 = vshrl.u32 %v434, 7
      %v436 = vsub.s32 0, %v435
      %v437 = vrot.slane %v399, %v436
      %v438 = vlaneseq
      %v439 = vshrl.u32 %v438, 7
      %v440 = vsub.s32 1, %v439
      %v441 = vrot.slane %v399, %v440
      %v442 = vlaneseq
      %v443 = vshrl.u32 %v442, 7
      %v444 = vsub.s32 2, %v443
      %v445 = vrot.slane %v399, %v444
      %v446 = vlaneseq
      %v447 = vshrl.u32 %v446, 7
      %v448 = vsub.s32 3, %v447
      %v449 = vrot.slane %v399, %v448
      %v450 = vlaneseq
      %v451 = vshrl.u32 %v450, 7
      %v452 = vsub.s32 4, %v451
      %v453 = vrot.slane %v399, %v452
      %v454 = vlaneseq
      %v455 = vshrl.u32 %v454, 7
      %v456 = vsub.s32 5, %v455
      %v457 = vrot.slane %v399, %v456
      %v458 = vlaneseq
      %v459 = vshrl.u32 %v458, 7
      %v460 = vsub.s32 6, %v459
      %v461 = vrot.slane %v399, %v460
      %v462 = vlaneseq
      %v463 = vshrl.u32 %v462, 7
      %v464 = vsub.s32 7, %v463
      %v465 = vrot.slane %v399, %v464
      %v482 = vmul.f32 %v366, %v405
      %v483 = vmul.f32 %v367, %v409
      %v484 = vmul.f32 %v368, %v413
      %v485 = vmul.f32 %v369, %v417
      %v486 = vmul.f32 %v370, %v421
      %v487 = vmul.f32 %v371, %v425
      %v488 = vmul.f32 %v372, %v429
      %v489 = vmul.f32 %v373, %v433
      %v490 = vmul.f32 %v374, %v437
      %v491 = vmul.f32 %v375, %v441
      %v492 = vmul.f32 %v376, %v445
      %v493 = vmul.f32 %v377, %v449
      %v494 = vmul.f32 %v378, %v453
      %v495 = vmul.f32 %v379, %v457
      %v496 = vmul.f32 %v380, %v461
      %v497 = vmul.f32 %v381, %v465
      %v498 = vmul.f32 %v382, %v405
      %v499 = vmul.f32 %v383, %v409
      %v500 = vmul.f32 %v384, %v413
      %v501 = vmul.f32 %v385, %v417
      %v502 = vmul.f32 %v386, %v421
      %v503 = vmul.f32 %v387, %v425
      %v504 = vmul.f32 %v388, %v429
      %v505 = vmul.f32 %v389, %v433
      %v506 = vmul.f32 %v390, %v437
      %v507 = vmul.f32 %v391, %v441
      %v508 = vmul.f32 %v392, %v445
      %v509 = vmul.f32 %v393, %v449
      %v510 = vmul.f32 %v394, %v453
      %v511 = vmul.f32 %v395, %v457
      %v512 = vmul.f32 %v396, %v461
      %v513 = vmul.f32 %v397, %v465
      %vm514 = vcmp.ge.f32.partialorder %v482, 0.0
      %vm515 = vcmp.ge.f32.partialorder %v483, 0.0
      %vm516 = vcmp.ge.f32.partialorder %v484, 0.0
      %vm517 = vcmp.ge.f32.partialorder %v485, 0.0
      %vm518 = vcmp.ge.f32.partialorder %v486, 0.0
      %vm519 = vcmp.ge.f32.partialorder %v487, 0.0
      %vm520 = vcmp.ge.f32.partialorder %v488, 0.0
      %vm521 = vcmp.ge.f32.partialorder %v489, 0.0
      %vm522 = vcmp.ge.f32.partialorder %v490, 0.0
      %vm523 = vcmp.ge.f32.partialorder %v491, 0.0
      %vm524 = vcmp.ge.f32.partialorder %v492, 0.0
      %vm525 = vcmp.ge.f32.partialorder %v493, 0.0
      %vm526 = vcmp.ge.f32.partialorder %v494, 0.0
      %vm527 = vcmp.ge.f32.partialorder %v495, 0.0
      %vm528 = vcmp.ge.f32.partialorder %v496, 0.0
      %vm529 = vcmp.ge.f32.partialorder %v497, 0.0
      %vm530 = vcmp.ge.f32.partialorder %v498, 0.0
      %vm531 = vcmp.ge.f32.partialorder %v499, 0.0
      %vm532 = vcmp.ge.f32.partialorder %v500, 0.0
      %vm533 = vcmp.ge.f32.partialorder %v501, 0.0
      %vm534 = vcmp.ge.f32.partialorder %v502, 0.0
      %vm535 = vcmp.ge.f32.partialorder %v503, 0.0
      %vm536 = vcmp.ge.f32.partialorder %v504, 0.0
      %vm537 = vcmp.ge.f32.partialorder %v505, 0.0
      %vm538 = vcmp.ge.f32.partialorder %v506, 0.0
      %vm539 = vcmp.ge.f32.partialorder %v507, 0.0
      %vm540 = vcmp.ge.f32.partialorder %v508, 0.0
      %vm541 = vcmp.ge.f32.partialorder %v509, 0.0
      %vm542 = vcmp.ge.f32.partialorder %v510, 0.0
      %vm543 = vcmp.ge.f32.partialorder %v511, 0.0
      %vm544 = vcmp.ge.f32.partialorder %v512, 0.0
      %vm545 = vcmp.ge.f32.partialorder %v513, 0.0
      %v546 = vmul.f32 %v482, 0.2
      %v547 = vmul.f32 %v483, 0.2
      %v548 = vmul.f32 %v484, 0.2
      %v549 = vmul.f32 %v485, 0.2
      %v550 = vmul.f32 %v486, 0.2
      %v551 = vmul.f32 %v487, 0.2
      %v552 = vmul.f32 %v488, 0.2
      %v553 = vmul.f32 %v489, 0.2
      %v554 = vmul.f32 %v490, 0.2
      %v555 = vmul.f32 %v491, 0.2
      %v556 = vmul.f32 %v492, 0.2
      %v557 = vmul.f32 %v493, 0.2
      %v558 = vmul.f32 %v494, 0.2
      %v559 = vmul.f32 %v495, 0.2
      %v560 = vmul.f32 %v496, 0.2
      %v561 = vmul.f32 %v497, 0.2
      %v562 = vmul.f32 %v498, 0.2
      %v563 = vmul.f32 %v499, 0.2
      %v564 = vmul.f32 %v500, 0.2
      %v565 = vmul.f32 %v501, 0.2
      %v566 = vmul.f32 %v502, 0.2
      %v567 = vmul.f32 %v503, 0.2
      %v568 = vmul.f32 %v504, 0.2
      %v569 = vmul.f32 %v505, 0.2
      %v570 = vmul.f32 %v506, 0.2
      %v571 = vmul.f32 %v507, 0.2
      %v572 = vmul.f32 %v508, 0.2
      %v573 = vmul.f32 %v509, 0.2
      %v574 = vmul.f32 %v510, 0.2
      %v575 = vmul.f32 %v511, 0.2
      %v576 = vmul.f32 %v512, 0.2
      %v577 = vmul.f32 %v513, 0.2
      %v578 = vsel %vm514, %v482, %v546
      %v579 = vsel %vm515, %v483, %v547
      %v580 = vsel %vm516, %v484, %v548
      %v581 = vsel %vm517, %v485, %v549
      %v582 = vsel %vm518, %v486, %v550
      %v583 = vsel %vm519, %v487, %v551
      %v584 = vsel %vm520, %v488, %v552
      %v585 = vsel %vm521, %v489, %v553
      %v586 = vsel %vm522, %v490, %v554
      %v587 = vsel %vm523, %v491, %v555
      %v588 = vsel %vm524, %v492, %v556
      %v589 = vsel %vm525, %v493, %v557
      %v590 = vsel %vm526, %v494, %v558
      %v591 = vsel %vm527, %v495, %v559
      %v592 = vsel %vm528, %v496, %v560
      %v593 = vsel %vm529, %v497, %v561
      %v594 = vsel %vm530, %v498, %v562
      %v595 = vsel %vm531, %v499, %v563
      %v596 = vsel %vm532, %v500, %v564
      %v597 = vsel %vm533, %v501, %v565
      %v598 = vsel %vm534, %v502, %v566
      %v599 = vsel %vm535, %v503, %v567
      %v600 = vsel %vm536, %v504, %v568
      %v601 = vsel %vm537, %v505, %v569
      %v602 = vsel %vm538, %v506, %v570
      %v603 = vsel %vm539, %v507, %v571
      %v604 = vsel %vm540, %v508, %v572
      %v605 = vsel %vm541, %v509, %v573
      %v606 = vsel %vm542, %v510, %v574
      %v607 = vsel %vm543, %v511, %v575
      %v608 = vsel %vm544, %v512, %v576
      %v609 = vsel %vm545, %v513, %v577
      %v610 = vpack.c.bf16 %v594, %v578
      %v611 = vpack.c.bf16 %v595, %v579
      %v612 = vpack.c.bf16 %v596, %v580
      %v613 = vpack.c.bf16 %v597, %v581
      %v614 = vpack.c.bf16 %v598, %v582
      %v615 = vpack.c.bf16 %v599, %v583
      %v616 = vpack.c.bf16 %v600, %v584
      %v617 = vpack.c.bf16 %v601, %v585
      %v618 = vpack.c.bf16 %v602, %v586
      %v619 = vpack.c.bf16 %v603, %v587
      %v620 = vpack.c.bf16 %v604, %v588
      %v621 = vpack.c.bf16 %v605, %v589
      %v622 = vpack.c.bf16 %v606, %v590
      %v623 = vpack.c.bf16 %v607, %v591
      %v624 = vpack.c.bf16 %v608, %v592
      %v625 = vpack.c.bf16 %v609, %v593
      %v626 = vld [vmem:[%s1] sm:$0xf]
      %v627 = vld [vmem:[%s1 + $0x4] sm:$0xf]
      %v628 = vld [vmem:[%s1 + $0x8] sm:$0xf]
      %v629 = vld [vmem:[%s1 + $0xc] sm:$0xf]
      %v630 = vld [vmem:[%s1 + $0x10] sm:$0xf]
      %v631 = vld [vmem:[%s1 + $0x14] sm:$0xf]
      %v632 = vld [vmem:[%s1 + $0x18] sm:$0xf]
      %v633 = vld [vmem:[%s1 + $0x1c] sm:$0xf]
      %v634 = vld [vmem:[%s1 + $0x20] sm:$0xf]
      %v635 = vld [vmem:[%s1 + $0x24] sm:$0xf]
      %v636 = vld [vmem:[%s1 + $0x28] sm:$0xf]
      %v637 = vld [vmem:[%s1 + $0x2c] sm:$0xf]
      %v638 = vld [vmem:[%s1 + $0x30] sm:$0xf]
      %v639 = vld [vmem:[%s1 + $0x34] sm:$0xf]
      %v640 = vld [vmem:[%s1 + $0x38] sm:$0xf]
      %v641 = vld [vmem:[%s1 + $0x3c] sm:$0xf]
      %v642 = vld [vmem:[%s1 + $0x40] sm:$0xf]
      %v643 = vld [vmem:[%s1 + $0x44] sm:$0xf]
      %v644 = vld [vmem:[%s1 + $0x48] sm:$0xf]
      %v645 = vld [vmem:[%s1 + $0x4c] sm:$0xf]
      %v646 = vld [vmem:[%s1 + $0x50] sm:$0xf]
      %v647 = vld [vmem:[%s1 + $0x54] sm:$0xf]
      %v648 = vld [vmem:[%s1 + $0x58] sm:$0xf]
      %v649 = vld [vmem:[%s1 + $0x5c] sm:$0xf]
      %v650 = vld [vmem:[%s1 + $0x60] sm:$0xf]
      %v651 = vld [vmem:[%s1 + $0x64] sm:$0xf]
      %v652 = vld [vmem:[%s1 + $0x68] sm:$0xf]
      %v653 = vld [vmem:[%s1 + $0x6c] sm:$0xf]
      %v654 = vld [vmem:[%s1 + $0x70] sm:$0xf]
      %v655 = vld [vmem:[%s1 + $0x74] sm:$0xf]
      %v656 = vld [vmem:[%s1 + $0x78] sm:$0xf]
      %v657 = vld [vmem:[%s1 + $0x7c] sm:$0xf]
      %v658 = vld [vmem:[%s1 + $0x80] sm:$0xf]
      %v659 = vld [vmem:[%s1 + $0x84] sm:$0xf]
      %v660 = vld [vmem:[%s1 + $0x88] sm:$0xf]
      %v661 = vld [vmem:[%s1 + $0x8c] sm:$0xf]
      %v662 = vld [vmem:[%s1 + $0x90] sm:$0xf]
      %v663 = vld [vmem:[%s1 + $0x94] sm:$0xf]
      %v664 = vld [vmem:[%s1 + $0x98] sm:$0xf]
      %v665 = vld [vmem:[%s1 + $0x9c] sm:$0xf]
      %v666 = vld [vmem:[%s1 + $0xa0] sm:$0xf]
      %v667 = vld [vmem:[%s1 + $0xa4] sm:$0xf]
      %v668 = vld [vmem:[%s1 + $0xa8] sm:$0xf]
      %v669 = vld [vmem:[%s1 + $0xac] sm:$0xf]
      %v670 = vld [vmem:[%s1 + $0xb0] sm:$0xf]
      %v671 = vld [vmem:[%s1 + $0xb4] sm:$0xf]
      %v672 = vld [vmem:[%s1 + $0xb8] sm:$0xf]
      %v673 = vld [vmem:[%s1 + $0xbc] sm:$0xf]
      %v674 = vld [vmem:[%s1 + $0xc0] sm:$0xf]
      %v675 = vld [vmem:[%s1 + $0xc4] sm:$0xf]
      %v676 = vld [vmem:[%s1 + $0xc8] sm:$0xf]
      %v677 = vld [vmem:[%s1 + $0xcc] sm:$0xf]
      %v678 = vld [vmem:[%s1 + $0xd0] sm:$0xf]
      %v679 = vld [vmem:[%s1 + $0xd4] sm:$0xf]
      %v680 = vld [vmem:[%s1 + $0xd8] sm:$0xf]
      %v681 = vld [vmem:[%s1 + $0xdc] sm:$0xf]
      %v682 = vld [vmem:[%s1 + $0xe0] sm:$0xf]
      %v683 = vld [vmem:[%s1 + $0xe4] sm:$0xf]
      %v684 = vld [vmem:[%s1 + $0xe8] sm:$0xf]
      %v685 = vld [vmem:[%s1 + $0xec] sm:$0xf]
      %v686 = vld [vmem:[%s1 + $0xf0] sm:$0xf]
      %v687 = vld [vmem:[%s1 + $0xf4] sm:$0xf]
      %v688 = vld [vmem:[%s1 + $0xf8] sm:$0xf]
      %v689 = vld [vmem:[%s1 + $0xfc] sm:$0xf]
      %v690 = vld [vmem:[%s1 + $0x100] sm:$0xf]
      %v691 = vld [vmem:[%s1 + $0x104] sm:$0xf]
      %v692 = vld [vmem:[%s1 + $0x108] sm:$0xf]
      %v693 = vld [vmem:[%s1 + $0x10c] sm:$0xf]
      %v694 = vld [vmem:[%s1 + $0x110] sm:$0xf]
      %v695 = vld [vmem:[%s1 + $0x114] sm:$0xf]
      %v696 = vld [vmem:[%s1 + $0x118] sm:$0xf]
      %v697 = vld [vmem:[%s1 + $0x11c] sm:$0xf]
      %v698 = vld [vmem:[%s1 + $0x120] sm:$0xf]
      %v699 = vld [vmem:[%s1 + $0x124] sm:$0xf]
      %v700 = vld [vmem:[%s1 + $0x128] sm:$0xf]
      %v701 = vld [vmem:[%s1 + $0x12c] sm:$0xf]
      %v702 = vld [vmem:[%s1 + $0x130] sm:$0xf]
      %v703 = vld [vmem:[%s1 + $0x134] sm:$0xf]
      %v704 = vld [vmem:[%s1 + $0x138] sm:$0xf]
      %v705 = vld [vmem:[%s1 + $0x13c] sm:$0xf]
      %v706 = vld [vmem:[%s1 + $0x140] sm:$0xf]
      %v707 = vld [vmem:[%s1 + $0x144] sm:$0xf]
      %v708 = vld [vmem:[%s1 + $0x148] sm:$0xf]
      %v709 = vld [vmem:[%s1 + $0x14c] sm:$0xf]
      %v710 = vld [vmem:[%s1 + $0x150] sm:$0xf]
      %v711 = vld [vmem:[%s1 + $0x154] sm:$0xf]
      %v712 = vld [vmem:[%s1 + $0x158] sm:$0xf]
      %v713 = vld [vmem:[%s1 + $0x15c] sm:$0xf]
      %v714 = vld [vmem:[%s1 + $0x160] sm:$0xf]
      %v715 = vld [vmem:[%s1 + $0x164] sm:$0xf]
      %v716 = vld [vmem:[%s1 + $0x168] sm:$0xf]
      %v717 = vld [vmem:[%s1 + $0x16c] sm:$0xf]
      %v718 = vld [vmem:[%s1 + $0x170] sm:$0xf]
      %v719 = vld [vmem:[%s1 + $0x174] sm:$0xf]
      %v720 = vld [vmem:[%s1 + $0x178] sm:$0xf]
      %v721 = vld [vmem:[%s1 + $0x17c] sm:$0xf]
      %v722 = vld [vmem:[%s1 + $0x180] sm:$0xf]
      %v723 = vld [vmem:[%s1 + $0x184] sm:$0xf]
      %v724 = vld [vmem:[%s1 + $0x188] sm:$0xf]
      %v725 = vld [vmem:[%s1 + $0x18c] sm:$0xf]
      %v726 = vld [vmem:[%s1 + $0x190] sm:$0xf]
      %v727 = vld [vmem:[%s1 + $0x194] sm:$0xf]
      %v728 = vld [vmem:[%s1 + $0x198] sm:$0xf]
      %v729 = vld [vmem:[%s1 + $0x19c] sm:$0xf]
      %v730 = vld [vmem:[%s1 + $0x1a0] sm:$0xf]
      %v731 = vld [vmem:[%s1 + $0x1a4] sm:$0xf]
      %v732 = vld [vmem:[%s1 + $0x1a8] sm:$0xf]
      %v733 = vld [vmem:[%s1 + $0x1ac] sm:$0xf]
      %v734 = vld [vmem:[%s1 + $0x1b0] sm:$0xf]
      %v735 = vld [vmem:[%s1 + $0x1b4] sm:$0xf]
      %v736 = vld [vmem:[%s1 + $0x1b8] sm:$0xf]
      %v737 = vld [vmem:[%s1 + $0x1bc] sm:$0xf]
      %v738 = vld [vmem:[%s1 + $0x1c0] sm:$0xf]
      %v739 = vld [vmem:[%s1 + $0x1c4] sm:$0xf]
      %v740 = vld [vmem:[%s1 + $0x1c8] sm:$0xf]
      %v741 = vld [vmem:[%s1 + $0x1cc] sm:$0xf]
      %v742 = vld [vmem:[%s1 + $0x1d0] sm:$0xf]
      %v743 = vld [vmem:[%s1 + $0x1d4] sm:$0xf]
      %v744 = vld [vmem:[%s1 + $0x1d8] sm:$0xf]
      %v745 = vld [vmem:[%s1 + $0x1dc] sm:$0xf]
      %v746 = vld [vmem:[%s1 + $0x1e0] sm:$0xf]
      %v747 = vld [vmem:[%s1 + $0x1e4] sm:$0xf]
      %v748 = vld [vmem:[%s1 + $0x1e8] sm:$0xf]
      %v749 = vld [vmem:[%s1 + $0x1ec] sm:$0xf]
      %v750 = vld [vmem:[%s1 + $0x1f0] sm:$0xf]
      %v751 = vld [vmem:[%s1 + $0x1f4] sm:$0xf]
      %v752 = vld [vmem:[%s1 + $0x1f8] sm:$0xf]
      %v753 = vld [vmem:[%s1 + $0x1fc] sm:$0xf]
      %v754 = vld [vmem:[%s1 + $0x200] sm:$0xf]
      %v755 = vld [vmem:[%s1 + $0x204] sm:$0xf]
      %v756 = vld [vmem:[%s1 + $0x208] sm:$0xf]
      %v757 = vld [vmem:[%s1 + $0x20c] sm:$0xf]
      %v758 = vld [vmem:[%s1 + $0x210] sm:$0xf]
      %v759 = vld [vmem:[%s1 + $0x214] sm:$0xf]
      %v760 = vld [vmem:[%s1 + $0x218] sm:$0xf]
      %v761 = vld [vmem:[%s1 + $0x21c] sm:$0xf]
      %v762 = vld [vmem:[%s1 + $0x220] sm:$0xf]
      %v763 = vld [vmem:[%s1 + $0x224] sm:$0xf]
      %v764 = vld [vmem:[%s1 + $0x228] sm:$0xf]
      %v765 = vld [vmem:[%s1 + $0x22c] sm:$0xf]
      %v766 = vld [vmem:[%s1 + $0x230] sm:$0xf]
      %v767 = vld [vmem:[%s1 + $0x234] sm:$0xf]
      %v768 = vld [vmem:[%s1 + $0x238] sm:$0xf]
      %v769 = vld [vmem:[%s1 + $0x23c] sm:$0xf]
      %v770 = vld [vmem:[%s1 + $0x240] sm:$0xf]
      %v771 = vld [vmem:[%s1 + $0x244] sm:$0xf]
      %v772 = vld [vmem:[%s1 + $0x248] sm:$0xf]
      %v773 = vld [vmem:[%s1 + $0x24c] sm:$0xf]
      %v774 = vld [vmem:[%s1 + $0x250] sm:$0xf]
      %v775 = vld [vmem:[%s1 + $0x254] sm:$0xf]
      %v776 = vld [vmem:[%s1 + $0x258] sm:$0xf]
      %v777 = vld [vmem:[%s1 + $0x25c] sm:$0xf]
      %v778 = vld [vmem:[%s1 + $0x260] sm:$0xf]
      %v779 = vld [vmem:[%s1 + $0x264] sm:$0xf]
      %v780 = vld [vmem:[%s1 + $0x268] sm:$0xf]
      %v781 = vld [vmem:[%s1 + $0x26c] sm:$0xf]
      %v782 = vld [vmem:[%s1 + $0x270] sm:$0xf]
      %v783 = vld [vmem:[%s1 + $0x274] sm:$0xf]
      %v784 = vld [vmem:[%s1 + $0x278] sm:$0xf]
      %v785 = vld [vmem:[%s1 + $0x27c] sm:$0xf]
      %v786 = vld [vmem:[%s1 + $0x280] sm:$0xf]
      %v787 = vld [vmem:[%s1 + $0x284] sm:$0xf]
      %v788 = vld [vmem:[%s1 + $0x288] sm:$0xf]
      %v789 = vld [vmem:[%s1 + $0x28c] sm:$0xf]
      %v790 = vld [vmem:[%s1 + $0x290] sm:$0xf]
      %v791 = vld [vmem:[%s1 + $0x294] sm:$0xf]
      %v792 = vld [vmem:[%s1 + $0x298] sm:$0xf]
      %v793 = vld [vmem:[%s1 + $0x29c] sm:$0xf]
      %v794 = vld [vmem:[%s1 + $0x2a0] sm:$0xf]
      %v795 = vld [vmem:[%s1 + $0x2a4] sm:$0xf]
      %v796 = vld [vmem:[%s1 + $0x2a8] sm:$0xf]
      %v797 = vld [vmem:[%s1 + $0x2ac] sm:$0xf]
      %v798 = vld [vmem:[%s1 + $0x2b0] sm:$0xf]
      %v799 = vld [vmem:[%s1 + $0x2b4] sm:$0xf]
      %v800 = vld [vmem:[%s1 + $0x2b8] sm:$0xf]
      %v801 = vld [vmem:[%s1 + $0x2bc] sm:$0xf]
      %v802 = vld [vmem:[%s1 + $0x2c0] sm:$0xf]
      %v803 = vld [vmem:[%s1 + $0x2c4] sm:$0xf]
      %v804 = vld [vmem:[%s1 + $0x2c8] sm:$0xf]
      %v805 = vld [vmem:[%s1 + $0x2cc] sm:$0xf]
      %v806 = vld [vmem:[%s1 + $0x2d0] sm:$0xf]
      %v807 = vld [vmem:[%s1 + $0x2d4] sm:$0xf]
      %v808 = vld [vmem:[%s1 + $0x2d8] sm:$0xf]
      %v809 = vld [vmem:[%s1 + $0x2dc] sm:$0xf]
      %v810 = vld [vmem:[%s1 + $0x2e0] sm:$0xf]
      %v811 = vld [vmem:[%s1 + $0x2e4] sm:$0xf]
      %v812 = vld [vmem:[%s1 + $0x2e8] sm:$0xf]
      %v813 = vld [vmem:[%s1 + $0x2ec] sm:$0xf]
      %v814 = vld [vmem:[%s1 + $0x2f0] sm:$0xf]
      %v815 = vld [vmem:[%s1 + $0x2f4] sm:$0xf]
      %v816 = vld [vmem:[%s1 + $0x2f8] sm:$0xf]
      %v817 = vld [vmem:[%s1 + $0x2fc] sm:$0xf]
      %v818 = vld [vmem:[%s1 + $0x300] sm:$0xf]
      %v819 = vld [vmem:[%s1 + $0x304] sm:$0xf]
      %v820 = vld [vmem:[%s1 + $0x308] sm:$0xf]
      %v821 = vld [vmem:[%s1 + $0x30c] sm:$0xf]
      %v822 = vld [vmem:[%s1 + $0x310] sm:$0xf]
      %v823 = vld [vmem:[%s1 + $0x314] sm:$0xf]
      %v824 = vld [vmem:[%s1 + $0x318] sm:$0xf]
      %v825 = vld [vmem:[%s1 + $0x31c] sm:$0xf]
      %v826 = vld [vmem:[%s1 + $0x320] sm:$0xf]
      %v827 = vld [vmem:[%s1 + $0x324] sm:$0xf]
      %v828 = vld [vmem:[%s1 + $0x328] sm:$0xf]
      %v829 = vld [vmem:[%s1 + $0x32c] sm:$0xf]
      %v830 = vld [vmem:[%s1 + $0x330] sm:$0xf]
      %v831 = vld [vmem:[%s1 + $0x334] sm:$0xf]
      %v832 = vld [vmem:[%s1 + $0x338] sm:$0xf]
      %v833 = vld [vmem:[%s1 + $0x33c] sm:$0xf]
      %v834 = vld [vmem:[%s1 + $0x340] sm:$0xf]
      %v835 = vld [vmem:[%s1 + $0x344] sm:$0xf]
      %v836 = vld [vmem:[%s1 + $0x348] sm:$0xf]
      %v837 = vld [vmem:[%s1 + $0x34c] sm:$0xf]
      %v838 = vld [vmem:[%s1 + $0x350] sm:$0xf]
      %v839 = vld [vmem:[%s1 + $0x354] sm:$0xf]
      %v840 = vld [vmem:[%s1 + $0x358] sm:$0xf]
      %v841 = vld [vmem:[%s1 + $0x35c] sm:$0xf]
      %v842 = vld [vmem:[%s1 + $0x360] sm:$0xf]
      %v843 = vld [vmem:[%s1 + $0x364] sm:$0xf]
      %v844 = vld [vmem:[%s1 + $0x368] sm:$0xf]
      %v845 = vld [vmem:[%s1 + $0x36c] sm:$0xf]
      %v846 = vld [vmem:[%s1 + $0x370] sm:$0xf]
      %v847 = vld [vmem:[%s1 + $0x374] sm:$0xf]
      %v848 = vld [vmem:[%s1 + $0x378] sm:$0xf]
      %v849 = vld [vmem:[%s1 + $0x37c] sm:$0xf]
      %v850 = vld [vmem:[%s1 + $0x380] sm:$0xf]
      %v851 = vld [vmem:[%s1 + $0x384] sm:$0xf]
      %v852 = vld [vmem:[%s1 + $0x388] sm:$0xf]
      %v853 = vld [vmem:[%s1 + $0x38c] sm:$0xf]
      %v854 = vld [vmem:[%s1 + $0x390] sm:$0xf]
      %v855 = vld [vmem:[%s1 + $0x394] sm:$0xf]
      %v856 = vld [vmem:[%s1 + $0x398] sm:$0xf]
      %v857 = vld [vmem:[%s1 + $0x39c] sm:$0xf]
      %v858 = vld [vmem:[%s1 + $0x3a0] sm:$0xf]
      %v859 = vld [vmem:[%s1 + $0x3a4] sm:$0xf]
      %v860 = vld [vmem:[%s1 + $0x3a8] sm:$0xf]
      %v861 = vld [vmem:[%s1 + $0x3ac] sm:$0xf]
      %v862 = vld [vmem:[%s1 + $0x3b0] sm:$0xf]
      %v863 = vld [vmem:[%s1 + $0x3b4] sm:$0xf]
      %v864 = vld [vmem:[%s1 + $0x3b8] sm:$0xf]
      %v865 = vld [vmem:[%s1 + $0x3bc] sm:$0xf]
      %v866 = vld [vmem:[%s1 + $0x3c0] sm:$0xf]
      %v867 = vld [vmem:[%s1 + $0x3c4] sm:$0xf]
      %v868 = vld [vmem:[%s1 + $0x3c8] sm:$0xf]
      %v869 = vld [vmem:[%s1 + $0x3cc] sm:$0xf]
      %v870 = vld [vmem:[%s1 + $0x3d0] sm:$0xf]
      %v871 = vld [vmem:[%s1 + $0x3d4] sm:$0xf]
      %v872 = vld [vmem:[%s1 + $0x3d8] sm:$0xf]
      %v873 = vld [vmem:[%s1 + $0x3dc] sm:$0xf]
      %v874 = vld [vmem:[%s1 + $0x3e0] sm:$0xf]
      %v875 = vld [vmem:[%s1 + $0x3e4] sm:$0xf]
      %v876 = vld [vmem:[%s1 + $0x3e8] sm:$0xf]
      %v877 = vld [vmem:[%s1 + $0x3ec] sm:$0xf]
      %v878 = vld [vmem:[%s1 + $0x3f0] sm:$0xf]
      %v879 = vld [vmem:[%s1 + $0x3f4] sm:$0xf]
      %v880 = vld [vmem:[%s1 + $0x3f8] sm:$0xf]
      %v881 = vld [vmem:[%s1 + $0x3fc] sm:$0xf]
      %v882 = vld [vmem:[#allocation2] sm:$0x1]
      %v884 = vlaneseq
      %v885 = vshrl.u32 %v884, 7
      %v886 = vsub.s32 0, %v885
      %v887 = vrot.slane %v882, %v886
      %v1145 = vunpack.c.l.b16 %v626
      %v1146 = vunpack.c.l.b16 %v627
      %v1147 = vunpack.c.l.b16 %v628
      %v1148 = vunpack.c.l.b16 %v629
      %v1149 = vunpack.c.l.b16 %v630
      %v1150 = vunpack.c.l.b16 %v631
      %v1151 = vunpack.c.l.b16 %v632
      %v1152 = vunpack.c.l.b16 %v633
      %v1153 = vunpack.c.l.b16 %v634
      %v1154 = vunpack.c.l.b16 %v635
      %v1155 = vunpack.c.l.b16 %v636
      %v1156 = vunpack.c.l.b16 %v637
      %v1157 = vunpack.c.l.b16 %v638
      %v1158 = vunpack.c.l.b16 %v639
      %v1159 = vunpack.c.l.b16 %v640
      %v1160 = vunpack.c.l.b16 %v641
      %v1161 = vunpack.c.l.b16 %v642
      %v1162 = vunpack.c.l.b16 %v643
      %v1163 = vunpack.c.l.b16 %v644
      %v1164 = vunpack.c.l.b16 %v645
      %v1165 = vunpack.c.l.b16 %v646
      %v1166 = vunpack.c.l.b16 %v647
      %v1167 = vunpack.c.l.b16 %v648
      %v1168 = vunpack.c.l.b16 %v649
      %v1169 = vunpack.c.l.b16 %v650
      %v1170 = vunpack.c.l.b16 %v651
      %v1171 = vunpack.c.l.b16 %v652
      %v1172 = vunpack.c.l.b16 %v653
      %v1173 = vunpack.c.l.b16 %v654
      %v1174 = vunpack.c.l.b16 %v655
      %v1175 = vunpack.c.l.b16 %v656
      %v1176 = vunpack.c.l.b16 %v657
      %v1177 = vunpack.c.l.b16 %v658
      %v1178 = vunpack.c.l.b16 %v659
      %v1179 = vunpack.c.l.b16 %v660
      %v1180 = vunpack.c.l.b16 %v661
      %v1181 = vunpack.c.l.b16 %v662
      %v1182 = vunpack.c.l.b16 %v663
      %v1183 = vunpack.c.l.b16 %v664
      %v1184 = vunpack.c.l.b16 %v665
      %v1185 = vunpack.c.l.b16 %v666
      %v1186 = vunpack.c.l.b16 %v667
      %v1187 = vunpack.c.l.b16 %v668
      %v1188 = vunpack.c.l.b16 %v669
      %v1189 = vunpack.c.l.b16 %v670
      %v1190 = vunpack.c.l.b16 %v671
      %v1191 = vunpack.c.l.b16 %v672
      %v1192 = vunpack.c.l.b16 %v673
      %v1193 = vunpack.c.l.b16 %v674
      %v1194 = vunpack.c.l.b16 %v675
      %v1195 = vunpack.c.l.b16 %v676
      %v1196 = vunpack.c.l.b16 %v677
      %v1197 = vunpack.c.l.b16 %v678
      %v1198 = vunpack.c.l.b16 %v679
      %v1199 = vunpack.c.l.b16 %v680
      %v1200 = vunpack.c.l.b16 %v681
      %v1201 = vunpack.c.l.b16 %v682
      %v1202 = vunpack.c.l.b16 %v683
      %v1203 = vunpack.c.l.b16 %v684
      %v1204 = vunpack.c.l.b16 %v685
      %v1205 = vunpack.c.l.b16 %v686
      %v1206 = vunpack.c.l.b16 %v687
      %v1207 = vunpack.c.l.b16 %v688
      %v1208 = vunpack.c.l.b16 %v689
      %v1209 = vunpack.c.l.b16 %v690
      %v1210 = vunpack.c.l.b16 %v691
      %v1211 = vunpack.c.l.b16 %v692
      %v1212 = vunpack.c.l.b16 %v693
      %v1213 = vunpack.c.l.b16 %v694
      %v1214 = vunpack.c.l.b16 %v695
      %v1215 = vunpack.c.l.b16 %v696
      %v1216 = vunpack.c.l.b16 %v697
      %v1217 = vunpack.c.l.b16 %v698
      %v1218 = vunpack.c.l.b16 %v699
      %v1219 = vunpack.c.l.b16 %v700
      %v1220 = vunpack.c.l.b16 %v701
      %v1221 = vunpack.c.l.b16 %v702
      %v1222 = vunpack.c.l.b16 %v703
      %v1223 = vunpack.c.l.b16 %v704
      %v1224 = vunpack.c.l.b16 %v705
      %v1225 = vunpack.c.l.b16 %v706
      %v1226 = vunpack.c.l.b16 %v707
      %v1227 = vunpack.c.l.b16 %v708
      %v1228 = vunpack.c.l.b16 %v709
      %v1229 = vunpack.c.l.b16 %v710
      %v1230 = vunpack.c.l.b16 %v711
      %v1231 = vunpack.c.l.b16 %v712
      %v1232 = vunpack.c.l.b16 %v713
      %v1233 = vunpack.c.l.b16 %v714
      %v1234 = vunpack.c.l.b16 %v715
      %v1235 = vunpack.c.l.b16 %v716
      %v1236 = vunpack.c.l.b16 %v717
      %v1237 = vunpack.c.l.b16 %v718
      %v1238 = vunpack.c.l.b16 %v719
      %v1239 = vunpack.c.l.b16 %v720
      %v1240 = vunpack.c.l.b16 %v721
      %v1241 = vunpack.c.l.b16 %v722
      %v1242 = vunpack.c.l.b16 %v723
      %v1243 = vunpack.c.l.b16 %v724
      %v1244 = vunpack.c.l.b16 %v725
      %v1245 = vunpack.c.l.b16 %v726
      %v1246 = vunpack.c.l.b16 %v727
      %v1247 = vunpack.c.l.b16 %v728
      %v1248 = vunpack.c.l.b16 %v729
      %v1249 = vunpack.c.l.b16 %v730
      %v1250 = vunpack.c.l.b16 %v731
      %v1251 = vunpack.c.l.b16 %v732
      %v1252 = vunpack.c.l.b16 %v733
      %v1253 = vunpack.c.l.b16 %v734
      %v1254 = vunpack.c.l.b16 %v735
      %v1255 = vunpack.c.l.b16 %v736
      %v1256 = vunpack.c.l.b16 %v737
      %v1257 = vunpack.c.l.b16 %v738
      %v1258 = vunpack.c.l.b16 %v739
      %v1259 = vunpack.c.l.b16 %v740
      %v1260 = vunpack.c.l.b16 %v741
      %v1261 = vunpack.c.l.b16 %v742
      %v1262 = vunpack.c.l.b16 %v743
      %v1263 = vunpack.c.l.b16 %v744
      %v1264 = vunpack.c.l.b16 %v745
      %v1265 = vunpack.c.l.b16 %v746
      %v1266 = vunpack.c.l.b16 %v747
      %v1267 = vunpack.c.l.b16 %v748
      %v1268 = vunpack.c.l.b16 %v749
      %v1269 = vunpack.c.l.b16 %v750
      %v1270 = vunpack.c.l.b16 %v751
      %v1271 = vunpack.c.l.b16 %v752
      %v1272 = vunpack.c.l.b16 %v753
      %v1273 = vunpack.c.l.b16 %v754
      %v1274 = vunpack.c.l.b16 %v755
      %v1275 = vunpack.c.l.b16 %v756
      %v1276 = vunpack.c.l.b16 %v757
      %v1277 = vunpack.c.l.b16 %v758
      %v1278 = vunpack.c.l.b16 %v759
      %v1279 = vunpack.c.l.b16 %v760
      %v1280 = vunpack.c.l.b16 %v761
      %v1281 = vunpack.c.l.b16 %v762
      %v1282 = vunpack.c.l.b16 %v763
      %v1283 = vunpack.c.l.b16 %v764
      %v1284 = vunpack.c.l.b16 %v765
      %v1285 = vunpack.c.l.b16 %v766
      %v1286 = vunpack.c.l.b16 %v767
      %v1287 = vunpack.c.l.b16 %v768
      %v1288 = vunpack.c.l.b16 %v769
      %v1289 = vunpack.c.l.b16 %v770
      %v1290 = vunpack.c.l.b16 %v771
      %v1291 = vunpack.c.l.b16 %v772
      %v1292 = vunpack.c.l.b16 %v773
      %v1293 = vunpack.c.l.b16 %v774
      %v1294 = vunpack.c.l.b16 %v775
      %v1295 = vunpack.c.l.b16 %v776
      %v1296 = vunpack.c.l.b16 %v777
      %v1297 = vunpack.c.l.b16 %v778
      %v1298 = vunpack.c.l.b16 %v779
      %v1299 = vunpack.c.l.b16 %v780
      %v1300 = vunpack.c.l.b16 %v781
      %v1301 = vunpack.c.l.b16 %v782
      %v1302 = vunpack.c.l.b16 %v783
      %v1303 = vunpack.c.l.b16 %v784
      %v1304 = vunpack.c.l.b16 %v785
      %v1305 = vunpack.c.l.b16 %v786
      %v1306 = vunpack.c.l.b16 %v787
      %v1307 = vunpack.c.l.b16 %v788
      %v1308 = vunpack.c.l.b16 %v789
      %v1309 = vunpack.c.l.b16 %v790
      %v1310 = vunpack.c.l.b16 %v791
      %v1311 = vunpack.c.l.b16 %v792
      %v1312 = vunpack.c.l.b16 %v793
      %v1313 = vunpack.c.l.b16 %v794
      %v1314 = vunpack.c.l.b16 %v795
      %v1315 = vunpack.c.l.b16 %v796
      %v1316 = vunpack.c.l.b16 %v797
      %v1317 = vunpack.c.l.b16 %v798
      %v1318 = vunpack.c.l.b16 %v799
      %v1319 = vunpack.c.l.b16 %v800
      %v1320 = vunpack.c.l.b16 %v801
      %v1321 = vunpack.c.l.b16 %v802
      %v1322 = vunpack.c.l.b16 %v803
      %v1323 = vunpack.c.l.b16 %v804
      %v1324 = vunpack.c.l.b16 %v805
      %v1325 = vunpack.c.l.b16 %v806
      %v1326 = vunpack.c.l.b16 %v807
      %v1327 = vunpack.c.l.b16 %v808
      %v1328 = vunpack.c.l.b16 %v809
      %v1329 = vunpack.c.l.b16 %v810
      %v1330 = vunpack.c.l.b16 %v811
      %v1331 = vunpack.c.l.b16 %v812
      %v1332 = vunpack.c.l.b16 %v813
      %v1333 = vunpack.c.l.b16 %v814
      %v1334 = vunpack.c.l.b16 %v815
      %v1335 = vunpack.c.l.b16 %v816
      %v1336 = vunpack.c.l.b16 %v817
      %v1337 = vunpack.c.l.b16 %v818
      %v1338 = vunpack.c.l.b16 %v819
      %v1339 = vunpack.c.l.b16 %v820
      %v1340 = vunpack.c.l.b16 %v821
      %v1341 = vunpack.c.l.b16 %v822
      %v1342 = vunpack.c.l.b16 %v823
      %v1343 = vunpack.c.l.b16 %v824
      %v1344 = vunpack.c.l.b16 %v825
      %v1345 = vunpack.c.l.b16 %v826
      %v1346 = vunpack.c.l.b16 %v827
      %v1347 = vunpack.c.l.b16 %v828
      %v1348 = vunpack.c.l.b16 %v829
      %v1349 = vunpack.c.l.b16 %v830
      %v1350 = vunpack.c.l.b16 %v831
      %v1351 = vunpack.c.l.b16 %v832
      %v1352 = vunpack.c.l.b16 %v833
      %v1353 = vunpack.c.l.b16 %v834
      %v1354 = vunpack.c.l.b16 %v835
      %v1355 = vunpack.c.l.b16 %v836
      %v1356 = vunpack.c.l.b16 %v837
      %v1357 = vunpack.c.l.b16 %v838
      %v1358 = vunpack.c.l.b16 %v839
      %v1359 = vunpack.c.l.b16 %v840
      %v1360 = vunpack.c.l.b16 %v841
      %v1361 = vunpack.c.l.b16 %v842
      %v1362 = vunpack.c.l.b16 %v843
      %v1363 = vunpack.c.l.b16 %v844
      %v1364 = vunpack.c.l.b16 %v845
      %v1365 = vunpack.c.l.b16 %v846
      %v1366 = vunpack.c.l.b16 %v847
      %v1367 = vunpack.c.l.b16 %v848
      %v1368 = vunpack.c.l.b16 %v849
      %v1369 = vunpack.c.l.b16 %v850
      %v1370 = vunpack.c.l.b16 %v851
      %v1371 = vunpack.c.l.b16 %v852
      %v1372 = vunpack.c.l.b16 %v853
      %v1373 = vunpack.c.l.b16 %v854
      %v1374 = vunpack.c.l.b16 %v855
      %v1375 = vunpack.c.l.b16 %v856
      %v1376 = vunpack.c.l.b16 %v857
      %v1377 = vunpack.c.l.b16 %v858
      %v1378 = vunpack.c.l.b16 %v859
      %v1379 = vunpack.c.l.b16 %v860
      %v1380 = vunpack.c.l.b16 %v861
      %v1381 = vunpack.c.l.b16 %v862
      %v1382 = vunpack.c.l.b16 %v863
      %v1383 = vunpack.c.l.b16 %v864
      %v1384 = vunpack.c.l.b16 %v865
      %v1385 = vunpack.c.l.b16 %v866
      %v1386 = vunpack.c.l.b16 %v867
      %v1387 = vunpack.c.l.b16 %v868
      %v1388 = vunpack.c.l.b16 %v869
      %v1389 = vunpack.c.l.b16 %v870
      %v1390 = vunpack.c.l.b16 %v871
      %v1391 = vunpack.c.l.b16 %v872
      %v1392 = vunpack.c.l.b16 %v873
      %v1393 = vunpack.c.l.b16 %v874
      %v1394 = vunpack.c.l.b16 %v875
      %v1395 = vunpack.c.l.b16 %v876
      %v1396 = vunpack.c.l.b16 %v877
      %v1397 = vunpack.c.l.b16 %v878
      %v1398 = vunpack.c.l.b16 %v879
      %v1399 = vunpack.c.l.b16 %v880
      %v1400 = vunpack.c.l.b16 %v881
      %v1401 = vpack.c.b16 %v1146, %v1145
      %v1402 = vpack.c.b16 %v1148, %v1147
      %v1403 = vpack.c.b16 %v1150, %v1149
      %v1404 = vpack.c.b16 %v1152, %v1151
      %v1405 = vpack.c.b16 %v1154, %v1153
      %v1406 = vpack.c.b16 %v1156, %v1155
      %v1407 = vpack.c.b16 %v1158, %v1157
      %v1408 = vpack.c.b16 %v1160, %v1159
      %v1409 = vpack.c.b16 %v1162, %v1161
      %v1410 = vpack.c.b16 %v1164, %v1163
      %v1411 = vpack.c.b16 %v1166, %v1165
      %v1412 = vpack.c.b16 %v1168, %v1167
      %v1413 = vpack.c.b16 %v1170, %v1169
      %v1414 = vpack.c.b16 %v1172, %v1171
      %v1415 = vpack.c.b16 %v1174, %v1173
      %v1416 = vpack.c.b16 %v1176, %v1175
      %v1417 = vpack.c.b16 %v1178, %v1177
      %v1418 = vpack.c.b16 %v1180, %v1179
      %v1419 = vpack.c.b16 %v1182, %v1181
      %v1420 = vpack.c.b16 %v1184, %v1183
      %v1421 = vpack.c.b16 %v1186, %v1185
      %v1422 = vpack.c.b16 %v1188, %v1187
      %v1423 = vpack.c.b16 %v1190, %v1189
      %v1424 = vpack.c.b16 %v1192, %v1191
      %v1425 = vpack.c.b16 %v1194, %v1193
      %v1426 = vpack.c.b16 %v1196, %v1195
      %v1427 = vpack.c.b16 %v1198, %v1197
      %v1428 = vpack.c.b16 %v1200, %v1199
      %v1429 = vpack.c.b16 %v1202, %v1201
      %v1430 = vpack.c.b16 %v1204, %v1203
      %v1431 = vpack.c.b16 %v1206, %v1205
      %v1432 = vpack.c.b16 %v1208, %v1207
      %v1433 = vpack.c.b16 %v1210, %v1209
      %v1434 = vpack.c.b16 %v1212, %v1211
      %v1435 = vpack.c.b16 %v1214, %v1213
      %v1436 = vpack.c.b16 %v1216, %v1215
      %v1437 = vpack.c.b16 %v1218, %v1217
      %v1438 = vpack.c.b16 %v1220, %v1219
      %v1439 = vpack.c.b16 %v1222, %v1221
      %v1440 = vpack.c.b16 %v1224, %v1223
      %v1441 = vpack.c.b16 %v1226, %v1225
      %v1442 = vpack.c.b16 %v1228, %v1227
      %v1443 = vpack.c.b16 %v1230, %v1229
      %v1444 = vpack.c.b16 %v1232, %v1231
      %v1445 = vpack.c.b16 %v1234, %v1233
      %v1446 = vpack.c.b16 %v1236, %v1235
      %v1447 = vpack.c.b16 %v1238, %v1237
      %v1448 = vpack.c.b16 %v1240, %v1239
      %v1449 = vpack.c.b16 %v1242, %v1241
      %v1450 = vpack.c.b16 %v1244, %v1243
      %v1451 = vpack.c.b16 %v1246, %v1245
      %v1452 = vpack.c.b16 %v1248, %v1247
      %v1453 = vpack.c.b16 %v1250, %v1249
      %v1454 = vpack.c.b16 %v1252, %v1251
      %v1455 = vpack.c.b16 %v1254, %v1253
      %v1456 = vpack.c.b16 %v1256, %v1255
      %v1457 = vpack.c.b16 %v1258, %v1257
      %v1458 = vpack.c.b16 %v1260, %v1259
      %v1459 = vpack.c.b16 %v1262, %v1261
      %v1460 = vpack.c.b16 %v1264, %v1263
      %v1461 = vpack.c.b16 %v1266, %v1265
      %v1462 = vpack.c.b16 %v1268, %v1267
      %v1463 = vpack.c.b16 %v1270, %v1269
      %v1464 = vpack.c.b16 %v1272, %v1271
      %v1465 = vpack.c.b16 %v1274, %v1273
      %v1466 = vpack.c.b16 %v1276, %v1275
      %v1467 = vpack.c.b16 %v1278, %v1277
      %v1468 = vpack.c.b16 %v1280, %v1279
      %v1469 = vpack.c.b16 %v1282, %v1281
      %v1470 = vpack.c.b16 %v1284, %v1283
      %v1471 = vpack.c.b16 %v1286, %v1285
      %v1472 = vpack.c.b16 %v1288, %v1287
      %v1473 = vpack.c.b16 %v1290, %v1289
      %v1474 = vpack.c.b16 %v1292, %v1291
      %v1475 = vpack.c.b16 %v1294, %v1293
      %v1476 = vpack.c.b16 %v1296, %v1295
      %v1477 = vpack.c.b16 %v1298, %v1297
      %v1478 = vpack.c.b16 %v1300, %v1299
      %v1479 = vpack.c.b16 %v1302, %v1301
      %v1480 = vpack.c.b16 %v1304, %v1303
      %v1481 = vpack.c.b16 %v1306, %v1305
      %v1482 = vpack.c.b16 %v1308, %v1307
      %v1483 = vpack.c.b16 %v1310, %v1309
      %v1484 = vpack.c.b16 %v1312, %v1311
      %v1485 = vpack.c.b16 %v1314, %v1313
      %v1486 = vpack.c.b16 %v1316, %v1315
      %v1487 = vpack.c.b16 %v1318, %v1317
      %v1488 = vpack.c.b16 %v1320, %v1319
      %v1489 = vpack.c.b16 %v1322, %v1321
      %v1490 = vpack.c.b16 %v1324, %v1323
      %v1491 = vpack.c.b16 %v1326, %v1325
      %v1492 = vpack.c.b16 %v1328, %v1327
      %v1493 = vpack.c.b16 %v1330, %v1329
      %v1494 = vpack.c.b16 %v1332, %v1331
      %v1495 = vpack.c.b16 %v1334, %v1333
      %v1496 = vpack.c.b16 %v1336, %v1335
      %v1497 = vpack.c.b16 %v1338, %v1337
      %v1498 = vpack.c.b16 %v1340, %v1339
      %v1499 = vpack.c.b16 %v1342, %v1341
      %v1500 = vpack.c.b16 %v1344, %v1343
      %v1501 = vpack.c.b16 %v1346, %v1345
      %v1502 = vpack.c.b16 %v1348, %v1347
      %v1503 = vpack.c.b16 %v1350, %v1349
      %v1504 = vpack.c.b16 %v1352, %v1351
      %v1505 = vpack.c.b16 %v1354, %v1353
      %v1506 = vpack.c.b16 %v1356, %v1355
      %v1507 = vpack.c.b16 %v1358, %v1357
      %v1508 = vpack.c.b16 %v1360, %v1359
      %v1509 = vpack.c.b16 %v1362, %v1361
      %v1510 = vpack.c.b16 %v1364, %v1363
      %v1511 = vpack.c.b16 %v1366, %v1365
      %v1512 = vpack.c.b16 %v1368, %v1367
      %v1513 = vpack.c.b16 %v1370, %v1369
      %v1514 = vpack.c.b16 %v1372, %v1371
      %v1515 = vpack.c.b16 %v1374, %v1373
      %v1516 = vpack.c.b16 %v1376, %v1375
      %v1517 = vpack.c.b16 %v1378, %v1377
      %v1518 = vpack.c.b16 %v1380, %v1379
      %v1519 = vpack.c.b16 %v1382, %v1381
      %v1520 = vpack.c.b16 %v1384, %v1383
      %v1521 = vpack.c.b16 %v1386, %v1385
      %v1522 = vpack.c.b16 %v1388, %v1387
      %v1523 = vpack.c.b16 %v1390, %v1389
      %v1524 = vpack.c.b16 %v1392, %v1391
      %v1525 = vpack.c.b16 %v1394, %v1393
      %v1526 = vpack.c.b16 %v1396, %v1395
      %v1527 = vpack.c.b16 %v1398, %v1397
      %v1528 = vpack.c.b16 %v1400, %v1399
      %1657 = vmatprep.subr.bf16.mxu0 0
      %1658 = vmatpush1.bf16.msra.mxu0 %v1401
      %1659 = vmatprep.subr.bf16.mxu0 0
      %1660 = vmatpush1.bf16.msra.mxu0 %v1402
      %1661 = vmatprep.subr.bf16.mxu0 0
      %1662 = vmatpush1.bf16.msra.mxu0 %v1403
      %1663 = vmatprep.subr.bf16.mxu0 0
      %1664 = vmatpush1.bf16.msra.mxu0 %v1404
      %1665 = vmatprep.subr.bf16.mxu0 0
      %1666 = vmatpush1.bf16.msra.mxu0 %v1405
      %1667 = vmatprep.subr.bf16.mxu0 0
      %1668 = vmatpush1.bf16.msra.mxu0 %v1406
      %1669 = vmatprep.subr.bf16.mxu0 0
      %1670 = vmatpush1.bf16.msra.mxu0 %v1407
      %1671 = vmatprep.subr.bf16.mxu0 0
      %1672 = vmatpush1.bf16.msra.mxu0 %v1408
      %1673 = vmatprep.subr.bf16.mxu0 0
      %1674 = vmatpush1.bf16.msra.mxu0 %v1409
      %1675 = vmatprep.subr.bf16.mxu0 0
      %1676 = vmatpush1.bf16.msra.mxu0 %v1410
      %1677 = vmatprep.subr.bf16.mxu0 0
      %1678 = vmatpush1.bf16.msra.mxu0 %v1411
      %1679 = vmatprep.subr.bf16.mxu0 0
      %1680 = vmatpush1.bf16.msra.mxu0 %v1412
      %1681 = vmatprep.subr.bf16.mxu0 0
      %1682 = vmatpush1.bf16.msra.mxu0 %v1413
      %1683 = vmatprep.subr.bf16.mxu0 0
      %1684 = vmatpush1.bf16.msra.mxu0 %v1414
      %1685 = vmatprep.subr.bf16.mxu0 0
      %1686 = vmatpush1.bf16.msra.mxu0 %v1415
      %1687 = vmatprep.subr.bf16.mxu0 0
      %1688 = vmatpush1.bf16.msra.mxu0 %v1416
      %1689 = vmatprep.mubr.bf16.mxu0 %v611
      %1690 = vmatmul.mubr.bf16.gmra.mrb[0].mxu0 %v610
      %v1691 = vpop.f32.mrb[0].mxu0
      %v1692 = vadd.f32 %v887, %v1691
      %v1693 = vpop.f32.mrb[0].mxu0
      %v1694 = vpop.f32.mrb[0].mxu0
      %v1695 = vadd.f32 %v887, %v1694
      %v1696 = vpop.f32.mrb[0].mxu0
      %1697 = vdwg.mxu0
      %1698 = vmatprep.subr.bf16.mxu0 0
      %1699 = vmatpush1.bf16.msra.mxu0 %v1417
      %1700 = vmatprep.subr.bf16.mxu0 0
      %1701 = vmatpush1.bf16.msra.mxu0 %v1418
      %1702 = vmatprep.subr.bf16.mxu0 0
      %1703 = vmatpush1.bf16.msra.mxu0 %v1419
      %1704 = vmatprep.subr.bf16.mxu0 0
      %1705 = vmatpush1.bf16.msra.mxu0 %v1420
      %1706 = vmatprep.subr.bf16.mxu0 0
      %1707 = vmatpush1.bf16.msra.mxu0 %v1421
      %1708 = vmatprep.subr.bf16.mxu0 0
      %1709 = vmatpush1.bf16.msra.mxu0 %v1422
      %1710 = vmatprep.subr.bf16.mxu0 0
      %1711 = vmatpush1.bf16.msra.mxu0 %v1423
      %1712 = vmatprep.subr.bf16.mxu0 0
      %1713 = vmatpush1.bf16.msra.mxu0 %v1424
      %1714 = vmatprep.subr.bf16.mxu0 0
      %1715 = vmatpush1.bf16.msra.mxu0 %v1425
      %1716 = vmatprep.subr.bf16.mxu0 0
      %1717 = vmatpush1.bf16.msra.mxu0 %v1426
      %1718 = vmatprep.subr.bf16.mxu0 0
      %1719 = vmatpush1.bf16.msra.mxu0 %v1427
      %1720 = vmatprep.subr.bf16.mxu0 0
      %1721 = vmatpush1.bf16.msra.mxu0 %v1428
      %1722 = vmatprep.subr.bf16.mxu0 0
      %1723 = vmatpush1.bf16.msra.mxu0 %v1429
      %1724 = vmatprep.subr.bf16.mxu0 0
      %1725 = vmatpush1.bf16.msra.mxu0 %v1430
      %1726 = vmatprep.subr.bf16.mxu0 0
      %1727 = vmatpush1.bf16.msra.mxu0 %v1431
      %1728 = vmatprep.subr.bf16.mxu0 0
      %1729 = vmatpush1.bf16.msra.mxu0 %v1432
      %1730 = vmatprep.mubr.bf16.mxu0 %v613
      %1731 = vmatmul.mubr.bf16.gmra.mrb[0].mxu0 %v612
      %v1732 = vpop.f32.mrb[0].mxu0
      %v1733 = vadd.f32 %v1692, %v1732
      %v1734 = vpop.f32.mrb[0].mxu0
      %v1735 = vpop.f32.mrb[0].mxu0
      %v1736 = vadd.f32 %v1695, %v1735
      %v1737 = vpop.f32.mrb[0].mxu0
      %1738 = vdwg.mxu0
      %1739 = vmatprep.subr.bf16.mxu0 0
      %1740 = vmatpush1.bf16.msra.mxu0 %v1433
      %1741 = vmatprep.subr.bf16.mxu0 0
      %1742 = vmatpush1.bf16.msra.mxu0 %v1434
      %1743 = vmatprep.subr.bf16.mxu0 0
      %1744 = vmatpush1.bf16.msra.mxu0 %v1435
      %1745 = vmatprep.subr.bf16.mxu0 0
      %1746 = vmatpush1.bf16.msra.mxu0 %v1436
      %1747 = vmatprep.subr.bf16.mxu0 0
      %1748 = vmatpush1.bf16.msra.mxu0 %v1437
      %1749 = vmatprep.subr.bf16.mxu0 0
      %1750 = vmatpush1.bf16.msra.mxu0 %v1438
      %1751 = vmatprep.subr.bf16.mxu0 0
      %1752 = vmatpush1.bf16.msra.mxu0 %v1439
      %1753 = vmatprep.subr.bf16.mxu0 0
      %1754 = vmatpush1.bf16.msra.mxu0 %v1440
      %1755 = vmatprep.subr.bf16.mxu0 0
      %1756 = vmatpush1.bf16.msra.mxu0 %v1441
      %1757 = vmatprep.subr.bf16.mxu0 0
      %1758 = vmatpush1.bf16.msra.mxu0 %v1442
      %1759 = vmatprep.subr.bf16.mxu0 0
      %1760 = vmatpush1.bf16.msra.mxu0 %v1443
      %1761 = vmatprep.subr.bf16.mxu0 0
      %1762 = vmatpush1.bf16.msra.mxu0 %v1444
      %1763 = vmatprep.subr.bf16.mxu0 0
      %1764 = vmatpush1.bf16.msra.mxu0 %v1445
      %1765 = vmatprep.subr.bf16.mxu0 0
      %1766 = vmatpush1.bf16.msra.mxu0 %v1446
      %1767 = vmatprep.subr.bf16.mxu0 0
      %1768 = vmatpush1.bf16.msra.mxu0 %v1447
      %1769 = vmatprep.subr.bf16.mxu0 0
      %1770 = vmatpush1.bf16.msra.mxu0 %v1448
      %1771 = vmatprep.mubr.bf16.mxu0 %v615
      %1772 = vmatmul.mubr.bf16.gmra.mrb[0].mxu0 %v614
      %v1773 = vpop.f32.mrb[0].mxu0
      %v1774 = vadd.f32 %v1733, %v1773
      %v1775 = vpop.f32.mrb[0].mxu0
      %v1776 = vpop.f32.mrb[0].mxu0
      %v1777 = vadd.f32 %v1736, %v1776
      %v1778 = vpop.f32.mrb[0].mxu0
      %1779 = vdwg.mxu0
      %1780 = vmatprep.subr.bf16.mxu0 0
      %1781 = vmatpush1.bf16.msra.mxu0 %v1449
      %1782 = vmatprep.subr.bf16.mxu0 0
      %1783 = vmatpush1.bf16.msra.mxu0 %v1450
      %1784 = vmatprep.subr.bf16.mxu0 0
      %1785 = vmatpush1.bf16.msra.mxu0 %v1451
      %1786 = vmatprep.subr.bf16.mxu0 0
      %1787 = vmatpush1.bf16.msra.mxu0 %v1452
      %1788 = vmatprep.subr.bf16.mxu0 0
      %1789 = vmatpush1.bf16.msra.mxu0 %v1453
      %1790 = vmatprep.subr.bf16.mxu0 0
      %1791 = vmatpush1.bf16.msra.mxu0 %v1454
      %1792 = vmatprep.subr.bf16.mxu0 0
      %1793 = vmatpush1.bf16.msra.mxu0 %v1455
      %1794 = vmatprep.subr.bf16.mxu0 0
      %1795 = vmatpush1.bf16.msra.mxu0 %v1456
      %1796 = vmatprep.subr.bf16.mxu0 0
      %1797 = vmatpush1.bf16.msra.mxu0 %v1457
      %1798 = vmatprep.subr.bf16.mxu0 0
      %1799 = vmatpush1.bf16.msra.mxu0 %v1458
      %1800 = vmatprep.subr.bf16.mxu0 0
      %1801 = vmatpush1.bf16.msra.mxu0 %v1459
      %1802 = vmatprep.subr.bf16.mxu0 0
      %1803 = vmatpush1.bf16.msra.mxu0 %v1460
      %1804 = vmatprep.subr.bf16.mxu0 0
      %1805 = vmatpush1.bf16.msra.mxu0 %v1461
      %1806 = vmatprep.subr.bf16.mxu0 0
      %1807 = vmatpush1.bf16.msra.mxu0 %v1462
      %1808 = vmatprep.subr.bf16.mxu0 0
      %1809 = vmatpush1.bf16.msra.mxu0 %v1463
      %1810 = vmatprep.subr.bf16.mxu0 0
      %1811 = vmatpush1.bf16.msra.mxu0 %v1464
      %1812 = vmatprep.mubr.bf16.mxu0 %v617
      %1813 = vmatmul.mubr.bf16.gmra.mrb[0].mxu0 %v616
      %v1814 = vpop.f32.mrb[0].mxu0
      %v1815 = vadd.f32 %v1774, %v1814
      %v1816 = vpop.f32.mrb[0].mxu0
      %v1817 = vpop.f32.mrb[0].mxu0
      %v1818 = vadd.f32 %v1777, %v1817
      %v1819 = vpop.f32.mrb[0].mxu0
      %1820 = vdwg.mxu0
      %1821 = vmatprep.subr.bf16.mxu0 0
      %1822 = vmatpush1.bf16.msra.mxu0 %v1465
      %1823 = vmatprep.subr.bf16.mxu0 0
      %1824 = vmatpush1.bf16.msra.mxu0 %v1466
      %1825 = vmatprep.subr.bf16.mxu0 0
      %1826 = vmatpush1.bf16.msra.mxu0 %v1467
      %1827 = vmatprep.subr.bf16.mxu0 0
      %1828 = vmatpush1.bf16.msra.mxu0 %v1468
      %1829 = vmatprep.subr.bf16.mxu0 0
      %1830 = vmatpush1.bf16.msra.mxu0 %v1469
      %1831 = vmatprep.subr.bf16.mxu0 0
      %1832 = vmatpush1.bf16.msra.mxu0 %v1470
      %1833 = vmatprep.subr.bf16.mxu0 0
      %1834 = vmatpush1.bf16.msra.mxu0 %v1471
      %1835 = vmatprep.subr.bf16.mxu0 0
      %1836 = vmatpush1.bf16.msra.mxu0 %v1472
      %1837 = vmatprep.subr.bf16.mxu0 0
      %1838 = vmatpush1.bf16.msra.mxu0 %v1473
      %1839 = vmatprep.subr.bf16.mxu0 0
      %1840 = vmatpush1.bf16.msra.mxu0 %v1474
      %1841 = vmatprep.subr.bf16.mxu0 0
      %1842 = vmatpush1.bf16.msra.mxu0 %v1475
      %1843 = vmatprep.subr.bf16.mxu0 0
      %1844 = vmatpush1.bf16.msra.mxu0 %v1476
      %1845 = vmatprep.subr.bf16.mxu0 0
      %1846 = vmatpush1.bf16.msra.mxu0 %v1477
      %1847 = vmatprep.subr.bf16.mxu0 0
      %1848 = vmatpush1.bf16.msra.mxu0 %v1478
      %1849 = vmatprep.subr.bf16.mxu0 0
      %1850 = vmatpush1.bf16.msra.mxu0 %v1479
      %1851 = vmatprep.subr.bf16.mxu0 0
      %1852 = vmatpush1.bf16.msra.mxu0 %v1480
      %1853 = vmatprep.mubr.bf16.mxu0 %v619
      %1854 = vmatmul.mubr.bf16.gmra.mrb[0].mxu0 %v618
      %v1855 = vpop.f32.mrb[0].mxu0
      %v1856 = vadd.f32 %v1815, %v1855
      %v1857 = vpop.f32.mrb[0].mxu0
      %v1858 = vpop.f32.mrb[0].mxu0
      %v1859 = vadd.f32 %v1818, %v1858
      %v1860 = vpop.f32.mrb[0].mxu0
      %1861 = vdwg.mxu0
      %1862 = vmatprep.subr.bf16.mxu0 0
      %1863 = vmatpush1.bf16.msra.mxu0 %v1481
      %1864 = vmatprep.subr.bf16.mxu0 0
      %1865 = vmatpush1.bf16.msra.mxu0 %v1482
      %1866 = vmatprep.subr.bf16.mxu0 0
      %1867 = vmatpush1.bf16.msra.mxu0 %v1483
      %1868 = vmatprep.subr.bf16.mxu0 0
      %1869 = vmatpush1.bf16.msra.mxu0 %v1484
      %1870 = vmatprep.subr.bf16.mxu0 0
      %1871 = vmatpush1.bf16.msra.mxu0 %v1485
      %1872 = vmatprep.subr.bf16.mxu0 0
      %1873 = vmatpush1.bf16.msra.mxu0 %v1486
      %1874 = vmatprep.subr.bf16.mxu0 0
      %1875 = vmatpush1.bf16.msra.mxu0 %v1487
      %1876 = vmatprep.subr.bf16.mxu0 0
      %1877 = vmatpush1.bf16.msra.mxu0 %v1488
      %1878 = vmatprep.subr.bf16.mxu0 0
      %1879 = vmatpush1.bf16.msra.mxu0 %v1489
      %1880 = vmatprep.subr.bf16.mxu0 0
      %1881 = vmatpush1.bf16.msra.mxu0 %v1490
      %1882 = vmatprep.subr.bf16.mxu0 0
      %1883 = vmatpush1.bf16.msra.mxu0 %v1491
      %1884 = vmatprep.subr.bf16.mxu0 0
      %1885 = vmatpush1.bf16.msra.mxu0 %v1492
      %1886 = vmatprep.subr.bf16.mxu0 0
      %1887 = vmatpush1.bf16.msra.mxu0 %v1493
      %1888 = vmatprep.subr.bf16.mxu0 0
      %1889 = vmatpush1.bf16.msra.mxu0 %v1494
      %1890 = vmatprep.subr.bf16.mxu0 0
      %1891 = vmatpush1.bf16.msra.mxu0 %v1495
      %1892 = vmatprep.subr.bf16.mxu0 0
      %1893 = vmatpush1.bf16.msra.mxu0 %v1496
      %1894 = vmatprep.mubr.bf16.mxu0 %v621
      %1895 = vmatmul.mubr.bf16.gmra.mrb[0].mxu0 %v620
      %v1896 = vpop.f32.mrb[0].mxu0
      %v1897 = vadd.f32 %v1856, %v1896
      %v1898 = vpop.f32.mrb[0].mxu0
      %v1899 = vpop.f32.mrb[0].mxu0
      %v1900 = vadd.f32 %v1859, %v1899
      %v1901 = vpop.f32.mrb[0].mxu0
      %1902 = vdwg.mxu0
      %1903 = vmatprep.subr.bf16.mxu0 0
      %1904 = vmatpush1.bf16.msra.mxu0 %v1497
      %1905 = vmatprep.subr.bf16.mxu0 0
      %1906 = vmatpush1.bf16.msra.mxu0 %v1498
      %1907 = vmatprep.subr.bf16.mxu0 0
      %1908 = vmatpush1.bf16.msra.mxu0 %v1499
      %1909 = vmatprep.subr.bf16.mxu0 0
      %1910 = vmatpush1.bf16.msra.mxu0 %v1500
      %1911 = vmatprep.subr.bf16.mxu0 0
      %1912 = vmatpush1.bf16.msra.mxu0 %v1501
      %1913 = vmatprep.subr.bf16.mxu0 0
      %1914 = vmatpush1.bf16.msra.mxu0 %v1502
      %1915 = vmatprep.subr.bf16.mxu0 0
      %1916 = vmatpush1.bf16.msra.mxu0 %v1503
      %1917 = vmatprep.subr.bf16.mxu0 0
      %1918 = vmatpush1.bf16.msra.mxu0 %v1504
      %1919 = vmatprep.subr.bf16.mxu0 0
      %1920 = vmatpush1.bf16.msra.mxu0 %v1505
      %1921 = vmatprep.subr.bf16.mxu0 0
      %1922 = vmatpush1.bf16.msra.mxu0 %v1506
      %1923 = vmatprep.subr.bf16.mxu0 0
      %1924 = vmatpush1.bf16.msra.mxu0 %v1507
      %1925 = vmatprep.subr.bf16.mxu0 0
      %1926 = vmatpush1.bf16.msra.mxu0 %v1508
      %1927 = vmatprep.subr.bf16.mxu0 0
      %1928 = vmatpush1.bf16.msra.mxu0 %v1509
      %1929 = vmatprep.subr.bf16.mxu0 0
      %1930 = vmatpush1.bf16.msra.mxu0 %v1510
      %1931 = vmatprep.subr.bf16.mxu0 0
      %1932 = vmatpush1.bf16.msra.mxu0 %v1511
      %1933 = vmatprep.subr.bf16.mxu0 0
      %1934 = vmatpush1.bf16.msra.mxu0 %v1512
      %1935 = vmatprep.mubr.bf16.mxu0 %v623
      %1936 = vmatmul.mubr.bf16.gmra.mrb[0].mxu0 %v622
      %v1937 = vpop.f32.mrb[0].mxu0
      %v1938 = vadd.f32 %v1897, %v1937
      %v1939 = vpop.f32.mrb[0].mxu0
      %v1940 = vpop.f32.mrb[0].mxu0
      %v1941 = vadd.f32 %v1900, %v1940
      %v1942 = vpop.f32.mrb[0].mxu0
      %1943 = vdwg.mxu0
      %1944 = vmatprep.subr.bf16.mxu0 0
      %1945 = vmatpush1.bf16.msra.mxu0 %v1513
      %1946 = vmatprep.subr.bf16.mxu0 0
      %1947 = vmatpush1.bf16.msra.mxu0 %v1514
      %1948 = vmatprep.subr.bf16.mxu0 0
      %1949 = vmatpush1.bf16.msra.mxu0 %v1515
      %1950 = vmatprep.subr.bf16.mxu0 0
      %1951 = vmatpush1.bf16.msra.mxu0 %v1516
      %1952 = vmatprep.subr.bf16.mxu0 0
      %1953 = vmatpush1.bf16.msra.mxu0 %v1517
      %1954 = vmatprep.subr.bf16.mxu0 0
      %1955 = vmatpush1.bf16.msra.mxu0 %v1518
      %1956 = vmatprep.subr.bf16.mxu0 0
      %1957 = vmatpush1.bf16.msra.mxu0 %v1519
      %1958 = vmatprep.subr.bf16.mxu0 0
      %1959 = vmatpush1.bf16.msra.mxu0 %v1520
      %1960 = vmatprep.subr.bf16.mxu0 0
      %1961 = vmatpush1.bf16.msra.mxu0 %v1521
      %1962 = vmatprep.subr.bf16.mxu0 0
      %1963 = vmatpush1.bf16.msra.mxu0 %v1522
      %1964 = vmatprep.subr.bf16.mxu0 0
      %1965 = vmatpush1.bf16.msra.mxu0 %v1523
      %1966 = vmatprep.subr.bf16.mxu0 0
      %1967 = vmatpush1.bf16.msra.mxu0 %v1524
      %1968 = vmatprep.subr.bf16.mxu0 0
      %1969 = vmatpush1.bf16.msra.mxu0 %v1525
      %1970 = vmatprep.subr.bf16.mxu0 0
      %1971 = vmatpush1.bf16.msra.mxu0 %v1526
      %1972 = vmatprep.subr.bf16.mxu0 0
      %1973 = vmatpush1.bf16.msra.mxu0 %v1527
      %1974 = vmatprep.subr.bf16.mxu0 0
      %1975 = vmatpush1.bf16.msra.mxu0 %v1528
      %1976 = vmatprep.mubr.bf16.mxu0 %v625
      %1977 = vmatmul.mubr.bf16.gmra.mrb[0].mxu0 %v624
      %v1978 = vpop.f32.mrb[0].mxu0
      %v1979 = vadd.f32 %v1938, %v1978
      %v1980 = vpop.f32.mrb[0].mxu0
      %v1981 = vpop.f32.mrb[0].mxu0
      %v1982 = vadd.f32 %v1941, %v1981
      %v1983 = vpop.f32.mrb[0].mxu0
      %1984 = vdwg.mxu0
      %v1985 = vpack.c.bf16 %v1982, %v1979
      %v1987 = vunpack.c.l.b16 %v1985
      %v1988 = vunpack.c.h.b16 %v1985
      %v1989 = vpack.c.b16 %v1987, %v1987
      %v1990 = vpack.c.b16 %v1988, %v1988
      %vm1993 = vcmask 3072
      %1994 = vst.msk [vmem:[%s231] sm:$0xf] %vm1993, %v1989
      %1995 = vst.msk [vmem:[%s231 + $0x4] sm:$0xf] %vm1993, %v1990
      %s1996 = smul.u32 2, %s18
      %p1997 = scmp.lt.s32.totalorder %s1996, 3
      %s1998 = scalar_select %p1997, %s1996, 3
      %s1999 = smul.addr %s1998, 4
      %s2000 = scalar_lea.vmem %s5, %s1999
      // Predicated region
      $region41: #{_lambda_.24} parent=39 // pred_check
        %p2001 = pneg %p146
      $region42: #{_lambda_.24} parent=39 // pred_check_branch
        %2003 = sbr.rel (%p2001) target = $region44
      $region43: #{_lambda_.24} parent=39 // pred_region
        %s2004 = smul.u32 2, %s18
      $region44: #{_lambda_.24} parent=39 // pred_fallthru
        _
    $region40: #{_lambda_.24} parent=5 // pred_fallthru
      _
    %p2005 = scmp.le.s32.totalorder 2, %s13
    // Predicated region
    $region45: #{_lambda_.24} parent=5 // pred_check
      %p2006 = pneg %p2005
    $region46: #{_lambda_.24} parent=5 // pred_check_branch
      %2008 = sbr.rel (%p2006) target = $region48
    $region47: #{_lambda_.24} parent=5 // pred_region
      %s2009 = ssub.s32 %s13, 2
      // Predicated region
      $region49: #{_lambda_.24} parent=47 // pred_check
        %p2010 = pneg %p152
      $region50: #{_lambda_.24} parent=47 // pred_check_branch
        %2012 = sbr.rel (%p2010) target = $region52
      $region51: #{_lambda_.24} parent=47 // pred_region
        %s2013 = smul.u32 2, %s19
        %p2014 = scmp.lt.s32.totalorder %s2013, 3
        %s2015 = scalar_select %p2014, %s2013, 3
        %s2016 = smul.addr %s2015, 4
        %s2017 = scalar_lea.vmem %s5, %s2016
      $region52: #{_lambda_.24} parent=47 // pred_fallthru
        _
    $region48: #{_lambda_.24} parent=5 // pred_fallthru
      _
  $region6: #{_lambda_.24} parent=0 // loop_footer
    %s17 = sadd.s32 1, %s13
  $region7: #{_lambda_.24} parent=0 // loop_footer_branch
    %12 = sbr.rel target = $region3
  $region8: #{_lambda_.24} parent=0 // loop_exit
    _

// kernel: _lambda_.15
$region0: #{_lambda_.15}
  #allocation0 [shape = 'u32[]', space=smem, size = 0x4, offset = 0x4, fixed_abs, tag = 'smem constant byte address 0x4 - core index']
  #allocation1 [shape = 'u32[144,128]{1,0:T(1,128)}', space=vmem, size = 0x12000, scoped, tag = 'internal scratch']
  %s0 = inlined_call_operand.vmem [shape: bf16[162,64], index: 0, kind: input, shape index: {}]
  %s1 = inlined_call_operand.vmem [shape: bf16[64,16], index: 1, kind: input, shape index: {}]
  %s2 = inlined_call_operand.vmem [shape: f32[1,16], index: 2, kind: input, shape index: {}]
  %s3 = inlined_call_operand.vmem [shape: bf16[162,16], index: 3, kind: output, shape index: {}]
  %s4 = sld [smem:[#allocation0]]
  $region89: #{_lambda_.15} parent=0
    _
  %s6 = ssub.s32 1, %s4
  %s7 = scalar_select 0, %s6, %s4
  $region1: #{_lambda_.15} parent=0
    #allocation2 [shape = 'u8[45056]{0}', space=vmem, size = 0xb000, scoped, tag = 'output window, operand 0']
    loop: start=0, step=1, limit=4
    $region2: #{_lambda_.15} parent=1 // loop_pre_header
      _
    $region3: #{_lambda_.15} parent=1 // loop_header
      %s9 = sphi 0, %s13
      %p10 = scmp.ge.s32.totalorder %s9, 4
      %s19 = sphi 0, %s21
      %s22 = sphi 0, %s19
      %s23 = sphi 0, %s22
      %s39 = sphi 0, %s23
      %s43 = sphi 0, %s43
      %s45 = sphi 0, %s43
      %s46 = sphi 0, %s45
      %s60 = sphi 0, %s46
      %s64 = sphi 0, %s64
      %s66 = sphi 0, %s64
      %s67 = sphi 0, %s66
      %s81 = sphi 0, %s67
      %s87 = sphi 0, %s89
      %s90 = sphi 0, %s87
      %s91 = sphi 0, %s90
      %s107 = sphi 0, %s91
    $region4: #{_lambda_.15} parent=1 // loop_header_branch
      %12 = sbr.rel (%p10) target = $region8
    $region5: #{_lambda_.15} parent=1 // loop_body
      %s14 = ssub.s32 %s9, 1
      %s15 = ssub.s32 %s9, 2
      %s16 = sadd.s32 %s9, 1
      %s17 = ssub.s32 %s9, %s16
      %p18 = scmp.eq.s32.totalorder %s17, 0
      %s20 = sadd.s32 %s19, 1
      %s21 = scalar_select %p18, %s19, %s20
      %p24 = pneg %p18
      %p25 = scmp.eq.s32.totalorder %s9, 1
      %p26 = por %p24, %p25
      %p27 = scmp.ne.s32.totalorder %s19, %s22
      %p28 = scmp.eq.s32.totalorder %s9, 0
      %p29 = por %p27, %p28
      %p30 = scmp.ne.s32.totalorder %s19, %s22
      %p31 = scmp.eq.s32.totalorder %s14, 1
      %p32 = por %p30, %p31
      %p33 = scmp.ne.s32.totalorder %s22, %s23
      %p34 = scmp.eq.s32.totalorder %s14, 0
      %p35 = por %p33, %p34
      %p36 = scmp.ne.s32.totalorder %s22, %s23
      %p37 = scmp.eq.s32.totalorder %s15, 1
      %p38 = por %p36, %p37
      %p40 = scmp.ne.s32.totalorder %s23, %s39
      %p41 = scmp.eq.s32.totalorder %s15, 0
      %p42 = por %p40, %p41
      %s44 = sadd.s32 %s43, 1
      %p47 = scmp.eq.s32.totalorder %s9, 1
      %p48 = scmp.ne.s32.totalorder %s43, %s45
      %p49 = scmp.eq.s32.totalorder %s9, 0
      %p50 = por %p48, %p49
      %p51 = scmp.ne.s32.totalorder %s43, %s45
      %p52 = scmp.eq.s32.totalorder %s14, 1
      %p53 = por %p51, %p52
      %p54 = scmp.ne.s32.totalorder %s45, %s46
      %p55 = scmp.eq.s32.totalorder %s14, 0
      %p56 = por %p54, %p55
      %p57 = scmp.ne.s32.totalorder %s45, %s46
      %p58 = scmp.eq.s32.totalorder %s15, 1
      %p59 = por %p57, %p58
      %p61 = scmp.ne.s32.totalorder %s46, %s60
      %p62 = scmp.eq.s32.totalorder %s15, 0
      %p63 = por %p61, %p62
      %s65 = sadd.s32 %s64, 1
      %p68 = scmp.eq.s32.totalorder %s9, 1
      %p69 = scmp.ne.s32.totalorder %s64, %s66
      %p70 = scmp.eq.s32.totalorder %s9, 0
      %p71 = por %p69, %p70
      %p72 = scmp.ne.s32.totalorder %s64, %s66
      %p73 = scmp.eq.s32.totalorder %s14, 1
      %p74 = por %p72, %p73
      %p75 = scmp.ne.s32.totalorder %s66, %s67
      %p76 = scmp.eq.s32.totalorder %s14, 0
      %p77 = por %p75, %p76
      %p78 = scmp.ne.s32.totalorder %s66, %s67
      %p79 = scmp.eq.s32.totalorder %s15, 1
      %p80 = por %p78, %p79
      %p82 = scmp.ne.s32.totalorder %s67, %s81
      %p83 = scmp.eq.s32.totalorder %s15, 0
      %p84 = por %p82, %p83
      %s85 = ssub.s32 %s9, %s16
      %p86 = scmp.eq.s32.totalorder %s85, 0
      %s88 = sadd.s32 %s87, 1
      %s89 = scalar_select %p86, %s87, %s88
      %p92 = pneg %p86
      %p93 = scmp.eq.s32.totalorder %s9, 1
      %p94 = por %p92, %p93
      %p95 = scmp.ne.s32.totalorder %s87, %s90
      %p96 = scmp.eq.s32.totalorder %s9, 0
      %p97 = por %p95, %p96
      %p98 = scmp.ne.s32.totalorder %s87, %s90
      %p99 = scmp.eq.s32.totalorder %s14, 1
      %p100 = por %p98, %p99
      %p101 = scmp.ne.s32.totalorder %s90, %s91
      %p102 = scmp.eq.s32.totalorder %s14, 0
      %p103 = por %p101, %p102
      %p104 = scmp.ne.s32.totalorder %s90, %s91
      %p105 = scmp.eq.s32.totalorder %s15, 1
      %p106 = por %p104, %p105
      %p108 = scmp.ne.s32.totalorder %s91, %s107
      %p109 = scmp.eq.s32.totalorder %s15, 0
      %p110 = por %p108, %p109
      %p111 = scmp.le.s32.totalorder 1, %s9
      %p112 = scmp.lt.s32.totalorder %s9, 3
      %p113 = pnand %p111, %p112
      %p114 = pneg %p113
      // Predicated region
      $region9: #{_lambda_.15} parent=5 // pred_check
        _
      $region10: #{_lambda_.15} parent=5 // pred_check_branch
        %116 = sbr.rel (%p113) target = $region12
      $region11: #{_lambda_.15} parent=5 // pred_region
        %s117 = ssub.s32 %s9, 1
        // Predicated region
        $region13: #{_lambda_.15} parent=11 // pred_check
          %p118 = pneg %p56
        $region14: #{_lambda_.15} parent=11 // pred_check_branch
          %120 = sbr.rel (%p118) target = $region16
        $region15: #{_lambda_.15} parent=11 // pred_region
          _
        $region16: #{_lambda_.15} parent=11 // pred_fallthru
          _
        // Predicated region
        $region17: #{_lambda_.15} parent=11 // pred_check
          %p121 = pneg %p77
        $region18: #{_lambda_.15} parent=11 // pred_check_branch
          %123 = sbr.rel (%p121) target = $region20
        $region19: #{_lambda_.15} parent=11 // pred_region
          _
        $region20: #{_lambda_.15} parent=11 // pred_fallthru
          _
      $region12: #{_lambda_.15} parent=5 // pred_fallthru
        _
      %p124 = scmp.lt.s32.totalorder %s9, 2
      // Predicated region
      $region21: #{_lambda_.15} parent=5 // pred_check
        %p125 = pneg %p124
      $region22: #{_lambda_.15} parent=5 // pred_check_branch
        %127 = sbr.rel (%p125) target = $region24
      $region23: #{_lambda_.15} parent=5 // pred_region
        // Predicated region
        $region25: #{_lambda_.15} parent=23 // pred_check
          %p128 = pneg %p29
        $region26: #{_lambda_.15} parent=23 // pred_check_branch
          %130 = sbr.rel (%p128) target = $region28
        $region27: #{_lambda_.15} parent=23 // pred_region
          %s131 = smul.u32 11, %s9
          %s132 = ssub.s32 21, %s131
          %p133 = scmp.lt.s32.totalorder %s132, 11
          %s134 = scalar_select %p133, %s132, 11
          %s135 = smul.u32 64, %s134
          %p136 = scmp.lt.s32.totalorder %s131, 20
          %s137 = scalar_select %p136, %s131, 20
          %s138 = smul.addr %s137, 4
          %s139 = scalar_lea.vmem %s0, %s138
          %s140 = smul.u32 11, %s9
          %s141 = ssub.s32 21, %s140
          %p142 = scmp.lt.s32.totalorder %s141, 11
          %s143 = scalar_select %p142, %s141, 11
          %s144 = smul.u32 64, %s143
        $region28: #{_lambda_.15} parent=23 // pred_fallthru
          _
      $region24: #{_lambda_.15} parent=5 // pred_fallthru
        _
      %p145 = scmp.le.s32.totalorder 1, %s9
      %p146 = scmp.lt.s32.totalorder %s9, 3
      %p147 = pnand %p145, %p146
      %p148 = pneg %p147
      // Predicated region
      $region29: #{_lambda_.15} parent=5 // pred_check
        _
      $region30: #{_lambda_.15} parent=5 // pred_check_branch
        %150 = sbr.rel (%p147) target = $region32
      $region31: #{_lambda_.15} parent=5 // pred_region
        %s151 = ssub.s32 %s9, 1
        %s152 = smul.u32 11, %s14
        %s153 = ssub.s32 21, %s152
        %p154 = scmp.lt.s32.totalorder %s153, 11
        %s155 = scalar_select %p154, %s153, 11
        %s156 = smul.u32 64, %s155
        %p157 = scmp.lt.s32.totalorder %s152, 20
        %s158 = scalar_select %p157, %s152, 20
        %s159 = smul.addr %s158, 4
        %s160 = scalar_lea.vmem %s0, %s159
        %p161 = pneg %p35
        %p162 = pneg %p32
        %p163 = pneg %p56
        %p164 = pneg %p53
        %p165 = pneg %p77
        %p166 = pneg %p74
        %p167 = pneg %p103
        %p168 = pneg %p100
        %s169 = sand.u32 %s90, 1
        %s170 = sand.u32 %s90, 1
        %s171 = smul.addr %s170, 44
        %s172 = scalar_lea.vmem [#allocation2], %s171
        %s173 = smul.u32 11, %s14
        %s174 = ssub.s32 21, %s173
        %p175 = scmp.lt.s32.totalorder %s174, 11
        %s176 = scalar_select %p175, %s174, 11
        %s177 = smul.u32 64, %s176
        %p178 = scmp.lt.s32.totalorder %s173, 20
        %s179 = scalar_select %p178, %s173, 20
        %s180 = smul.addr %s179, 4
        %s181 = scalar_lea.vmem %s0, %s180
        %s182 = smul.u32 11, %s14
        %s183 = ssub.s32 21, %s182
        %p184 = scmp.lt.s32.totalorder %s183, 11
        %s185 = scalar_select %p184, %s183, 11
        %s186 = smul.u32 64, %s185
        %s187 = smul.u32 11, %s14
        %s188 = ssub.s32 21, %s187
        %p189 = scmp.lt.s32.totalorder %s188, 11
        %s190 = scalar_select %p189, %s188, 11
        %s191 = smul.u32 64, %s190
        %v193 = vld [vmem:[%s181] sm:$0xf]
        %v194 = vld [vmem:[%s181 + $0x4] sm:$0xf]
        %v195 = vld [vmem:[%s181 + $0x8] sm:$0xf]
        %v196 = vld [vmem:[%s181 + $0xc] sm:$0xf]
        %v197 = vld [vmem:[%s181 + $0x10] sm:$0xf]
        %v198 = vld [vmem:[%s181 + $0x14] sm:$0xf]
        %v199 = vld [vmem:[%s181 + $0x18] sm:$0xf]
        %v200 = vld [vmem:[%s181 + $0x1c] sm:$0xf]
        %v201 = vld [vmem:[%s181 + $0x20] sm:$0xf]
        %v202 = vld [vmem:[%s181 + $0x24] sm:$0xf]
        %v203 = vld [vmem:[%s181 + $0x28] sm:$0xf]
        %v204 = vld [vmem:[%s1] sm:$0xf]
        %v205 = vld [vmem:[%s1 + $0x4] sm:$0xf]
        %v206 = vld [vmem:[%s1 + $0x8] sm:$0xf]
        %v207 = vld [vmem:[%s1 + $0xc] sm:$0xf]
        %v208 = vld [vmem:[%s1 + $0x10] sm:$0xf]
        %v209 = vld [vmem:[%s1 + $0x14] sm:$0xf]
        %v210 = vld [vmem:[%s1 + $0x18] sm:$0xf]
        %v211 = vld [vmem:[%s1 + $0x1c] sm:$0xf]
        %v212 = vld [vmem:[%s2] sm:$0x1]
        %v214 = vlaneseq
        %v215 = vshrl.u32 %v214, 7
        %v216 = vsub.s32 0, %v215
        %v217 = vrot.slane %v212, %v216
        %v230 = vunpack.c.l.b16 %v193
        %v231 = vunpack.c.l.b16 %v194
        %v232 = vunpack.c.l.b16 %v195
        %v233 = vunpack.c.l.b16 %v196
        %v234 = vunpack.c.l.b16 %v197
        %v235 = vunpack.c.l.b16 %v198
        %v236 = vunpack.c.l.b16 %v199
        %v237 = vunpack.c.l.b16 %v200
        %v238 = vunpack.c.l.b16 %v201
        %v239 = vunpack.c.l.b16 %v202
        %v240 = vunpack.c.l.b16 %v203
        %v241 = vpack.c.b16 %v231, %v230
        %v242 = vpack.c.b16 %v233, %v232
        %v243 = vpack.c.b16 %v235, %v234
        %v244 = vpack.c.b16 %v237, %v236
        %v245 = vpack.c.b16 %v239, %v238
        %v246 = vpack.c.b16 %v240, %v240
        %v255 = vunpack.c.l.b16 %v204
        %v256 = vunpack.c.l.b16 %v205
        %v257 = vunpack.c.l.b16 %v206
        %v258 = vunpack.c.l.b16 %v207
        %v259 = vunpack.c.l.b16 %v208
        %v260 = vunpack.c.l.b16 %v209
        %v261 = vunpack.c.l.b16 %v210
        %v262 = vunpack.c.l.b16 %v211
        %v263 = vpack.c.b16 %v256, %v255
        %v264 = vpack.c.b16 %v258, %v257
        %v265 = vpack.c.b16 %v260, %v259
        %v266 = vpack.c.b16 %v262, %v261
        %vm271 = vcmask 523264
        %v273 = vsel %vm271, %v241, 0
        %v276 = vsel %vm271, %v242, 0
        %v279 = vsel %vm271, %v243, 0
        %v282 = vsel %vm271, %v244, 0
        %v285 = vsel %vm271, %v245, 0
        %v288 = vsel %vm271, %v246, 0
        %290 = vmatprep.subr.bf16.mxu0 0
        %291 = vmatpush1.bf16.msra.mxu0 %v263
        %292 = vmatprep.subr.bf16.mxu0 0
        %293 = vmatpush1.bf16.msra.mxu0 %v264
        %294 = vmatprep.subr.bf16.mxu0 0
        %295 = vmatpush1.bf16.msra.mxu0 %v265
        %296 = vmatprep.subr.bf16.mxu0 0
        %297 = vmatpush1.bf16.msra.mxu0 %v266
        %298 = vmatprep.subr.bf16.mxu0 0
        %299 = vmatpush1.bf16.msra.mxu0 0
        %300 = vmatprep.subr.bf16.mxu0 0
        %301 = vmatpush1.bf16.msra.mxu0 0
        %302 = vmatprep.subr.bf16.mxu0 0
        %303 = vmatpush1.bf16.msra.mxu0 0
        %304 = vmatprep.subr.bf16.mxu0 0
        %305 = vmatpush1.bf16.msra.mxu0 0
        %306 = vmatprep.subr.bf16.mxu0 0
        %307 = vmatpush1.bf16.msra.mxu0 0
        %308 = vmatprep.subr.bf16.mxu0 0
        %309 = vmatpush1.bf16.msra.mxu0 0
        %310 = vmatprep.subr.bf16.mxu0 0
        %311 = vmatpush1.bf16.msra.mxu0 0
        %312 = vmatprep.subr.bf16.mxu0 0
        %313 = vmatpush1.bf16.msra.mxu0 0
        %314 = vmatprep.subr.bf16.mxu0 0
        %315 = vmatpush1.bf16.msra.mxu0 0
        %316 = vmatprep.subr.bf16.mxu0 0
        %317 = vmatpush1.bf16.msra.mxu0 0
        %318 = vmatprep.subr.bf16.mxu0 0
        %319 = vmatpush1.bf16.msra.mxu0 0
        %320 = vmatprep.subr.bf16.mxu0 0
        %321 = vmatpush1.bf16.msra.mxu0 0
        %322 = vmatprep.mubr.bf16.mxu0 0
        %323 = vmatmul.mubr.bf16.gmra.mrb[0].mxu0 %v273
        %v324 = vpop.f32.mrb[0].mxu0
        %v325 = vadd.f32 %v217, %v324
        %v326 = vpop.f32.mrb[0].mxu0
        %v327 = vpop.f32.mrb[0].mxu0
        %v328 = vadd.f32 %v217, %v327
        %v329 = vpop.f32.mrb[0].mxu0
        %330 = vmatprep.mubr.bf16.mxu0 0
        %331 = vmatmul.mubr.bf16.gmra.mrb[0].mxu0 %v276
        %v332 = vpop.f32.mrb[0].mxu0
        %v333 = vadd.f32 %v217, %v332
        %v334 = vpop.f32.mrb[0].mxu0
        %v335 = vpop.f32.mrb[0].mxu0
        %v336 = vadd.f32 %v217, %v335
        %v337 = vpop.f32.mrb[0].mxu0
        %338 = vmatprep.mubr.bf16.mxu0 0
        %339 = vmatmul.mubr.bf16.gmra.mrb[0].mxu0 %v279
        %v340 = vpop.f32.mrb[0].mxu0
        %v341 = vadd.f32 %v217, %v340
        %v342 = vpop.f32.mrb[0].mxu0
        %v343 = vpop.f32.mrb[0].mxu0
        %v344 = vadd.f32 %v217, %v343
        %v345 = vpop.f32.mrb[0].mxu0
        %346 = vmatprep.mubr.bf16.mxu0 0
        %347 = vmatmul.mubr.bf16.gmra.mrb[0].mxu0 %v282
        %v348 = vpop.f32.mrb[0].mxu0
        %v349 = vadd.f32 %v217, %v348
        %v350 = vpop.f32.mrb[0].mxu0
        %v351 = vpop.f32.mrb[0].mxu0
        %v352 = vadd.f32 %v217, %v351
        %v353 = vpop.f32.mrb[0].mxu0
        %354 = vmatprep.mubr.bf16.mxu0 0
        %355 = vmatmul.mubr.bf16.gmra.mrb[0].mxu0 %v285
        %v356 = vpop.f32.mrb[0].mxu0
        %v357 = vadd.f32 %v217, %v356
        %v358 = vpop.f32.mrb[0].mxu0
        %v359 = vpop.f32.mrb[0].mxu0
        %v360 = vadd.f32 %v217, %v359
        %v361 = vpop.f32.mrb[0].mxu0
        %362 = vmatprep.mubr.bf16.mxu0 0
        %363 = vmatmul.mubr.bf16.gmra.mrb[0].mxu0 %v288
        %v364 = vpop.f32.mrb[0].mxu0
        %v365 = vadd.f32 %v217, %v364
        %v366 = vpop.f32.mrb[0].mxu0
        %v367 = vpop.f32.mrb[0].mxu0
        %v368 = vpop.f32.mrb[0].mxu0
        %369 = vdwg.mxu0
        %vm370 = vcmp.ge.f32.partialorder %v325, 0.0
        %vm371 = vcmp.ge.f32.partialorder %v328, 0.0
        %vm372 = vcmp.ge.f32.partialorder %v333, 0.0
        %vm373 = vcmp.ge.f32.partialorder %v336, 0.0
        %vm374 = vcmp.ge.f32.partialorder %v341, 0.0
        %vm375 = vcmp.ge.f32.partialorder %v344, 0.0
        %vm376 = vcmp.ge.f32.partialorder %v349, 0.0
        %vm377 = vcmp.ge.f32.partialorder %v352, 0.0
        %vm378 = vcmp.ge.f32.partialorder %v357, 0.0
        %vm379 = vcmp.ge.f32.partialorder %v360, 0.0
        %vm380 = vcmp.ge.f32.partialorder %v365, 0.0
        %v381 = vmul.f32 %v325, 0.2
        %v382 = vmul.f32 %v328, 0.2
        %v383 = vmul.f32 %v333, 0.2
        %v384 = vmul.f32 %v336, 0.2
        %v385 = vmul.f32 %v341, 0.2
        %v386 = vmul.f32 %v344, 0.2
        %v387 = vmul.f32 %v349, 0.2
        %v388 = vmul.f32 %v352, 0.2
        %v389 = vmul.f32 %v357, 0.2
        %v390 = vmul.f32 %v360, 0.2
        %v391 = vmul.f32 %v365, 0.2
        %v392 = vsel %vm370, %v325, %v381
        %v393 = vsel %vm371, %v328, %v382
        %v394 = vsel %vm372, %v333, %v383
        %v395 = vsel %vm373, %v336, %v384
        %v396 = vsel %vm374, %v341, %v385
        %v397 = vsel %vm375, %v344, %v386
        %v398 = vsel %vm376, %v349, %v387
        %v399 = vsel %vm377, %v352, %v388
        %v400 = vsel %vm378, %v357, %v389
        %v401 = vsel %vm379, %v360, %v390
        %v402 = vsel %vm380, %v365, %v391
        %v403 = vpack.c.bf16 %v393, %v392
        %v404 = vpack.c.bf16 %v395, %v394
        %v405 = vpack.c.bf16 %v397, %v396
        %v406 = vpack.c.bf16 %v399, %v398
        %v407 = vpack.c.bf16 %v401, %v400
        %v408 = vpack.c.bf16 %v402, %v402
        %v415 = vunpack.c.l.b16 %v403
        %v416 = vunpack.c.h.b16 %v403
        %v417 = vunpack.c.l.b16 %v404
        %v418 = vunpack.c.h.b16 %v404
        %v419 = vunpack.c.l.b16 %v405
        %v420 = vunpack.c.h.b16 %v405
        %v421 = vunpack.c.l.b16 %v406
        %v422 = vunpack.c.h.b16 %v406
        %v423 = vunpack.c.l.b16 %v407
        %v424 = vunpack.c.h.b16 %v407
        %v425 = vunpack.c.l.b16 %v408
        %v426 = vpack.c.b16 %v415, %v415
        %v427 = vpack.c.b16 %v416, %v416
        %v428 = vpack.c.b16 %v417, %v417
        %v429 = vpack.c.b16 %v418, %v418
        %v430 = vpack.c.b16 %v419, %v419
        %v431 = vpack.c.b16 %v420, %v420
        %v432 = vpack.c.b16 %v421, %v421
        %v433 = vpack.c.b16 %v422, %v422
        %v434 = vpack.c.b16 %v423, %v423
        %v435 = vpack.c.b16 %v424, %v424
        %v436 = vpack.c.b16 %v425, %v425
        %vm448 = vcmask 125952
        %449 = vst.msk [vmem:[%s172] sm:$0xf] %vm448, %v426
        %450 = vst.msk [vmem:[%s172 + $0x4] sm:$0xf] %vm448, %v427
        %451 = vst.msk [vmem:[%s172 + $0x8] sm:$0xf] %vm448, %v428
        %452 = vst.msk [vmem:[%s172 + $0xc] sm:$0xf] %vm448, %v429
        %453 = vst.msk [vmem:[%s172 + $0x10] sm:$0xf] %vm448, %v430
        %454 = vst.msk [vmem:[%s172 + $0x14] sm:$0xf] %vm448, %v431
        %455 = vst.msk [vmem:[%s172 + $0x18] sm:$0xf] %vm448, %v432
        %456 = vst.msk [vmem:[%s172 + $0x1c] sm:$0xf] %vm448, %v433
        %457 = vst.msk [vmem:[%s172 + $0x20] sm:$0xf] %vm448, %v434
        %458 = vst.msk [vmem:[%s172 + $0x24] sm:$0xf] %vm448, %v435
        %459 = vst.msk [vmem:[%s172 + $0x28] sm:$0xf] %vm448, %v436
        %s460 = sand.u32 %s90, 1
        %s461 = sand.u32 %s90, 1
        %s462 = smul.addr %s461, 44
        %s463 = scalar_lea.vmem [#allocation2], %s462
        // Predicated region
        $region33: #{_lambda_.15} parent=31 // pred_check
          %p464 = pneg %p100
        $region34: #{_lambda_.15} parent=31 // pred_check_branch
          %466 = sbr.rel (%p464) target = $region36
        $region35: #{_lambda_.15} parent=31 // pred_region
          %s467 = smul.u32 11, %s14
          %s468 = ssub.s32 21, %s467
          %p469 = scmp.lt.s32.totalorder %s468, 11
          %s470 = scalar_select %p469, %s468, 11
          %s471 = smul.u32 64, %s470
          %p472 = scmp.ne.s32.totalorder 0, %s471
          %s473 = smul.addr %s467, 4
          %s474 = scalar_lea.vmem %s3, %s473
          // Predicated region
          $region37: #{_lambda_.15} parent=35 // pred_check
            %p475 = pneg %p472
          $region38: #{_lambda_.15} parent=35 // pred_check_branch
            %477 = sbr.rel (%p475) target = $region40
          $region39: #{_lambda_.15} parent=35 // pred_region
            // Predicated region
            $region41: #{_lambda_.15} parent=39 // pred_check
              _
            $region42: #{_lambda_.15} parent=39 // pred_check_branch
              %479 = sbr.rel target = $region44
            $region43: #{_lambda_.15} parent=39 // pred_region
              // Predicated region
              $region63: #{_lambda_.15} parent=43 // pred_check
                _
              $region64: #{_lambda_.15} parent=43 // pred_check_branch
                %549 = sbr.rel (0) target = $region66
              $region65: #{_lambda_.15} parent=43 // pred_region
                %s551 = sdiv.u32.pop %s470, 11
                %s552 = srem.u32.pop %s470, 11
                // While loop
                $region67: #{_lambda_.15} parent=65 // loop_pre_header
                  _
                $region68: #{_lambda_.15} parent=65 // loop_header
                  %s554 = sphi 0, %s556
                  %p555 = scmp.ge.s32.totalorder %s554, %s551
                  %s559 = sphi 0, %s586
                  %s560 = sphi %s463, %s589
                  %s561 = sphi %s474, %s590
                $region69: #{_lambda_.15} parent=65 // loop_header_branch
                  %558 = sbr.rel (%p555) target = $region73
                $region70: #{_lambda_.15} parent=65 // loop_body
                  %v562 = vld [vmem:[%s560] sm:$0xf]
                  %563 = vst [vmem:[%s561] sm:$0xf] %v562
                  %v564 = vld [vmem:[%s560 + $0x4] sm:$0xf]
                  %565 = vst [vmem:[%s561 + $0x4] sm:$0xf] %v564
                  %v566 = vld [vmem:[%s560 + $0x8] sm:$0xf]
                  %567 = vst [vmem:[%s561 + $0x8] sm:$0xf] %v566
                  %v568 = vld [vmem:[%s560 + $0xc] sm:$0xf]
                  %569 = vst [vmem:[%s561 + $0xc] sm:$0xf] %v568
                  %v570 = vld [vmem:[%s560 + $0x10] sm:$0xf]
                  %571 = vst [vmem:[%s561 + $0x10] sm:$0xf] %v570
                  %v572 = vld [vmem:[%s560 + $0x14] sm:$0xf]
                  %573 = vst [vmem:[%s561 + $0x14] sm:$0xf] %v572
                  %v574 = vld [vmem:[%s560 + $0x18] sm:$0xf]
                  %575 = vst [vmem:[%s561 + $0x18] sm:$0xf] %v574
                  %v576 = vld [vmem:[%s560 + $0x1c] sm:$0xf]
                  %577 = vst [vmem:[%s561 + $0x1c] sm:$0xf] %v576
                  %v578 = vld [vmem:[%s560 + $0x20] sm:$0xf]
                  %579 = vst [vmem:[%s561 + $0x20] sm:$0xf] %v578
                  %v580 = vld [vmem:[%s560 + $0x24] sm:$0xf]
                  %581 = vst [vmem:[%s561 + $0x24] sm:$0xf] %v580
                  %v582 = vld [vmem:[%s560 + $0x28] sm:$0xf]
                  %583 = vst [vmem:[%s561 + $0x28] sm:$0xf] %v582
                  %s584 = sadd.s32 1, %s559
                  %p585 = scmp.ge.s32.totalorder %s584, %s551
                  %s586 = scalar_select %p585, 0, %s584
                  %s587 = smul.u32 %s586, 44
                  %s588 = smul.u32 %s586, 44
                  %s589 = scalar_lea.vmem %s463, %s587 [#allocation2]
                  %s590 = scalar_lea.vmem %s474, %s588
                $region71: #{_lambda_.15} parent=65 // loop_footer
                  %s556 = sadd.s32 %s554, 1
                $region72: #{_lambda_.15} parent=65 // loop_footer_branch
                  %553 = sbr.rel target = $region68
                $region73: #{_lambda_.15} parent=65 // loop_exit
                  _
                %s591 = sdiv.u32.pop %s470, 11
                %s592 = srem.u32.pop %s470, 11
                %s593 = smul.u32 %s591, 11
                %s594 = smul.u32 4, %s593
                %s595 = scalar_lea.vmem %s463, %s594 [#allocation2]
                %s596 = smul.u32 4, %s593
                %s597 = scalar_lea.vmem %s474, %s596
                // While loop
                $region74: #{_lambda_.15} parent=65 // loop_pre_header
                  _
                $region75: #{_lambda_.15} parent=65 // loop_header
                  %s599 = sphi 0, %s601
                  %p600 = scmp.ge.s32.totalorder %s599, %s592
                  %s604 = sphi 0, %s611
                  %s605 = sphi %s595, %s614
                  %s606 = sphi %s597, %s615
                $region76: #{_lambda_.15} parent=65 // loop_header_branch
                  %603 = sbr.rel (%p600) target = $region80
                $region77: #{_lambda_.15} parent=65 // loop_body
                  %v607 = vld [vmem:[%s605] sm:$0xf]
                  %608 = vst [vmem:[%s606] sm:$0xf] %v607
                  %s609 = sadd.s32 1, %s604
                  %p610 = scmp.ge.s32.totalorder %s609, %s592
                  %s611 = scalar_select %p610, 0, %s609
                  %s612 = smul.u32 %s611, 4
                  %s613 = smul.u32 %s611, 4
                  %s614 = scalar_lea.vmem %s595, %s612 [#allocation2]
                  %s615 = scalar_lea.vmem %s597, %s613
                $region78: #{_lambda_.15} parent=65 // loop_footer
                  %s601 = sadd.s32 %s599, 1
                $region79: #{_lambda_.15} parent=65 // loop_footer_branch
                  %598 = sbr.rel target = $region75
                $region80: #{_lambda_.15} parent=65 // loop_exit
                  _
              $region66: #{_lambda_.15} parent=43 // pred_fallthru
                _
            $region44: #{_lambda_.15} parent=39 // pred_fallthru
              _
            // Predicated region
            $region45: #{_lambda_.15} parent=39 // pred_check
              _
            $region46: #{_lambda_.15} parent=39 // pred_check_branch
              %481 = sbr.rel (0) target = $region48
            $region47: #{_lambda_.15} parent=39 // pred_region
              %s483 = sdiv.u32.pop %s470, 11
              %s484 = srem.u32.pop %s470, 11
              // While loop
              $region49: #{_lambda_.15} parent=47 // loop_pre_header
                _
              $region50: #{_lambda_.15} parent=47 // loop_header
                %s486 = sphi 0, %s488
                %p487 = scmp.ge.s32.totalorder %s486, %s483
                %s491 = sphi 0, %s518
                %s492 = sphi %s463, %s521
                %s493 = sphi %s474, %s522
              $region51: #{_lambda_.15} parent=47 // loop_header_branch
                %490 = sbr.rel (%p487) target = $region55
              $region52: #{_lambda_.15} parent=47 // loop_body
                %v494 = vld [vmem:[%s492] sm:$0xf]
                %495 = vst [vmem:[%s493] sm:$0xf] %v494
                %v496 = vld [vmem:[%s492 + $0x4] sm:$0xf]
                %497 = vst [vmem:[%s493 + $0x4] sm:$0xf] %v496
                %v498 = vld [vmem:[%s492 + $0x8] sm:$0xf]
                %499 = vst [vmem:[%s493 + $0x8] sm:$0xf] %v498
                %v500 = vld [vmem:[%s492 + $0xc] sm:$0xf]
                %501 = vst [vmem:[%s493 + $0xc] sm:$0xf] %v500
                %v502 = vld [vmem:[%s492 + $0x10] sm:$0xf]
                %503 = vst [vmem:[%s493 + $0x10] sm:$0xf] %v502
                %v504 = vld [vmem:[%s492 + $0x14] sm:$0xf]
                %505 = vst [vmem:[%s493 + $0x14] sm:$0xf] %v504
                %v506 = vld [vmem:[%s492 + $0x18] sm:$0xf]
                %507 = vst [vmem:[%s493 + $0x18] sm:$0xf] %v506
                %v508 = vld [vmem:[%s492 + $0x1c] sm:$0xf]
                %509 = vst [vmem:[%s493 + $0x1c] sm:$0xf] %v508
                %v510 = vld [vmem:[%s492 + $0x20] sm:$0xf]
                %511 = vst [vmem:[%s493 + $0x20] sm:$0xf] %v510
                %v512 = vld [vmem:[%s492 + $0x24] sm:$0xf]
                %513 = vst [vmem:[%s493 + $0x24] sm:$0xf] %v512
                %v514 = vld [vmem:[%s492 + $0x28] sm:$0xf]
                %515 = vst [vmem:[%s493 + $0x28] sm:$0xf] %v514
                %s516 = sadd.s32 1, %s491
                %p517 = scmp.ge.s32.totalorder %s516, %s483
                %s518 = scalar_select %p517, 0, %s516
                %s519 = smul.u32 %s518, 44
                %s520 = smul.u32 %s518, 44
                %s521 = scalar_lea.vmem %s463, %s519 [#allocation2]
                %s522 = scalar_lea.vmem %s474, %s520
              $region53: #{_lambda_.15} parent=47 // loop_footer
                %s488 = sadd.s32 %s486, 1
              $region54: #{_lambda_.15} parent=47 // loop_footer_branch
                %485 = sbr.rel target = $region50
              $region55: #{_lambda_.15} parent=47 // loop_exit
                _
              %s523 = sdiv.u32.pop %s470, 11
              %s524 = srem.u32.pop %s470, 11
              %s525 = smul.u32 %s523, 11
              %s526 = smul.u32 4, %s525
              %s527 = scalar_lea.vmem %s463, %s526 [#allocation2]
              %s528 = smul.u32 4, %s525
              %s529 = scalar_lea.vmem %s474, %s528
              // While loop
              $region56: #{_lambda_.15} parent=47 // loop_pre_header
                _
              $region57: #{_lambda_.15} parent=47 // loop_header
                %s531 = sphi 0, %s533
                %p532 = scmp.ge.s32.totalorder %s531, %s524
                %s536 = sphi 0, %s543
                %s537 = sphi %s527, %s546
                %s538 = sphi %s529, %s547
              $region58: #{_lambda_.15} parent=47 // loop_header_branch
                %535 = sbr.rel (%p532) target = $region62
              $region59: #{_lambda_.15} parent=47 // loop_body
                %v539 = vld [vmem:[%s537] sm:$0xf]
                %540 = vst [vmem:[%s538] sm:$0xf] %v539
                %s541 = sadd.s32 1, %s536
                %p542 = scmp.ge.s32.totalorder %s541, %s524
                %s543 = scalar_select %p542, 0, %s541
                %s544 = smul.u32 %s543, 4
                %s545 = smul.u32 %s543, 4
                %s546 = scalar_lea.vmem %s527, %s544 [#allocation2]
                %s547 = scalar_lea.vmem %s529, %s545
              $region60: #{_lambda_.15} parent=47 // loop_footer
                %s533 = sadd.s32 %s531, 1
              $region61: #{_lambda_.15} parent=47 // loop_footer_branch
                %530 = sbr.rel target = $region57
              $region62: #{_lambda_.15} parent=47 // loop_exit
                _
            $region48: #{_lambda_.15} parent=39 // pred_fallthru
              _
          $region40: #{_lambda_.15} parent=35 // pred_fallthru
            _
          %616 = vnop
        $region36: #{_lambda_.15} parent=31 // pred_fallthru
          _
      $region32: #{_lambda_.15} parent=5 // pred_fallthru
        _
      %p617 = scmp.le.s32.totalorder 2, %s9
      // Predicated region
      $region81: #{_lambda_.15} parent=5 // pred_check
        %p618 = pneg %p617
      $region82: #{_lambda_.15} parent=5 // pred_check_branch
        %620 = sbr.rel (%p618) target = $region84
      $region83: #{_lambda_.15} parent=5 // pred_region
        %s621 = ssub.s32 %s9, 2
        // Predicated region
        $region85: #{_lambda_.15} parent=83 // pred_check
          %p622 = pneg %p106
        $region86: #{_lambda_.15} parent=83 // pred_check_branch
          %624 = sbr.rel (%p622) target = $region88
        $region87: #{_lambda_.15} parent=83 // pred_region
          %s625 = sand.u32 %s91, 1
          %s626 = sand.u32 %s91, 1
          %s627 = smul.addr %s626, 44
          %s628 = scalar_lea.vmem [#allocation2], %s627
        $region88: #{_lambda_.15} parent=83 // pred_fallthru
          _
      $region84: #{_lambda_.15} parent=5 // pred_fallthru
        _
    $region6: #{_lambda_.15} parent=1 // loop_footer
      %s13 = sadd.s32 1, %s9
    $region7: #{_lambda_.15} parent=1 // loop_footer_branch
      %8 = sbr.rel target = $region3
    $region8: #{_lambda_.15} parent=1 // loop_exit
      _

// kernel: _lambda_.16
$region0: #{_lambda_.16}
  #allocation0 [shape = 'u32[]', space=smem, size = 0x4, offset = 0x4, fixed_abs, tag = 'smem constant byte address 0x4 - core index']
  #allocation1 [shape = 'u32[144,128]{1,0:T(1,128)}', space=vmem, size = 0x12000, scoped, tag = 'internal scratch']
  %s0 = inlined_call_operand.vmem [shape: bf16[50,256], index: 0, kind: input, shape index: {}]
  %s1 = inlined_call_operand.vmem [shape: bf16[256,32], index: 1, kind: input, shape index: {}]
  %s2 = inlined_call_operand.vmem [shape: f32[1,32], index: 2, kind: input, shape index: {}]
  %s3 = inlined_call_operand.vmem [shape: bf16[50,32], index: 3, kind: output, shape index: {0}]
  %s4 = inlined_call_operand.vmem [shape: f32[1,32], index: 4, kind: output, shape index: {1}]
  %s5 = inlined_call_operand.vmem [shape: f32[1,32], index: 5, kind: output, shape index: {2}]
  %6 = xla_tuple %s3, %s4, %s5
  %s7 = sld [smem:[#allocation0]]
  $region38: #{_lambda_.16} parent=0
    _
  %s9 = ssub.s32 1, %s7
  %s10 = scalar_select 0, %s9, %s7
  // Predicated region
  $region2: #{_lambda_.16} parent=0 // pred_check
    _
  $region3: #{_lambda_.16} parent=0 // pred_check_branch
    %12 = sbr.rel (0) target = $region5
  $region4: #{_lambda_.16} parent=0 // pred_region
    _
  $region5: #{_lambda_.16} parent=0 // pred_fallthru
    _
  // Predicated region
  $region6: #{_lambda_.16} parent=0 // pred_check
    _
  $region7: #{_lambda_.16} parent=0 // pred_check_branch
    %14 = sbr.rel (0) target = $region9
  $region8: #{_lambda_.16} parent=0 // pred_region
    _
  $region9: #{_lambda_.16} parent=0 // pred_fallthru
    _
  // Predicated region
  $region10: #{_lambda_.16} parent=0 // pred_check
    _
  $region11: #{_lambda_.16} parent=0 // pred_check_branch
    %16 = sbr.rel (0) target = $region13
  $region12: #{_lambda_.16} parent=0 // pred_region
    _
  $region13: #{_lambda_.16} parent=0 // pred_fallthru
    _
  %v18 = vld [vmem:[%s0] sm:$0xff]
  %v19 = vld [vmem:[%s0 + $0x8] sm:$0xff]
  %v20 = vld [vmem:[%s0 + $0x10] sm:$0xff]
  %v21 = vld [vmem:[%s0 + $0x18] sm:$0xff]
  %v22 = vld [vmem:[%s0 + $0x20] sm:$0xff]
  %v23 = vld [vmem:[%s0 + $0x28] sm:$0xff]
  %v24 = vld [vmem:[%s0 + $0x30] sm:$0x11]
  %v25 = vld [vmem:[%s1] sm:$0xf]
  %v26 = vld [vmem:[%s1 + $0x4] sm:$0xf]
  %v27 = vld [vmem:[%s1 + $0x8] sm:$0xf]
  %v28 = vld [vmem:[%s1 + $0xc] sm:$0xf]
  %v29 = vld [vmem:[%s1 + $0x10] sm:$0xf]
  %v30 = vld [vmem:[%s1 + $0x14] sm:$0xf]
  %v31 = vld [vmem:[%s1 + $0x18] sm:$0xf]
  %v32 = vld [vmem:[%s1 + $0x1c] sm:$0xf]
  %v33 = vld [vmem:[%s1 + $0x20] sm:$0xf]
  %v34 = vld [vmem:[%s1 + $0x24] sm:$0xf]
  %v35 = vld [vmem:[%s1 + $0x28] sm:$0xf]
  %v36 = vld [vmem:[%s1 + $0x2c] sm:$0xf]
  %v37 = vld [vmem:[%s1 + $0x30] sm:$0xf]
  %v38 = vld [vmem:[%s1 + $0x34] sm:$0xf]
  %v39 = vld [vmem:[%s1 + $0x38] sm:$0xf]
  %v40 = vld [vmem:[%s1 + $0x3c] sm:$0xf]
  %v41 = vld [vmem:[%s1 + $0x40] sm:$0xf]
  %v42 = vld [vmem:[%s1 + $0x44] sm:$0xf]
  %v43 = vld [vmem:[%s1 + $0x48] sm:$0xf]
  %v44 = vld [vmem:[%s1 + $0x4c] sm:$0xf]
  %v45 = vld [vmem:[%s1 + $0x50] sm:$0xf]
  %v46 = vld [vmem:[%s1 + $0x54] sm:$0xf]
  %v47 = vld [vmem:[%s1 + $0x58] sm:$0xf]
  %v48 = vld [vmem:[%s1 + $0x5c] sm:$0xf]
  %v49 = vld [vmem:[%s1 + $0x60] sm:$0xf]
  %v50 = vld [vmem:[%s1 + $0x64] sm:$0xf]
  %v51 = vld [vmem:[%s1 + $0x68] sm:$0xf]
  %v52 = vld [vmem:[%s1 + $0x6c] sm:$0xf]
  %v53 = vld [vmem:[%s1 + $0x70] sm:$0xf]
  %v54 = vld [vmem:[%s1 + $0x74] sm:$0xf]
  %v55 = vld [vmem:[%s1 + $0x78] sm:$0xf]
  %v56 = vld [vmem:[%s1 + $0x7c] sm:$0xf]
  %v57 = vld [vmem:[%s2] sm:$0x1]
  %v59 = vlaneseq
  %v60 = vshrl.u32 %v59, 7
  %v61 = vsub.s32 0, %v60
  %v62 = vrot.slane %v57, %v61
  %v71 = vunpack.c.l.b16 %v18
  %v72 = vunpack.c.h.b16 %v18
  %v73 = vunpack.c.l.b16 %v19
  %v74 = vunpack.c.h.b16 %v19
  %v75 = vunpack.c.l.b16 %v20
  %v76 = vunpack.c.h.b16 %v20
  %v77 = vunpack.c.l.b16 %v21
  %v78 = vunpack.c.h.b16 %v21
  %v79 = vunpack.c.l.b16 %v22
  %v80 = vunpack.c.h.b16 %v22
  %v81 = vunpack.c.l.b16 %v23
  %v82 = vunpack.c.h.b16 %v23
  %v83 = vunpack.c.l.b16 %v24
  %v84 = vunpack.c.h.b16 %v24
  %v85 = vpack.c.b16 %v73, %v71
  %v86 = vpack.c.b16 %v74, %v72
  %v87 = vpack.c.b16 %v77, %v75
  %v88 = vpack.c.b16 %v78, %v76
  %v89 = vpack.c.b16 %v81, %v79
  %v90 = vpack.c.b16 %v82, %v80
  %v91 = vpack.c.b16 %v83, %v83
  %v92 = vpack.c.b16 %v84, %v84
  %v133 = vunpack.c.l.b16 %v25
  %v134 = vunpack.c.l.b16 %v26
  %v135 = vunpack.c.l.b16 %v27
  %v136 = vunpack.c.l.b16 %v28
  %v137 = vunpack.c.l.b16 %v29
  %v138 = vunpack.c.l.b16 %v30
  %v139 = vunpack.c.l.b16 %v31
  %v140 = vunpack.c.l.b16 %v32
  %v141 = vunpack.c.l.b16 %v33
  %v142 = vunpack.c.l.b16 %v34
  %v143 = vunpack.c.l.b16 %v35
  %v144 = vunpack.c.l.b16 %v36
  %v145 = vunpack.c.l.b16 %v37
  %v146 = vunpack.c.l.b16 %v38
  %v147 = vunpack.c.l.b16 %v39
  %v148 = vunpack.c.l.b16 %v40
  %v149 = vunpack.c.l.b16 %v41
  %v150 = vunpack.c.l.b16 %v42
  %v151 = vunpack.c.l.b16 %v43
  %v152 = vunpack.c.l.b16 %v44
  %v153 = vunpack.c.l.b16 %v45
  %v154 = vunpack.c.l.b16 %v46
  %v155 = vunpack.c.l.b16 %v47
  %v156 = vunpack.c.l.b16 %v48
  %v157 = vunpack.c.l.b16 %v49
  %v158 = vunpack.c.l.b16 %v50
  %v159 = vunpack.c.l.b16 %v51
  %v160 = vunpack.c.l.b16 %v52
  %v161 = vunpack.c.l.b16 %v53
  %v162 = vunpack.c.l.b16 %v54
  %v163 = vunpack.c.l.b16 %v55
  %v164 = vunpack.c.l.b16 %v56
  %v165 = vpack.c.b16 %v134, %v133
  %v166 = vpack.c.b16 %v136, %v135
  %v167 = vpack.c.b16 %v138, %v137
  %v168 = vpack.c.b16 %v140, %v139
  %v169 = vpack.c.b16 %v142, %v141
  %v170 = vpack.c.b16 %v144, %v143
  %v171 = vpack.c.b16 %v146, %v145
  %v172 = vpack.c.b16 %v148, %v147
  %v173 = vpack.c.b16 %v150, %v149
  %v174 = vpack.c.b16 %v152, %v151
  %v175 = vpack.c.b16 %v154, %v153
  %v176 = vpack.c.b16 %v156, %v155
  %v177 = vpack.c.b16 %v158, %v157
  %v178 = vpack.c.b16 %v160, %v159
  %v179 = vpack.c.b16 %v162, %v161
  %v180 = vpack.c.b16 %v164, %v163
  %197 = vmatprep.subr.bf16.mxu0 0
  %198 = vmatpush1.bf16.msra.mxu0 %v165
  %199 = vmatprep.subr.bf16.mxu0 0
  %200 = vmatpush1.bf16.msra.mxu0 %v166
  %201 = vmatprep.subr.bf16.mxu0 0
  %202 = vmatpush1.bf16.msra.mxu0 %v167
  %203 = vmatprep.subr.bf16.mxu0 0
  %204 = vmatpush1.bf16.msra.mxu0 %v168
  %205 = vmatprep.subr.bf16.mxu0 0
  %206 = vmatpush1.bf16.msra.mxu0 %v169
  %207 = vmatprep.subr.bf16.mxu0 0
  %208 = vmatpush1.bf16.msra.mxu0 %v170
  %209 = vmatprep.subr.bf16.mxu0 0
  %210 = vmatpush1.bf16.msra.mxu0 %v171
  %211 = vmatprep.subr.bf16.mxu0 0
  %212 = vmatpush1.bf16.msra.mxu0 %v172
  %213 = vmatprep.subr.bf16.mxu0 0
  %214 = vmatpush1.bf16.msra.mxu0 %v173
  %215 = vmatprep.subr.bf16.mxu0 0
  %216 = vmatpush1.bf16.msra.mxu0 %v174
  %217 = vmatprep.subr.bf16.mxu0 0
  %218 = vmatpush1.bf16.msra.mxu0 %v175
  %219 = vmatprep.subr.bf16.mxu0 0
  %220 = vmatpush1.bf16.msra.mxu0 %v176
  %221 = vmatprep.subr.bf16.mxu0 0
  %222 = vmatpush1.bf16.msra.mxu0 %v177
  %223 = vmatprep.subr.bf16.mxu0 0
  %224 = vmatpush1.bf16.msra.mxu0 %v178
  %225 = vmatprep.subr.bf16.mxu0 0
  %226 = vmatpush1.bf16.msra.mxu0 %v179
  %227 = vmatprep.subr.bf16.mxu0 0
  %228 = vmatpush1.bf16.msra.mxu0 %v180
  %229 = vmatprep.mubr.bf16.mxu0 %v86
  %230 = vmatmul.mubr.bf16.gmra.mrb[0].mxu0 %v85
  %v231 = vpop.f32.mrb[0].mxu0
  %v232 = vadd.f32 %v62, %v231
  %v233 = vpop.f32.mrb[0].mxu0
  %v234 = vpop.f32.mrb[0].mxu0
  %v235 = vadd.f32 %v62, %v234
  %v236 = vpop.f32.mrb[0].mxu0
  %237 = vmatprep.mubr.bf16.mxu0 %v88
  %238 = vmatmul.mubr.bf16.gmra.mrb[0].mxu0 %v87
  %v239 = vpop.f32.mrb[0].mxu0
  %v240 = vadd.f32 %v62, %v239
  %v241 = vpop.f32.mrb[0].mxu0
  %v242 = vpop.f32.mrb[0].mxu0
  %v243 = vadd.f32 %v62, %v242
  %v244 = vpop.f32.mrb[0].mxu0
  %245 = vmatprep.mubr.bf16.mxu0 %v90
  %246 = vmatmul.mubr.bf16.gmra.mrb[0].mxu0 %v89
  %v247 = vpop.f32.mrb[0].mxu0
  %v248 = vadd.f32 %v62, %v247
  %v249 = vpop.f32.mrb[0].mxu0
  %v250 = vpop.f32.mrb[0].mxu0
  %v251 = vadd.f32 %v62, %v250
  %v252 = vpop.f32.mrb[0].mxu0
  %253 = vmatprep.mubr.bf16.mxu0 %v92
  %254 = vmatmul.mubr.bf16.gmra.mrb[0].mxu0 %v91
  %v255 = vpop.f32.mrb[0].mxu0
  %v256 = vadd.f32 %v62, %v255
  %v257 = vpop.f32.mrb[0].mxu0
  %v258 = vpop.f32.mrb[0].mxu0
  %v259 = vpop.f32.mrb[0].mxu0
  %260 = vdwg.mxu0
  %v261 = vpack.c.bf16 %v235, %v232
  %v262 = vpack.c.bf16 %v243, %v240
  %v263 = vpack.c.bf16 %v251, %v248
  %v264 = vpack.c.bf16 %v256, %v256
  %v269 = vunpack.c.l.b16 %v261
  %v270 = vunpack.c.h.b16 %v261
  %v271 = vunpack.c.l.b16 %v262
  %v272 = vunpack.c.h.b16 %v262
  %v273 = vunpack.c.l.b16 %v263
  %v274 = vunpack.c.h.b16 %v263
  %v275 = vunpack.c.l.b16 %v264
  %v276 = vpack.c.b16 %v269, %v269
  %v277 = vpack.c.b16 %v270, %v270
  %v278 = vpack.c.b16 %v271, %v271
  %v279 = vpack.c.b16 %v272, %v272
  %v280 = vpack.c.b16 %v273, %v273
  %v281 = vpack.c.b16 %v274, %v274
  %v282 = vpack.c.b16 %v275, %v275
  %vm290 = vcmask 257024
  %291 = vst.msk [vmem:[%s3] sm:$0xf] %vm290, %v276
  %292 = vst.msk [vmem:[%s3 + $0x4] sm:$0xf] %vm290, %v277
  %293 = vst.msk [vmem:[%s3 + $0x8] sm:$0xf] %vm290, %v278
  %294 = vst.msk [vmem:[%s3 + $0xc] sm:$0xf] %vm290, %v279
  %295 = vst.msk [vmem:[%s3 + $0x10] sm:$0xf] %vm290, %v280
  %296 = vst.msk [vmem:[%s3 + $0x14] sm:$0xf] %vm290, %v281
  %vm297 = vcmask 253952
  %298 = vst.msk [vmem:[%s3 + $0x18] sm:$0x1] %vm297, %v282
  %vm299 = vcmask 261120
  %v300 = vsel %vm299, %v232, 0.0
  %v301 = vsel %vm299, %v235, 0.0
  %v302 = vadd.f32 %v300, %v301
  %v303 = vsel %vm299, %v240, 0.0
  %v304 = vadd.f32 %v302, %v303
  %v305 = vsel %vm299, %v243, 0.0
  %v306 = vadd.f32 %v304, %v305
  %v307 = vsel %vm299, %v248, 0.0
  %v308 = vadd.f32 %v306, %v307
  %v309 = vsel %vm299, %v251, 0.0
  %v310 = vadd.f32 %v308, %v309
  %vm311 = vcmask 254976
  %v312 = vsel %vm311, %v256, 0.0
  %v313 = vadd.f32 %v310, %v312
  %v314 = vrot.slane %v313, 4
  %v315 = vadd.f32 %v313, %v314
  %v316 = vrot.slane %v315, 2
  %v317 = vadd.f32 %v315, %v316
  %v318 = vrot.slane %v317, 1
  %v319 = vadd.f32 %v317, %v318
  %320 = vst.msk [vmem:[%s4] sm:$0x1] %vm297, %v319
  %v321 = vmul.f32 %v232, %v232
  %v322 = vmul.f32 %v235, %v235
  %v323 = vmul.f32 %v240, %v240
  %v324 = vmul.f32 %v243, %v243
  %v325 = vmul.f32 %v248, %v248
  %v326 = vmul.f32 %v251, %v251
  %v327 = vmul.f32 %v256, %v256
  %v328 = vsel %vm299, %v321, 0.0
  %v329 = vsel %vm299, %v322, 0.0
  %v330 = vadd.f32 %v328, %v329
  %v331 = vsel %vm299, %v323, 0.0
  %v332 = vadd.f32 %v330, %v331
  %v333 = vsel %vm299, %v324, 0.0
  %v334 = vadd.f32 %v332, %v333
  %v335 = vsel %vm299, %v325, 0.0
  %v336 = vadd.f32 %v334, %v335
  %v337 = vsel %vm299, %v326, 0.0
  %v338 = vadd.f32 %v336, %v337
  %v339 = vsel %vm311, %v327, 0.0
  %v340 = vadd.f32 %v338, %v339
  %v341 = vrot.slane %v340, 4
  %v342 = vadd.f32 %v340, %v341
  %v343 = vrot.slane %v342, 2
  %v344 = vadd.f32 %v342, %v343
  %v345 = vrot.slane %v344, 1
  %v346 = vadd.f32 %v344, %v345
  %347 = vst.msk [vmem:[%s5] sm:$0x1] %vm297, %v346
  // Predicated region
  $region14: #{_lambda_.16} parent=0 // pred_check
    _
  $region15: #{_lambda_.16} parent=0 // pred_check_branch
    %349 = sbr.rel (0) target = $region17
  $region16: #{_lambda_.16} parent=0 // pred_region
    _
  $region17: #{_lambda_.16} parent=0 // pred_fallthru
    _
  // Predicated region
  $region18: #{_lambda_.16} parent=0 // pred_check
    _
  $region19: #{_lambda_.16} parent=0 // pred_check_branch
    %351 = sbr.rel (0) target = $region21
  $region20: #{_lambda_.16} parent=0 // pred_region
    _
  $region21: #{_lambda_.16} parent=0 // pred_fallthru
    _
  // Predicated region
  $region22: #{_lambda_.16} parent=0 // pred_check
    _
  $region23: #{_lambda_.16} parent=0 // pred_check_branch
    %353 = sbr.rel (0) target = $region25
  $region24: #{_lambda_.16} parent=0 // pred_region
    _
  $region25: #{_lambda_.16} parent=0 // pred_fallthru
    _
  // Predicated region
  $region26: #{_lambda_.16} parent=0 // pred_check
    _
  $region27: #{_lambda_.16} parent=0 // pred_check_branch
    %355 = sbr.rel (0) target = $region29
  $region28: #{_lambda_.16} parent=0 // pred_region
    _
  $region29: #{_lambda_.16} parent=0 // pred_fallthru
    _
  // Predicated region
  $region30: #{_lambda_.16} parent=0 // pred_check
    _
  $region31: #{_lambda_.16} parent=0 // pred_check_branch
    %357 = sbr.rel (0) target = $region33
  $region32: #{_lambda_.16} parent=0 // pred_region
    _
  $region33: #{_lambda_.16} parent=0 // pred_fallthru
    _
  // Predicated region
  $region34: #{_lambda_.16} parent=0 // pred_check
    _
  $region35: #{_lambda_.16} parent=0 // pred_check_branch
    %359 = sbr.rel (0) target = $region37
  $region36: #{_lambda_.16} parent=0 // pred_region
    _
  $region37: #{_lambda_.16} parent=0 // pred_fallthru
    _

// kernel: _lambda_.17
$region0: #{_lambda_.17}
  #allocation0 [shape = 'u32[]', space=smem, size = 0x4, offset = 0x4, fixed_abs, tag = 'smem constant byte address 0x4 - core index']
  #allocation1 [shape = 'u32[144,128]{1,0:T(1,128)}', space=vmem, size = 0x12000, scoped, tag = 'internal scratch']
  %s0 = inlined_call_operand.vmem [shape: bf16[18,512], index: 0, kind: input, shape index: {}]
  %s1 = inlined_call_operand.vmem [shape: bf16[512,64], index: 1, kind: input, shape index: {}]
  %s2 = inlined_call_operand.vmem [shape: f32[1,64], index: 2, kind: input, shape index: {}]
  %s3 = inlined_call_operand.vmem [shape: f32[1,512], index: 3, kind: input, shape index: {}]
  %s4 = inlined_call_operand.vmem [shape: f32[1,512], index: 4, kind: input, shape index: {}]
  %s5 = inlined_call_operand.vmem [shape: bf16[18,64], index: 5, kind: output, shape index: {0}]
  %s6 = inlined_call_operand.vmem [shape: f32[1,64], index: 6, kind: output, shape index: {1}]
  %s7 = inlined_call_operand.vmem [shape: f32[1,64], index: 7, kind: output, shape index: {2}]
  %8 = xla_tuple %s5, %s6, %s7
  %s9 = sld [smem:[#allocation0]]
  $region46: #{_lambda_.17} parent=0
    _
  %s11 = ssub.s32 1, %s9
  %s12 = scalar_select 0, %s11, %s9
  // Predicated region
  $region2: #{_lambda_.17} parent=0 // pred_check
    _
  $region3: #{_lambda_.17} parent=0 // pred_check_branch
    %14 = sbr.rel (0) target = $region5
  $region4: #{_lambda_.17} parent=0 // pred_region
    _
  $region5: #{_lambda_.17} parent=0 // pred_fallthru
    _
  // Predicated region
  $region6: #{_lambda_.17} parent=0 // pred_check
    _
  $region7: #{_lambda_.17} parent=0 // pred_check_branch
    %16 = sbr.rel (0) target = $region9
  $region8: #{_lambda_.17} parent=0 // pred_region
    _
  $region9: #{_lambda_.17} parent=0 // pred_fallthru
    _
  // Predicated region
  $region10: #{_lambda_.17} parent=0 // pred_check
    _
  $region11: #{_lambda_.17} parent=0 // pred_check_branch
    %18 = sbr.rel (0) target = $region13
  $region12: #{_lambda_.17} parent=0 // pred_region
    _
  $region13: #{_lambda_.17} parent=0 // pred_fallthru
    _
  // Predicated region
  $region14: #{_lambda_.17} parent=0 // pred_check
    _
  $region15: #{_lambda_.17} parent=0 // pred_check_branch
    %20 = sbr.rel (0) target = $region17
  $region16: #{_lambda_.17} parent=0 // pred_region
    _
  $region17: #{_lambda_.17} parent=0 // pred_fallthru
    _
  // Predicated region
  $region18: #{_lambda_.17} parent=0 // pred_check
    _
  $region19: #{_lambda_.17} parent=0 // pred_check_branch
    %22 = sbr.rel (0) target = $region21
  $region20: #{_lambda_.17} parent=0 // pred_region
    _
  $region21: #{_lambda_.17} parent=0 // pred_fallthru
    _
  %v24 = vld [vmem:[%s0] sm:$0xff]
  %v25 = vld [vmem:[%s0 + $0x8] sm:$0xff]
  %v26 = vld [vmem:[%s0 + $0x10] sm:$0xff]
  %v27 = vld [vmem:[%s0 + $0x18] sm:$0xff]
  %v28 = vld [vmem:[%s0 + $0x20] sm:$0x11]
  %v29 = vld [vmem:[%s0 + $0x28] sm:$0x11]
  %v30 = vunpack.c.l.bf16 %v24
  %v31 = vunpack.c.h.bf16 %v24
  %v32 = vunpack.c.l.bf16 %v25
  %v33 = vunpack.c.h.bf16 %v25
  %v34 = vunpack.c.l.bf16 %v26
  %v35 = vunpack.c.h.bf16 %v26
  %v36 = vunpack.c.l.bf16 %v27
  %v37 = vunpack.c.h.bf16 %v27
  %v38 = vunpack.c.l.bf16 %v28
  %v39 = vunpack.c.h.bf16 %v28
  %v40 = vunpack.c.l.bf16 %v29
  %v41 = vunpack.c.h.bf16 %v29
  %v42 = vld [vmem:[%s4] sm:$0xf]
  %v44 = vlaneseq
  %v45 = vshrl.u32 %v44, 7
  %v46 = vsub.s32 0, %v45
  %v47 = vrot.slane %v42, %v46
  %v48 = vlaneseq
  %v49 = vshrl.u32 %v48, 7
  %v50 = vsub.s32 1, %v49
  %v51 = vrot.slane %v42, %v50
  %v52 = vlaneseq
  %v53 = vshrl.u32 %v52, 7
  %v54 = vsub.s32 2, %v53
  %v55 = vrot.slane %v42, %v54
  %v56 = vlaneseq
  %v57 = vshrl.u32 %v56, 7
  %v58 = vsub.s32 3, %v57
  %v59 = vrot.slane %v42, %v58
  %v64 = vsub.f32 %v30, %v47
  %v65 = vsub.f32 %v31, %v51
  %v66 = vsub.f32 %v32, %v55
  %v67 = vsub.f32 %v33, %v59
  %v68 = vsub.f32 %v34, %v47
  %v69 = vsub.f32 %v35, %v51
  %v70 = vsub.f32 %v36, %v55
  %v71 = vsub.f32 %v37, %v59
  %v72 = vsub.f32 %v38, %v47
  %v73 = vsub.f32 %v39, %v51
  %v74 = vsub.f32 %v40, %v55
  %v75 = vsub.f32 %v41, %v59
  %v76 = vld [vmem:[%s3] sm:$0xf]
  %v78 = vlaneseq
  %v79 = vshrl.u32 %v78, 7
  %v80 = vsub.s32 0, %v79
  %v81 = vrot.slane %v76, %v80
  %v82 = vlaneseq
  %v83 = vshrl.u32 %v82, 7
  %v84 = vsub.s32 1, %v83
  %v85 = vrot.slane %v76, %v84
  %v86 = vlaneseq
  %v87 = vshrl.u32 %v86, 7
  %v88 = vsub.s32 2, %v87
  %v89 = vrot.slane %v76, %v88
  %v90 = vlaneseq
  %v91 = vshrl.u32 %v90, 7
  %v92 = vsub.s32 3, %v91
  %v93 = vrot.slane %v76, %v92
  %v98 = vmul.f32 %v64, %v81
  %v99 = vmul.f32 %v65, %v85
  %v100 = vmul.f32 %v66, %v89
  %v101 = vmul.f32 %v67, %v93
  %v102 = vmul.f32 %v68, %v81
  %v103 = vmul.f32 %v69, %v85
  %v104 = vmul.f32 %v70, %v89
  %v105 = vmul.f32 %v71, %v93
  %v106 = vmul.f32 %v72, %v81
  %v107 = vmul.f32 %v73, %v85
  %v108 = vmul.f32 %v74, %v89
  %v109 = vmul.f32 %v75, %v93
  %vm110 = vcmp.ge.f32.partialorder %v98, 0.0
  %vm111 = vcmp.ge.f32.partialorder %v99, 0.0
  %vm112 = vcmp.ge.f32.partialorder %v100, 0.0
  %vm113 = vcmp.ge.f32.partialorder %v101, 0.0
  %vm114 = vcmp.ge.f32.partialorder %v102, 0.0
  %vm115 = vcmp.ge.f32.partialorder %v103, 0.0
  %vm116 = vcmp.ge.f32.partialorder %v104, 0.0
  %vm117 = vcmp.ge.f32.partialorder %v105, 0.0
  %vm118 = vcmp.ge.f32.partialorder %v106, 0.0
  %vm119 = vcmp.ge.f32.partialorder %v107, 0.0
  %vm120 = vcmp.ge.f32.partialorder %v108, 0.0
  %vm121 = vcmp.ge.f32.partialorder %v109, 0.0
  %v122 = vmul.f32 %v98, 0.2
  %v123 = vmul.f32 %v99, 0.2
  %v124 = vmul.f32 %v100, 0.2
  %v125 = vmul.f32 %v101, 0.2
  %v126 = vmul.f32 %v102, 0.2
  %v127 = vmul.f32 %v103, 0.2
  %v128 = vmul.f32 %v104, 0.2
  %v129 = vmul.f32 %v105, 0.2
  %v130 = vmul.f32 %v106, 0.2
  %v131 = vmul.f32 %v107, 0.2
  %v132 = vmul.f32 %v108, 0.2
  %v133 = vmul.f32 %v109, 0.2
  %v134 = vsel %vm110, %v98, %v122
  %v135 = vsel %vm111, %v99, %v123
  %v136 = vsel %vm112, %v100, %v124
  %v137 = vsel %vm113, %v101, %v125
  %v138 = vsel %vm114, %v102, %v126
  %v139 = vsel %vm115, %v103, %v127
  %v140 = vsel %vm116, %v104, %v128
  %v141 = vsel %vm117, %v105, %v129
  %v142 = vsel %vm118, %v106, %v130
  %v143 = vsel %vm119, %v107, %v131
  %v144 = vsel %vm120, %v108, %v132
  %v145 = vsel %vm121, %v109, %v133
  %v146 = vpack.c.bf16 %v138, %v134
  %v147 = vpack.c.bf16 %v139, %v135
  %v148 = vpack.c.bf16 %v140, %v136
  %v149 = vpack.c.bf16 %v141, %v137
  %v150 = vpack.c.bf16 %v142, %v142
  %v151 = vpack.c.bf16 %v143, %v143
  %v152 = vpack.c.bf16 %v144, %v144
  %v153 = vpack.c.bf16 %v145, %v145
  %v154 = vld [vmem:[%s1] sm:$0xf]
  %v155 = vld [vmem:[%s1 + $0x4] sm:$0xf]
  %v156 = vld [vmem:[%s1 + $0x8] sm:$0xf]
  %v157 = vld [vmem:[%s1 + $0xc] sm:$0xf]
  %v158 = vld [vmem:[%s1 + $0x10] sm:$0xf]
  %v159 = vld [vmem:[%s1 + $0x14] sm:$0xf]
  %v160 = vld [vmem:[%s1 + $0x18] sm:$0xf]
  %v161 = vld [vmem:[%s1 + $0x1c] sm:$0xf]
  %v162 = vld [vmem:[%s1 + $0x20] sm:$0xf]
  %v163 = vld [vmem:[%s1 + $0x24] sm:$0xf]
  %v164 = vld [vmem:[%s1 + $0x28] sm:$0xf]
  %v165 = vld [vmem:[%s1 + $0x2c] sm:$0xf]
  %v166 = vld [vmem:[%s1 + $0x30] sm:$0xf]
  %v167 = vld [vmem:[%s1 + $0x34] sm:$0xf]
  %v168 = vld [vmem:[%s1 + $0x38] sm:$0xf]
  %v169 = vld [vmem:[%s1 + $0x3c] sm:$0xf]
  %v170 = vld [vmem:[%s1 + $0x40] sm:$0xf]
  %v171 = vld [vmem:[%s1 + $0x44] sm:$0xf]
  %v172 = vld [vmem:[%s1 + $0x48] sm:$0xf]
  %v173 = vld [vmem:[%s1 + $0x4c] sm:$0xf]
  %v174 = vld [vmem:[%s1 + $0x50] sm:$0xf]
  %v175 = vld [vmem:[%s1 + $0x54] sm:$0xf]
  %v176 = vld [vmem:[%s1 + $0x58] sm:$0xf]
  %v177 = vld [vmem:[%s1 + $0x5c] sm:$0xf]
  %v178 = vld [vmem:[%s1 + $0x60] sm:$0xf]
  %v179 = vld [vmem:[%s1 + $0x64] sm:$0xf]
  %v180 = vld [vmem:[%s1 + $0x68] sm:$0xf]
  %v181 = vld [vmem:[%s1 + $0x6c] sm:$0xf]
  %v182 = vld [vmem:[%s1 + $0x70] sm:$0xf]
  %v183 = vld [vmem:[%s1 + $0x74] sm:$0xf]
  %v184 = vld [vmem:[%s1 + $0x78] sm:$0xf]
  %v185 = vld [vmem:[%s1 + $0x7c] sm:$0xf]
  %v186 = vld [vmem:[%s1 + $0x80] sm:$0xf]
  %v187 = vld [vmem:[%s1 + $0x84] sm:$0xf]
  %v188 = vld [vmem:[%s1 + $0x88] sm:$0xf]
  %v189 = vld [vmem:[%s1 + $0x8c] sm:$0xf]
  %v190 = vld [vmem:[%s1 + $0x90] sm:$0xf]
  %v191 = vld [vmem:[%s1 + $0x94] sm:$0xf]
  %v192 = vld [vmem:[%s1 + $0x98] sm:$0xf]
  %v193 = vld [vmem:[%s1 + $0x9c] sm:$0xf]
  %v194 = vld [vmem:[%s1 + $0xa0] sm:$0xf]
  %v195 = vld [vmem:[%s1 + $0xa4] sm:$0xf]
  %v196 = vld [vmem:[%s1 + $0xa8] sm:$0xf]
  %v197 = vld [vmem:[%s1 + $0xac] sm:$0xf]
  %v198 = vld [vmem:[%s1 + $0xb0] sm:$0xf]
  %v199 = vld [vmem:[%s1 + $0xb4] sm:$0xf]
  %v200 = vld [vmem:[%s1 + $0xb8] sm:$0xf]
  %v201 = vld [vmem:[%s1 + $0xbc] sm:$0xf]
  %v202 = vld [vmem:[%s1 + $0xc0] sm:$0xf]
  %v203 = vld [vmem:[%s1 + $0xc4] sm:$0xf]
  %v204 = vld [vmem:[%s1 + $0xc8] sm:$0xf]
  %v205 = vld [vmem:[%s1 + $0xcc] sm:$0xf]
  %v206 = vld [vmem:[%s1 + $0xd0] sm:$0xf]
  %v207 = vld [vmem:[%s1 + $0xd4] sm:$0xf]
  %v208 = vld [vmem:[%s1 + $0xd8] sm:$0xf]
  %v209 = vld [vmem:[%s1 + $0xdc] sm:$0xf]
  %v210 = vld [vmem:[%s1 + $0xe0] sm:$0xf]
  %v211 = vld [vmem:[%s1 + $0xe4] sm:$0xf]
  %v212 = vld [vmem:[%s1 + $0xe8] sm:$0xf]
  %v213 = vld [vmem:[%s1 + $0xec] sm:$0xf]
  %v214 = vld [vmem:[%s1 + $0xf0] sm:$0xf]
  %v215 = vld [vmem:[%s1 + $0xf4] sm:$0xf]
  %v216 = vld [vmem:[%s1 + $0xf8] sm:$0xf]
  %v217 = vld [vmem:[%s1 + $0xfc] sm:$0xf]
  %v218 = vld [vmem:[%s2] sm:$0x1]
  %v220 = vlaneseq
  %v221 = vshrl.u32 %v220, 7
  %v222 = vsub.s32 0, %v221
  %v223 = vrot.slane %v218, %v222
  %v289 = vunpack.c.l.b16 %v154
  %v290 = vunpack.c.l.b16 %v155
  %v291 = vunpack.c.l.b16 %v156
  %v292 = vunpack.c.l.b16 %v157
  %v293 = vunpack.c.l.b16 %v158
  %v294 = vunpack.c.l.b16 %v159
  %v295 = vunpack.c.l.b16 %v160
  %v296 = vunpack.c.l.b16 %v161
  %v297 = vunpack.c.l.b16 %v162
  %v298 = vunpack.c.l.b16 %v163
  %v299 = vunpack.c.l.b16 %v164
  %v300 = vunpack.c.l.b16 %v165
  %v301 = vunpack.c.l.b16 %v166
  %v302 = vunpack.c.l.b16 %v167
  %v303 = vunpack.c.l.b16 %v168
  %v304 = vunpack.c.l.b16 %v169
  %v305 = vunpack.c.l.b16 %v170
  %v306 = vunpack.c.l.b16 %v171
  %v307 = vunpack.c.l.b16 %v172
  %v308 = vunpack.c.l.b16 %v173
  %v309 = vunpack.c.l.b16 %v174
  %v310 = vunpack.c.l.b16 %v175
  %v311 = vunpack.c.l.b16 %v176
  %v312 = vunpack.c.l.b16 %v177
  %v313 = vunpack.c.l.b16 %v178
  %v314 = vunpack.c.l.b16 %v179
  %v315 = vunpack.c.l.b16 %v180
  %v316 = vunpack.c.l.b16 %v181
  %v317 = vunpack.c.l.b16 %v182
  %v318 = vunpack.c.l.b16 %v183
  %v319 = vunpack.c.l.b16 %v184
  %v320 = vunpack.c.l.b16 %v185
  %v321 = vunpack.c.l.b16 %v186
  %v322 = vunpack.c.l.b16 %v187
  %v323 = vunpack.c.l.b16 %v188
  %v324 = vunpack.c.l.b16 %v189
  %v325 = vunpack.c.l.b16 %v190
  %v326 = vunpack.c.l.b16 %v191
  %v327 = vunpack.c.l.b16 %v192
  %v328 = vunpack.c.l.b16 %v193
  %v329 = vunpack.c.l.b16 %v194
  %v330 = vunpack.c.l.b16 %v195
  %v331 = vunpack.c.l.b16 %v196
  %v332 = vunpack.c.l.b16 %v197
  %v333 = vunpack.c.l.b16 %v198
  %v334 = vunpack.c.l.b16 %v199
  %v335 = vunpack.c.l.b16 %v200
  %v336 = vunpack.c.l.b16 %v201
  %v337 = vunpack.c.l.b16 %v202
  %v338 = vunpack.c.l.b16 %v203
  %v339 = vunpack.c.l.b16 %v204
  %v340 = vunpack.c.l.b16 %v205
  %v341 = vunpack.c.l.b16 %v206
  %v342 = vunpack.c.l.b16 %v207
  %v343 = vunpack.c.l.b16 %v208
  %v344 = vunpack.c.l.b16 %v209
  %v345 = vunpack.c.l.b16 %v210
  %v346 = vunpack.c.l.b16 %v211
  %v347 = vunpack.c.l.b16 %v212
  %v348 = vunpack.c.l.b16 %v213
  %v349 = vunpack.c.l.b16 %v214
  %v350 = vunpack.c.l.b16 %v215
  %v351 = vunpack.c.l.b16 %v216
  %v352 = vunpack.c.l.b16 %v217
  %v353 = vpack.c.b16 %v290, %v289
  %v354 = vpack.c.b16 %v292, %v291
  %v355 = vpack.c.b16 %v294, %v293
  %v356 = vpack.c.b16 %v296, %v295
  %v357 = vpack.c.b16 %v298, %v297
  %v358 = vpack.c.b16 %v300, %v299
  %v359 = vpack.c.b16 %v302, %v301
  %v360 = vpack.c.b16 %v304, %v303
  %v361 = vpack.c.b16 %v306, %v305
  %v362 = vpack.c.b16 %v308, %v307
  %v363 = vpack.c.b16 %v310, %v309
  %v364 = vpack.c.b16 %v312, %v311
  %v365 = vpack.c.b16 %v314, %v313
  %v366 = vpack.c.b16 %v316, %v315
  %v367 = vpack.c.b16 %v318, %v317
  %v368 = vpack.c.b16 %v320, %v319
  %v369 = vpack.c.b16 %v322, %v321
  %v370 = vpack.c.b16 %v324, %v323
  %v371 = vpack.c.b16 %v326, %v325
  %v372 = vpack.c.b16 %v328, %v327
  %v373 = vpack.c.b16 %v330, %v329
  %v374 = vpack.c.b16 %v332, %v331
  %v375 = vpack.c.b16 %v334, %v333
  %v376 = vpack.c.b16 %v336, %v335
  %v377 = vpack.c.b16 %v338, %v337
  %v378 = vpack.c.b16 %v340, %v339
  %v379 = vpack.c.b16 %v342, %v341
  %v380 = vpack.c.b16 %v344, %v343
  %v381 = vpack.c.b16 %v346, %v345
  %v382 = vpack.c.b16 %v348, %v347
  %v383 = vpack.c.b16 %v350, %v349
  %v384 = vpack.c.b16 %v352, %v351
  %417 = vmatprep.subr.bf16.mxu0 0
  %418 = vmatpush1.bf16.msra.mxu0 %v353
  %419 = vmatprep.subr.bf16.mxu0 0
  %420 = vmatpush1.bf16.msra.mxu0 %v354
  %421 = vmatprep.subr.bf16.mxu0 0
  %422 = vmatpush1.bf16.msra.mxu0 %v355
  %423 = vmatprep.subr.bf16.mxu0 0
  %424 = vmatpush1.bf16.msra.mxu0 %v356
  %425 = vmatprep.subr.bf16.mxu0 0
  %426 = vmatpush1.bf16.msra.mxu0 %v357
  %427 = vmatprep.subr.bf16.mxu0 0
  %428 = vmatpush1.bf16.msra.mxu0 %v358
  %429 = vmatprep.subr.bf16.mxu0 0
  %430 = vmatpush1.bf16.msra.mxu0 %v359
  %431 = vmatprep.subr.bf16.mxu0 0
  %432 = vmatpush1.bf16.msra.mxu0 %v360
  %433 = vmatprep.subr.bf16.mxu0 0
  %434 = vmatpush1.bf16.msra.mxu0 %v361
  %435 = vmatprep.subr.bf16.mxu0 0
  %436 = vmatpush1.bf16.msra.mxu0 %v362
  %437 = vmatprep.subr.bf16.mxu0 0
  %438 = vmatpush1.bf16.msra.mxu0 %v363
  %439 = vmatprep.subr.bf16.mxu0 0
  %440 = vmatpush1.bf16.msra.mxu0 %v364
  %441 = vmatprep.subr.bf16.mxu0 0
  %442 = vmatpush1.bf16.msra.mxu0 %v365
  %443 = vmatprep.subr.bf16.mxu0 0
  %444 = vmatpush1.bf16.msra.mxu0 %v366
  %445 = vmatprep.subr.bf16.mxu0 0
  %446 = vmatpush1.bf16.msra.mxu0 %v367
  %447 = vmatprep.subr.bf16.mxu0 0
  %448 = vmatpush1.bf16.msra.mxu0 %v368
  %449 = vmatprep.mubr.bf16.mxu0 %v147
  %450 = vmatmul.mubr.bf16.gmra.mrb[0].mxu0 %v146
  %v451 = vpop.f32.mrb[0].mxu0
  %v452 = vadd.f32 %v223, %v451
  %v453 = vpop.f32.mrb[0].mxu0
  %v454 = vpop.f32.mrb[0].mxu0
  %v455 = vadd.f32 %v223, %v454
  %v456 = vpop.f32.mrb[0].mxu0
  %457 = vmatprep.mubr.bf16.mxu0 %v151
  %458 = vmatmul.mubr.bf16.gmra.mrb[0].mxu0 %v150
  %v459 = vpop.f32.mrb[0].mxu0
  %v460 = vadd.f32 %v223, %v459
  %v461 = vpop.f32.mrb[0].mxu0
  %v462 = vpop.f32.mrb[0].mxu0
  %v463 = vpop.f32.mrb[0].mxu0
  %464 = vdwg.mxu0
  %465 = vmatprep.subr.bf16.mxu0 0
  %466 = vmatpush1.bf16.msra.mxu0 %v369
  %467 = vmatprep.subr.bf16.mxu0 0
  %468 = vmatpush1.bf16.msra.mxu0 %v370
  %469 = vmatprep.subr.bf16.mxu0 0
  %470 = vmatpush1.bf16.msra.mxu0 %v371
  %471 = vmatprep.subr.bf16.mxu0 0
  %472 = vmatpush1.bf16.msra.mxu0 %v372
  %473 = vmatprep.subr.bf16.mxu0 0
  %474 = vmatpush1.bf16.msra.mxu0 %v373
  %475 = vmatprep.subr.bf16.mxu0 0
  %476 = vmatpush1.bf16.msra.mxu0 %v374
  %477 = vmatprep.subr.bf16.mxu0 0
  %478 = vmatpush1.bf16.msra.mxu0 %v375
  %479 = vmatprep.subr.bf16.mxu0 0
  %480 = vmatpush1.bf16.msra.mxu0 %v376
  %481 = vmatprep.subr.bf16.mxu0 0
  %482 = vmatpush1.bf16.msra.mxu0 %v377
  %483 = vmatprep.subr.bf16.mxu0 0
  %484 = vmatpush1.bf16.msra.mxu0 %v378
  %485 = vmatprep.subr.bf16.mxu0 0
  %486 = vmatpush1.bf16.msra.mxu0 %v379
  %487 = vmatprep.subr.bf16.mxu0 0
  %488 = vmatpush1.bf16.msra.mxu0 %v380
  %489 = vmatprep.subr.bf16.mxu0 0
  %490 = vmatpush1.bf16.msra.mxu0 %v381
  %491 = vmatprep.subr.bf16.mxu0 0
  %492 = vmatpush1.bf16.msra.mxu0 %v382
  %493 = vmatprep.subr.bf16.mxu0 0
  %494 = vmatpush1.bf16.msra.mxu0 %v383
  %495 = vmatprep.subr.bf16.mxu0 0
  %496 = vmatpush1.bf16.msra.mxu0 %v384
  %497 = vmatprep.mubr.bf16.mxu0 %v149
  %498 = vmatmul.mubr.bf16.gmra.mrb[0].mxu0 %v148
  %v499 = vpop.f32.mrb[0].mxu0
  %v500 = vadd.f32 %v452, %v499
  %v501 = vpop.f32.mrb[0].mxu0
  %v502 = vpop.f32.mrb[0].mxu0
  %v503 = vadd.f32 %v455, %v502
  %v504 = vpop.f32.mrb[0].mxu0
  %505 = vmatprep.mubr.bf16.mxu0 %v153
  %506 = vmatmul.mubr.bf16.gmra.mrb[0].mxu0 %v152
  %v507 = vpop.f32.mrb[0].mxu0
  %v508 = vadd.f32 %v460, %v507
  %v509 = vpop.f32.mrb[0].mxu0
  %v510 = vpop.f32.mrb[0].mxu0
  %v511 = vpop.f32.mrb[0].mxu0
  %512 = vdwg.mxu0
  %v513 = vpack.c.bf16 %v503, %v500
  %v514 = vpack.c.bf16 %v508, %v508
  %v517 = vunpack.c.l.b16 %v513
  %v518 = vunpack.c.h.b16 %v513
  %v519 = vunpack.c.l.b16 %v514
  %v520 = vpack.c.b16 %v517, %v517
  %v521 = vpack.c.b16 %v518, %v518
  %v522 = vpack.c.b16 %v519, %v519
  %vm526 = vcmask 519168
  %527 = vst.msk [vmem:[%s5] sm:$0xf] %vm526, %v520
  %528 = vst.msk [vmem:[%s5 + $0x4] sm:$0xf] %vm526, %v521
  %vm529 = vcmask 516096
  %530 = vst.msk [vmem:[%s5 + $0x8] sm:$0x1] %vm529, %v522
  %vm531 = vcmask 523264
  %v532 = vsel %vm531, %v500, 0.0
  %v533 = vsel %vm531, %v503, 0.0
  %v534 = vadd.f32 %v532, %v533
  %vm535 = vcmask 517120
  %v536 = vsel %vm535, %v508, 0.0
  %v537 = vadd.f32 %v534, %v536
  %v538 = vrot.slane %v537, 4
  %v539 = vadd.f32 %v537, %v538
  %v540 = vrot.slane %v539, 2
  %v541 = vadd.f32 %v539, %v540
  %v542 = vrot.slane %v541, 1
  %v543 = vadd.f32 %v541, %v542
  %544 = vst.msk [vmem:[%s6] sm:$0x1] %vm529, %v543
  %v545 = vmul.f32 %v500, %v500
  %v546 = vmul.f32 %v503, %v503
  %v547 = vmul.f32 %v508, %v508
  %v548 = vsel %vm531, %v545, 0.0
  %v549 = vsel %vm531, %v546, 0.0
  %v550 = vadd.f32 %v548, %v549
  %v551 = vsel %vm535, %v547, 0.0
  %v552 = vadd.f32 %v550, %v551
  %v553 = vrot.slane %v552, 4
  %v554 = vadd.f32 %v552, %v553
  %v555 = vrot.slane %v554, 2
  %v556 = vadd.f32 %v554, %v555
  %v557 = vrot.slane %v556, 1
  %v558 = vadd.f32 %v556, %v557
  %559 = vst.msk [vmem:[%s7] sm:$0x1] %vm529, %v558
  // Predicated region
  $region22: #{_lambda_.17} parent=0 // pred_check
    _
  $region23: #{_lambda_.17} parent=0 // pred_check_branch
    %561 = sbr.rel (0) target = $region25
  $region24: #{_lambda_.17} parent=0 // pred_region
    _
  $region25: #{_lambda_.17} parent=0 // pred_fallthru
    _
  // Predicated region
  $region26: #{_lambda_.17} parent=0 // pred_check
    _
  $region27: #{_lambda_.17} parent=0 // pred_check_branch
    %563 = sbr.rel (0) target = $region29
  $region28: #{_lambda_.17} parent=0 // pred_region
    _
  $region29: #{_lambda_.17} parent=0 // pred_fallthru
    _
  // Predicated region
  $region30: #{_lambda_.17} parent=0 // pred_check
    _
  $region31: #{_lambda_.17} parent=0 // pred_check_branch
    %565 = sbr.rel (0) target = $region33
  $region32: #{_lambda_.17} parent=0 // pred_region
    _
  $region33: #{_lambda_.17} parent=0 // pred_fallthru
    _
  // Predicated region
  $region34: #{_lambda_.17} parent=0 // pred_check
    _
  $region35: #{_lambda_.17} parent=0 // pred_check_branch
    %567 = sbr.rel (0) target = $region37
  $region36: #{_lambda_.17} parent=0 // pred_region
    _
  $region37: #{_lambda_.17} parent=0 // pred_fallthru
    _
  // Predicated region
  $region38: #{_lambda_.17} parent=0 // pred_check
    _
  $region39: #{_lambda_.17} parent=0 // pred_check_branch
    %569 = sbr.rel (0) target = $region41
  $region40: #{_lambda_.17} parent=0 // pred_region
    _
  $region41: #{_lambda_.17} parent=0 // pred_fallthru
    _
  // Predicated region
  $region42: #{_lambda_.17} parent=0 // pred_check
    _
  $region43: #{_lambda_.17} parent=0 // pred_check_branch
    %571 = sbr.rel (0) target = $region45
  $region44: #{_lambda_.17} parent=0 // pred_region
    _
  $region45: #{_lambda_.17} parent=0 // pred_fallthru
    _

// kernel: _lambda_.18
$region0: #{_lambda_.18}
  #allocation0 [shape = 'u32[]', space=smem, size = 0x4, offset = 0x4, fixed_abs, tag = 'smem constant byte address 0x4 - core index']
  #allocation1 [shape = 'u32[144,128]{1,0:T(1,128)}', space=vmem, size = 0x12000, scoped, tag = 'internal scratch']
  %s0 = inlined_call_operand.vmem [shape: bf16[32,1024], index: 0, kind: input, shape index: {}]
  %s1 = inlined_call_operand.vmem [shape: bf16[1024,128], index: 1, kind: input, shape index: {}]
  %s2 = inlined_call_operand.vmem [shape: f32[1,128], index: 2, kind: input, shape index: {}]
  %s3 = inlined_call_operand.vmem [shape: f32[1,1024], index: 3, kind: input, shape index: {}]
  %s4 = inlined_call_operand.vmem [shape: f32[1,1024], index: 4, kind: input, shape index: {}]
  %s5 = inlined_call_operand.vmem [shape: bf16[32,128], index: 5, kind: output, shape index: {0}]
  %s6 = inlined_call_operand.vmem [shape: f32[1,128], index: 6, kind: output, shape index: {1}]
  %s7 = inlined_call_operand.vmem [shape: f32[1,128], index: 7, kind: output, shape index: {2}]
  %8 = xla_tuple %s5, %s6, %s7
  %s9 = sld [smem:[#allocation0]]
  $region46: #{_lambda_.18} parent=0
    _
  %s11 = ssub.s32 1, %s9
  %s12 = scalar_select 0, %s11, %s9
  // Predicated region
  $region2: #{_lambda_.18} parent=0 // pred_check
    _
  $region3: #{_lambda_.18} parent=0 // pred_check_branch
    %14 = sbr.rel (0) target = $region5
  $region4: #{_lambda_.18} parent=0 // pred_region
    _
  $region5: #{_lambda_.18} parent=0 // pred_fallthru
    _
  // Predicated region
  $region6: #{_lambda_.18} parent=0 // pred_check
    _
  $region7: #{_lambda_.18} parent=0 // pred_check_branch
    %16 = sbr.rel (0) target = $region9
  $region8: #{_lambda_.18} parent=0 // pred_region
    _
  $region9: #{_lambda_.18} parent=0 // pred_fallthru
    _
  // Predicated region
  $region10: #{_lambda_.18} parent=0 // pred_check
    _
  $region11: #{_lambda_.18} parent=0 // pred_check_branch
    %18 = sbr.rel (0) target = $region13
  $region12: #{_lambda_.18} parent=0 // pred_region
    _
  $region13: #{_lambda_.18} parent=0 // pred_fallthru
    _
  // Predicated region
  $region14: #{_lambda_.18} parent=0 // pred_check
    _
  $region15: #{_lambda_.18} parent=0 // pred_check_branch
    %20 = sbr.rel (0) target = $region17
  $region16: #{_lambda_.18} parent=0 // pred_region
    _
  $region17: #{_lambda_.18} parent=0 // pred_fallthru
    _
  // Predicated region
  $region18: #{_lambda_.18} parent=0 // pred_check
    _
  $region19: #{_lambda_.18} parent=0 // pred_check_branch
    %22 = sbr.rel (0) target = $region21
  $region20: #{_lambda_.18} parent=0 // pred_region
    _
  $region21: #{_lambda_.18} parent=0 // pred_fallthru
    _
  %v24 = vld [vmem:[%s0] sm:$0xff]
  %v25 = vld [vmem:[%s0 + $0x8] sm:$0xff]
  %v26 = vld [vmem:[%s0 + $0x10] sm:$0xff]
  %v27 = vld [vmem:[%s0 + $0x18] sm:$0xff]
  %v28 = vld [vmem:[%s0 + $0x20] sm:$0xff]
  %v29 = vld [vmem:[%s0 + $0x28] sm:$0xff]
  %v30 = vld [vmem:[%s0 + $0x30] sm:$0xff]
  %v31 = vld [vmem:[%s0 + $0x38] sm:$0xff]
  %v32 = vld [vmem:[%s0 + $0x40] sm:$0xff]
  %v33 = vld [vmem:[%s0 + $0x48] sm:$0xff]
  %v34 = vld [vmem:[%s0 + $0x50] sm:$0xff]
  %v35 = vld [vmem:[%s0 + $0x58] sm:$0xff]
  %v36 = vld [vmem:[%s0 + $0x60] sm:$0xff]
  %v37 = vld [vmem:[%s0 + $0x68] sm:$0xff]
  %v38 = vld [vmem:[%s0 + $0x70] sm:$0xff]
  %v39 = vld [vmem:[%s0 + $0x78] sm:$0xff]
  %v40 = vunpack.c.l.bf16 %v24
  %v41 = vunpack.c.h.bf16 %v24
  %v42 = vunpack.c.l.bf16 %v25
  %v43 = vunpack.c.h.bf16 %v25
  %v44 = vunpack.c.l.bf16 %v26
  %v45 = vunpack.c.h.bf16 %v26
  %v46 = vunpack.c.l.bf16 %v27
  %v47 = vunpack.c.h.bf16 %v27
  %v48 = vunpack.c.l.bf16 %v28
  %v49 = vunpack.c.h.bf16 %v28
  %v50 = vunpack.c.l.bf16 %v29
  %v51 = vunpack.c.h.bf16 %v29
  %v52 = vunpack.c.l.bf16 %v30
  %v53 = vunpack.c.h.bf16 %v30
  %v54 = vunpack.c.l.bf16 %v31
  %v55 = vunpack.c.h.bf16 %v31
  %v56 = vunpack.c.l.bf16 %v32
  %v57 = vunpack.c.h.bf16 %v32
  %v58 = vunpack.c.l.bf16 %v33
  %v59 = vunpack.c.h.bf16 %v33
  %v60 = vunpack.c.l.bf16 %v34
  %v61 = vunpack.c.h.bf16 %v34
  %v62 = vunpack.c.l.bf16 %v35
  %v63 = vunpack.c.h.bf16 %v35
  %v64 = vunpack.c.l.bf16 %v36
  %v65 = vunpack.c.h.bf16 %v36
  %v66 = vunpack.c.l.bf16 %v37
  %v67 = vunpack.c.h.bf16 %v37
  %v68 = vunpack.c.l.bf16 %v38
  %v69 = vunpack.c.h.bf16 %v38
  %v70 = vunpack.c.l.bf16 %v39
  %v71 = vunpack.c.h.bf16 %v39
  %v72 = vld [vmem:[%s4] sm:$0xff]
  %v74 = vlaneseq
  %v75 = vshrl.u32 %v74, 7
  %v76 = vsub.s32 0, %v75
  %v77 = vrot.slane %v72, %v76
  %v78 = vlaneseq
  %v79 = vshrl.u32 %v78, 7
  %v80 = vsub.s32 1, %v79
  %v81 = vrot.slane %v72, %v80
  %v82 = vlaneseq
  %v83 = vshrl.u32 %v82, 7
  %v84 = vsub.s32 2, %v83
  %v85 = vrot.slane %v72, %v84
  %v86 = vlaneseq
  %v87 = vshrl.u32 %v86, 7
  %v88 = vsub.s32 3, %v87
  %v89 = vrot.slane %v72, %v88
  %v90 = vlaneseq
  %v91 = vshrl.u32 %v90, 7
  %v92 = vsub.s32 4, %v91
  %v93 = vrot.slane %v72, %v92
  %v94 = vlaneseq
  %v95 = vshrl.u32 %v94, 7
  %v96 = vsub.s32 5, %v95
  %v97 = vrot.slane %v72, %v96
  %v98 = vlaneseq
  %v99 = vshrl.u32 %v98, 7
  %v100 = vsub.s32 6, %v99
  %v101 = vrot.slane %v72, %v100
  %v102 = vlaneseq
  %v103 = vshrl.u32 %v102, 7
  %v104 = vsub.s32 7, %v103
  %v105 = vrot.slane %v72, %v104
  %v114 = vsub.f32 %v40, %v77
  %v115 = vsub.f32 %v41, %v81
  %v116 = vsub.f32 %v42, %v85
  %v117 = vsub.f32 %v43, %v89
  %v118 = vsub.f32 %v44, %v93
  %v119 = vsub.f32 %v45, %v97
  %v120 = vsub.f32 %v46, %v101
  %v121 = vsub.f32 %v47, %v105
  %v122 = vsub.f32 %v48, %v77
  %v123 = vsub.f32 %v49, %v81
  %v124 = vsub.f32 %v50, %v85
  %v125 = vsub.f32 %v51, %v89
  %v126 = vsub.f32 %v52, %v93
  %v127 = vsub.f32 %v53, %v97
  %v128 = vsub.f32 %v54, %v101
  %v129 = vsub.f32 %v55, %v105
  %v130 = vsub.f32 %v56, %v77
  %v131 = vsub.f32 %v57, %v81
  %v132 = vsub.f32 %v58, %v85
  %v133 = vsub.f32 %v59, %v89
  %v134 = vsub.f32 %v60, %v93
  %v135 = vsub.f32 %v61, %v97
  %v136 = vsub.f32 %v62, %v101
  %v137 = vsub.f32 %v63, %v105
  %v138 = vsub.f32 %v64, %v77
  %v139 = vsub.f32 %v65, %v81
  %v140 = vsub.f32 %v66, %v85
  %v141 = vsub.f32 %v67, %v89
  %v142 = vsub.f32 %v68, %v93
  %v143 = vsub.f32 %v69, %v97
  %v144 = vsub.f32 %v70, %v101
  %v145 = vsub.f32 %v71, %v105
  %v146 = vld [vmem:[%s3] sm:$0xff]
  %v148 = vlaneseq
  %v149 = vshrl.u32 %v148, 7
  %v150 = vsub.s32 0, %v149
  %v151 = vrot.slane %v146, %v150
  %v152 = vlaneseq
  %v153 = vshrl.u32 %v152, 7
  %v154 = vsub.s32 1, %v153
  %v155 = vrot.slane %v146, %v154
  %v156 = vlaneseq
  %v157 = vshrl.u32 %v156, 7
  %v158 = vsub.s32 2, %v157
  %v159 = vrot.slane %v146, %v158
  %v160 = vlaneseq
  %v161 = vshrl.u32 %v160, 7
  %v162 = vsub.s32 3, %v161
  %v163 = vrot.slane %v146, %v162
  %v164 = vlaneseq
  %v165 = vshrl.u32 %v164, 7
  %v166 = vsub.s32 4, %v165
  %v167 = vrot.slane %v146, %v166
  %v168 = vlaneseq
  %v169 = vshrl.u32 %v168, 7
  %v170 = vsub.s32 5, %v169
  %v171 = vrot.slane %v146, %v170
  %v172 = vlaneseq
  %v173 = vshrl.u32 %v172, 7
  %v174 = vsub.s32 6, %v173
  %v175 = vrot.slane %v146, %v174
  %v176 = vlaneseq
  %v177 = vshrl.u32 %v176, 7
  %v178 = vsub.s32 7, %v177
  %v179 = vrot.slane %v146, %v178
  %v188 = vmul.f32 %v114, %v151
  %v189 = vmul.f32 %v115, %v155
  %v190 = vmul.f32 %v116, %v159
  %v191 = vmul.f32 %v117, %v163
  %v192 = vmul.f32 %v118, %v167
  %v193 = vmul.f32 %v119, %v171
  %v194 = vmul.f32 %v120, %v175
  %v195 = vmul.f32 %v121, %v179
  %v196 = vmul.f32 %v122, %v151
  %v197 = vmul.f32 %v123, %v155
  %v198 = vmul.f32 %v124, %v159
  %v199 = vmul.f32 %v125, %v163
  %v200 = vmul.f32 %v126, %v167
  %v201 = vmul.f32 %v127, %v171
  %v202 = vmul.f32 %v128, %v175
  %v203 = vmul.f32 %v129, %v179
  %v204 = vmul.f32 %v130, %v151
  %v205 = vmul.f32 %v131, %v155
  %v206 = vmul.f32 %v132, %v159
  %v207 = vmul.f32 %v133, %v163
  %v208 = vmul.f32 %v134, %v167
  %v209 = vmul.f32 %v135, %v171
  %v210 = vmul.f32 %v136, %v175
  %v211 = vmul.f32 %v137, %v179
  %v212 = vmul.f32 %v138, %v151
  %v213 = vmul.f32 %v139, %v155
  %v214 = vmul.f32 %v140, %v159
  %v215 = vmul.f32 %v141, %v163
  %v216 = vmul.f32 %v142, %v167
  %v217 = vmul.f32 %v143, %v171
  %v218 = vmul.f32 %v144, %v175
  %v219 = vmul.f32 %v145, %v179
  %vm220 = vcmp.ge.f32.partialorder %v188, 0.0
  %vm221 = vcmp.ge.f32.partialorder %v189, 0.0
  %vm222 = vcmp.ge.f32.partialorder %v190, 0.0
  %vm223 = vcmp.ge.f32.partialorder %v191, 0.0
  %vm224 = vcmp.ge.f32.partialorder %v192, 0.0
  %vm225 = vcmp.ge.f32.partialorder %v193, 0.0
  %vm226 = vcmp.ge.f32.partialorder %v194, 0.0
  %vm227 = vcmp.ge.f32.partialorder %v195, 0.0
  %vm228 = vcmp.ge.f32.partialorder %v196, 0.0
  %vm229 = vcmp.ge.f32.partialorder %v197, 0.0
  %vm230 = vcmp.ge.f32.partialorder %v198, 0.0
  %vm231 = vcmp.ge.f32.partialorder %v199, 0.0
  %vm232 = vcmp.ge.f32.partialorder %v200, 0.0
  %vm233 = vcmp.ge.f32.partialorder %v201, 0.0
  %vm234 = vcmp.ge.f32.partialorder %v202, 0.0
  %vm235 = vcmp.ge.f32.partialorder %v203, 0.0
  %vm236 = vcmp.ge.f32.partialorder %v204, 0.0
  %vm237 = vcmp.ge.f32.partialorder %v205, 0.0
  %vm238 = vcmp.ge.f32.partialorder %v206, 0.0
  %vm239 = vcmp.ge.f32.partialorder %v207, 0.0
  %vm240 = vcmp.ge.f32.partialorder %v208, 0.0
  %vm241 = vcmp.ge.f32.partialorder %v209, 0.0
  %vm242 = vcmp.ge.f32.partialorder %v210, 0.0
  %vm243 = vcmp.ge.f32.partialorder %v211, 0.0
  %vm244 = vcmp.ge.f32.partialorder %v212, 0.0
  %vm245 = vcmp.ge.f32.partialorder %v213, 0.0
  %vm246 = vcmp.ge.f32.partialorder %v214, 0.0
  %vm247 = vcmp.ge.f32.partialorder %v215, 0.0
  %vm248 = vcmp.ge.f32.partialorder %v216, 0.0
  %vm249 = vcmp.ge.f32.partialorder %v217, 0.0
  %vm250 = vcmp.ge.f32.partialorder %v218, 0.0
  %vm251 = vcmp.ge.f32.partialorder %v219, 0.0
  %v252 = vmul.f32 %v188, 0.2
  %v253 = vmul.f32 %v189, 0.2
  %v254 = vmul.f32 %v190, 0.2
  %v255 = vmul.f32 %v191, 0.2
  %v256 = vmul.f32 %v192, 0.2
  %v257 = vmul.f32 %v193, 0.2
  %v258 = vmul.f32 %v194, 0.2
  %v259 = vmul.f32 %v195, 0.2
  %v260 = vmul.f32 %v196, 0.2
  %v261 = vmul.f32 %v197, 0.2
  %v262 = vmul.f32 %v198, 0.2
  %v263 = vmul.f32 %v199, 0.2
  %v264 = vmul.f32 %v200, 0.2
  %v265 = vmul.f32 %v201, 0.2
  %v266 = vmul.f32 %v202, 0.2
  %v267 = vmul.f32 %v203, 0.2
  %v268 = vmul.f32 %v204, 0.2
  %v269 = vmul.f32 %v205, 0.2
  %v270 = vmul.f32 %v206, 0.2
  %v271 = vmul.f32 %v207, 0.2
  %v272 = vmul.f32 %v208, 0.2
  %v273 = vmul.f32 %v209, 0.2
  %v274 = vmul.f32 %v210, 0.2
  %v275 = vmul.f32 %v211, 0.2
  %v276 = vmul.f32 %v212, 0.2
  %v277 = vmul.f32 %v213, 0.2
  %v278 = vmul.f32 %v214, 0.2
  %v279 = vmul.f32 %v215, 0.2
  %v280 = vmul.f32 %v216, 0.2
  %v281 = vmul.f32 %v217, 0.2
  %v282 = vmul.f32 %v218, 0.2
  %v283 = vmul.f32 %v219, 0.2
  %v284 = vsel %vm220, %v188, %v252
  %v285 = vsel %vm221, %v189, %v253
  %v286 = vsel %vm222, %v190, %v254
  %v287 = vsel %vm223, %v191, %v255
  %v288 = vsel %vm224, %v192, %v256
  %v289 = vsel %vm225, %v193, %v257
  %v290 = vsel %vm226, %v194, %v258
  %v291 = vsel %vm227, %v195, %v259
  %v292 = vsel %vm228, %v196, %v260
  %v293 = vsel %vm229, %v197, %v261
  %v294 = vsel %vm230, %v198, %v262
  %v295 = vsel %vm231, %v199, %v263
  %v296 = vsel %vm232, %v200, %v264
  %v297 = vsel %vm233, %v201, %v265
  %v298 = vsel %vm234, %v202, %v266
  %v299 = vsel %vm235, %v203, %v267
  %v300 = vsel %vm236, %v204, %v268
  %v301 = vsel %vm237, %v205, %v269
  %v302 = vsel %vm238, %v206, %v270
  %v303 = vsel %vm239, %v207, %v271
  %v304 = vsel %vm240, %v208, %v272
  %v305 = vsel %vm241, %v209, %v273
  %v306 = vsel %vm242, %v210, %v274
  %v307 = vsel %vm243, %v211, %v275
  %v308 = vsel %vm244, %v212, %v276
  %v309 = vsel %vm245, %v213, %v277
  %v310 = vsel %vm246, %v214, %v278
  %v311 = vsel %vm247, %v215, %v279
  %v312 = vsel %vm248, %v216, %v280
  %v313 = vsel %vm249, %v217, %v281
  %v314 = vsel %vm250, %v218, %v282
  %v315 = vsel %vm251, %v219, %v283
  %v316 = vpack.c.bf16 %v292, %v284
  %v317 = vpack.c.bf16 %v293, %v285
  %v318 = vpack.c.bf16 %v294, %v286
  %v319 = vpack.c.bf16 %v295, %v287
  %v320 = vpack.c.bf16 %v296, %v288
  %v321 = vpack.c.bf16 %v297, %v289
  %v322 = vpack.c.bf16 %v298, %v290
  %v323 = vpack.c.bf16 %v299, %v291
  %v324 = vpack.c.bf16 %v308, %v300
  %v325 = vpack.c.bf16 %v309, %v301
  %v326 = vpack.c.bf16 %v310, %v302
  %v327 = vpack.c.bf16 %v311, %v303
  %v328 = vpack.c.bf16 %v312, %v304
  %v329 = vpack.c.bf16 %v313, %v305
  %v330 = vpack.c.bf16 %v314, %v306
  %v331 = vpack.c.bf16 %v315, %v307
  %v332 = vld [vmem:[%s1] sm:$0xf]
  %v333 = vld [vmem:[%s1 + $0x4] sm:$0xf]
  %v334 = vld [vmem:[%s1 + $0x8] sm:$0xf]
  %v335 = vld [vmem:[%s1 + $0xc] sm:$0xf]
  %v336 = vld [vmem:[%s1 + $0x10] sm:$0xf]
  %v337 = vld [vmem:[%s1 + $0x14] sm:$0xf]
  %v338 = vld [vmem:[%s1 + $0x18] sm:$0xf]
  %v339 = vld [vmem:[%s1 + $0x1c] sm:$0xf]
  %v340 = vld [vmem:[%s1 + $0x20] sm:$0xf]
  %v341 = vld [vmem:[%s1 + $0x24] sm:$0xf]
  %v342 = vld [vmem:[%s1 + $0x28] sm:$0xf]
  %v343 = vld [vmem:[%s1 + $0x2c] sm:$0xf]
  %v344 = vld [vmem:[%s1 + $0x30] sm:$0xf]
  %v345 = vld [vmem:[%s1 + $0x34] sm:$0xf]
  %v346 = vld [vmem:[%s1 + $0x38] sm:$0xf]
  %v347 = vld [vmem:[%s1 + $0x3c] sm:$0xf]
  %v348 = vld [vmem:[%s1 + $0x40] sm:$0xf]
  %v349 = vld [vmem:[%s1 + $0x44] sm:$0xf]
  %v350 = vld [vmem:[%s1 + $0x48] sm:$0xf]
  %v351 = vld [vmem:[%s1 + $0x4c] sm:$0xf]
  %v352 = vld [vmem:[%s1 + $0x50] sm:$0xf]
  %v353 = vld [vmem:[%s1 + $0x54] sm:$0xf]
  %v354 = vld [vmem:[%s1 + $0x58] sm:$0xf]
  %v355 = vld [vmem:[%s1 + $0x5c] sm:$0xf]
  %v356 = vld [vmem:[%s1 + $0x60] sm:$0xf]
  %v357 = vld [vmem:[%s1 + $0x64] sm:$0xf]
  %v358 = vld [vmem:[%s1 + $0x68] sm:$0xf]
  %v359 = vld [vmem:[%s1 + $0x6c] sm:$0xf]
  %v360 = vld [vmem:[%s1 + $0x70] sm:$0xf]
  %v361 = vld [vmem:[%s1 + $0x74] sm:$0xf]
  %v362 = vld [vmem:[%s1 + $0x78] sm:$0xf]
  %v363 = vld [vmem:[%s1 + $0x7c] sm:$0xf]
  %v364 = vld [vmem:[%s1 + $0x80] sm:$0xf]
  %v365 = vld [vmem:[%s1 + $0x84] sm:$0xf]
  %v366 = vld [vmem:[%s1 + $0x88] sm:$0xf]
  %v367 = vld [vmem:[%s1 + $0x8c] sm:$0xf]
  %v368 = vld [vmem:[%s1 + $0x90] sm:$0xf]
  %v369 = vld [vmem:[%s1 + $0x94] sm:$0xf]
  %v370 = vld [vmem:[%s1 + $0x98] sm:$0xf]
  %v371 = vld [vmem:[%s1 + $0x9c] sm:$0xf]
  %v372 = vld [vmem:[%s1 + $0xa0] sm:$0xf]
  %v373 = vld [vmem:[%s1 + $0xa4] sm:$0xf]
  %v374 = vld [vmem:[%s1 + $0xa8] sm:$0xf]
  %v375 = vld [vmem:[%s1 + $0xac] sm:$0xf]
  %v376 = vld [vmem:[%s1 + $0xb0] sm:$0xf]
  %v377 = vld [vmem:[%s1 + $0xb4] sm:$0xf]
  %v378 = vld [vmem:[%s1 + $0xb8] sm:$0xf]
  %v379 = vld [vmem:[%s1 + $0xbc] sm:$0xf]
  %v380 = vld [vmem:[%s1 + $0xc0] sm:$0xf]
  %v381 = vld [vmem:[%s1 + $0xc4] sm:$0xf]
  %v382 = vld [vmem:[%s1 + $0xc8] sm:$0xf]
  %v383 = vld [vmem:[%s1 + $0xcc] sm:$0xf]
  %v384 = vld [vmem:[%s1 + $0xd0] sm:$0xf]
  %v385 = vld [vmem:[%s1 + $0xd4] sm:$0xf]
  %v386 = vld [vmem:[%s1 + $0xd8] sm:$0xf]
  %v387 = vld [vmem:[%s1 + $0xdc] sm:$0xf]
  %v388 = vld [vmem:[%s1 + $0xe0] sm:$0xf]
  %v389 = vld [vmem:[%s1 + $0xe4] sm:$0xf]
  %v390 = vld [vmem:[%s1 + $0xe8] sm:$0xf]
  %v391 = vld [vmem:[%s1 + $0xec] sm:$0xf]
  %v392 = vld [vmem:[%s1 + $0xf0] sm:$0xf]
  %v393 = vld [vmem:[%s1 + $0xf4] sm:$0xf]
  %v394 = vld [vmem:[%s1 + $0xf8] sm:$0xf]
  %v395 = vld [vmem:[%s1 + $0xfc] sm:$0xf]
  %v396 = vld [vmem:[%s1 + $0x100] sm:$0xf]
  %v397 = vld [vmem:[%s1 + $0x104] sm:$0xf]
  %v398 = vld [vmem:[%s1 + $0x108] sm:$0xf]
  %v399 = vld [vmem:[%s1 + $0x10c] sm:$0xf]
  %v400 = vld [vmem:[%s1 + $0x110] sm:$0xf]
  %v401 = vld [vmem:[%s1 + $0x114] sm:$0xf]
  %v402 = vld [vmem:[%s1 + $0x118] sm:$0xf]
  %v403 = vld [vmem:[%s1 + $0x11c] sm:$0xf]
  %v404 = vld [vmem:[%s1 + $0x120] sm:$0xf]
  %v405 = vld [vmem:[%s1 + $0x124] sm:$0xf]
  %v406 = vld [vmem:[%s1 + $0x128] sm:$0xf]
  %v407 = vld [vmem:[%s1 + $0x12c] sm:$0xf]
  %v408 = vld [vmem:[%s1 + $0x130] sm:$0xf]
  %v409 = vld [vmem:[%s1 + $0x134] sm:$0xf]
  %v410 = vld [vmem:[%s1 + $0x138] sm:$0xf]
  %v411 = vld [vmem:[%s1 + $0x13c] sm:$0xf]
  %v412 = vld [vmem:[%s1 + $0x140] sm:$0xf]
  %v413 = vld [vmem:[%s1 + $0x144] sm:$0xf]
  %v414 = vld [vmem:[%s1 + $0x148] sm:$0xf]
  %v415 = vld [vmem:[%s1 + $0x14c] sm:$0xf]
  %v416 = vld [vmem:[%s1 + $0x150] sm:$0xf]
  %v417 = vld [vmem:[%s1 + $0x154] sm:$0xf]
  %v418 = vld [vmem:[%s1 + $0x158] sm:$0xf]
  %v419 = vld [vmem:[%s1 + $0x15c] sm:$0xf]
  %v420 = vld [vmem:[%s1 + $0x160] sm:$0xf]
  %v421 = vld [vmem:[%s1 + $0x164] sm:$0xf]
  %v422 = vld [vmem:[%s1 + $0x168] sm:$0xf]
  %v423 = vld [vmem:[%s1 + $0x16c] sm:$0xf]
  %v424 = vld [vmem:[%s1 + $0x170] sm:$0xf]
  %v425 = vld [vmem:[%s1 + $0x174] sm:$0xf]
  %v426 = vld [vmem:[%s1 + $0x178] sm:$0xf]
  %v427 = vld [vmem:[%s1 + $0x17c] sm:$0xf]
  %v428 = vld [vmem:[%s1 + $0x180] sm:$0xf]
  %v429 = vld [vmem:[%s1 + $0x184] sm:$0xf]
  %v430 = vld [vmem:[%s1 + $0x188] sm:$0xf]
  %v431 = vld [vmem:[%s1 + $0x18c] sm:$0xf]
  %v432 = vld [vmem:[%s1 + $0x190] sm:$0xf]
  %v433 = vld [vmem:[%s1 + $0x194] sm:$0xf]
  %v434 = vld [vmem:[%s1 + $0x198] sm:$0xf]
  %v435 = vld [vmem:[%s1 + $0x19c] sm:$0xf]
  %v436 = vld [vmem:[%s1 + $0x1a0] sm:$0xf]
  %v437 = vld [vmem:[%s1 + $0x1a4] sm:$0xf]
  %v438 = vld [vmem:[%s1 + $0x1a8] sm:$0xf]
  %v439 = vld [vmem:[%s1 + $0x1ac] sm:$0xf]
  %v440 = vld [vmem:[%s1 + $0x1b0] sm:$0xf]
  %v441 = vld [vmem:[%s1 + $0x1b4] sm:$0xf]
  %v442 = vld [vmem:[%s1 + $0x1b8] sm:$0xf]
  %v443 = vld [vmem:[%s1 + $0x1bc] sm:$0xf]
  %v444 = vld [vmem:[%s1 + $0x1c0] sm:$0xf]
  %v445 = vld [vmem:[%s1 + $0x1c4] sm:$0xf]
  %v446 = vld [vmem:[%s1 + $0x1c8] sm:$0xf]
  %v447 = vld [vmem:[%s1 + $0x1cc] sm:$0xf]
  %v448 = vld [vmem:[%s1 + $0x1d0] sm:$0xf]
  %v449 = vld [vmem:[%s1 + $0x1d4] sm:$0xf]
  %v450 = vld [vmem:[%s1 + $0x1d8] sm:$0xf]
  %v451 = vld [vmem:[%s1 + $0x1dc] sm:$0xf]
  %v452 = vld [vmem:[%s1 + $0x1e0] sm:$0xf]
  %v453 = vld [vmem:[%s1 + $0x1e4] sm:$0xf]
  %v454 = vld [vmem:[%s1 + $0x1e8] sm:$0xf]
  %v455 = vld [vmem:[%s1 + $0x1ec] sm:$0xf]
  %v456 = vld [vmem:[%s1 + $0x1f0] sm:$0xf]
  %v457 = vld [vmem:[%s1 + $0x1f4] sm:$0xf]
  %v458 = vld [vmem:[%s1 + $0x1f8] sm:$0xf]
  %v459 = vld [vmem:[%s1 + $0x1fc] sm:$0xf]
  %v460 = vld [vmem:[%s2] sm:$0x1]
  %v462 = vlaneseq
  %v463 = vshrl.u32 %v462, 7
  %v464 = vsub.s32 0, %v463
  %v465 = vrot.slane %v460, %v464
  %v595 = vunpack.c.l.b16 %v332
  %v596 = vunpack.c.l.b16 %v333
  %v597 = vunpack.c.l.b16 %v334
  %v598 = vunpack.c.l.b16 %v335
  %v599 = vunpack.c.l.b16 %v336
  %v600 = vunpack.c.l.b16 %v337
  %v601 = vunpack.c.l.b16 %v338
  %v602 = vunpack.c.l.b16 %v339
  %v603 = vunpack.c.l.b16 %v340
  %v604 = vunpack.c.l.b16 %v341
  %v605 = vunpack.c.l.b16 %v342
  %v606 = vunpack.c.l.b16 %v343
  %v607 = vunpack.c.l.b16 %v344
  %v608 = vunpack.c.l.b16 %v345
  %v609 = vunpack.c.l.b16 %v346
  %v610 = vunpack.c.l.b16 %v347
  %v611 = vunpack.c.l.b16 %v348
  %v612 = vunpack.c.l.b16 %v349
  %v613 = vunpack.c.l.b16 %v350
  %v614 = vunpack.c.l.b16 %v351
  %v615 = vunpack.c.l.b16 %v352
  %v616 = vunpack.c.l.b16 %v353
  %v617 = vunpack.c.l.b16 %v354
  %v618 = vunpack.c.l.b16 %v355
  %v619 = vunpack.c.l.b16 %v356
  %v620 = vunpack.c.l.b16 %v357
  %v621 = vunpack.c.l.b16 %v358
  %v622 = vunpack.c.l.b16 %v359
  %v623 = vunpack.c.l.b16 %v360
  %v624 = vunpack.c.l.b16 %v361
  %v625 = vunpack.c.l.b16 %v362
  %v626 = vunpack.c.l.b16 %v363
  %v627 = vunpack.c.l.b16 %v364
  %v628 = vunpack.c.l.b16 %v365
  %v629 = vunpack.c.l.b16 %v366
  %v630 = vunpack.c.l.b16 %v367
  %v631 = vunpack.c.l.b16 %v368
  %v632 = vunpack.c.l.b16 %v369
  %v633 = vunpack.c.l.b16 %v370
  %v634 = vunpack.c.l.b16 %v371
  %v635 = vunpack.c.l.b16 %v372
  %v636 = vunpack.c.l.b16 %v373
  %v637 = vunpack.c.l.b16 %v374
  %v638 = vunpack.c.l.b16 %v375
  %v639 = vunpack.c.l.b16 %v376
  %v640 = vunpack.c.l.b16 %v377
  %v641 = vunpack.c.l.b16 %v378
  %v642 = vunpack.c.l.b16 %v379
  %v643 = vunpack.c.l.b16 %v380
  %v644 = vunpack.c.l.b16 %v381
  %v645 = vunpack.c.l.b16 %v382
  %v646 = vunpack.c.l.b16 %v383
  %v647 = vunpack.c.l.b16 %v384
  %v648 = vunpack.c.l.b16 %v385
  %v649 = vunpack.c.l.b16 %v386
  %v650 = vunpack.c.l.b16 %v387
  %v651 = vunpack.c.l.b16 %v388
  %v652 = vunpack.c.l.b16 %v389
  %v653 = vunpack.c.l.b16 %v390
  %v654 = vunpack.c.l.b16 %v391
  %v655 = vunpack.c.l.b16 %v392
  %v656 = vunpack.c.l.b16 %v393
  %v657 = vunpack.c.l.b16 %v394
  %v658 = vunpack.c.l.b16 %v395
  %v659 = vunpack.c.l.b16 %v396
  %v660 = vunpack.c.l.b16 %v397
  %v661 = vunpack.c.l.b16 %v398
  %v662 = vunpack.c.l.b16 %v399
  %v663 = vunpack.c.l.b16 %v400
  %v664 = vunpack.c.l.b16 %v401
  %v665 = vunpack.c.l.b16 %v402
  %v666 = vunpack.c.l.b16 %v403
  %v667 = vunpack.c.l.b16 %v404
  %v668 = vunpack.c.l.b16 %v405
  %v669 = vunpack.c.l.b16 %v406
  %v670 = vunpack.c.l.b16 %v407
  %v671 = vunpack.c.l.b16 %v408
  %v672 = vunpack.c.l.b16 %v409
  %v673 = vunpack.c.l.b16 %v410
  %v674 = vunpack.c.l.b16 %v411
  %v675 = vunpack.c.l.b16 %v412
  %v676 = vunpack.c.l.b16 %v413
  %v677 = vunpack.c.l.b16 %v414
  %v678 = vunpack.c.l.b16 %v415
  %v679 = vunpack.c.l.b16 %v416
  %v680 = vunpack.c.l.b16 %v417
  %v681 = vunpack.c.l.b16 %v418
  %v682 = vunpack.c.l.b16 %v419
  %v683 = vunpack.c.l.b16 %v420
  %v684 = vunpack.c.l.b16 %v421
  %v685 = vunpack.c.l.b16 %v422
  %v686 = vunpack.c.l.b16 %v423
  %v687 = vunpack.c.l.b16 %v424
  %v688 = vunpack.c.l.b16 %v425
  %v689 = vunpack.c.l.b16 %v426
  %v690 = vunpack.c.l.b16 %v427
  %v691 = vunpack.c.l.b16 %v428
  %v692 = vunpack.c.l.b16 %v429
  %v693 = vunpack.c.l.b16 %v430
  %v694 = vunpack.c.l.b16 %v431
  %v695 = vunpack.c.l.b16 %v432
  %v696 = vunpack.c.l.b16 %v433
  %v697 = vunpack.c.l.b16 %v434
  %v698 = vunpack.c.l.b16 %v435
  %v699 = vunpack.c.l.b16 %v436
  %v700 = vunpack.c.l.b16 %v437
  %v701 = vunpack.c.l.b16 %v438
  %v702 = vunpack.c.l.b16 %v439
  %v703 = vunpack.c.l.b16 %v440
  %v704 = vunpack.c.l.b16 %v441
  %v705 = vunpack.c.l.b16 %v442
  %v706 = vunpack.c.l.b16 %v443
  %v707 = vunpack.c.l.b16 %v444
  %v708 = vunpack.c.l.b16 %v445
  %v709 = vunpack.c.l.b16 %v446
  %v710 = vunpack.c.l.b16 %v447
  %v711 = vunpack.c.l.b16 %v448
  %v712 = vunpack.c.l.b16 %v449
  %v713 = vunpack.c.l.b16 %v450
  %v714 = vunpack.c.l.b16 %v451
  %v715 = vunpack.c.l.b16 %v452
  %v716 = vunpack.c.l.b16 %v453
  %v717 = vunpack.c.l.b16 %v454
  %v718 = vunpack.c.l.b16 %v455
  %v719 = vunpack.c.l.b16 %v456
  %v720 = vunpack.c.l.b16 %v457
  %v721 = vunpack.c.l.b16 %v458
  %v722 = vunpack.c.l.b16 %v459
  %v723 = vpack.c.b16 %v596, %v595
  %v724 = vpack.c.b16 %v598, %v597
  %v725 = vpack.c.b16 %v600, %v599
  %v726 = vpack.c.b16 %v602, %v601
  %v727 = vpack.c.b16 %v604, %v603
  %v728 = vpack.c.b16 %v606, %v605
  %v729 = vpack.c.b16 %v608, %v607
  %v730 = vpack.c.b16 %v610, %v609
  %v731 = vpack.c.b16 %v612, %v611
  %v732 = vpack.c.b16 %v614, %v613
  %v733 = vpack.c.b16 %v616, %v615
  %v734 = vpack.c.b16 %v618, %v617
  %v735 = vpack.c.b16 %v620, %v619
  %v736 = vpack.c.b16 %v622, %v621
  %v737 = vpack.c.b16 %v624, %v623
  %v738 = vpack.c.b16 %v626, %v625
  %v739 = vpack.c.b16 %v628, %v627
  %v740 = vpack.c.b16 %v630, %v629
  %v741 = vpack.c.b16 %v632, %v631
  %v742 = vpack.c.b16 %v634, %v633
  %v743 = vpack.c.b16 %v636, %v635
  %v744 = vpack.c.b16 %v638, %v637
  %v745 = vpack.c.b16 %v640, %v639
  %v746 = vpack.c.b16 %v642, %v641
  %v747 = vpack.c.b16 %v644, %v643
  %v748 = vpack.c.b16 %v646, %v645
  %v749 = vpack.c.b16 %v648, %v647
  %v750 = vpack.c.b16 %v650, %v649
  %v751 = vpack.c.b16 %v652, %v651
  %v752 = vpack.c.b16 %v654, %v653
  %v753 = vpack.c.b16 %v656, %v655
  %v754 = vpack.c.b16 %v658, %v657
  %v755 = vpack.c.b16 %v660, %v659
  %v756 = vpack.c.b16 %v662, %v661
  %v757 = vpack.c.b16 %v664, %v663
  %v758 = vpack.c.b16 %v666, %v665
  %v759 = vpack.c.b16 %v668, %v667
  %v760 = vpack.c.b16 %v670, %v669
  %v761 = vpack.c.b16 %v672, %v671
  %v762 = vpack.c.b16 %v674, %v673
  %v763 = vpack.c.b16 %v676, %v675
  %v764 = vpack.c.b16 %v678, %v677
  %v765 = vpack.c.b16 %v680, %v679
  %v766 = vpack.c.b16 %v682, %v681
  %v767 = vpack.c.b16 %v684, %v683
  %v768 = vpack.c.b16 %v686, %v685
  %v769 = vpack.c.b16 %v688, %v687
  %v770 = vpack.c.b16 %v690, %v689
  %v771 = vpack.c.b16 %v692, %v691
  %v772 = vpack.c.b16 %v694, %v693
  %v773 = vpack.c.b16 %v696, %v695
  %v774 = vpack.c.b16 %v698, %v697
  %v775 = vpack.c.b16 %v700, %v699
  %v776 = vpack.c.b16 %v702, %v701
  %v777 = vpack.c.b16 %v704, %v703
  %v778 = vpack.c.b16 %v706, %v705
  %v779 = vpack.c.b16 %v708, %v707
  %v780 = vpack.c.b16 %v710, %v709
  %v781 = vpack.c.b16 %v712, %v711
  %v782 = vpack.c.b16 %v714, %v713
  %v783 = vpack.c.b16 %v716, %v715
  %v784 = vpack.c.b16 %v718, %v717
  %v785 = vpack.c.b16 %v720, %v719
  %v786 = vpack.c.b16 %v722, %v721
  %851 = vmatprep.subr.bf16.mxu0 0
  %852 = vmatpush1.bf16.msra.mxu0 %v723
  %853 = vmatprep.subr.bf16.mxu0 0
  %854 = vmatpush1.bf16.msra.mxu0 %v724
  %855 = vmatprep.subr.bf16.mxu0 0
  %856 = vmatpush1.bf16.msra.mxu0 %v725
  %857 = vmatprep.subr.bf16.mxu0 0
  %858 = vmatpush1.bf16.msra.mxu0 %v726
  %859 = vmatprep.subr.bf16.mxu0 0
  %860 = vmatpush1.bf16.msra.mxu0 %v727
  %861 = vmatprep.subr.bf16.mxu0 0
  %862 = vmatpush1.bf16.msra.mxu0 %v728
  %863 = vmatprep.subr.bf16.mxu0 0
  %864 = vmatpush1.bf16.msra.mxu0 %v729
  %865 = vmatprep.subr.bf16.mxu0 0
  %866 = vmatpush1.bf16.msra.mxu0 %v730
  %867 = vmatprep.subr.bf16.mxu0 0
  %868 = vmatpush1.bf16.msra.mxu0 %v731
  %869 = vmatprep.subr.bf16.mxu0 0
  %870 = vmatpush1.bf16.msra.mxu0 %v732
  %871 = vmatprep.subr.bf16.mxu0 0
  %872 = vmatpush1.bf16.msra.mxu0 %v733
  %873 = vmatprep.subr.bf16.mxu0 0
  %874 = vmatpush1.bf16.msra.mxu0 %v734
  %875 = vmatprep.subr.bf16.mxu0 0
  %876 = vmatpush1.bf16.msra.mxu0 %v735
  %877 = vmatprep.subr.bf16.mxu0 0
  %878 = vmatpush1.bf16.msra.mxu0 %v736
  %879 = vmatprep.subr.bf16.mxu0 0
  %880 = vmatpush1.bf16.msra.mxu0 %v737
  %881 = vmatprep.subr.bf16.mxu0 0
  %882 = vmatpush1.bf16.msra.mxu0 %v738
  %883 = vmatprep.mubr.bf16.mxu0 %v317
  %884 = vmatmul.mubr.bf16.gmra.mrb[0].mxu0 %v316
  %v885 = vpop.f32.mrb[0].mxu0
  %v886 = vadd.f32 %v465, %v885
  %v887 = vpop.f32.mrb[0].mxu0
  %v888 = vpop.f32.mrb[0].mxu0
  %v889 = vadd.f32 %v465, %v888
  %v890 = vpop.f32.mrb[0].mxu0
  %891 = vmatprep.mubr.bf16.mxu0 %v325
  %892 = vmatmul.mubr.bf16.gmra.mrb[0].mxu0 %v324
  %v893 = vpop.f32.mrb[0].mxu0
  %v894 = vadd.f32 %v465, %v893
  %v895 = vpop.f32.mrb[0].mxu0
  %v896 = vpop.f32.mrb[0].mxu0
  %v897 = vadd.f32 %v465, %v896
  %v898 = vpop.f32.mrb[0].mxu0
  %899 = vdwg.mxu0
  %900 = vmatprep.subr.bf16.mxu0 0
  %901 = vmatpush1.bf16.msra.mxu0 %v739
  %902 = vmatprep.subr.bf16.mxu0 0
  %903 = vmatpush1.bf16.msra.mxu0 %v740
  %904 = vmatprep.subr.bf16.mxu0 0
  %905 = vmatpush1.bf16.msra.mxu0 %v741
  %906 = vmatprep.subr.bf16.mxu0 0
  %907 = vmatpush1.bf16.msra.mxu0 %v742
  %908 = vmatprep.subr.bf16.mxu0 0
  %909 = vmatpush1.bf16.msra.mxu0 %v743
  %910 = vmatprep.subr.bf16.mxu0 0
  %911 = vmatpush1.bf16.msra.mxu0 %v744
  %912 = vmatprep.subr.bf16.mxu0 0
  %913 = vmatpush1.bf16.msra.mxu0 %v745
  %914 = vmatprep.subr.bf16.mxu0 0
  %915 = vmatpush1.bf16.msra.mxu0 %v746
  %916 = vmatprep.subr.bf16.mxu0 0
  %917 = vmatpush1.bf16.msra.mxu0 %v747
  %918 = vmatprep.subr.bf16.mxu0 0
  %919 = vmatpush1.bf16.msra.mxu0 %v748
  %920 = vmatprep.subr.bf16.mxu0 0
  %921 = vmatpush1.bf16.msra.mxu0 %v749
  %922 = vmatprep.subr.bf16.mxu0 0
  %923 = vmatpush1.bf16.msra.mxu0 %v750
  %924 = vmatprep.subr.bf16.mxu0 0
  %925 = vmatpush1.bf16.msra.mxu0 %v751
  %926 = vmatprep.subr.bf16.mxu0 0
  %927 = vmatpush1.bf16.msra.mxu0 %v752
  %928 = vmatprep.subr.bf16.mxu0 0
  %929 = vmatpush1.bf16.msra.mxu0 %v753
  %930 = vmatprep.subr.bf16.mxu0 0
  %931 = vmatpush1.bf16.msra.mxu0 %v754
  %932 = vmatprep.mubr.bf16.mxu0 %v319
  %933 = vmatmul.mubr.bf16.gmra.mrb[0].mxu0 %v318
  %v934 = vpop.f32.mrb[0].mxu0
  %v935 = vadd.f32 %v886, %v934
  %v936 = vpop.f32.mrb[0].mxu0
  %v937 = vpop.f32.mrb[0].mxu0
  %v938 = vadd.f32 %v889, %v937
  %v939 = vpop.f32.mrb[0].mxu0
  %940 = vmatprep.mubr.bf16.mxu0 %v327
  %941 = vmatmul.mubr.bf16.gmra.mrb[0].mxu0 %v326
  %v942 = vpop.f32.mrb[0].mxu0
  %v943 = vadd.f32 %v894, %v942
  %v944 = vpop.f32.mrb[0].mxu0
  %v945 = vpop.f32.mrb[0].mxu0
  %v946 = vadd.f32 %v897, %v945
  %v947 = vpop.f32.mrb[0].mxu0
  %948 = vdwg.mxu0
  %949 = vmatprep.subr.bf16.mxu0 0
  %950 = vmatpush1.bf16.msra.mxu0 %v755
  %951 = vmatprep.subr.bf16.mxu0 0
  %952 = vmatpush1.bf16.msra.mxu0 %v756
  %953 = vmatprep.subr.bf16.mxu0 0
  %954 = vmatpush1.bf16.msra.mxu0 %v757
  %955 = vmatprep.subr.bf16.mxu0 0
  %956 = vmatpush1.bf16.msra.mxu0 %v758
  %957 = vmatprep.subr.bf16.mxu0 0
  %958 = vmatpush1.bf16.msra.mxu0 %v759
  %959 = vmatprep.subr.bf16.mxu0 0
  %960 = vmatpush1.bf16.msra.mxu0 %v760
  %961 = vmatprep.subr.bf16.mxu0 0
  %962 = vmatpush1.bf16.msra.mxu0 %v761
  %963 = vmatprep.subr.bf16.mxu0 0
  %964 = vmatpush1.bf16.msra.mxu0 %v762
  %965 = vmatprep.subr.bf16.mxu0 0
  %966 = vmatpush1.bf16.msra.mxu0 %v763
  %967 = vmatprep.subr.bf16.mxu0 0
  %968 = vmatpush1.bf16.msra.mxu0 %v764
  %969 = vmatprep.subr.bf16.mxu0 0
  %970 = vmatpush1.bf16.msra.mxu0 %v765
  %971 = vmatprep.subr.bf16.mxu0 0
  %972 = vmatpush1.bf16.msra.mxu0 %v766
  %973 = vmatprep.subr.bf16.mxu0 0
  %974 = vmatpush1.bf16.msra.mxu0 %v767
  %975 = vmatprep.subr.bf16.mxu0 0
  %976 = vmatpush1.bf16.msra.mxu0 %v768
  %977 = vmatprep.subr.bf16.mxu0 0
  %978 = vmatpush1.bf16.msra.mxu0 %v769
  %979 = vmatprep.subr.bf16.mxu0 0
  %980 = vmatpush1.bf16.msra.mxu0 %v770
  %981 = vmatprep.mubr.bf16.mxu0 %v321
  %982 = vmatmul.mubr.bf16.gmra.mrb[0].mxu0 %v320
  %v983 = vpop.f32.mrb[0].mxu0
  %v984 = vadd.f32 %v935, %v983
  %v985 = vpop.f32.mrb[0].mxu0
  %v986 = vpop.f32.mrb[0].mxu0
  %v987 = vadd.f32 %v938, %v986
  %v988 = vpop.f32.mrb[0].mxu0
  %989 = vmatprep.mubr.bf16.mxu0 %v329
  %990 = vmatmul.mubr.bf16.gmra.mrb[0].mxu0 %v328
  %v991 = vpop.f32.mrb[0].mxu0
  %v992 = vadd.f32 %v943, %v991
  %v993 = vpop.f32.mrb[0].mxu0
  %v994 = vpop.f32.mrb[0].mxu0
  %v995 = vadd.f32 %v946, %v994
  %v996 = vpop.f32.mrb[0].mxu0
  %997 = vdwg.mxu0
  %998 = vmatprep.subr.bf16.mxu0 0
  %999 = vmatpush1.bf16.msra.mxu0 %v771
  %1000 = vmatprep.subr.bf16.mxu0 0
  %1001 = vmatpush1.bf16.msra.mxu0 %v772
  %1002 = vmatprep.subr.bf16.mxu0 0
  %1003 = vmatpush1.bf16.msra.mxu0 %v773
  %1004 = vmatprep.subr.bf16.mxu0 0
  %1005 = vmatpush1.bf16.msra.mxu0 %v774
  %1006 = vmatprep.subr.bf16.mxu0 0
  %1007 = vmatpush1.bf16.msra.mxu0 %v775
  %1008 = vmatprep.subr.bf16.mxu0 0
  %1009 = vmatpush1.bf16.msra.mxu0 %v776
  %1010 = vmatprep.subr.bf16.mxu0 0
  %1011 = vmatpush1.bf16.msra.mxu0 %v777
  %1012 = vmatprep.subr.bf16.mxu0 0
  %1013 = vmatpush1.bf16.msra.mxu0 %v778
  %1014 = vmatprep.subr.bf16.mxu0 0
  %1015 = vmatpush1.bf16.msra.mxu0 %v779
  %1016 = vmatprep.subr.bf16.mxu0 0
  %1017 = vmatpush1.bf16.msra.mxu0 %v780
  %1018 = vmatprep.subr.bf16.mxu0 0
  %1019 = vmatpush1.bf16.msra.mxu0 %v781
  %1020 = vmatprep.subr.bf16.mxu0 0
  %1021 = vmatpush1.bf16.msra.mxu0 %v782
  %1022 = vmatprep.subr.bf16.mxu0 0
  %1023 = vmatpush1.bf16.msra.mxu0 %v783
  %1024 = vmatprep.subr.bf16.mxu0 0
  %1025 = vmatpush1.bf16.msra.mxu0 %v784
  %1026 = vmatprep.subr.bf16.mxu0 0
  %1027 = vmatpush1.bf16.msra.mxu0 %v785
  %1028 = vmatprep.subr.bf16.mxu0 0
  %1029 = vmatpush1.bf16.msra.mxu0 %v786
  %1030 = vmatprep.mubr.bf16.mxu0 %v323
  %1031 = vmatmul.mubr.bf16.gmra.mrb[0].mxu0 %v322
  %v1032 = vpop.f32.mrb[0].mxu0
  %v1033 = vadd.f32 %v984, %v1032
  %v1034 = vpop.f32.mrb[0].mxu0
  %v1035 = vpop.f32.mrb[0].mxu0
  %v1036 = vadd.f32 %v987, %v1035
  %v1037 = vpop.f32.mrb[0].mxu0
  %1038 = vmatprep.mubr.bf16.mxu0 %v331
  %1039 = vmatmul.mubr.bf16.gmra.mrb[0].mxu0 %v330
  %v1040 = vpop.f32.mrb[0].mxu0
  %v1041 = vadd.f32 %v992, %v1040
  %v1042 = vpop.f32.mrb[0].mxu0
  %v1043 = vpop.f32.mrb[0].mxu0
  %v1044 = vadd.f32 %v995, %v1043
  %v1045 = vpop.f32.mrb[0].mxu0
  %1046 = vdwg.mxu0
  %v1047 = vpack.c.bf16 %v1036, %v1033
  %v1048 = vpack.c.bf16 %v1044, %v1041
  %v1051 = vunpack.c.l.b16 %v1047
  %v1052 = vunpack.c.h.b16 %v1047
  %v1053 = vunpack.c.l.b16 %v1048
  %v1054 = vunpack.c.h.b16 %v1048
  %v1055 = vpack.c.b16 %v1051, %v1051
  %v1056 = vpack.c.b16 %v1052, %v1052
  %v1057 = vpack.c.b16 %v1053, %v1053
  %v1058 = vpack.c.b16 %v1054, %v1054
  %1063 = vst [vmem:[%s5] sm:$0xf] %v1055
  %1064 = vst [vmem:[%s5 + $0x4] sm:$0xf] %v1056
  %1065 = vst [vmem:[%s5 + $0x8] sm:$0xf] %v1057
  %1066 = vst [vmem:[%s5 + $0xc] sm:$0xf] %v1058
  %v1067 = vadd.f32 %v1033, %v1036
  %v1068 = vadd.f32 %v1067, %v1041
  %v1069 = vadd.f32 %v1068, %v1044
  %v1070 = vrot.slane %v1069, 4
  %v1071 = vadd.f32 %v1069, %v1070
  %v1072 = vrot.slane %v1071, 2
  %v1073 = vadd.f32 %v1071, %v1072
  %v1074 = vrot.slane %v1073, 1
  %v1075 = vadd.f32 %v1073, %v1074
  %1076 = vst [vmem:[%s6] sm:$0x1] %v1075
  %v1077 = vmul.f32 %v1033, %v1033
  %v1078 = vmul.f32 %v1036, %v1036
  %v1079 = vmul.f32 %v1041, %v1041
  %v1080 = vmul.f32 %v1044, %v1044
  %v1081 = vadd.f32 %v1077, %v1078
  %v1082 = vadd.f32 %v1081, %v1079
  %v1083 = vadd.f32 %v1082, %v1080
  %v1084 = vrot.slane %v1083, 4
  %v1085 = vadd.f32 %v1083, %v1084
  %v1086 = vrot.slane %v1085, 2
  %v1087 = vadd.f32 %v1085, %v1086
  %v1088 = vrot.slane %v1087, 1
  %v1089 = vadd.f32 %v1087, %v1088
  %1090 = vst [vmem:[%s7] sm:$0x1] %v1089
  // Predicated region
  $region22: #{_lambda_.18} parent=0 // pred_check
    _
  $region23: #{_lambda_.18} parent=0 // pred_check_branch
    %1092 = sbr.rel (0) target = $region25
  $region24: #{_lambda_.18} parent=0 // pred_region
    _
  $region25: #{_lambda_.18} parent=0 // pred_fallthru
    _
  // Predicated region
  $region26: #{_lambda_.18} parent=0 // pred_check
    _
  $region27: #{_lambda_.18} parent=0 // pred_check_branch
    %1094 = sbr.rel (0) target = $region29
  $region28: #{_lambda_.18} parent=0 // pred_region
    _
  $region29: #{_lambda_.18} parent=0 // pred_fallthru
    _
  // Predicated region
  $region30: #{_lambda_.18} parent=0 // pred_check
    _
  $region31: #{_lambda_.18} parent=0 // pred_check_branch
    %1096 = sbr.rel (0) target = $region33
  $region32: #{_lambda_.18} parent=0 // pred_region
    _
  $region33: #{_lambda_.18} parent=0 // pred_fallthru
    _
  // Predicated region
  $region34: #{_lambda_.18} parent=0 // pred_check
    _
  $region35: #{_lambda_.18} parent=0 // pred_check_branch
    %1098 = sbr.rel (0) target = $region37
  $region36: #{_lambda_.18} parent=0 // pred_region
    _
  $region37: #{_lambda_.18} parent=0 // pred_fallthru
    _
  // Predicated region
  $region38: #{_lambda_.18} parent=0 // pred_check
    _
  $region39: #{_lambda_.18} parent=0 // pred_check_branch
    %1100 = sbr.rel (0) target = $region41
  $region40: #{_lambda_.18} parent=0 // pred_region
    _
  $region41: #{_lambda_.18} parent=0 // pred_fallthru
    _
  // Predicated region
  $region42: #{_lambda_.18} parent=0 // pred_check
    _
  $region43: #{_lambda_.18} parent=0 // pred_check_branch
    %1102 = sbr.rel (0) target = $region45
  $region44: #{_lambda_.18} parent=0 // pred_region
    _
  $region45: #{_lambda_.18} parent=0 // pred_fallthru
    _

// kernel: _lambda_.19
$region0: #{_lambda_.19}
  #allocation0 [shape = 'u32[]', space=smem, size = 0x4, offset = 0x4, fixed_abs, tag = 'smem constant byte address 0x4 - core index']
  #allocation1 [shape = 'u32[144,128]{1,0:T(1,128)}', space=vmem, size = 0x12000, scoped, tag = 'internal scratch']
  #allocation2 [shape = 'f32[1,1]{1,0:T(1,128)S(1)}', space=vmem, size = 0x200, scoped, tag = 'scoped memory for _lambda_.19']
  %s0 = inlined_call_operand.vmem [shape: bf16[50,2048], index: 0, kind: input, shape index: {}]
  %s1 = inlined_call_operand.vmem [shape: bf16[2048,1], index: 1, kind: input, shape index: {}]
  %s2 = inlined_call_operand.<no memory space> [shape: f32[1,1], index: 2, kind: input, shape index: {}]
  %s3 = inlined_call_operand.vmem [shape: f32[1,2048], index: 3, kind: input, shape index: {}]
  %s4 = inlined_call_operand.vmem [shape: f32[1,2048], index: 4, kind: input, shape index: {}]
  %s5 = inlined_call_operand.vmem [shape: bf16[50,1], index: 5, kind: output, shape index: {}]
  %s6 = sld [smem:[#allocation0]]
  $region97: #{_lambda_.19} parent=0
    _
  %s8 = ssub.s32 1, %s6
  %s9 = scalar_select 0, %s8, %s6
  %v10 = vstv %s2
  %11 = vst [vmem:[#allocation2] sm:$0x1] %v10
  $region1: #{_lambda_.19} parent=0
    #allocation3 [shape = 'u8[16384]{0}', space=vmem, size = 0x4000, scoped, tag = 'output window, operand 0']
    loop: start=0, step=1, limit=4
    $region2: #{_lambda_.19} parent=1 // loop_pre_header
      _
    $region3: #{_lambda_.19} parent=1 // loop_header
      %s13 = sphi 0, %s17
      %p14 = scmp.ge.s32.totalorder %s13, 4
      %s23 = sphi 0, %s25
      %s26 = sphi 0, %s23
      %s27 = sphi 0, %s26
      %s43 = sphi 0, %s27
      %s47 = sphi 0, %s47
      %s49 = sphi 0, %s47
      %s50 = sphi 0, %s49
      %s64 = sphi 0, %s50
      %s68 = sphi 0, %s68
      %s70 = sphi 0, %s68
      %s71 = sphi 0, %s70
      %s85 = sphi 0, %s71
      %s89 = sphi 0, %s89
      %s91 = sphi 0, %s89
      %s92 = sphi 0, %s91
      %s106 = sphi 0, %s92
      %s110 = sphi 0, %s110
      %s112 = sphi 0, %s110
      %s113 = sphi 0, %s112
      %s127 = sphi 0, %s113
      %s133 = sphi 0, %s135
      %s136 = sphi 0, %s133
      %s137 = sphi 0, %s136
      %s153 = sphi 0, %s137
    $region4: #{_lambda_.19} parent=1 // loop_header_branch
      %16 = sbr.rel (%p14) target = $region8
    $region5: #{_lambda_.19} parent=1 // loop_body
      %s18 = ssub.s32 %s13, 1
      %s19 = ssub.s32 %s13, 2
      %s20 = sadd.s32 %s13, 1
      %s21 = ssub.s32 %s13, %s20
      %p22 = scmp.eq.s32.totalorder %s21, 0
      %s24 = sadd.s32 %s23, 1
      %s25 = scalar_select %p22, %s23, %s24
      %p28 = pneg %p22
      %p29 = scmp.eq.s32.totalorder %s13, 1
      %p30 = por %p28, %p29
      %p31 = scmp.ne.s32.totalorder %s23, %s26
      %p32 = scmp.eq.s32.totalorder %s13, 0
      %p33 = por %p31, %p32
      %p34 = scmp.ne.s32.totalorder %s23, %s26
      %p35 = scmp.eq.s32.totalorder %s18, 1
      %p36 = por %p34, %p35
      %p37 = scmp.ne.s32.totalorder %s26, %s27
      %p38 = scmp.eq.s32.totalorder %s18, 0
      %p39 = por %p37, %p38
      %p40 = scmp.ne.s32.totalorder %s26, %s27
      %p41 = scmp.eq.s32.totalorder %s19, 1
      %p42 = por %p40, %p41
      %p44 = scmp.ne.s32.totalorder %s27, %s43
      %p45 = scmp.eq.s32.totalorder %s19, 0
      %p46 = por %p44, %p45
      %s48 = sadd.s32 %s47, 1
      %p51 = scmp.eq.s32.totalorder %s13, 1
      %p52 = scmp.ne.s32.totalorder %s47, %s49
      %p53 = scmp.eq.s32.totalorder %s13, 0
      %p54 = por %p52, %p53
      %p55 = scmp.ne.s32.totalorder %s47, %s49
      %p56 = scmp.eq.s32.totalorder %s18, 1
      %p57 = por %p55, %p56
      %p58 = scmp.ne.s32.totalorder %s49, %s50
      %p59 = scmp.eq.s32.totalorder %s18, 0
      %p60 = por %p58, %p59
      %p61 = scmp.ne.s32.totalorder %s49, %s50
      %p62 = scmp.eq.s32.totalorder %s19, 1
      %p63 = por %p61, %p62
      %p65 = scmp.ne.s32.totalorder %s50, %s64
      %p66 = scmp.eq.s32.totalorder %s19, 0
      %p67 = por %p65, %p66
      %s69 = sadd.s32 %s68, 1
      %p72 = scmp.eq.s32.totalorder %s13, 1
      %p73 = scmp.ne.s32.totalorder %s68, %s70
      %p74 = scmp.eq.s32.totalorder %s13, 0
      %p75 = por %p73, %p74
      %p76 = scmp.ne.s32.totalorder %s68, %s70
      %p77 = scmp.eq.s32.totalorder %s18, 1
      %p78 = por %p76, %p77
      %p79 = scmp.ne.s32.totalorder %s70, %s71
      %p80 = scmp.eq.s32.totalorder %s18, 0
      %p81 = por %p79, %p80
      %p82 = scmp.ne.s32.totalorder %s70, %s71
      %p83 = scmp.eq.s32.totalorder %s19, 1
      %p84 = por %p82, %p83
      %p86 = scmp.ne.s32.totalorder %s71, %s85
      %p87 = scmp.eq.s32.totalorder %s19, 0
      %p88 = por %p86, %p87
      %s90 = sadd.s32 %s89, 1
      %p93 = scmp.eq.s32.totalorder %s13, 1
      %p94 = scmp.ne.s32.totalorder %s89, %s91
      %p95 = scmp.eq.s32.totalorder %s13, 0
      %p96 = por %p94, %p95
      %p97 = scmp.ne.s32.totalorder %s89, %s91
      %p98 = scmp.eq.s32.totalorder %s18, 1
      %p99 = por %p97, %p98
      %p100 = scmp.ne.s32.totalorder %s91, %s92
      %p101 = scmp.eq.s32.totalorder %s18, 0
      %p102 = por %p100, %p101
      %p103 = scmp.ne.s32.totalorder %s91, %s92
      %p104 = scmp.eq.s32.totalorder %s19, 1
      %p105 = por %p103, %p104
      %p107 = scmp.ne.s32.totalorder %s92, %s106
      %p108 = scmp.eq.s32.totalorder %s19, 0
      %p109 = por %p107, %p108
      %s111 = sadd.s32 %s110, 1
      %p114 = scmp.eq.s32.totalorder %s13, 1
      %p115 = scmp.ne.s32.totalorder %s110, %s112
      %p116 = scmp.eq.s32.totalorder %s13, 0
      %p117 = por %p115, %p116
      %p118 = scmp.ne.s32.totalorder %s110, %s112
      %p119 = scmp.eq.s32.totalorder %s18, 1
      %p120 = por %p118, %p119
      %p121 = scmp.ne.s32.totalorder %s112, %s113
      %p122 = scmp.eq.s32.totalorder %s18, 0
      %p123 = por %p121, %p122
      %p124 = scmp.ne.s32.totalorder %s112, %s113
      %p125 = scmp.eq.s32.totalorder %s19, 1
      %p126 = por %p124, %p125
      %p128 = scmp.ne.s32.totalorder %s113, %s127
      %p129 = scmp.eq.s32.totalorder %s19, 0
      %p130 = por %p128, %p129
      %s131 = ssub.s32 %s13, %s20
      %p132 = scmp.eq.s32.totalorder %s131, 0
      %s134 = sadd.s32 %s133, 1
      %s135 = scalar_select %p132, %s133, %s134
      %p138 = pneg %p132
      %p139 = scmp.eq.s32.totalorder %s13, 1
      %p140 = por %p138, %p139
      %p141 = scmp.ne.s32.totalorder %s133, %s136
      %p142 = scmp.eq.s32.totalorder %s13, 0
      %p143 = por %p141, %p142
      %p144 = scmp.ne.s32.totalorder %s133, %s136
      %p145 = scmp.eq.s32.totalorder %s18, 1
      %p146 = por %p144, %p145
      %p147 = scmp.ne.s32.totalorder %s136, %s137
      %p148 = scmp.eq.s32.totalorder %s18, 0
      %p149 = por %p147, %p148
      %p150 = scmp.ne.s32.totalorder %s136, %s137
      %p151 = scmp.eq.s32.totalorder %s19, 1
      %p152 = por %p150, %p151
      %p154 = scmp.ne.s32.totalorder %s137, %s153
      %p155 = scmp.eq.s32.totalorder %s19, 0
      %p156 = por %p154, %p155
      %p157 = scmp.le.s32.totalorder 1, %s13
      %p158 = scmp.lt.s32.totalorder %s13, 3
      %p159 = pnand %p157, %p158
      %p160 = pneg %p159
      // Predicated region
      $region9: #{_lambda_.19} parent=5 // pred_check
        _
      $region10: #{_lambda_.19} parent=5 // pred_check_branch
        %162 = sbr.rel (%p159) target = $region12
      $region11: #{_lambda_.19} parent=5 // pred_region
        %s163 = ssub.s32 %s13, 1
        // Predicated region
        $region13: #{_lambda_.19} parent=11 // pred_check
          %p164 = pneg %p60
        $region14: #{_lambda_.19} parent=11 // pred_check_branch
          %166 = sbr.rel (%p164) target = $region16
        $region15: #{_lambda_.19} parent=11 // pred_region
          _
        $region16: #{_lambda_.19} parent=11 // pred_fallthru
          _
        // Predicated region
        $region17: #{_lambda_.19} parent=11 // pred_check
          %p167 = pneg %p81
        $region18: #{_lambda_.19} parent=11 // pred_check_branch
          %169 = sbr.rel (%p167) target = $region20
        $region19: #{_lambda_.19} parent=11 // pred_region
          _
        $region20: #{_lambda_.19} parent=11 // pred_fallthru
          _
        // Predicated region
        $region21: #{_lambda_.19} parent=11 // pred_check
          %p170 = pneg %p102
        $region22: #{_lambda_.19} parent=11 // pred_check_branch
          %172 = sbr.rel (%p170) target = $region24
        $region23: #{_lambda_.19} parent=11 // pred_region
          _
        $region24: #{_lambda_.19} parent=11 // pred_fallthru
          _
        // Predicated region
        $region25: #{_lambda_.19} parent=11 // pred_check
          %p173 = pneg %p123
        $region26: #{_lambda_.19} parent=11 // pred_check_branch
          %175 = sbr.rel (%p173) target = $region28
        $region27: #{_lambda_.19} parent=11 // pred_region
          _
        $region28: #{_lambda_.19} parent=11 // pred_fallthru
          _
      $region12: #{_lambda_.19} parent=5 // pred_fallthru
        _
      %p176 = scmp.lt.s32.totalorder %s13, 2
      // Predicated region
      $region29: #{_lambda_.19} parent=5 // pred_check
        %p177 = pneg %p176
      $region30: #{_lambda_.19} parent=5 // pred_check_branch
        %179 = sbr.rel (%p177) target = $region32
      $region31: #{_lambda_.19} parent=5 // pred_region
        // Predicated region
        $region33: #{_lambda_.19} parent=31 // pred_check
          %p180 = pneg %p33
        $region34: #{_lambda_.19} parent=31 // pred_check_branch
          %182 = sbr.rel (%p180) target = $region36
        $region35: #{_lambda_.19} parent=31 // pred_region
          %s183 = smul.u32 4, %s13
          %s184 = ssub.s32 7, %s183
          %p185 = scmp.lt.s32.totalorder %s184, 4
          %s186 = scalar_select %p185, %s184, 4
          %s187 = smul.u32 64, %s186
          %s188 = smul.u32 %s187, 16
          %p189 = scmp.lt.s32.totalorder %s183, 6
          %s190 = scalar_select %p189, %s183, 6
          %s191 = smul.addr %s190, 16
          %s192 = smul.addr %s191, 4
          %s193 = scalar_lea.vmem %s0, %s192
          %s194 = smul.u32 4, %s13
          %s195 = ssub.s32 7, %s194
          %p196 = scmp.lt.s32.totalorder %s195, 4
          %s197 = scalar_select %p196, %s195, 4
          %s198 = smul.u32 64, %s197
          %s199 = smul.u32 %s198, 16
        $region36: #{_lambda_.19} parent=31 // pred_fallthru
          _
      $region32: #{_lambda_.19} parent=5 // pred_fallthru
        _
      %p200 = scmp.le.s32.totalorder 1, %s13
      %p201 = scmp.lt.s32.totalorder %s13, 3
      %p202 = pnand %p200, %p201
      %p203 = pneg %p202
      // Predicated region
      $region37: #{_lambda_.19} parent=5 // pred_check
        _
      $region38: #{_lambda_.19} parent=5 // pred_check_branch
        %205 = sbr.rel (%p202) target = $region40
      $region39: #{_lambda_.19} parent=5 // pred_region
        %s206 = ssub.s32 %s13, 1
        %s207 = smul.u32 4, %s18
        %s208 = ssub.s32 7, %s207
        %p209 = scmp.lt.s32.totalorder %s208, 4
        %s210 = scalar_select %p209, %s208, 4
        %s211 = smul.u32 64, %s210
        %s212 = smul.u32 %s211, 16
        %p213 = scmp.lt.s32.totalorder %s207, 6
        %s214 = scalar_select %p213, %s207, 6
        %s215 = smul.addr %s214, 16
        %s216 = smul.addr %s215, 4
        %s217 = scalar_lea.vmem %s0, %s216
        %p218 = pneg %p39
        %p219 = pneg %p36
        %p220 = pneg %p60
        %p221 = pneg %p57
        %p222 = pneg %p81
        %p223 = pneg %p78
        %p224 = pneg %p102
        %p225 = pneg %p99
        %p226 = pneg %p123
        %p227 = pneg %p120
        %p228 = pneg %p149
        %p229 = pneg %p146
        %s230 = sand.u32 %s136, 1
        %s231 = sand.u32 %s136, 1
        %s232 = smul.addr %s231, 16
        %s233 = scalar_lea.vmem [#allocation3], %s232
        %s234 = smul.u32 4, %s18
        %s235 = ssub.s32 7, %s234
        %p236 = scmp.lt.s32.totalorder %s235, 4
        %s237 = scalar_select %p236, %s235, 4
        %s238 = smul.u32 64, %s237
        %s239 = smul.u32 %s238, 16
        %p240 = scmp.lt.s32.totalorder %s234, 6
        %s241 = scalar_select %p240, %s234, 6
        %s242 = smul.addr %s241, 16
        %s243 = smul.addr %s242, 4
        %s244 = scalar_lea.vmem %s0, %s243
        %s245 = smul.u32 4, %s18
        %s246 = ssub.s32 7, %s245
        %p247 = scmp.lt.s32.totalorder %s246, 4
        %s248 = scalar_select %p247, %s246, 4
        %s249 = smul.u32 64, %s248
        %s250 = smul.u32 %s249, 16
        %s251 = smul.u32 4, %s18
        %s252 = ssub.s32 7, %s251
        %p253 = scmp.lt.s32.totalorder %s252, 4
        %s254 = scalar_select %p253, %s252, 4
        %s255 = smul.u32 64, %s254
        %v257 = vld [vmem:[%s244] sm:$0xff]
        %v258 = vld [vmem:[%s244 + $0x8] sm:$0xff]
        %v259 = vld [vmem:[%s244 + $0x10] sm:$0xff]
        %v260 = vld [vmem:[%s244 + $0x18] sm:$0xff]
        %v261 = vld [vmem:[%s244 + $0x20] sm:$0xff]
        %v262 = vld [vmem:[%s244 + $0x28] sm:$0xff]
        %v263 = vld [vmem:[%s244 + $0x30] sm:$0xff]
        %v264 = vld [vmem:[%s244 + $0x38] sm:$0xff]
        %v265 = vld [vmem:[%s244 + $0x40] sm:$0xff]
        %v266 = vld [vmem:[%s244 + $0x48] sm:$0xff]
        %v267 = vld [vmem:[%s244 + $0x50] sm:$0xff]
        %v268 = vld [vmem:[%s244 + $0x58] sm:$0xff]
        %v269 = vld [vmem:[%s244 + $0x60] sm:$0xff]
        %v270 = vld [vmem:[%s244 + $0x68] sm:$0xff]
        %v271 = vld [vmem:[%s244 + $0x70] sm:$0xff]
        %v272 = vld [vmem:[%s244 + $0x78] sm:$0xff]
        %v273 = vld [vmem:[%s244 + $0x80] sm:$0xff]
        %v274 = vld [vmem:[%s244 + $0x88] sm:$0xff]
        %v275 = vld [vmem:[%s244 + $0x90] sm:$0xff]
        %v276 = vld [vmem:[%s244 + $0x98] sm:$0xff]
        %v277 = vld [vmem:[%s244 + $0xa0] sm:$0xff]
        %v278 = vld [vmem:[%s244 + $0xa8] sm:$0xff]
        %v279 = vld [vmem:[%s244 + $0xb0] sm:$0xff]
        %v280 = vld [vmem:[%s244 + $0xb8] sm:$0xff]
        %v281 = vld [vmem:[%s244 + $0xc0] sm:$0xff]
        %v282 = vld [vmem:[%s244 + $0xc8] sm:$0xff]
        %v283 = vld [vmem:[%s244 + $0xd0] sm:$0xff]
        %v284 = vld [vmem:[%s244 + $0xd8] sm:$0xff]
        %v285 = vld [vmem:[%s244 + $0xe0] sm:$0xff]
        %v286 = vld [vmem:[%s244 + $0xe8] sm:$0xff]
        %v287 = vld [vmem:[%s244 + $0xf0] sm:$0xff]
        %v288 = vld [vmem:[%s244 + $0xf8] sm:$0xff]
        %v289 = vunpack.c.l.bf16 %v257
        %v290 = vunpack.c.h.bf16 %v257
        %v291 = vunpack.c.l.bf16 %v258
        %v292 = vunpack.c.h.bf16 %v258
        %v293 = vunpack.c.l.bf16 %v259
        %v294 = vunpack.c.h.bf16 %v259
        %v295 = vunpack.c.l.bf16 %v260
        %v296 = vunpack.c.h.bf16 %v260
        %v297 = vunpack.c.l.bf16 %v261
        %v298 = vunpack.c.h.bf16 %v261
        %v299 = vunpack.c.l.bf16 %v262
        %v300 = vunpack.c.h.bf16 %v262
        %v301 = vunpack.c.l.bf16 %v263
        %v302 = vunpack.c.h.bf16 %v263
        %v303 = vunpack.c.l.bf16 %v264
        %v304 = vunpack.c.h.bf16 %v264
        %v305 = vunpack.c.l.bf16 %v265
        %v306 = vunpack.c.h.bf16 %v265
        %v307 = vunpack.c.l.bf16 %v266
        %v308 = vunpack.c.h.bf16 %v266
        %v309 = vunpack.c.l.bf16 %v267
        %v310 = vunpack.c.h.bf16 %v267
        %v311 = vunpack.c.l.bf16 %v268
        %v312 = vunpack.c.h.bf16 %v268
        %v313 = vunpack.c.l.bf16 %v269
        %v314 = vunpack.c.h.bf16 %v269
        %v315 = vunpack.c.l.bf16 %v270
        %v316 = vunpack.c.h.bf16 %v270
        %v317 = vunpack.c.l.bf16 %v271
        %v318 = vunpack.c.h.bf16 %v271
        %v319 = vunpack.c.l.bf16 %v272
        %v320 = vunpack.c.h.bf16 %v272
        %v321 = vunpack.c.l.bf16 %v273
        %v322 = vunpack.c.h.bf16 %v273
        %v323 = vunpack.c.l.bf16 %v274
        %v324 = vunpack.c.h.bf16 %v274
        %v325 = vunpack.c.l.bf16 %v275
        %v326 = vunpack.c.h.bf16 %v275
        %v327 = vunpack.c.l.bf16 %v276
        %v328 = vunpack.c.h.bf16 %v276
        %v329 = vunpack.c.l.bf16 %v277
        %v330 = vunpack.c.h.bf16 %v277
        %v331 = vunpack.c.l.bf16 %v278
        %v332 = vunpack.c.h.bf16 %v278
        %v333 = vunpack.c.l.bf16 %v279
        %v334 = vunpack.c.h.bf16 %v279
        %v335 = vunpack.c.l.bf16 %v280
        %v336 = vunpack.c.h.bf16 %v280
        %v337 = vunpack.c.l.bf16 %v281
        %v338 = vunpack.c.h.bf16 %v281
        %v339 = vunpack.c.l.bf16 %v282
        %v340 = vunpack.c.h.bf16 %v282
        %v341 = vunpack.c.l.bf16 %v283
        %v342 = vunpack.c.h.bf16 %v283
        %v343 = vunpack.c.l.bf16 %v284
        %v344 = vunpack.c.h.bf16 %v284
        %v345 = vunpack.c.l.bf16 %v285
        %v346 = vunpack.c.h.bf16 %v285
        %v347 = vunpack.c.l.bf16 %v286
        %v348 = vunpack.c.h.bf16 %v286
        %v349 = vunpack.c.l.bf16 %v287
        %v350 = vunpack.c.h.bf16 %v287
        %v351 = vunpack.c.l.bf16 %v288
        %v352 = vunpack.c.h.bf16 %v288
        %v353 = vld [vmem:[%s4] sm:$0xff]
        %v354 = vld [vmem:[%s4 + $0x8] sm:$0xff]
        %v357 = vlaneseq
        %v358 = vshrl.u32 %v357, 7
        %v359 = vsub.s32 0, %v358
        %v360 = vrot.slane %v353, %v359
        %v361 = vlaneseq
        %v362 = vshrl.u32 %v361, 7
        %v363 = vsub.s32 1, %v362
        %v364 = vrot.slane %v353, %v363
        %v365 = vlaneseq
        %v366 = vshrl.u32 %v365, 7
        %v367 = vsub.s32 2, %v366
        %v368 = vrot.slane %v353, %v367
        %v369 = vlaneseq
        %v370 = vshrl.u32 %v369, 7
        %v371 = vsub.s32 3, %v370
        %v372 = vrot.slane %v353, %v371
        %v373 = vlaneseq
        %v374 = vshrl.u32 %v373, 7
        %v375 = vsub.s32 4, %v374
        %v376 = vrot.slane %v353, %v375
        %v377 = vlaneseq
        %v378 = vshrl.u32 %v377, 7
        %v379 = vsub.s32 5, %v378
        %v380 = vrot.slane %v353, %v379
        %v381 = vlaneseq
        %v382 = vshrl.u32 %v381, 7
        %v383 = vsub.s32 6, %v382
        %v384 = vrot.slane %v353, %v383
        %v385 = vlaneseq
        %v386 = vshrl.u32 %v385, 7
        %v387 = vsub.s32 7, %v386
        %v388 = vrot.slane %v353, %v387
        %v389 = vlaneseq
        %v390 = vshrl.u32 %v389, 7
        %v391 = vsub.s32 0, %v390
        %v392 = vrot.slane %v354, %v391
        %v393 = vlaneseq
        %v394 = vshrl.u32 %v393, 7
        %v395 = vsub.s32 1, %v394
        %v396 = vrot.slane %v354, %v395
        %v397 = vlaneseq
        %v398 = vshrl.u32 %v397, 7
        %v399 = vsub.s32 2, %v398
        %v400 = vrot.slane %v354, %v399
        %v401 = vlaneseq
        %v402 = vshrl.u32 %v401, 7
        %v403 = vsub.s32 3, %v402
        %v404 = vrot.slane %v354, %v403
        %v405 = vlaneseq
        %v406 = vshrl.u32 %v405, 7
        %v407 = vsub.s32 4, %v406
        %v408 = vrot.slane %v354, %v407
        %v409 = vlaneseq
        %v410 = vshrl.u32 %v409, 7
        %v411 = vsub.s32 5, %v410
        %v412 = vrot.slane %v354, %v411
        %v413 = vlaneseq
        %v414 = vshrl.u32 %v413, 7
        %v415 = vsub.s32 6, %v414
        %v416 = vrot.slane %v354, %v415
        %v417 = vlaneseq
        %v418 = vshrl.u32 %v417, 7
        %v419 = vsub.s32 7, %v418
        %v420 = vrot.slane %v354, %v419
        %v437 = vsub.f32 %v289, %v360
        %v438 = vsub.f32 %v290, %v364
        %v439 = vsub.f32 %v291, %v368
        %v440 = vsub.f32 %v292, %v372
        %v441 = vsub.f32 %v293, %v376
        %v442 = vsub.f32 %v294, %v380
        %v443 = vsub.f32 %v295, %v384
        %v444 = vsub.f32 %v296, %v388
        %v445 = vsub.f32 %v297, %v392
        %v446 = vsub.f32 %v298, %v396
        %v447 = vsub.f32 %v299, %v400
        %v448 = vsub.f32 %v300, %v404
        %v449 = vsub.f32 %v301, %v408
        %v450 = vsub.f32 %v302, %v412
        %v451 = vsub.f32 %v303, %v416
        %v452 = vsub.f32 %v304, %v420
        %v453 = vsub.f32 %v305, %v360
        %v454 = vsub.f32 %v306, %v364
        %v455 = vsub.f32 %v307, %v368
        %v456 = vsub.f32 %v308, %v372
        %v457 = vsub.f32 %v309, %v376
        %v458 = vsub.f32 %v310, %v380
        %v459 = vsub.f32 %v311, %v384
        %v460 = vsub.f32 %v312, %v388
        %v461 = vsub.f32 %v313, %v392
        %v462 = vsub.f32 %v314, %v396
        %v463 = vsub.f32 %v315, %v400
        %v464 = vsub.f32 %v316, %v404
        %v465 = vsub.f32 %v317, %v408
        %v466 = vsub.f32 %v318, %v412
        %v467 = vsub.f32 %v319, %v416
        %v468 = vsub.f32 %v320, %v420
        %v469 = vsub.f32 %v321, %v360
        %v470 = vsub.f32 %v322, %v364
        %v471 = vsub.f32 %v323, %v368
        %v472 = vsub.f32 %v324, %v372
        %v473 = vsub.f32 %v325, %v376
        %v474 = vsub.f32 %v326, %v380
        %v475 = vsub.f32 %v327, %v384
        %v476 = vsub.f32 %v328, %v388
        %v477 = vsub.f32 %v329, %v392
        %v478 = vsub.f32 %v330, %v396
        %v479 = vsub.f32 %v331, %v400
        %v480 = vsub.f32 %v332, %v404
        %v481 = vsub.f32 %v333, %v408
        %v482 = vsub.f32 %v334, %v412
        %v483 = vsub.f32 %v335, %v416
        %v484 = vsub.f32 %v336, %v420
        %v485 = vsub.f32 %v337, %v360
        %v486 = vsub.f32 %v338, %v364
        %v487 = vsub.f32 %v339, %v368
        %v488 = vsub.f32 %v340, %v372
        %v489 = vsub.f32 %v341, %v376
        %v490 = vsub.f32 %v342, %v380
        %v491 = vsub.f32 %v343, %v384
        %v492 = vsub.f32 %v344, %v388
        %v493 = vsub.f32 %v345, %v392
        %v494 = vsub.f32 %v346, %v396
        %v495 = vsub.f32 %v347, %v400
        %v496 = vsub.f32 %v348, %v404
        %v497 = vsub.f32 %v349, %v408
        %v498 = vsub.f32 %v350, %v412
        %v499 = vsub.f32 %v351, %v416
        %v500 = vsub.f32 %v352, %v420
        %v501 = vld [vmem:[%s3] sm:$0xff]
        %v502 = vld [vmem:[%s3 + $0x8] sm:$0xff]
        %v505 = vlaneseq
        %v506 = vshrl.u32 %v505, 7
        %v507 = vsub.s32 0, %v506
        %v508 = vrot.slane %v501, %v507
        %v509 = vlaneseq
        %v510 = vshrl.u32 %v509, 7
        %v511 = vsub.s32 1, %v510
        %v512 = vrot.slane %v501, %v511
        %v513 = vlaneseq
        %v514 = vshrl.u32 %v513, 7
        %v515 = vsub.s32 2, %v514
        %v516 = vrot.slane %v501, %v515
        %v517 = vlaneseq
        %v518 = vshrl.u32 %v517, 7
        %v519 = vsub.s32 3, %v518
        %v520 = vrot.slane %v501, %v519
        %v521 = vlaneseq
        %v522 = vshrl.u32 %v521, 7
        %v523 = vsub.s32 4, %v522
        %v524 = vrot.slane %v501, %v523
        %v525 = vlaneseq
        %v526 = vshrl.u32 %v525, 7
        %v527 = vsub.s32 5, %v526
        %v528 = vrot.slane %v501, %v527
        %v529 = vlaneseq
        %v530 = vshrl.u32 %v529, 7
        %v531 = vsub.s32 6, %v530
        %v532 = vrot.slane %v501, %v531
        %v533 = vlaneseq
        %v534 = vshrl.u32 %v533, 7
        %v535 = vsub.s32 7, %v534
        %v536 = vrot.slane %v501, %v535
        %v537 = vlaneseq
        %v538 = vshrl.u32 %v537, 7
        %v539 = vsub.s32 0, %v538
        %v540 = vrot.slane %v502, %v539
        %v541 = vlaneseq
        %v542 = vshrl.u32 %v541, 7
        %v543 = vsub.s32 1, %v542
        %v544 = vrot.slane %v502, %v543
        %v545 = vlaneseq
        %v546 = vshrl.u32 %v545, 7
        %v547 = vsub.s32 2, %v546
        %v548 = vrot.slane %v502, %v547
        %v549 = vlaneseq
        %v550 = vshrl.u32 %v549, 7
        %v551 = vsub.s32 3, %v550
        %v552 = vrot.slane %v502, %v551
        %v553 = vlaneseq
        %v554 = vshrl.u32 %v553, 7
        %v555 = vsub.s32 4, %v554
        %v556 = vrot.slane %v502, %v555
        %v557 = vlaneseq
        %v558 = vshrl.u32 %v557, 7
        %v559 = vsub.s32 5, %v558
        %v560 = vrot.slane %v502, %v559
        %v561 = vlaneseq
        %v562 = vshrl.u32 %v561, 7
        %v563 = vsub.s32 6, %v562
        %v564 = vrot.slane %v502, %v563
        %v565 = vlaneseq
        %v566 = vshrl.u32 %v565, 7
        %v567 = vsub.s32 7, %v566
        %v568 = vrot.slane %v502, %v567
        %v585 = vmul.f32 %v437, %v508
        %v586 = vmul.f32 %v438, %v512
        %v587 = vmul.f32 %v439, %v516
        %v588 = vmul.f32 %v440, %v520
        %v589 = vmul.f32 %v441, %v524
        %v590 = vmul.f32 %v442, %v528
        %v591 = vmul.f32 %v443, %v532
        %v592 = vmul.f32 %v444, %v536
        %v593 = vmul.f32 %v445, %v540
        %v594 = vmul.f32 %v446, %v544
        %v595 = vmul.f32 %v447, %v548
        %v596 = vmul.f32 %v448, %v552
        %v597 = vmul.f32 %v449, %v556
        %v598 = vmul.f32 %v450, %v560
        %v599 = vmul.f32 %v451, %v564
        %v600 = vmul.f32 %v452, %v568
        %v601 = vmul.f32 %v453, %v508
        %v602 = vmul.f32 %v454, %v512
        %v603 = vmul.f32 %v455, %v516
        %v604 = vmul.f32 %v456, %v520
        %v605 = vmul.f32 %v457, %v524
        %v606 = vmul.f32 %v458, %v528
        %v607 = vmul.f32 %v459, %v532
        %v608 = vmul.f32 %v460, %v536
        %v609 = vmul.f32 %v461, %v540
        %v610 = vmul.f32 %v462, %v544
        %v611 = vmul.f32 %v463, %v548
        %v612 = vmul.f32 %v464, %v552
        %v613 = vmul.f32 %v465, %v556
        %v614 = vmul.f32 %v466, %v560
        %v615 = vmul.f32 %v467, %v564
        %v616 = vmul.f32 %v468, %v568
        %v617 = vmul.f32 %v469, %v508
        %v618 = vmul.f32 %v470, %v512
        %v619 = vmul.f32 %v471, %v516
        %v620 = vmul.f32 %v472, %v520
        %v621 = vmul.f32 %v473, %v524
        %v622 = vmul.f32 %v474, %v528
        %v623 = vmul.f32 %v475, %v532
        %v624 = vmul.f32 %v476, %v536
        %v625 = vmul.f32 %v477, %v540
        %v626 = vmul.f32 %v478, %v544
        %v627 = vmul.f32 %v479, %v548
        %v628 = vmul.f32 %v480, %v552
        %v629 = vmul.f32 %v481, %v556
        %v630 = vmul.f32 %v482, %v560
        %v631 = vmul.f32 %v483, %v564
        %v632 = vmul.f32 %v484, %v568
        %v633 = vmul.f32 %v485, %v508
        %v634 = vmul.f32 %v486, %v512
        %v635 = vmul.f32 %v487, %v516
        %v636 = vmul.f32 %v488, %v520
        %v637 = vmul.f32 %v489, %v524
        %v638 = vmul.f32 %v490, %v528
        %v639 = vmul.f32 %v491, %v532
        %v640 = vmul.f32 %v492, %v536
        %v641 = vmul.f32 %v493, %v540
        %v642 = vmul.f32 %v494, %v544
        %v643 = vmul.f32 %v495, %v548
        %v644 = vmul.f32 %v496, %v552
        %v645 = vmul.f32 %v497, %v556
        %v646 = vmul.f32 %v498, %v560
        %v647 = vmul.f32 %v499, %v564
        %v648 = vmul.f32 %v500, %v568
        %vm649 = vcmp.ge.f32.partialorder %v585, 0.0
        %vm650 = vcmp.ge.f32.partialorder %v586, 0.0
        %vm651 = vcmp.ge.f32.partialorder %v587, 0.0
        %vm652 = vcmp.ge.f32.partialorder %v588, 0.0
        %vm653 = vcmp.ge.f32.partialorder %v589, 0.0
        %vm654 = vcmp.ge.f32.partialorder %v590, 0.0
        %vm655 = vcmp.ge.f32.partialorder %v591, 0.0
        %vm656 = vcmp.ge.f32.partialorder %v592, 0.0
        %vm657 = vcmp.ge.f32.partialorder %v593, 0.0
        %vm658 = vcmp.ge.f32.partialorder %v594, 0.0
        %vm659 = vcmp.ge.f32.partialorder %v595, 0.0
        %vm660 = vcmp.ge.f32.partialorder %v596, 0.0
        %vm661 = vcmp.ge.f32.partialorder %v597, 0.0
        %vm662 = vcmp.ge.f32.partialorder %v598, 0.0
        %vm663 = vcmp.ge.f32.partialorder %v599, 0.0
        %vm664 = vcmp.ge.f32.partialorder %v600, 0.0
        %vm665 = vcmp.ge.f32.partialorder %v601, 0.0
        %vm666 = vcmp.ge.f32.partialorder %v602, 0.0
        %vm667 = vcmp.ge.f32.partialorder %v603, 0.0
        %vm668 = vcmp.ge.f32.partialorder %v604, 0.0
        %vm669 = vcmp.ge.f32.partialorder %v605, 0.0
        %vm670 = vcmp.ge.f32.partialorder %v606, 0.0
        %vm671 = vcmp.ge.f32.partialorder %v607, 0.0
        %vm672 = vcmp.ge.f32.partialorder %v608, 0.0
        %vm673 = vcmp.ge.f32.partialorder %v609, 0.0
        %vm674 = vcmp.ge.f32.partialorder %v610, 0.0
        %vm675 = vcmp.ge.f32.partialorder %v611, 0.0
        %vm676 = vcmp.ge.f32.partialorder %v612, 0.0
        %vm677 = vcmp.ge.f32.partialorder %v613, 0.0
        %vm678 = vcmp.ge.f32.partialorder %v614, 0.0
        %vm679 = vcmp.ge.f32.partialorder %v615, 0.0
        %vm680 = vcmp.ge.f32.partialorder %v616, 0.0
        %vm681 = vcmp.ge.f32.partialorder %v617, 0.0
        %vm682 = vcmp.ge.f32.partialorder %v618, 0.0
        %vm683 = vcmp.ge.f32.partialorder %v619, 0.0
        %vm684 = vcmp.ge.f32.partialorder %v620, 0.0
        %vm685 = vcmp.ge.f32.partialorder %v621, 0.0
        %vm686 = vcmp.ge.f32.partialorder %v622, 0.0
        %vm687 = vcmp.ge.f32.partialorder %v623, 0.0
        %vm688 = vcmp.ge.f32.partialorder %v624, 0.0
        %vm689 = vcmp.ge.f32.partialorder %v625, 0.0
        %vm690 = vcmp.ge.f32.partialorder %v626, 0.0
        %vm691 = vcmp.ge.f32.partialorder %v627, 0.0
        %vm692 = vcmp.ge.f32.partialorder %v628, 0.0
        %vm693 = vcmp.ge.f32.partialorder %v629, 0.0
        %vm694 = vcmp.ge.f32.partialorder %v630, 0.0
        %vm695 = vcmp.ge.f32.partialorder %v631, 0.0
        %vm696 = vcmp.ge.f32.partialorder %v632, 0.0
        %vm697 = vcmp.ge.f32.partialorder %v633, 0.0
        %vm698 = vcmp.ge.f32.partialorder %v634, 0.0
        %vm699 = vcmp.ge.f32.partialorder %v635, 0.0
        %vm700 = vcmp.ge.f32.partialorder %v636, 0.0
        %vm701 = vcmp.ge.f32.partialorder %v637, 0.0
        %vm702 = vcmp.ge.f32.partialorder %v638, 0.0
        %vm703 = vcmp.ge.f32.partialorder %v639, 0.0
        %vm704 = vcmp.ge.f32.partialorder %v640, 0.0
        %vm705 = vcmp.ge.f32.partialorder %v641, 0.0
        %vm706 = vcmp.ge.f32.partialorder %v642, 0.0
        %vm707 = vcmp.ge.f32.partialorder %v643, 0.0
        %vm708 = vcmp.ge.f32.partialorder %v644, 0.0
        %vm709 = vcmp.ge.f32.partialorder %v645, 0.0
        %vm710 = vcmp.ge.f32.partialorder %v646, 0.0
        %vm711 = vcmp.ge.f32.partialorder %v647, 0.0
        %vm712 = vcmp.ge.f32.partialorder %v648, 0.0
        %v713 = vmul.f32 %v585, 0.2
        %v714 = vmul.f32 %v586, 0.2
        %v715 = vmul.f32 %v587, 0.2
        %v716 = vmul.f32 %v588, 0.2
        %v717 = vmul.f32 %v589, 0.2
        %v718 = vmul.f32 %v590, 0.2
        %v719 = vmul.f32 %v591, 0.2
        %v720 = vmul.f32 %v592, 0.2
        %v721 = vmul.f32 %v593, 0.2
        %v722 = vmul.f32 %v594, 0.2
        %v723 = vmul.f32 %v595, 0.2
        %v724 = vmul.f32 %v596, 0.2
        %v725 = vmul.f32 %v597, 0.2
        %v726 = vmul.f32 %v598, 0.2
        %v727 = vmul.f32 %v599, 0.2
        %v728 = vmul.f32 %v600, 0.2
        %v729 = vmul.f32 %v601, 0.2
        %v730 = vmul.f32 %v602, 0.2
        %v731 = vmul.f32 %v603, 0.2
        %v732 = vmul.f32 %v604, 0.2
        %v733 = vmul.f32 %v605, 0.2
        %v734 = vmul.f32 %v606, 0.2
        %v735 = vmul.f32 %v607, 0.2
        %v736 = vmul.f32 %v608, 0.2
        %v737 = vmul.f32 %v609, 0.2
        %v738 = vmul.f32 %v610, 0.2
        %v739 = vmul.f32 %v611, 0.2
        %v740 = vmul.f32 %v612, 0.2
        %v741 = vmul.f32 %v613, 0.2
        %v742 = vmul.f32 %v614, 0.2
        %v743 = vmul.f32 %v615, 0.2
        %v744 = vmul.f32 %v616, 0.2
        %v745 = vmul.f32 %v617, 0.2
        %v746 = vmul.f32 %v618, 0.2
        %v747 = vmul.f32 %v619, 0.2
        %v748 = vmul.f32 %v620, 0.2
        %v749 = vmul.f32 %v621, 0.2
        %v750 = vmul.f32 %v622, 0.2
        %v751 = vmul.f32 %v623, 0.2
        %v752 = vmul.f32 %v624, 0.2
        %v753 = vmul.f32 %v625, 0.2
        %v754 = vmul.f32 %v626, 0.2
        %v755 = vmul.f32 %v627, 0.2
        %v756 = vmul.f32 %v628, 0.2
        %v757 = vmul.f32 %v629, 0.2
        %v758 = vmul.f32 %v630, 0.2
        %v759 = vmul.f32 %v631, 0.2
        %v760 = vmul.f32 %v632, 0.2
        %v761 = vmul.f32 %v633, 0.2
        %v762 = vmul.f32 %v634, 0.2
        %v763 = vmul.f32 %v635, 0.2
        %v764 = vmul.f32 %v636, 0.2
        %v765 = vmul.f32 %v637, 0.2
        %v766 = vmul.f32 %v638, 0.2
        %v767 = vmul.f32 %v639, 0.2
        %v768 = vmul.f32 %v640, 0.2
        %v769 = vmul.f32 %v641, 0.2
        %v770 = vmul.f32 %v642, 0.2
        %v771 = vmul.f32 %v643, 0.2
        %v772 = vmul.f32 %v644, 0.2
        %v773 = vmul.f32 %v645, 0.2
        %v774 = vmul.f32 %v646, 0.2
        %v775 = vmul.f32 %v647, 0.2
        %v776 = vmul.f32 %v648, 0.2
        %v777 = vsel %vm649, %v585, %v713
        %v778 = vsel %vm650, %v586, %v714
        %v779 = vsel %vm651, %v587, %v715
        %v780 = vsel %vm652, %v588, %v716
        %v781 = vsel %vm653, %v589, %v717
        %v782 = vsel %vm654, %v590, %v718
        %v783 = vsel %vm655, %v591, %v719
        %v784 = vsel %vm656, %v592, %v720
        %v785 = vsel %vm657, %v593, %v721
        %v786 = vsel %vm658, %v594, %v722
        %v787 = vsel %vm659, %v595, %v723
        %v788 = vsel %vm660, %v596, %v724
        %v789 = vsel %vm661, %v597, %v725
        %v790 = vsel %vm662, %v598, %v726
        %v791 = vsel %vm663, %v599, %v727
        %v792 = vsel %vm664, %v600, %v728
        %v793 = vsel %vm665, %v601, %v729
        %v794 = vsel %vm666, %v602, %v730
        %v795 = vsel %vm667, %v603, %v731
        %v796 = vsel %vm668, %v604, %v732
        %v797 = vsel %vm669, %v605, %v733
        %v798 = vsel %vm670, %v606, %v734
        %v799 = vsel %vm671, %v607, %v735
        %v800 = vsel %vm672, %v608, %v736
        %v801 = vsel %vm673, %v609, %v737
        %v802 = vsel %vm674, %v610, %v738
        %v803 = vsel %vm675, %v611, %v739
        %v804 = vsel %vm676, %v612, %v740
        %v805 = vsel %vm677, %v613, %v741
        %v806 = vsel %vm678, %v614, %v742
        %v807 = vsel %vm679, %v615, %v743
        %v808 = vsel %vm680, %v616, %v744
        %v809 = vsel %vm681, %v617, %v745
        %v810 = vsel %vm682, %v618, %v746
        %v811 = vsel %vm683, %v619, %v747
        %v812 = vsel %vm684, %v620, %v748
        %v813 = vsel %vm685, %v621, %v749
        %v814 = vsel %vm686, %v622, %v750
        %v815 = vsel %vm687, %v623, %v751
        %v816 = vsel %vm688, %v624, %v752
        %v817 = vsel %vm689, %v625, %v753
        %v818 = vsel %vm690, %v626, %v754
        %v819 = vsel %vm691, %v627, %v755
        %v820 = vsel %vm692, %v628, %v756
        %v821 = vsel %vm693, %v629, %v757
        %v822 = vsel %vm694, %v630, %v758
        %v823 = vsel %vm695, %v631, %v759
        %v824 = vsel %vm696, %v632, %v760
        %v825 = vsel %vm697, %v633, %v761
        %v826 = vsel %vm698, %v634, %v762
        %v827 = vsel %vm699, %v635, %v763
        %v828 = vsel %vm700, %v636, %v764
        %v829 = vsel %vm701, %v637, %v765
        %v830 = vsel %vm702, %v638, %v766
        %v831 = vsel %vm703, %v639, %v767
        %v832 = vsel %vm704, %v640, %v768
        %v833 = vsel %vm705, %v641, %v769
        %v834 = vsel %vm706, %v642, %v770
        %v835 = vsel %vm707, %v643, %v771
        %v836 = vsel %vm708, %v644, %v772
        %v837 = vsel %vm709, %v645, %v773
        %v838 = vsel %vm710, %v646, %v774
        %v839 = vsel %vm711, %v647, %v775
        %v840 = vsel %vm712, %v648, %v776
        %v841 = vpack.c.bf16 %v793, %v777
        %v842 = vpack.c.bf16 %v794, %v778
        %v843 = vpack.c.bf16 %v795, %v779
        %v844 = vpack.c.bf16 %v796, %v780
        %v845 = vpack.c.bf16 %v797, %v781
        %v846 = vpack.c.bf16 %v798, %v782
        %v847 = vpack.c.bf16 %v799, %v783
        %v848 = vpack.c.bf16 %v800, %v784
        %v849 = vpack.c.bf16 %v801, %v785
        %v850 = vpack.c.bf16 %v802, %v786
        %v851 = vpack.c.bf16 %v803, %v787
        %v852 = vpack.c.bf16 %v804, %v788
        %v853 = vpack.c.bf16 %v805, %v789
        %v854 = vpack.c.bf16 %v806, %v790
        %v855 = vpack.c.bf16 %v807, %v791
        %v856 = vpack.c.bf16 %v808, %v792
        %v857 = vpack.c.bf16 %v825, %v809
        %v858 = vpack.c.bf16 %v826, %v810
        %v859 = vpack.c.bf16 %v827, %v811
        %v860 = vpack.c.bf16 %v828, %v812
        %v861 = vpack.c.bf16 %v829, %v813
        %v862 = vpack.c.bf16 %v830, %v814
        %v863 = vpack.c.bf16 %v831, %v815
        %v864 = vpack.c.bf16 %v832, %v816
        %v865 = vpack.c.bf16 %v833, %v817
        %v866 = vpack.c.bf16 %v834, %v818
        %v867 = vpack.c.bf16 %v835, %v819
        %v868 = vpack.c.bf16 %v836, %v820
        %v869 = vpack.c.bf16 %v837, %v821
        %v870 = vpack.c.bf16 %v838, %v822
        %v871 = vpack.c.bf16 %v839, %v823
        %v872 = vpack.c.bf16 %v840, %v824
        %v873 = vld [vmem:[%s1] sm:$0xf]
        %v874 = vld [vmem:[%s1 + $0x4] sm:$0xf]
        %v875 = vld [vmem:[%s1 + $0x8] sm:$0xf]
        %v876 = vld [vmem:[%s1 + $0xc] sm:$0xf]
        %v877 = vld [vmem:[%s1 + $0x10] sm:$0xf]
        %v878 = vld [vmem:[%s1 + $0x14] sm:$0xf]
        %v879 = vld [vmem:[%s1 + $0x18] sm:$0xf]
        %v880 = vld [vmem:[%s1 + $0x1c] sm:$0xf]
        %v881 = vld [vmem:[%s1 + $0x20] sm:$0xf]
        %v882 = vld [vmem:[%s1 + $0x24] sm:$0xf]
        %v883 = vld [vmem:[%s1 + $0x28] sm:$0xf]
        %v884 = vld [vmem:[%s1 + $0x2c] sm:$0xf]
        %v885 = vld [vmem:[%s1 + $0x30] sm:$0xf]
        %v886 = vld [vmem:[%s1 + $0x34] sm:$0xf]
        %v887 = vld [vmem:[%s1 + $0x38] sm:$0xf]
        %v888 = vld [vmem:[%s1 + $0x3c] sm:$0xf]
        %v889 = vld [vmem:[%s1 + $0x40] sm:$0xf]
        %v890 = vld [vmem:[%s1 + $0x44] sm:$0xf]
        %v891 = vld [vmem:[%s1 + $0x48] sm:$0xf]
        %v892 = vld [vmem:[%s1 + $0x4c] sm:$0xf]
        %v893 = vld [vmem:[%s1 + $0x50] sm:$0xf]
        %v894 = vld [vmem:[%s1 + $0x54] sm:$0xf]
        %v895 = vld [vmem:[%s1 + $0x58] sm:$0xf]
        %v896 = vld [vmem:[%s1 + $0x5c] sm:$0xf]
        %v897 = vld [vmem:[%s1 + $0x60] sm:$0xf]
        %v898 = vld [vmem:[%s1 + $0x64] sm:$0xf]
        %v899 = vld [vmem:[%s1 + $0x68] sm:$0xf]
        %v900 = vld [vmem:[%s1 + $0x6c] sm:$0xf]
        %v901 = vld [vmem:[%s1 + $0x70] sm:$0xf]
        %v902 = vld [vmem:[%s1 + $0x74] sm:$0xf]
        %v903 = vld [vmem:[%s1 + $0x78] sm:$0xf]
        %v904 = vld [vmem:[%s1 + $0x7c] sm:$0xf]
        %v905 = vld [vmem:[%s1 + $0x80] sm:$0xf]
        %v906 = vld [vmem:[%s1 + $0x84] sm:$0xf]
        %v907 = vld [vmem:[%s1 + $0x88] sm:$0xf]
        %v908 = vld [vmem:[%s1 + $0x8c] sm:$0xf]
        %v909 = vld [vmem:[%s1 + $0x90] sm:$0xf]
        %v910 = vld [vmem:[%s1 + $0x94] sm:$0xf]
        %v911 = vld [vmem:[%s1 + $0x98] sm:$0xf]
        %v912 = vld [vmem:[%s1 + $0x9c] sm:$0xf]
        %v913 = vld [vmem:[%s1 + $0xa0] sm:$0xf]
        %v914 = vld [vmem:[%s1 + $0xa4] sm:$0xf]
        %v915 = vld [vmem:[%s1 + $0xa8] sm:$0xf]
        %v916 = vld [vmem:[%s1 + $0xac] sm:$0xf]
        %v917 = vld [vmem:[%s1 + $0xb0] sm:$0xf]
        %v918 = vld [vmem:[%s1 + $0xb4] sm:$0xf]
        %v919 = vld [vmem:[%s1 + $0xb8] sm:$0xf]
        %v920 = vld [vmem:[%s1 + $0xbc] sm:$0xf]
        %v921 = vld [vmem:[%s1 + $0xc0] sm:$0xf]
        %v922 = vld [vmem:[%s1 + $0xc4] sm:$0xf]
        %v923 = vld [vmem:[%s1 + $0xc8] sm:$0xf]
        %v924 = vld [vmem:[%s1 + $0xcc] sm:$0xf]
        %v925 = vld [vmem:[%s1 + $0xd0] sm:$0xf]
        %v926 = vld [vmem:[%s1 + $0xd4] sm:$0xf]
        %v927 = vld [vmem:[%s1 + $0xd8] sm:$0xf]
        %v928 = vld [vmem:[%s1 + $0xdc] sm:$0xf]
        %v929 = vld [vmem:[%s1 + $0xe0] sm:$0xf]
        %v930 = vld [vmem:[%s1 + $0xe4] sm:$0xf]
        %v931 = vld [vmem:[%s1 + $0xe8] sm:$0xf]
        %v932 = vld [vmem:[%s1 + $0xec] sm:$0xf]
        %v933 = vld [vmem:[%s1 + $0xf0] sm:$0xf]
        %v934 = vld [vmem:[%s1 + $0xf4] sm:$0xf]
        %v935 = vld [vmem:[%s1 + $0xf8] sm:$0xf]
        %v936 = vld [vmem:[%s1 + $0xfc] sm:$0xf]
        %v937 = vld [vmem:[%s1 + $0x100] sm:$0xf]
        %v938 = vld [vmem:[%s1 + $0x104] sm:$0xf]
        %v939 = vld [vmem:[%s1 + $0x108] sm:$0xf]
        %v940 = vld [vmem:[%s1 + $0x10c] sm:$0xf]
        %v941 = vld [vmem:[%s1 + $0x110] sm:$0xf]
        %v942 = vld [vmem:[%s1 + $0x114] sm:$0xf]
        %v943 = vld [vmem:[%s1 + $0x118] sm:$0xf]
        %v944 = vld [vmem:[%s1 + $0x11c] sm:$0xf]
        %v945 = vld [vmem:[%s1 + $0x120] sm:$0xf]
        %v946 = vld [vmem:[%s1 + $0x124] sm:$0xf]
        %v947 = vld [vmem:[%s1 + $0x128] sm:$0xf]
        %v948 = vld [vmem:[%s1 + $0x12c] sm:$0xf]
        %v949 = vld [vmem:[%s1 + $0x130] sm:$0xf]
        %v950 = vld [vmem:[%s1 + $0x134] sm:$0xf]
        %v951 = vld [vmem:[%s1 + $0x138] sm:$0xf]
        %v952 = vld [vmem:[%s1 + $0x13c] sm:$0xf]
        %v953 = vld [vmem:[%s1 + $0x140] sm:$0xf]
        %v954 = vld [vmem:[%s1 + $0x144] sm:$0xf]
        %v955 = vld [vmem:[%s1 + $0x148] sm:$0xf]
        %v956 = vld [vmem:[%s1 + $0x14c] sm:$0xf]
        %v957 = vld [vmem:[%s1 + $0x150] sm:$0xf]
        %v958 = vld [vmem:[%s1 + $0x154] sm:$0xf]
        %v959 = vld [vmem:[%s1 + $0x158] sm:$0xf]
        %v960 = vld [vmem:[%s1 + $0x15c] sm:$0xf]
        %v961 = vld [vmem:[%s1 + $0x160] sm:$0xf]
        %v962 = vld [vmem:[%s1 + $0x164] sm:$0xf]
        %v963 = vld [vmem:[%s1 + $0x168] sm:$0xf]
        %v964 = vld [vmem:[%s1 + $0x16c] sm:$0xf]
        %v965 = vld [vmem:[%s1 + $0x170] sm:$0xf]
        %v966 = vld [vmem:[%s1 + $0x174] sm:$0xf]
        %v967 = vld [vmem:[%s1 + $0x178] sm:$0xf]
        %v968 = vld [vmem:[%s1 + $0x17c] sm:$0xf]
        %v969 = vld [vmem:[%s1 + $0x180] sm:$0xf]
        %v970 = vld [vmem:[%s1 + $0x184] sm:$0xf]
        %v971 = vld [vmem:[%s1 + $0x188] sm:$0xf]
        %v972 = vld [vmem:[%s1 + $0x18c] sm:$0xf]
        %v973 = vld [vmem:[%s1 + $0x190] sm:$0xf]
        %v974 = vld [vmem:[%s1 + $0x194] sm:$0xf]
        %v975 = vld [vmem:[%s1 + $0x198] sm:$0xf]
        %v976 = vld [vmem:[%s1 + $0x19c] sm:$0xf]
        %v977 = vld [vmem:[%s1 + $0x1a0] sm:$0xf]
        %v978 = vld [vmem:[%s1 + $0x1a4] sm:$0xf]
        %v979 = vld [vmem:[%s1 + $0x1a8] sm:$0xf]
        %v980 = vld [vmem:[%s1 + $0x1ac] sm:$0xf]
        %v981 = vld [vmem:[%s1 + $0x1b0] sm:$0xf]
        %v982 = vld [vmem:[%s1 + $0x1b4] sm:$0xf]
        %v983 = vld [vmem:[%s1 + $0x1b8] sm:$0xf]
        %v984 = vld [vmem:[%s1 + $0x1bc] sm:$0xf]
        %v985 = vld [vmem:[%s1 + $0x1c0] sm:$0xf]
        %v986 = vld [vmem:[%s1 + $0x1c4] sm:$0xf]
        %v987 = vld [vmem:[%s1 + $0x1c8] sm:$0xf]
        %v988 = vld [vmem:[%s1 + $0x1cc] sm:$0xf]
        %v989 = vld [vmem:[%s1 + $0x1d0] sm:$0xf]
        %v990 = vld [vmem:[%s1 + $0x1d4] sm:$0xf]
        %v991 = vld [vmem:[%s1 + $0x1d8] sm:$0xf]
        %v992 = vld [vmem:[%s1 + $0x1dc] sm:$0xf]
        %v993 = vld [vmem:[%s1 + $0x1e0] sm:$0xf]
        %v994 = vld [vmem:[%s1 + $0x1e4] sm:$0xf]
        %v995 = vld [vmem:[%s1 + $0x1e8] sm:$0xf]
        %v996 = vld [vmem:[%s1 + $0x1ec] sm:$0xf]
        %v997 = vld [vmem:[%s1 + $0x1f0] sm:$0xf]
        %v998 = vld [vmem:[%s1 + $0x1f4] sm:$0xf]
        %v999 = vld [vmem:[%s1 + $0x1f8] sm:$0xf]
        %v1000 = vld [vmem:[%s1 + $0x1fc] sm:$0xf]
        %v1001 = vld [vmem:[%s1 + $0x200] sm:$0xf]
        %v1002 = vld [vmem:[%s1 + $0x204] sm:$0xf]
        %v1003 = vld [vmem:[%s1 + $0x208] sm:$0xf]
        %v1004 = vld [vmem:[%s1 + $0x20c] sm:$0xf]
        %v1005 = vld [vmem:[%s1 + $0x210] sm:$0xf]
        %v1006 = vld [vmem:[%s1 + $0x214] sm:$0xf]
        %v1007 = vld [vmem:[%s1 + $0x218] sm:$0xf]
        %v1008 = vld [vmem:[%s1 + $0x21c] sm:$0xf]
        %v1009 = vld [vmem:[%s1 + $0x220] sm:$0xf]
        %v1010 = vld [vmem:[%s1 + $0x224] sm:$0xf]
        %v1011 = vld [vmem:[%s1 + $0x228] sm:$0xf]
        %v1012 = vld [vmem:[%s1 + $0x22c] sm:$0xf]
        %v1013 = vld [vmem:[%s1 + $0x230] sm:$0xf]
        %v1014 = vld [vmem:[%s1 + $0x234] sm:$0xf]
        %v1015 = vld [vmem:[%s1 + $0x238] sm:$0xf]
        %v1016 = vld [vmem:[%s1 + $0x23c] sm:$0xf]
        %v1017 = vld [vmem:[%s1 + $0x240] sm:$0xf]
        %v1018 = vld [vmem:[%s1 + $0x244] sm:$0xf]
        %v1019 = vld [vmem:[%s1 + $0x248] sm:$0xf]
        %v1020 = vld [vmem:[%s1 + $0x24c] sm:$0xf]
        %v1021 = vld [vmem:[%s1 + $0x250] sm:$0xf]
        %v1022 = vld [vmem:[%s1 + $0x254] sm:$0xf]
        %v1023 = vld [vmem:[%s1 + $0x258] sm:$0xf]
        %v1024 = vld [vmem:[%s1 + $0x25c] sm:$0xf]
        %v1025 = vld [vmem:[%s1 + $0x260] sm:$0xf]
        %v1026 = vld [vmem:[%s1 + $0x264] sm:$0xf]
        %v1027 = vld [vmem:[%s1 + $0x268] sm:$0xf]
        %v1028 = vld [vmem:[%s1 + $0x26c] sm:$0xf]
        %v1029 = vld [vmem:[%s1 + $0x270] sm:$0xf]
        %v1030 = vld [vmem:[%s1 + $0x274] sm:$0xf]
        %v1031 = vld [vmem:[%s1 + $0x278] sm:$0xf]
        %v1032 = vld [vmem:[%s1 + $0x27c] sm:$0xf]
        %v1033 = vld [vmem:[%s1 + $0x280] sm:$0xf]
        %v1034 = vld [vmem:[%s1 + $0x284] sm:$0xf]
        %v1035 = vld [vmem:[%s1 + $0x288] sm:$0xf]
        %v1036 = vld [vmem:[%s1 + $0x28c] sm:$0xf]
        %v1037 = vld [vmem:[%s1 + $0x290] sm:$0xf]
        %v1038 = vld [vmem:[%s1 + $0x294] sm:$0xf]
        %v1039 = vld [vmem:[%s1 + $0x298] sm:$0xf]
        %v1040 = vld [vmem:[%s1 + $0x29c] sm:$0xf]
        %v1041 = vld [vmem:[%s1 + $0x2a0] sm:$0xf]
        %v1042 = vld [vmem:[%s1 + $0x2a4] sm:$0xf]
        %v1043 = vld [vmem:[%s1 + $0x2a8] sm:$0xf]
        %v1044 = vld [vmem:[%s1 + $0x2ac] sm:$0xf]
        %v1045 = vld [vmem:[%s1 + $0x2b0] sm:$0xf]
        %v1046 = vld [vmem:[%s1 + $0x2b4] sm:$0xf]
        %v1047 = vld [vmem:[%s1 + $0x2b8] sm:$0xf]
        %v1048 = vld [vmem:[%s1 + $0x2bc] sm:$0xf]
        %v1049 = vld [vmem:[%s1 + $0x2c0] sm:$0xf]
        %v1050 = vld [vmem:[%s1 + $0x2c4] sm:$0xf]
        %v1051 = vld [vmem:[%s1 + $0x2c8] sm:$0xf]
        %v1052 = vld [vmem:[%s1 + $0x2cc] sm:$0xf]
        %v1053 = vld [vmem:[%s1 + $0x2d0] sm:$0xf]
        %v1054 = vld [vmem:[%s1 + $0x2d4] sm:$0xf]
        %v1055 = vld [vmem:[%s1 + $0x2d8] sm:$0xf]
        %v1056 = vld [vmem:[%s1 + $0x2dc] sm:$0xf]
        %v1057 = vld [vmem:[%s1 + $0x2e0] sm:$0xf]
        %v1058 = vld [vmem:[%s1 + $0x2e4] sm:$0xf]
        %v1059 = vld [vmem:[%s1 + $0x2e8] sm:$0xf]
        %v1060 = vld [vmem:[%s1 + $0x2ec] sm:$0xf]
        %v1061 = vld [vmem:[%s1 + $0x2f0] sm:$0xf]
        %v1062 = vld [vmem:[%s1 + $0x2f4] sm:$0xf]
        %v1063 = vld [vmem:[%s1 + $0x2f8] sm:$0xf]
        %v1064 = vld [vmem:[%s1 + $0x2fc] sm:$0xf]
        %v1065 = vld [vmem:[%s1 + $0x300] sm:$0xf]
        %v1066 = vld [vmem:[%s1 + $0x304] sm:$0xf]
        %v1067 = vld [vmem:[%s1 + $0x308] sm:$0xf]
        %v1068 = vld [vmem:[%s1 + $0x30c] sm:$0xf]
        %v1069 = vld [vmem:[%s1 + $0x310] sm:$0xf]
        %v1070 = vld [vmem:[%s1 + $0x314] sm:$0xf]
        %v1071 = vld [vmem:[%s1 + $0x318] sm:$0xf]
        %v1072 = vld [vmem:[%s1 + $0x31c] sm:$0xf]
        %v1073 = vld [vmem:[%s1 + $0x320] sm:$0xf]
        %v1074 = vld [vmem:[%s1 + $0x324] sm:$0xf]
        %v1075 = vld [vmem:[%s1 + $0x328] sm:$0xf]
        %v1076 = vld [vmem:[%s1 + $0x32c] sm:$0xf]
        %v1077 = vld [vmem:[%s1 + $0x330] sm:$0xf]
        %v1078 = vld [vmem:[%s1 + $0x334] sm:$0xf]
        %v1079 = vld [vmem:[%s1 + $0x338] sm:$0xf]
        %v1080 = vld [vmem:[%s1 + $0x33c] sm:$0xf]
        %v1081 = vld [vmem:[%s1 + $0x340] sm:$0xf]
        %v1082 = vld [vmem:[%s1 + $0x344] sm:$0xf]
        %v1083 = vld [vmem:[%s1 + $0x348] sm:$0xf]
        %v1084 = vld [vmem:[%s1 + $0x34c] sm:$0xf]
        %v1085 = vld [vmem:[%s1 + $0x350] sm:$0xf]
        %v1086 = vld [vmem:[%s1 + $0x354] sm:$0xf]
        %v1087 = vld [vmem:[%s1 + $0x358] sm:$0xf]
        %v1088 = vld [vmem:[%s1 + $0x35c] sm:$0xf]
        %v1089 = vld [vmem:[%s1 + $0x360] sm:$0xf]
        %v1090 = vld [vmem:[%s1 + $0x364] sm:$0xf]
        %v1091 = vld [vmem:[%s1 + $0x368] sm:$0xf]
        %v1092 = vld [vmem:[%s1 + $0x36c] sm:$0xf]
        %v1093 = vld [vmem:[%s1 + $0x370] sm:$0xf]
        %v1094 = vld [vmem:[%s1 + $0x374] sm:$0xf]
        %v1095 = vld [vmem:[%s1 + $0x378] sm:$0xf]
        %v1096 = vld [vmem:[%s1 + $0x37c] sm:$0xf]
        %v1097 = vld [vmem:[%s1 + $0x380] sm:$0xf]
        %v1098 = vld [vmem:[%s1 + $0x384] sm:$0xf]
        %v1099 = vld [vmem:[%s1 + $0x388] sm:$0xf]
        %v1100 = vld [vmem:[%s1 + $0x38c] sm:$0xf]
        %v1101 = vld [vmem:[%s1 + $0x390] sm:$0xf]
        %v1102 = vld [vmem:[%s1 + $0x394] sm:$0xf]
        %v1103 = vld [vmem:[%s1 + $0x398] sm:$0xf]
        %v1104 = vld [vmem:[%s1 + $0x39c] sm:$0xf]
        %v1105 = vld [vmem:[%s1 + $0x3a0] sm:$0xf]
        %v1106 = vld [vmem:[%s1 + $0x3a4] sm:$0xf]
        %v1107 = vld [vmem:[%s1 + $0x3a8] sm:$0xf]
        %v1108 = vld [vmem:[%s1 + $0x3ac] sm:$0xf]
        %v1109 = vld [vmem:[%s1 + $0x3b0] sm:$0xf]
        %v1110 = vld [vmem:[%s1 + $0x3b4] sm:$0xf]
        %v1111 = vld [vmem:[%s1 + $0x3b8] sm:$0xf]
        %v1112 = vld [vmem:[%s1 + $0x3bc] sm:$0xf]
        %v1113 = vld [vmem:[%s1 + $0x3c0] sm:$0xf]
        %v1114 = vld [vmem:[%s1 + $0x3c4] sm:$0xf]
        %v1115 = vld [vmem:[%s1 + $0x3c8] sm:$0xf]
        %v1116 = vld [vmem:[%s1 + $0x3cc] sm:$0xf]
        %v1117 = vld [vmem:[%s1 + $0x3d0] sm:$0xf]
        %v1118 = vld [vmem:[%s1 + $0x3d4] sm:$0xf]
        %v1119 = vld [vmem:[%s1 + $0x3d8] sm:$0xf]
        %v1120 = vld [vmem:[%s1 + $0x3dc] sm:$0xf]
        %v1121 = vld [vmem:[%s1 + $0x3e0] sm:$0xf]
        %v1122 = vld [vmem:[%s1 + $0x3e4] sm:$0xf]
        %v1123 = vld [vmem:[%s1 + $0x3e8] sm:$0xf]
        %v1124 = vld [vmem:[%s1 + $0x3ec] sm:$0xf]
        %v1125 = vld [vmem:[%s1 + $0x3f0] sm:$0xf]
        %v1126 = vld [vmem:[%s1 + $0x3f4] sm:$0xf]
        %v1127 = vld [vmem:[%s1 + $0x3f8] sm:$0xf]
        %v1128 = vld [vmem:[%s1 + $0x3fc] sm:$0xf]
        %v1129 = vld [vmem:[#allocation2] sm:$0x1]
        %v1131 = vlaneseq
        %v1132 = vshrl.u32 %v1131, 7
        %v1133 = vsub.s32 0, %v1132
        %v1134 = vrot.slane %v1129, %v1133
        %v1392 = vunpack.c.l.b16 %v873
        %v1393 = vunpack.c.l.b16 %v874
        %v1394 = vunpack.c.l.b16 %v875
        %v1395 = vunpack.c.l.b16 %v876
        %v1396 = vunpack.c.l.b16 %v877
        %v1397 = vunpack.c.l.b16 %v878
        %v1398 = vunpack.c.l.b16 %v879
        %v1399 = vunpack.c.l.b16 %v880
        %v1400 = vunpack.c.l.b16 %v881
        %v1401 = vunpack.c.l.b16 %v882
        %v1402 = vunpack.c.l.b16 %v883
        %v1403 = vunpack.c.l.b16 %v884
        %v1404 = vunpack.c.l.b16 %v885
        %v1405 = vunpack.c.l.b16 %v886
        %v1406 = vunpack.c.l.b16 %v887
        %v1407 = vunpack.c.l.b16 %v888
        %v1408 = vunpack.c.l.b16 %v889
        %v1409 = vunpack.c.l.b16 %v890
        %v1410 = vunpack.c.l.b16 %v891
        %v1411 = vunpack.c.l.b16 %v892
        %v1412 = vunpack.c.l.b16 %v893
        %v1413 = vunpack.c.l.b16 %v894
        %v1414 = vunpack.c.l.b16 %v895
        %v1415 = vunpack.c.l.b16 %v896
        %v1416 = vunpack.c.l.b16 %v897
        %v1417 = vunpack.c.l.b16 %v898
        %v1418 = vunpack.c.l.b16 %v899
        %v1419 = vunpack.c.l.b16 %v900
        %v1420 = vunpack.c.l.b16 %v901
        %v1421 = vunpack.c.l.b16 %v902
        %v1422 = vunpack.c.l.b16 %v903
        %v1423 = vunpack.c.l.b16 %v904
        %v1424 = vunpack.c.l.b16 %v905
        %v1425 = vunpack.c.l.b16 %v906
        %v1426 = vunpack.c.l.b16 %v907
        %v1427 = vunpack.c.l.b16 %v908
        %v1428 = vunpack.c.l.b16 %v909
        %v1429 = vunpack.c.l.b16 %v910
        %v1430 = vunpack.c.l.b16 %v911
        %v1431 = vunpack.c.l.b16 %v912
        %v1432 = vunpack.c.l.b16 %v913
        %v1433 = vunpack.c.l.b16 %v914
        %v1434 = vunpack.c.l.b16 %v915
        %v1435 = vunpack.c.l.b16 %v916
        %v1436 = vunpack.c.l.b16 %v917
        %v1437 = vunpack.c.l.b16 %v918
        %v1438 = vunpack.c.l.b16 %v919
        %v1439 = vunpack.c.l.b16 %v920
        %v1440 = vunpack.c.l.b16 %v921
        %v1441 = vunpack.c.l.b16 %v922
        %v1442 = vunpack.c.l.b16 %v923
        %v1443 = vunpack.c.l.b16 %v924
        %v1444 = vunpack.c.l.b16 %v925
        %v1445 = vunpack.c.l.b16 %v926
        %v1446 = vunpack.c.l.b16 %v927
        %v1447 = vunpack.c.l.b16 %v928
        %v1448 = vunpack.c.l.b16 %v929
        %v1449 = vunpack.c.l.b16 %v930
        %v1450 = vunpack.c.l.b16 %v931
        %v1451 = vunpack.c.l.b16 %v932
        %v1452 = vunpack.c.l.b16 %v933
        %v1453 = vunpack.c.l.b16 %v934
        %v1454 = vunpack.c.l.b16 %v935
        %v1455 = vunpack.c.l.b16 %v936
        %v1456 = vunpack.c.l.b16 %v937
        %v1457 = vunpack.c.l.b16 %v938
        %v1458 = vunpack.c.l.b16 %v939
        %v1459 = vunpack.c.l.b16 %v940
        %v1460 = vunpack.c.l.b16 %v941
        %v1461 = vunpack.c.l.b16 %v942
        %v1462 = vunpack.c.l.b16 %v943
        %v1463 = vunpack.c.l.b16 %v944
        %v1464 = vunpack.c.l.b16 %v945
        %v1465 = vunpack.c.l.b16 %v946
        %v1466 = vunpack.c.l.b16 %v947
        %v1467 = vunpack.c.l.b16 %v948
        %v1468 = vunpack.c.l.b16 %v949
        %v1469 = vunpack.c.l.b16 %v950
        %v1470 = vunpack.c.l.b16 %v951
        %v1471 = vunpack.c.l.b16 %v952
        %v1472 = vunpack.c.l.b16 %v953
        %v1473 = vunpack.c.l.b16 %v954
        %v1474 = vunpack.c.l.b16 %v955
        %v1475 = vunpack.c.l.b16 %v956
        %v1476 = vunpack.c.l.b16 %v957
        %v1477 = vunpack.c.l.b16 %v958
        %v1478 = vunpack.c.l.b16 %v959
        %v1479 = vunpack.c.l.b16 %v960
        %v1480 = vunpack.c.l.b16 %v961
        %v1481 = vunpack.c.l.b16 %v962
        %v1482 = vunpack.c.l.b16 %v963
        %v1483 = vunpack.c.l.b16 %v964
        %v1484 = vunpack.c.l.b16 %v965
        %v1485 = vunpack.c.l.b16 %v966
        %v1486 = vunpack.c.l.b16 %v967
        %v1487 = vunpack.c.l.b16 %v968
        %v1488 = vunpack.c.l.b16 %v969
        %v1489 = vunpack.c.l.b16 %v970
        %v1490 = vunpack.c.l.b16 %v971
        %v1491 = vunpack.c.l.b16 %v972
        %v1492 = vunpack.c.l.b16 %v973
        %v1493 = vunpack.c.l.b16 %v974
        %v1494 = vunpack.c.l.b16 %v975
        %v1495 = vunpack.c.l.b16 %v976
        %v1496 = vunpack.c.l.b16 %v977
        %v1497 = vunpack.c.l.b16 %v978
        %v1498 = vunpack.c.l.b16 %v979
        %v1499 = vunpack.c.l.b16 %v980
        %v1500 = vunpack.c.l.b16 %v981
        %v1501 = vunpack.c.l.b16 %v982
        %v1502 = vunpack.c.l.b16 %v983
        %v1503 = vunpack.c.l.b16 %v984
        %v1504 = vunpack.c.l.b16 %v985
        %v1505 = vunpack.c.l.b16 %v986
        %v1506 = vunpack.c.l.b16 %v987
        %v1507 = vunpack.c.l.b16 %v988
        %v1508 = vunpack.c.l.b16 %v989
        %v1509 = vunpack.c.l.b16 %v990
        %v1510 = vunpack.c.l.b16 %v991
        %v1511 = vunpack.c.l.b16 %v992
        %v1512 = vunpack.c.l.b16 %v993
        %v1513 = vunpack.c.l.b16 %v994
        %v1514 = vunpack.c.l.b16 %v995
        %v1515 = vunpack.c.l.b16 %v996
        %v1516 = vunpack.c.l.b16 %v997
        %v1517 = vunpack.c.l.b16 %v998
        %v1518 = vunpack.c.l.b16 %v999
        %v1519 = vunpack.c.l.b16 %v1000
        %v1520 = vunpack.c.l.b16 %v1001
        %v1521 = vunpack.c.l.b16 %v1002
        %v1522 = vunpack.c.l.b16 %v1003
        %v1523 = vunpack.c.l.b16 %v1004
        %v1524 = vunpack.c.l.b16 %v1005
        %v1525 = vunpack.c.l.b16 %v1006
        %v1526 = vunpack.c.l.b16 %v1007
        %v1527 = vunpack.c.l.b16 %v1008
        %v1528 = vunpack.c.l.b16 %v1009
        %v1529 = vunpack.c.l.b16 %v1010
        %v1530 = vunpack.c.l.b16 %v1011
        %v1531 = vunpack.c.l.b16 %v1012
        %v1532 = vunpack.c.l.b16 %v1013
        %v1533 = vunpack.c.l.b16 %v1014
        %v1534 = vunpack.c.l.b16 %v1015
        %v1535 = vunpack.c.l.b16 %v1016
        %v1536 = vunpack.c.l.b16 %v1017
        %v1537 = vunpack.c.l.b16 %v1018
        %v1538 = vunpack.c.l.b16 %v1019
        %v1539 = vunpack.c.l.b16 %v1020
        %v1540 = vunpack.c.l.b16 %v1021
        %v1541 = vunpack.c.l.b16 %v1022
        %v1542 = vunpack.c.l.b16 %v1023
        %v1543 = vunpack.c.l.b16 %v1024
        %v1544 = vunpack.c.l.b16 %v1025
        %v1545 = vunpack.c.l.b16 %v1026
        %v1546 = vunpack.c.l.b16 %v1027
        %v1547 = vunpack.c.l.b16 %v1028
        %v1548 = vunpack.c.l.b16 %v1029
        %v1549 = vunpack.c.l.b16 %v1030
        %v1550 = vunpack.c.l.b16 %v1031
        %v1551 = vunpack.c.l.b16 %v1032
        %v1552 = vunpack.c.l.b16 %v1033
        %v1553 = vunpack.c.l.b16 %v1034
        %v1554 = vunpack.c.l.b16 %v1035
        %v1555 = vunpack.c.l.b16 %v1036
        %v1556 = vunpack.c.l.b16 %v1037
        %v1557 = vunpack.c.l.b16 %v1038
        %v1558 = vunpack.c.l.b16 %v1039
        %v1559 = vunpack.c.l.b16 %v1040
        %v1560 = vunpack.c.l.b16 %v1041
        %v1561 = vunpack.c.l.b16 %v1042
        %v1562 = vunpack.c.l.b16 %v1043
        %v1563 = vunpack.c.l.b16 %v1044
        %v1564 = vunpack.c.l.b16 %v1045
        %v1565 = vunpack.c.l.b16 %v1046
        %v1566 = vunpack.c.l.b16 %v1047
        %v1567 = vunpack.c.l.b16 %v1048
        %v1568 = vunpack.c.l.b16 %v1049
        %v1569 = vunpack.c.l.b16 %v1050
        %v1570 = vunpack.c.l.b16 %v1051
        %v1571 = vunpack.c.l.b16 %v1052
        %v1572 = vunpack.c.l.b16 %v1053
        %v1573 = vunpack.c.l.b16 %v1054
        %v1574 = vunpack.c.l.b16 %v1055
        %v1575 = vunpack.c.l.b16 %v1056
        %v1576 = vunpack.c.l.b16 %v1057
        %v1577 = vunpack.c.l.b16 %v1058
        %v1578 = vunpack.c.l.b16 %v1059
        %v1579 = vunpack.c.l.b16 %v1060
        %v1580 = vunpack.c.l.b16 %v1061
        %v1581 = vunpack.c.l.b16 %v1062
        %v1582 = vunpack.c.l.b16 %v1063
        %v1583 = vunpack.c.l.b16 %v1064
        %v1584 = vunpack.c.l.b16 %v1065
        %v1585 = vunpack.c.l.b16 %v1066
        %v1586 = vunpack.c.l.b16 %v1067
        %v1587 = vunpack.c.l.b16 %v1068
        %v1588 = vunpack.c.l.b16 %v1069
        %v1589 = vunpack.c.l.b16 %v1070
        %v1590 = vunpack.c.l.b16 %v1071
        %v1591 = vunpack.c.l.b16 %v1072
        %v1592 = vunpack.c.l.b16 %v1073
        %v1593 = vunpack.c.l.b16 %v1074
        %v1594 = vunpack.c.l.b16 %v1075
        %v1595 = vunpack.c.l.b16 %v1076
        %v1596 = vunpack.c.l.b16 %v1077
        %v1597 = vunpack.c.l.b16 %v1078
        %v1598 = vunpack.c.l.b16 %v1079
        %v1599 = vunpack.c.l.b16 %v1080
        %v1600 = vunpack.c.l.b16 %v1081
        %v1601 = vunpack.c.l.b16 %v1082
        %v1602 = vunpack.c.l.b16 %v1083
        %v1603 = vunpack.c.l.b16 %v1084
        %v1604 = vunpack.c.l.b16 %v1085
        %v1605 = vunpack.c.l.b16 %v1086
        %v1606 = vunpack.c.l.b16 %v1087
        %v1607 = vunpack.c.l.b16 %v1088
        %v1608 = vunpack.c.l.b16 %v1089
        %v1609 = vunpack.c.l.b16 %v1090
        %v1610 = vunpack.c.l.b16 %v1091
        %v1611 = vunpack.c.l.b16 %v1092
        %v1612 = vunpack.c.l.b16 %v1093
        %v1613 = vunpack.c.l.b16 %v1094
        %v1614 = vunpack.c.l.b16 %v1095
        %v1615 = vunpack.c.l.b16 %v1096
        %v1616 = vunpack.c.l.b16 %v1097
        %v1617 = vunpack.c.l.b16 %v1098
        %v1618 = vunpack.c.l.b16 %v1099
        %v1619 = vunpack.c.l.b16 %v1100
        %v1620 = vunpack.c.l.b16 %v1101
        %v1621 = vunpack.c.l.b16 %v1102
        %v1622 = vunpack.c.l.b16 %v1103
        %v1623 = vunpack.c.l.b16 %v1104
        %v1624 = vunpack.c.l.b16 %v1105
        %v1625 = vunpack.c.l.b16 %v1106
        %v1626 = vunpack.c.l.b16 %v1107
        %v1627 = vunpack.c.l.b16 %v1108
        %v1628 = vunpack.c.l.b16 %v1109
        %v1629 = vunpack.c.l.b16 %v1110
        %v1630 = vunpack.c.l.b16 %v1111
        %v1631 = vunpack.c.l.b16 %v1112
        %v1632 = vunpack.c.l.b16 %v1113
        %v1633 = vunpack.c.l.b16 %v1114
        %v1634 = vunpack.c.l.b16 %v1115
        %v1635 = vunpack.c.l.b16 %v1116
        %v1636 = vunpack.c.l.b16 %v1117
        %v1637 = vunpack.c.l.b16 %v1118
        %v1638 = vunpack.c.l.b16 %v1119
        %v1639 = vunpack.c.l.b16 %v1120
        %v1640 = vunpack.c.l.b16 %v1121
        %v1641 = vunpack.c.l.b16 %v1122
        %v1642 = vunpack.c.l.b16 %v1123
        %v1643 = vunpack.c.l.b16 %v1124
        %v1644 = vunpack.c.l.b16 %v1125
        %v1645 = vunpack.c.l.b16 %v1126
        %v1646 = vunpack.c.l.b16 %v1127
        %v1647 = vunpack.c.l.b16 %v1128
        %v1648 = vpack.c.b16 %v1393, %v1392
        %v1649 = vpack.c.b16 %v1395, %v1394
        %v1650 = vpack.c.b16 %v1397, %v1396
        %v1651 = vpack.c.b16 %v1399, %v1398
        %v1652 = vpack.c.b16 %v1401, %v1400
        %v1653 = vpack.c.b16 %v1403, %v1402
        %v1654 = vpack.c.b16 %v1405, %v1404
        %v1655 = vpack.c.b16 %v1407, %v1406
        %v1656 = vpack.c.b16 %v1409, %v1408
        %v1657 = vpack.c.b16 %v1411, %v1410
        %v1658 = vpack.c.b16 %v1413, %v1412
        %v1659 = vpack.c.b16 %v1415, %v1414
        %v1660 = vpack.c.b16 %v1417, %v1416
        %v1661 = vpack.c.b16 %v1419, %v1418
        %v1662 = vpack.c.b16 %v1421, %v1420
        %v1663 = vpack.c.b16 %v1423, %v1422
        %v1664 = vpack.c.b16 %v1425, %v1424
        %v1665 = vpack.c.b16 %v1427, %v1426
        %v1666 = vpack.c.b16 %v1429, %v1428
        %v1667 = vpack.c.b16 %v1431, %v1430
        %v1668 = vpack.c.b16 %v1433, %v1432
        %v1669 = vpack.c.b16 %v1435, %v1434
        %v1670 = vpack.c.b16 %v1437, %v1436
        %v1671 = vpack.c.b16 %v1439, %v1438
        %v1672 = vpack.c.b16 %v1441, %v1440
        %v1673 = vpack.c.b16 %v1443, %v1442
        %v1674 = vpack.c.b16 %v1445, %v1444
        %v1675 = vpack.c.b16 %v1447, %v1446
        %v1676 = vpack.c.b16 %v1449, %v1448
        %v1677 = vpack.c.b16 %v1451, %v1450
        %v1678 = vpack.c.b16 %v1453, %v1452
        %v1679 = vpack.c.b16 %v1455, %v1454
        %v1680 = vpack.c.b16 %v1457, %v1456
        %v1681 = vpack.c.b16 %v1459, %v1458
        %v1682 = vpack.c.b16 %v1461, %v1460
        %v1683 = vpack.c.b16 %v1463, %v1462
        %v1684 = vpack.c.b16 %v1465, %v1464
        %v1685 = vpack.c.b16 %v1467, %v1466
        %v1686 = vpack.c.b16 %v1469, %v1468
        %v1687 = vpack.c.b16 %v1471, %v1470
        %v1688 = vpack.c.b16 %v1473, %v1472
        %v1689 = vpack.c.b16 %v1475, %v1474
        %v1690 = vpack.c.b16 %v1477, %v1476
        %v1691 = vpack.c.b16 %v1479, %v1478
        %v1692 = vpack.c.b16 %v1481, %v1480
        %v1693 = vpack.c.b16 %v1483, %v1482
        %v1694 = vpack.c.b16 %v1485, %v1484
        %v1695 = vpack.c.b16 %v1487, %v1486
        %v1696 = vpack.c.b16 %v1489, %v1488
        %v1697 = vpack.c.b16 %v1491, %v1490
        %v1698 = vpack.c.b16 %v1493, %v1492
        %v1699 = vpack.c.b16 %v1495, %v1494
        %v1700 = vpack.c.b16 %v1497, %v1496
        %v1701 = vpack.c.b16 %v1499, %v1498
        %v1702 = vpack.c.b16 %v1501, %v1500
        %v1703 = vpack.c.b16 %v1503, %v1502
        %v1704 = vpack.c.b16 %v1505, %v1504
        %v1705 = vpack.c.b16 %v1507, %v1506
        %v1706 = vpack.c.b16 %v1509, %v1508
        %v1707 = vpack.c.b16 %v1511, %v1510
        %v1708 = vpack.c.b16 %v1513, %v1512
        %v1709 = vpack.c.b16 %v1515, %v1514
        %v1710 = vpack.c.b16 %v1517, %v1516
        %v1711 = vpack.c.b16 %v1519, %v1518
        %v1712 = vpack.c.b16 %v1521, %v1520
        %v1713 = vpack.c.b16 %v1523, %v1522
        %v1714 = vpack.c.b16 %v1525, %v1524
        %v1715 = vpack.c.b16 %v1527, %v1526
        %v1716 = vpack.c.b16 %v1529, %v1528
        %v1717 = vpack.c.b16 %v1531, %v1530
        %v1718 = vpack.c.b16 %v1533, %v1532
        %v1719 = vpack.c.b16 %v1535, %v1534
        %v1720 = vpack.c.b16 %v1537, %v1536
        %v1721 = vpack.c.b16 %v1539, %v1538
        %v1722 = vpack.c.b16 %v1541, %v1540
        %v1723 = vpack.c.b16 %v1543, %v1542
        %v1724 = vpack.c.b16 %v1545, %v1544
        %v1725 = vpack.c.b16 %v1547, %v1546
        %v1726 = vpack.c.b16 %v1549, %v1548
        %v1727 = vpack.c.b16 %v1551, %v1550
        %v1728 = vpack.c.b16 %v1553, %v1552
        %v1729 = vpack.c.b16 %v1555, %v1554
        %v1730 = vpack.c.b16 %v1557, %v1556
        %v1731 = vpack.c.b16 %v1559, %v1558
        %v1732 = vpack.c.b16 %v1561, %v1560
        %v1733 = vpack.c.b16 %v1563, %v1562
        %v1734 = vpack.c.b16 %v1565, %v1564
        %v1735 = vpack.c.b16 %v1567, %v1566
        %v1736 = vpack.c.b16 %v1569, %v1568
        %v1737 = vpack.c.b16 %v1571, %v1570
        %v1738 = vpack.c.b16 %v1573, %v1572
        %v1739 = vpack.c.b16 %v1575, %v1574
        %v1740 = vpack.c.b16 %v1577, %v1576
        %v1741 = vpack.c.b16 %v1579, %v1578
        %v1742 = vpack.c.b16 %v1581, %v1580
        %v1743 = vpack.c.b16 %v1583, %v1582
        %v1744 = vpack.c.b16 %v1585, %v1584
        %v1745 = vpack.c.b16 %v1587, %v1586
        %v1746 = vpack.c.b16 %v1589, %v1588
        %v1747 = vpack.c.b16 %v1591, %v1590
        %v1748 = vpack.c.b16 %v1593, %v1592
        %v1749 = vpack.c.b16 %v1595, %v1594
        %v1750 = vpack.c.b16 %v1597, %v1596
        %v1751 = vpack.c.b16 %v1599, %v1598
        %v1752 = vpack.c.b16 %v1601, %v1600
        %v1753 = vpack.c.b16 %v1603, %v1602
        %v1754 = vpack.c.b16 %v1605, %v1604
        %v1755 = vpack.c.b16 %v1607, %v1606
        %v1756 = vpack.c.b16 %v1609, %v1608
        %v1757 = vpack.c.b16 %v1611, %v1610
        %v1758 = vpack.c.b16 %v1613, %v1612
        %v1759 = vpack.c.b16 %v1615, %v1614
        %v1760 = vpack.c.b16 %v1617, %v1616
        %v1761 = vpack.c.b16 %v1619, %v1618
        %v1762 = vpack.c.b16 %v1621, %v1620
        %v1763 = vpack.c.b16 %v1623, %v1622
        %v1764 = vpack.c.b16 %v1625, %v1624
        %v1765 = vpack.c.b16 %v1627, %v1626
        %v1766 = vpack.c.b16 %v1629, %v1628
        %v1767 = vpack.c.b16 %v1631, %v1630
        %v1768 = vpack.c.b16 %v1633, %v1632
        %v1769 = vpack.c.b16 %v1635, %v1634
        %v1770 = vpack.c.b16 %v1637, %v1636
        %v1771 = vpack.c.b16 %v1639, %v1638
        %v1772 = vpack.c.b16 %v1641, %v1640
        %v1773 = vpack.c.b16 %v1643, %v1642
        %v1774 = vpack.c.b16 %v1645, %v1644
        %v1775 = vpack.c.b16 %v1647, %v1646
        %1904 = vmatprep.subr.bf16.mxu0 0
        %1905 = vmatpush1.bf16.msra.mxu0 %v1648
        %1906 = vmatprep.subr.bf16.mxu0 0
        %1907 = vmatpush1.bf16.msra.mxu0 %v1649
        %1908 = vmatprep.subr.bf16.mxu0 0
        %1909 = vmatpush1.bf16.msra.mxu0 %v1650
        %1910 = vmatprep.subr.bf16.mxu0 0
        %1911 = vmatpush1.bf16.msra.mxu0 %v1651
        %1912 = vmatprep.subr.bf16.mxu0 0
        %1913 = vmatpush1.bf16.msra.mxu0 %v1652
        %1914 = vmatprep.subr.bf16.mxu0 0
        %1915 = vmatpush1.bf16.msra.mxu0 %v1653
        %1916 = vmatprep.subr.bf16.mxu0 0
        %1917 = vmatpush1.bf16.msra.mxu0 %v1654
        %1918 = vmatprep.subr.bf16.mxu0 0
        %1919 = vmatpush1.bf16.msra.mxu0 %v1655
        %1920 = vmatprep.subr.bf16.mxu0 0
        %1921 = vmatpush1.bf16.msra.mxu0 %v1656
        %1922 = vmatprep.subr.bf16.mxu0 0
        %1923 = vmatpush1.bf16.msra.mxu0 %v1657
        %1924 = vmatprep.subr.bf16.mxu0 0
        %1925 = vmatpush1.bf16.msra.mxu0 %v1658
        %1926 = vmatprep.subr.bf16.mxu0 0
        %1927 = vmatpush1.bf16.msra.mxu0 %v1659
        %1928 = vmatprep.subr.bf16.mxu0 0
        %1929 = vmatpush1.bf16.msra.mxu0 %v1660
        %1930 = vmatprep.subr.bf16.mxu0 0
        %1931 = vmatpush1.bf16.msra.mxu0 %v1661
        %1932 = vmatprep.subr.bf16.mxu0 0
        %1933 = vmatpush1.bf16.msra.mxu0 %v1662
        %1934 = vmatprep.subr.bf16.mxu0 0
        %1935 = vmatpush1.bf16.msra.mxu0 %v1663
        %1936 = vmatprep.mubr.bf16.mxu0 %v842
        %1937 = vmatmul.mubr.bf16.gmra.mrb[0].mxu0 %v841
        %v1938 = vpop.f32.mrb[0].mxu0
        %v1939 = vadd.f32 %v1134, %v1938
        %v1940 = vpop.f32.mrb[0].mxu0
        %v1941 = vpop.f32.mrb[0].mxu0
        %v1942 = vadd.f32 %v1134, %v1941
        %v1943 = vpop.f32.mrb[0].mxu0
        %1944 = vmatprep.mubr.bf16.mxu0 %v858
        %1945 = vmatmul.mubr.bf16.gmra.mrb[0].mxu0 %v857
        %v1946 = vpop.f32.mrb[0].mxu0
        %v1947 = vadd.f32 %v1134, %v1946
        %v1948 = vpop.f32.mrb[0].mxu0
        %v1949 = vpop.f32.mrb[0].mxu0
        %v1950 = vadd.f32 %v1134, %v1949
        %v1951 = vpop.f32.mrb[0].mxu0
        %1952 = vdwg.mxu0
        %1953 = vmatprep.subr.bf16.mxu0 0
        %1954 = vmatpush1.bf16.msra.mxu0 %v1664
        %1955 = vmatprep.subr.bf16.mxu0 0
        %1956 = vmatpush1.bf16.msra.mxu0 %v1665
        %1957 = vmatprep.subr.bf16.mxu0 0
        %1958 = vmatpush1.bf16.msra.mxu0 %v1666
        %1959 = vmatprep.subr.bf16.mxu0 0
        %1960 = vmatpush1.bf16.msra.mxu0 %v1667
        %1961 = vmatprep.subr.bf16.mxu0 0
        %1962 = vmatpush1.bf16.msra.mxu0 %v1668
        %1963 = vmatprep.subr.bf16.mxu0 0
        %1964 = vmatpush1.bf16.msra.mxu0 %v1669
        %1965 = vmatprep.subr.bf16.mxu0 0
        %1966 = vmatpush1.bf16.msra.mxu0 %v1670
        %1967 = vmatprep.subr.bf16.mxu0 0
        %1968 = vmatpush1.bf16.msra.mxu0 %v1671
        %1969 = vmatprep.subr.bf16.mxu0 0
        %1970 = vmatpush1.bf16.msra.mxu0 %v1672
        %1971 = vmatprep.subr.bf16.mxu0 0
        %1972 = vmatpush1.bf16.msra.mxu0 %v1673
        %1973 = vmatprep.subr.bf16.mxu0 0
        %1974 = vmatpush1.bf16.msra.mxu0 %v1674
        %1975 = vmatprep.subr.bf16.mxu0 0
        %1976 = vmatpush1.bf16.msra.mxu0 %v1675
        %1977 = vmatprep.subr.bf16.mxu0 0
        %1978 = vmatpush1.bf16.msra.mxu0 %v1676
        %1979 = vmatprep.subr.bf16.mxu0 0
        %1980 = vmatpush1.bf16.msra.mxu0 %v1677
        %1981 = vmatprep.subr.bf16.mxu0 0
        %1982 = vmatpush1.bf16.msra.mxu0 %v1678
        %1983 = vmatprep.subr.bf16.mxu0 0
        %1984 = vmatpush1.bf16.msra.mxu0 %v1679
        %1985 = vmatprep.mubr.bf16.mxu0 %v844
        %1986 = vmatmul.mubr.bf16.gmra.mrb[0].mxu0 %v843
        %v1987 = vpop.f32.mrb[0].mxu0
        %v1988 = vadd.f32 %v1939, %v1987
        %v1989 = vpop.f32.mrb[0].mxu0
        %v1990 = vpop.f32.mrb[0].mxu0
        %v1991 = vadd.f32 %v1942, %v1990
        %v1992 = vpop.f32.mrb[0].mxu0
        %1993 = vmatprep.mubr.bf16.mxu0 %v860
        %1994 = vmatmul.mubr.bf16.gmra.mrb[0].mxu0 %v859
        %v1995 = vpop.f32.mrb[0].mxu0
        %v1996 = vadd.f32 %v1947, %v1995
        %v1997 = vpop.f32.mrb[0].mxu0
        %v1998 = vpop.f32.mrb[0].mxu0
        %v1999 = vadd.f32 %v1950, %v1998
        %v2000 = vpop.f32.mrb[0].mxu0
        %2001 = vdwg.mxu0
        %2002 = vmatprep.subr.bf16.mxu0 0
        %2003 = vmatpush1.bf16.msra.mxu0 %v1680
        %2004 = vmatprep.subr.bf16.mxu0 0
        %2005 = vmatpush1.bf16.msra.mxu0 %v1681
        %2006 = vmatprep.subr.bf16.mxu0 0
        %2007 = vmatpush1.bf16.msra.mxu0 %v1682
        %2008 = vmatprep.subr.bf16.mxu0 0
        %2009 = vmatpush1.bf16.msra.mxu0 %v1683
        %2010 = vmatprep.subr.bf16.mxu0 0
        %2011 = vmatpush1.bf16.msra.mxu0 %v1684
        %2012 = vmatprep.subr.bf16.mxu0 0
        %2013 = vmatpush1.bf16.msra.mxu0 %v1685
        %2014 = vmatprep.subr.bf16.mxu0 0
        %2015 = vmatpush1.bf16.msra.mxu0 %v1686
        %2016 = vmatprep.subr.bf16.mxu0 0
        %2017 = vmatpush1.bf16.msra.mxu0 %v1687
        %2018 = vmatprep.subr.bf16.mxu0 0
        %2019 = vmatpush1.bf16.msra.mxu0 %v1688
        %2020 = vmatprep.subr.bf16.mxu0 0
        %2021 = vmatpush1.bf16.msra.mxu0 %v1689
        %2022 = vmatprep.subr.bf16.mxu0 0
        %2023 = vmatpush1.bf16.msra.mxu0 %v1690
        %2024 = vmatprep.subr.bf16.mxu0 0
        %2025 = vmatpush1.bf16.msra.mxu0 %v1691
        %2026 = vmatprep.subr.bf16.mxu0 0
        %2027 = vmatpush1.bf16.msra.mxu0 %v1692
        %2028 = vmatprep.subr.bf16.mxu0 0
        %2029 = vmatpush1.bf16.msra.mxu0 %v1693
        %2030 = vmatprep.subr.bf16.mxu0 0
        %2031 = vmatpush1.bf16.msra.mxu0 %v1694
        %2032 = vmatprep.subr.bf16.mxu0 0
        %2033 = vmatpush1.bf16.msra.mxu0 %v1695
        %2034 = vmatprep.mubr.bf16.mxu0 %v846
        %2035 = vmatmul.mubr.bf16.gmra.mrb[0].mxu0 %v845
        %v2036 = vpop.f32.mrb[0].mxu0
        %v2037 = vadd.f32 %v1988, %v2036
        %v2038 = vpop.f32.mrb[0].mxu0
        %v2039 = vpop.f32.mrb[0].mxu0
        %v2040 = vadd.f32 %v1991, %v2039
        %v2041 = vpop.f32.mrb[0].mxu0
        %2042 = vmatprep.mubr.bf16.mxu0 %v862
        %2043 = vmatmul.mubr.bf16.gmra.mrb[0].mxu0 %v861
        %v2044 = vpop.f32.mrb[0].mxu0
        %v2045 = vadd.f32 %v1996, %v2044
        %v2046 = vpop.f32.mrb[0].mxu0
        %v2047 = vpop.f32.mrb[0].mxu0
        %v2048 = vadd.f32 %v1999, %v2047
        %v2049 = vpop.f32.mrb[0].mxu0
        %2050 = vdwg.mxu0
        %2051 = vmatprep.subr.bf16.mxu0 0
        %2052 = vmatpush1.bf16.msra.mxu0 %v1696
        %2053 = vmatprep.subr.bf16.mxu0 0
        %2054 = vmatpush1.bf16.msra.mxu0 %v1697
        %2055 = vmatprep.subr.bf16.mxu0 0
        %2056 = vmatpush1.bf16.msra.mxu0 %v1698
        %2057 = vmatprep.subr.bf16.mxu0 0
        %2058 = vmatpush1.bf16.msra.mxu0 %v1699
        %2059 = vmatprep.subr.bf16.mxu0 0
        %2060 = vmatpush1.bf16.msra.mxu0 %v1700
        %2061 = vmatprep.subr.bf16.mxu0 0
        %2062 = vmatpush1.bf16.msra.mxu0 %v1701
        %2063 = vmatprep.subr.bf16.mxu0 0
        %2064 = vmatpush1.bf16.msra.mxu0 %v1702
        %2065 = vmatprep.subr.bf16.mxu0 0
        %2066 = vmatpush1.bf16.msra.mxu0 %v1703
        %2067 = vmatprep.subr.bf16.mxu0 0
        %2068 = vmatpush1.bf16.msra.mxu0 %v1704
        %2069 = vmatprep.subr.bf16.mxu0 0
        %2070 = vmatpush1.bf16.msra.mxu0 %v1705
        %2071 = vmatprep.subr.bf16.mxu0 0
        %2072 = vmatpush1.bf16.msra.mxu0 %v1706
        %2073 = vmatprep.subr.bf16.mxu0 0
        %2074 = vmatpush1.bf16.msra.mxu0 %v1707
        %2075 = vmatprep.subr.bf16.mxu0 0
        %2076 = vmatpush1.bf16.msra.mxu0 %v1708
        %2077 = vmatprep.subr.bf16.mxu0 0
        %2078 = vmatpush1.bf16.msra.mxu0 %v1709
        %2079 = vmatprep.subr.bf16.mxu0 0
        %2080 = vmatpush1.bf16.msra.mxu0 %v1710
        %2081 = vmatprep.subr.bf16.mxu0 0
        %2082 = vmatpush1.bf16.msra.mxu0 %v1711
        %2083 = vmatprep.mubr.bf16.mxu0 %v848
        %2084 = vmatmul.mubr.bf16.gmra.mrb[0].mxu0 %v847
        %v2085 = vpop.f32.mrb[0].mxu0
        %v2086 = vadd.f32 %v2037, %v2085
        %v2087 = vpop.f32.mrb[0].mxu0
        %v2088 = vpop.f32.mrb[0].mxu0
        %v2089 = vadd.f32 %v2040, %v2088
        %v2090 = vpop.f32.mrb[0].mxu0
        %2091 = vmatprep.mubr.bf16.mxu0 %v864
        %2092 = vmatmul.mubr.bf16.gmra.mrb[0].mxu0 %v863
        %v2093 = vpop.f32.mrb[0].mxu0
        %v2094 = vadd.f32 %v2045, %v2093
        %v2095 = vpop.f32.mrb[0].mxu0
        %v2096 = vpop.f32.mrb[0].mxu0
        %v2097 = vadd.f32 %v2048, %v2096
        %v2098 = vpop.f32.mrb[0].mxu0
        %2099 = vdwg.mxu0
        %2100 = vmatprep.subr.bf16.mxu0 0
        %2101 = vmatpush1.bf16.msra.mxu0 %v1712
        %2102 = vmatprep.subr.bf16.mxu0 0
        %2103 = vmatpush1.bf16.msra.mxu0 %v1713
        %2104 = vmatprep.subr.bf16.mxu0 0
        %2105 = vmatpush1.bf16.msra.mxu0 %v1714
        %2106 = vmatprep.subr.bf16.mxu0 0
        %2107 = vmatpush1.bf16.msra.mxu0 %v1715
        %2108 = vmatprep.subr.bf16.mxu0 0
        %2109 = vmatpush1.bf16.msra.mxu0 %v1716
        %2110 = vmatprep.subr.bf16.mxu0 0
        %2111 = vmatpush1.bf16.msra.mxu0 %v1717
        %2112 = vmatprep.subr.bf16.mxu0 0
        %2113 = vmatpush1.bf16.msra.mxu0 %v1718
        %2114 = vmatprep.subr.bf16.mxu0 0
        %2115 = vmatpush1.bf16.msra.mxu0 %v1719
        %2116 = vmatprep.subr.bf16.mxu0 0
        %2117 = vmatpush1.bf16.msra.mxu0 %v1720
        %2118 = vmatprep.subr.bf16.mxu0 0
        %2119 = vmatpush1.bf16.msra.mxu0 %v1721
        %2120 = vmatprep.subr.bf16.mxu0 0
        %2121 = vmatpush1.bf16.msra.mxu0 %v1722
        %2122 = vmatprep.subr.bf16.mxu0 0
        %2123 = vmatpush1.bf16.msra.mxu0 %v1723
        %2124 = vmatprep.subr.bf16.mxu0 0
        %2125 = vmatpush1.bf16.msra.mxu0 %v1724
        %2126 = vmatprep.subr.bf16.mxu0 0
        %2127 = vmatpush1.bf16.msra.mxu0 %v1725
        %2128 = vmatprep.subr.bf16.mxu0 0
        %2129 = vmatpush1.bf16.msra.mxu0 %v1726
        %2130 = vmatprep.subr.bf16.mxu0 0
        %2131 = vmatpush1.bf16.msra.mxu0 %v1727
        %2132 = vmatprep.mubr.bf16.mxu0 %v850
        %2133 = vmatmul.mubr.bf16.gmra.mrb[0].mxu0 %v849
        %v2134 = vpop.f32.mrb[0].mxu0
        %v2135 = vadd.f32 %v2086, %v2134
        %v2136 = vpop.f32.mrb[0].mxu0
        %v2137 = vpop.f32.mrb[0].mxu0
        %v2138 = vadd.f32 %v2089, %v2137
        %v2139 = vpop.f32.mrb[0].mxu0
        %2140 = vmatprep.mubr.bf16.mxu0 %v866
        %2141 = vmatmul.mubr.bf16.gmra.mrb[0].mxu0 %v865
        %v2142 = vpop.f32.mrb[0].mxu0
        %v2143 = vadd.f32 %v2094, %v2142
        %v2144 = vpop.f32.mrb[0].mxu0
        %v2145 = vpop.f32.mrb[0].mxu0
        %v2146 = vadd.f32 %v2097, %v2145
        %v2147 = vpop.f32.mrb[0].mxu0
        %2148 = vdwg.mxu0
        %2149 = vmatprep.subr.bf16.mxu0 0
        %2150 = vmatpush1.bf16.msra.mxu0 %v1728
        %2151 = vmatprep.subr.bf16.mxu0 0
        %2152 = vmatpush1.bf16.msra.mxu0 %v1729
        %2153 = vmatprep.subr.bf16.mxu0 0
        %2154 = vmatpush1.bf16.msra.mxu0 %v1730
        %2155 = vmatprep.subr.bf16.mxu0 0
        %2156 = vmatpush1.bf16.msra.mxu0 %v1731
        %2157 = vmatprep.subr.bf16.mxu0 0
        %2158 = vmatpush1.bf16.msra.mxu0 %v1732
        %2159 = vmatprep.subr.bf16.mxu0 0
        %2160 = vmatpush1.bf16.msra.mxu0 %v1733
        %2161 = vmatprep.subr.bf16.mxu0 0
        %2162 = vmatpush1.bf16.msra.mxu0 %v1734
        %2163 = vmatprep.subr.bf16.mxu0 0
        %2164 = vmatpush1.bf16.msra.mxu0 %v1735
        %2165 = vmatprep.subr.bf16.mxu0 0
        %2166 = vmatpush1.bf16.msra.mxu0 %v1736
        %2167 = vmatprep.subr.bf16.mxu0 0
        %2168 = vmatpush1.bf16.msra.mxu0 %v1737
        %2169 = vmatprep.subr.bf16.mxu0 0
        %2170 = vmatpush1.bf16.msra.mxu0 %v1738
        %2171 = vmatprep.subr.bf16.mxu0 0
        %2172 = vmatpush1.bf16.msra.mxu0 %v1739
        %2173 = vmatprep.subr.bf16.mxu0 0
        %2174 = vmatpush1.bf16.msra.mxu0 %v1740
        %2175 = vmatprep.subr.bf16.mxu0 0
        %2176 = vmatpush1.bf16.msra.mxu0 %v1741
        %2177 = vmatprep.subr.bf16.mxu0 0
        %2178 = vmatpush1.bf16.msra.mxu0 %v1742
        %2179 = vmatprep.subr.bf16.mxu0 0
        %2180 = vmatpush1.bf16.msra.mxu0 %v1743
        %2181 = vmatprep.mubr.bf16.mxu0 %v852
        %2182 = vmatmul.mubr.bf16.gmra.mrb[0].mxu0 %v851
        %v2183 = vpop.f32.mrb[0].mxu0
        %v2184 = vadd.f32 %v2135, %v2183
        %v2185 = vpop.f32.mrb[0].mxu0
        %v2186 = vpop.f32.mrb[0].mxu0
        %v2187 = vadd.f32 %v2138, %v2186
        %v2188 = vpop.f32.mrb[0].mxu0
        %2189 = vmatprep.mubr.bf16.mxu0 %v868
        %2190 = vmatmul.mubr.bf16.gmra.mrb[0].mxu0 %v867
        %v2191 = vpop.f32.mrb[0].mxu0
        %v2192 = vadd.f32 %v2143, %v2191
        %v2193 = vpop.f32.mrb[0].mxu0
        %v2194 = vpop.f32.mrb[0].mxu0
        %v2195 = vadd.f32 %v2146, %v2194
        %v2196 = vpop.f32.mrb[0].mxu0
        %2197 = vdwg.mxu0
        %2198 = vmatprep.subr.bf16.mxu0 0
        %2199 = vmatpush1.bf16.msra.mxu0 %v1744
        %2200 = vmatprep.subr.bf16.mxu0 0
        %2201 = vmatpush1.bf16.msra.mxu0 %v1745
        %2202 = vmatprep.subr.bf16.mxu0 0
        %2203 = vmatpush1.bf16.msra.mxu0 %v1746
        %2204 = vmatprep.subr.bf16.mxu0 0
        %2205 = vmatpush1.bf16.msra.mxu0 %v1747
        %2206 = vmatprep.subr.bf16.mxu0 0
        %2207 = vmatpush1.bf16.msra.mxu0 %v1748
        %2208 = vmatprep.subr.bf16.mxu0 0
        %2209 = vmatpush1.bf16.msra.mxu0 %v1749
        %2210 = vmatprep.subr.bf16.mxu0 0
        %2211 = vmatpush1.bf16.msra.mxu0 %v1750
        %2212 = vmatprep.subr.bf16.mxu0 0
        %2213 = vmatpush1.bf16.msra.mxu0 %v1751
        %2214 = vmatprep.subr.bf16.mxu0 0
        %2215 = vmatpush1.bf16.msra.mxu0 %v1752
        %2216 = vmatprep.subr.bf16.mxu0 0
        %2217 = vmatpush1.bf16.msra.mxu0 %v1753
        %2218 = vmatprep.subr.bf16.mxu0 0
        %2219 = vmatpush1.bf16.msra.mxu0 %v1754
        %2220 = vmatprep.subr.bf16.mxu0 0
        %2221 = vmatpush1.bf16.msra.mxu0 %v1755
        %2222 = vmatprep.subr.bf16.mxu0 0
        %2223 = vmatpush1.bf16.msra.mxu0 %v1756
        %2224 = vmatprep.subr.bf16.mxu0 0
        %2225 = vmatpush1.bf16.msra.mxu0 %v1757
        %2226 = vmatprep.subr.bf16.mxu0 0
        %2227 = vmatpush1.bf16.msra.mxu0 %v1758
        %2228 = vmatprep.subr.bf16.mxu0 0
        %2229 = vmatpush1.bf16.msra.mxu0 %v1759
        %2230 = vmatprep.mubr.bf16.mxu0 %v854
        %2231 = vmatmul.mubr.bf16.gmra.mrb[0].mxu0 %v853
        %v2232 = vpop.f32.mrb[0].mxu0
        %v2233 = vadd.f32 %v2184, %v2232
        %v2234 = vpop.f32.mrb[0].mxu0
        %v2235 = vpop.f32.mrb[0].mxu0
        %v2236 = vadd.f32 %v2187, %v2235
        %v2237 = vpop.f32.mrb[0].mxu0
        %2238 = vmatprep.mubr.bf16.mxu0 %v870
        %2239 = vmatmul.mubr.bf16.gmra.mrb[0].mxu0 %v869
        %v2240 = vpop.f32.mrb[0].mxu0
        %v2241 = vadd.f32 %v2192, %v2240
        %v2242 = vpop.f32.mrb[0].mxu0
        %v2243 = vpop.f32.mrb[0].mxu0
        %v2244 = vadd.f32 %v2195, %v2243
        %v2245 = vpop.f32.mrb[0].mxu0
        %2246 = vdwg.mxu0
        %2247 = vmatprep.subr.bf16.mxu0 0
        %2248 = vmatpush1.bf16.msra.mxu0 %v1760
        %2249 = vmatprep.subr.bf16.mxu0 0
        %2250 = vmatpush1.bf16.msra.mxu0 %v1761
        %2251 = vmatprep.subr.bf16.mxu0 0
        %2252 = vmatpush1.bf16.msra.mxu0 %v1762
        %2253 = vmatprep.subr.bf16.mxu0 0
        %2254 = vmatpush1.bf16.msra.mxu0 %v1763
        %2255 = vmatprep.subr.bf16.mxu0 0
        %2256 = vmatpush1.bf16.msra.mxu0 %v1764
        %2257 = vmatprep.subr.bf16.mxu0 0
        %2258 = vmatpush1.bf16.msra.mxu0 %v1765
        %2259 = vmatprep.subr.bf16.mxu0 0
        %2260 = vmatpush1.bf16.msra.mxu0 %v1766
        %2261 = vmatprep.subr.bf16.mxu0 0
        %2262 = vmatpush1.bf16.msra.mxu0 %v1767
        %2263 = vmatprep.subr.bf16.mxu0 0
        %2264 = vmatpush1.bf16.msra.mxu0 %v1768
        %2265 = vmatprep.subr.bf16.mxu0 0
        %2266 = vmatpush1.bf16.msra.mxu0 %v1769
        %2267 = vmatprep.subr.bf16.mxu0 0
        %2268 = vmatpush1.bf16.msra.mxu0 %v1770
        %2269 = vmatprep.subr.bf16.mxu0 0
        %2270 = vmatpush1.bf16.msra.mxu0 %v1771
        %2271 = vmatprep.subr.bf16.mxu0 0
        %2272 = vmatpush1.bf16.msra.mxu0 %v1772
        %2273 = vmatprep.subr.bf16.mxu0 0
        %2274 = vmatpush1.bf16.msra.mxu0 %v1773
        %2275 = vmatprep.subr.bf16.mxu0 0
        %2276 = vmatpush1.bf16.msra.mxu0 %v1774
        %2277 = vmatprep.subr.bf16.mxu0 0
        %2278 = vmatpush1.bf16.msra.mxu0 %v1775
        %2279 = vmatprep.mubr.bf16.mxu0 %v856
        %2280 = vmatmul.mubr.bf16.gmra.mrb[0].mxu0 %v855
        %v2281 = vpop.f32.mrb[0].mxu0
        %v2282 = vadd.f32 %v2233, %v2281
        %v2283 = vpop.f32.mrb[0].mxu0
        %v2284 = vpop.f32.mrb[0].mxu0
        %v2285 = vadd.f32 %v2236, %v2284
        %v2286 = vpop.f32.mrb[0].mxu0
        %2287 = vmatprep.mubr.bf16.mxu0 %v872
        %2288 = vmatmul.mubr.bf16.gmra.mrb[0].mxu0 %v871
        %v2289 = vpop.f32.mrb[0].mxu0
        %v2290 = vadd.f32 %v2241, %v2289
        %v2291 = vpop.f32.mrb[0].mxu0
        %v2292 = vpop.f32.mrb[0].mxu0
        %v2293 = vadd.f32 %v2244, %v2292
        %v2294 = vpop.f32.mrb[0].mxu0
        %2295 = vdwg.mxu0
        %v2296 = vpack.c.bf16 %v2285, %v2282
        %v2297 = vpack.c.bf16 %v2293, %v2290
        %v2300 = vunpack.c.l.b16 %v2296
        %v2301 = vunpack.c.h.b16 %v2296
        %v2302 = vunpack.c.l.b16 %v2297
        %v2303 = vunpack.c.h.b16 %v2297
        %v2304 = vpack.c.b16 %v2300, %v2300
        %v2305 = vpack.c.b16 %v2301, %v2301
        %v2306 = vpack.c.b16 %v2302, %v2302
        %v2307 = vpack.c.b16 %v2303, %v2303
        %vm2312 = vcmask 3072
        %2313 = vst.msk [vmem:[%s233] sm:$0xf] %vm2312, %v2304
        %2314 = vst.msk [vmem:[%s233 + $0x4] sm:$0xf] %vm2312, %v2305
        %2315 = vst.msk [vmem:[%s233 + $0x8] sm:$0xf] %vm2312, %v2306
        %2316 = vst.msk [vmem:[%s233 + $0xc] sm:$0xf] %vm2312, %v2307
        %s2317 = sand.u32 %s136, 1
        %s2318 = sand.u32 %s136, 1
        %s2319 = smul.addr %s2318, 16
        %s2320 = scalar_lea.vmem [#allocation3], %s2319
        // Predicated region
        $region41: #{_lambda_.19} parent=39 // pred_check
          %p2321 = pneg %p146
        $region42: #{_lambda_.19} parent=39 // pred_check_branch
          %2323 = sbr.rel (%p2321) target = $region44
        $region43: #{_lambda_.19} parent=39 // pred_region
          %s2324 = smul.u32 4, %s18
          %s2325 = ssub.s32 7, %s2324
          %p2326 = scmp.lt.s32.totalorder %s2325, 4
          %s2327 = scalar_select %p2326, %s2325, 4
          %s2328 = smul.u32 64, %s2327
          %p2329 = scmp.ne.s32.totalorder 0, %s2328
          %s2330 = smul.addr %s2324, 4
          %s2331 = scalar_lea.vmem %s5, %s2330
          // Predicated region
          $region45: #{_lambda_.19} parent=43 // pred_check
            %p2332 = pneg %p2329
          $region46: #{_lambda_.19} parent=43 // pred_check_branch
            %2334 = sbr.rel (%p2332) target = $region48
          $region47: #{_lambda_.19} parent=43 // pred_region
            // Predicated region
            $region49: #{_lambda_.19} parent=47 // pred_check
              _
            $region50: #{_lambda_.19} parent=47 // pred_check_branch
              %2336 = sbr.rel target = $region52
            $region51: #{_lambda_.19} parent=47 // pred_region
              // Predicated region
              $region71: #{_lambda_.19} parent=51 // pred_check
                _
              $region72: #{_lambda_.19} parent=51 // pred_check_branch
                %2391 = sbr.rel (0) target = $region74
              $region73: #{_lambda_.19} parent=51 // pred_region
                %s2393 = sshrl.u32 %s2327, 2
                // While loop
                $region75: #{_lambda_.19} parent=73 // loop_pre_header
                  _
                $region76: #{_lambda_.19} parent=73 // loop_header
                  %s2395 = sphi 0, %s2397
                  %p2396 = scmp.ge.s32.totalorder %s2395, %s2393
                  %s2400 = sphi 0, %s2413
                  %s2401 = sphi %s2320, %s2416
                  %s2402 = sphi %s2331, %s2417
                $region77: #{_lambda_.19} parent=73 // loop_header_branch
                  %2399 = sbr.rel (%p2396) target = $region81
                $region78: #{_lambda_.19} parent=73 // loop_body
                  %v2403 = vld [vmem:[%s2401] sm:$0xf]
                  %2404 = vst [vmem:[%s2402] sm:$0xf] %v2403
                  %v2405 = vld [vmem:[%s2401 + $0x4] sm:$0xf]
                  %2406 = vst [vmem:[%s2402 + $0x4] sm:$0xf] %v2405
                  %v2407 = vld [vmem:[%s2401 + $0x8] sm:$0xf]
                  %2408 = vst [vmem:[%s2402 + $0x8] sm:$0xf] %v2407
                  %v2409 = vld [vmem:[%s2401 + $0xc] sm:$0xf]
                  %2410 = vst [vmem:[%s2402 + $0xc] sm:$0xf] %v2409
                  %s2411 = sadd.s32 1, %s2400
                  %p2412 = scmp.ge.s32.totalorder %s2411, %s2393
                  %s2413 = scalar_select %p2412, 0, %s2411
                  %s2414 = smul.u32 %s2413, 16
                  %s2415 = smul.u32 %s2413, 16
                  %s2416 = scalar_lea.vmem %s2320, %s2414 [#allocation3]
                  %s2417 = scalar_lea.vmem %s2331, %s2415
                $region79: #{_lambda_.19} parent=73 // loop_footer
                  %s2397 = sadd.s32 %s2395, 1
                $region80: #{_lambda_.19} parent=73 // loop_footer_branch
                  %2394 = sbr.rel target = $region76
                $region81: #{_lambda_.19} parent=73 // loop_exit
                  _
                %s2418 = sshrl.u32 %s2327, 2
                %s2419 = sand.u32 %s2327, 3
                %s2420 = smul.u32 %s2418, 4
                %s2421 = smul.u32 4, %s2420
                %s2422 = scalar_lea.vmem %s2320, %s2421 [#allocation3]
                %s2423 = smul.u32 4, %s2420
                %s2424 = scalar_lea.vmem %s2331, %s2423
                // While loop
                $region82: #{_lambda_.19} parent=73 // loop_pre_header
                  _
                $region83: #{_lambda_.19} parent=73 // loop_header
                  %s2426 = sphi 0, %s2428
                  %p2427 = scmp.ge.s32.totalorder %s2426, %s2419
                  %s2431 = sphi 0, %s2438
                  %s2432 = sphi %s2422, %s2441
                  %s2433 = sphi %s2424, %s2442
                $region84: #{_lambda_.19} parent=73 // loop_header_branch
                  %2430 = sbr.rel (%p2427) target = $region88
                $region85: #{_lambda_.19} parent=73 // loop_body
                  %v2434 = vld [vmem:[%s2432] sm:$0xf]
                  %2435 = vst [vmem:[%s2433] sm:$0xf] %v2434
                  %s2436 = sadd.s32 1, %s2431
                  %p2437 = scmp.ge.s32.totalorder %s2436, %s2419
                  %s2438 = scalar_select %p2437, 0, %s2436
                  %s2439 = smul.u32 %s2438, 4
                  %s2440 = smul.u32 %s2438, 4
                  %s2441 = scalar_lea.vmem %s2422, %s2439 [#allocation3]
                  %s2442 = scalar_lea.vmem %s2424, %s2440
                $region86: #{_lambda_.19} parent=73 // loop_footer
                  %s2428 = sadd.s32 %s2426, 1
                $region87: #{_lambda_.19} parent=73 // loop_footer_branch
                  %2425 = sbr.rel target = $region83
                $region88: #{_lambda_.19} parent=73 // loop_exit
                  _
              $region74: #{_lambda_.19} parent=51 // pred_fallthru
                _
            $region52: #{_lambda_.19} parent=47 // pred_fallthru
              _
            // Predicated region
            $region53: #{_lambda_.19} parent=47 // pred_check
              _
            $region54: #{_lambda_.19} parent=47 // pred_check_branch
              %2338 = sbr.rel (0) target = $region56
            $region55: #{_lambda_.19} parent=47 // pred_region
              %s2340 = sshrl.u32 %s2327, 2
              // While loop
              $region57: #{_lambda_.19} parent=55 // loop_pre_header
                _
              $region58: #{_lambda_.19} parent=55 // loop_header
                %s2342 = sphi 0, %s2344
                %p2343 = scmp.ge.s32.totalorder %s2342, %s2340
                %s2347 = sphi 0, %s2360
                %s2348 = sphi %s2320, %s2363
                %s2349 = sphi %s2331, %s2364
              $region59: #{_lambda_.19} parent=55 // loop_header_branch
                %2346 = sbr.rel (%p2343) target = $region63
              $region60: #{_lambda_.19} parent=55 // loop_body
                %v2350 = vld [vmem:[%s2348] sm:$0xf]
                %2351 = vst [vmem:[%s2349] sm:$0xf] %v2350
                %v2352 = vld [vmem:[%s2348 + $0x4] sm:$0xf]
                %2353 = vst [vmem:[%s2349 + $0x4] sm:$0xf] %v2352
                %v2354 = vld [vmem:[%s2348 + $0x8] sm:$0xf]
                %2355 = vst [vmem:[%s2349 + $0x8] sm:$0xf] %v2354
                %v2356 = vld [vmem:[%s2348 + $0xc] sm:$0xf]
                %2357 = vst [vmem:[%s2349 + $0xc] sm:$0xf] %v2356
                %s2358 = sadd.s32 1, %s2347
                %p2359 = scmp.ge.s32.totalorder %s2358, %s2340
                %s2360 = scalar_select %p2359, 0, %s2358
                %s2361 = smul.u32 %s2360, 16
                %s2362 = smul.u32 %s2360, 16
                %s2363 = scalar_lea.vmem %s2320, %s2361 [#allocation3]
                %s2364 = scalar_lea.vmem %s2331, %s2362
              $region61: #{_lambda_.19} parent=55 // loop_footer
                %s2344 = sadd.s32 %s2342, 1
              $region62: #{_lambda_.19} parent=55 // loop_footer_branch
                %2341 = sbr.rel target = $region58
              $region63: #{_lambda_.19} parent=55 // loop_exit
                _
              %s2365 = sshrl.u32 %s2327, 2
              %s2366 = sand.u32 %s2327, 3
              %s2367 = smul.u32 %s2365, 4
              %s2368 = smul.u32 4, %s2367
              %s2369 = scalar_lea.vmem %s2320, %s2368 [#allocation3]
              %s2370 = smul.u32 4, %s2367
              %s2371 = scalar_lea.vmem %s2331, %s2370
              // While loop
              $region64: #{_lambda_.19} parent=55 // loop_pre_header
                _
              $region65: #{_lambda_.19} parent=55 // loop_header
                %s2373 = sphi 0, %s2375
                %p2374 = scmp.ge.s32.totalorder %s2373, %s2366
                %s2378 = sphi 0, %s2385
                %s2379 = sphi %s2369, %s2388
                %s2380 = sphi %s2371, %s2389
              $region66: #{_lambda_.19} parent=55 // loop_header_branch
                %2377 = sbr.rel (%p2374) target = $region70
              $region67: #{_lambda_.19} parent=55 // loop_body
                %v2381 = vld [vmem:[%s2379] sm:$0xf]
                %2382 = vst [vmem:[%s2380] sm:$0xf] %v2381
                %s2383 = sadd.s32 1, %s2378
                %p2384 = scmp.ge.s32.totalorder %s2383, %s2366
                %s2385 = scalar_select %p2384, 0, %s2383
                %s2386 = smul.u32 %s2385, 4
                %s2387 = smul.u32 %s2385, 4
                %s2388 = scalar_lea.vmem %s2369, %s2386 [#allocation3]
                %s2389 = scalar_lea.vmem %s2371, %s2387
              $region68: #{_lambda_.19} parent=55 // loop_footer
                %s2375 = sadd.s32 %s2373, 1
              $region69: #{_lambda_.19} parent=55 // loop_footer_branch
                %2372 = sbr.rel target = $region65
              $region70: #{_lambda_.19} parent=55 // loop_exit
                _
            $region56: #{_lambda_.19} parent=47 // pred_fallthru
              _
          $region48: #{_lambda_.19} parent=43 // pred_fallthru
            _
          %2443 = vnop
        $region44: #{_lambda_.19} parent=39 // pred_fallthru
          _
      $region40: #{_lambda_.19} parent=5 // pred_fallthru
        _
      %p2444 = scmp.le.s32.totalorder 2, %s13
      // Predicated region
      $region89: #{_lambda_.19} parent=5 // pred_check
        %p2445 = pneg %p2444
      $region90: #{_lambda_.19} parent=5 // pred_check_branch
        %2447 = sbr.rel (%p2445) target = $region92
      $region91: #{_lambda_.19} parent=5 // pred_region
        %s2448 = ssub.s32 %s13, 2
        // Predicated region
        $region93: #{_lambda_.19} parent=91 // pred_check
          %p2449 = pneg %p152
        $region94: #{_lambda_.19} parent=91 // pred_check_branch
          %2451 = sbr.rel (%p2449) target = $region96
        $region95: #{_lambda_.19} parent=91 // pred_region
          %s2452 = sand.u32 %s137, 1
          %s2453 = sand.u32 %s137, 1
          %s2454 = smul.addr %s2453, 16
          %s2455 = scalar_lea.vmem [#allocation3], %s2454
        $region96: #{_lambda_.19} parent=91 // pred_fallthru
          _
      $region92: #{_lambda_.19} parent=5 // pred_fallthru
        _
    $region6: #{_lambda_.19} parent=1 // loop_footer
      %s17 = sadd.s32 1, %s13
    $region7: #{_lambda_.19} parent=1 // loop_footer_branch
      %12 = sbr.rel target = $region3
    $region8: #{_lambda_.19} parent=1 // loop_exit
      _

</llo_original>
